<compile_context>
chip_gen: v7x
topology: tpu7x:2x2x1
jax: 0.10.0
libtpu: 0.0.40
codegen_flags: <defaults>
</compile_context>

<pallas_src>
import functools

import jax
import jax.numpy as jnp
from jax import lax
from jax.experimental import pallas as pl
from jax.experimental.pallas import tpu as pltpu  # noqa: F401  (TPU backend namespace)

# ---------------- tiny-T5 config ----------------
VOCAB = 256
D_MODEL = 64
D_FF = 128
N_HEADS = 4
D_KV = 16
INNER = N_HEADS * D_KV            # 64
N_LAYERS = 2
NUM_BUCKETS = 32
MAX_DISTANCE = 128
EPS = 1e-6


# ---------------- fully fused kernel ----------------
def _t5_fused_kernel(enc_ids_ref, dec_ids_ref, shared_ref, enc_bias_ref, dec_bias_ref,
                     e_ln0, e_wqkv, e_wo_attn, e_ln1, e_wi, e_wo, enc_final_ln,
                     d_ln0, d_sa_wqkv, d_sa_wo, d_ln1, d_ca_wq, d_ca_wkv, d_ca_wo,
                     d_ln2, d_wi, d_wo, dec_final_ln, shared_t,
                     logits_ref, *, B, Se, Sd):
    shared = shared_ref[...]                                   # (VOCAB, D) f32, VMEM-resident

    # ---- in-kernel helpers (all operate on VMEM-resident values) ----
    def embed(ids):                                            # ids: (T, 1) int32
        T = ids.shape[0]
        vocab_iota = lax.broadcasted_iota(jnp.int32, (T, VOCAB), 1)
        onehot = (ids == vocab_iota).astype(jnp.float32)       # exact 0/1 rows
        return jnp.dot(onehot, shared, preferred_element_type=jnp.float32)

    def rms(x, w):                                             # T5 RMSNorm, f32 VPU path
        var = jnp.mean(x * x, axis=-1, keepdims=True)
        return x * lax.rsqrt(var + EPS) * w

    def softmax(s):
        s = s - jnp.max(s, axis=-1, keepdims=True)
        p = jnp.exp(s)
        return p * pl.reciprocal(jnp.sum(p, axis=-1, keepdims=True), approx=True)

    def attention(q, k, v, bias, b, sq, sk):
        # q: (b*sq, INNER) f32, k/v: (b*sk, INNER) f32, bias: (H, sq, sk) f32 or None
        qb = q.reshape(b, sq, INNER).astype(jnp.bfloat16)      # cast once, not per head
        kb = k.reshape(b, sk, INNER).astype(jnp.bfloat16)
        vb = v.reshape(b, sk, INNER).astype(jnp.bfloat16)
        heads = []
        for h in range(N_HEADS):                               # static head loop, batched over B
            c = h * D_KV
            s = jnp.einsum('bqd,bkd->bqk', qb[:, :, c:c + D_KV], kb[:, :, c:c + D_KV],
                           preferred_element_type=jnp.float32)
            if bias is not None:                               # T5: no 1/sqrt(d) scaling
                s = s + bias[h][None]
            p = softmax(s)
            ctx = jnp.einsum('bqk,bkd->bqd', p.astype(jnp.bfloat16), vb[:, :, c:c + D_KV],
                             preferred_element_type=jnp.float32)
            heads.append(ctx.reshape(b * sq, D_KV))
        return jnp.concatenate(heads, axis=-1)                 # (b*sq, INNER)

    def self_attn(x, ln_w, wqkv, wo, bias, b, s):
        h = rms(x, ln_w)
        qkv = jnp.dot(h.astype(jnp.bfloat16), wqkv, preferred_element_type=jnp.float32)
        ctx = attention(qkv[:, :INNER], qkv[:, INNER:2 * INNER], qkv[:, 2 * INNER:],
                        bias, b, s, s)
        return x + jnp.dot(ctx.astype(jnp.bfloat16), wo, preferred_element_type=jnp.float32)

    def cross_attn(x, enc_bf, ln_w, wq, wkv, wo, b, sq, sk):
        h = rms(x, ln_w)
        q = jnp.dot(h.astype(jnp.bfloat16), wq, preferred_element_type=jnp.float32)
        kv = jnp.dot(enc_bf, wkv, preferred_element_type=jnp.float32)
        ctx = attention(q, kv[:, :INNER], kv[:, INNER:], None, b, sq, sk)
        return x + jnp.dot(ctx.astype(jnp.bfloat16), wo, preferred_element_type=jnp.float32)

    def ffn(x, ln_w, wi, wo):
        h = rms(x, ln_w)
        a = jnp.dot(h.astype(jnp.bfloat16), wi, preferred_element_type=jnp.float32)
        a = jnp.maximum(a, 0.0)                                # ReLU-activated T5 FFN
        return x + jnp.dot(a.astype(jnp.bfloat16), wo, preferred_element_type=jnp.float32)

    # -------- encoder --------
    x = embed(enc_ids_ref[...])                                # (B*Se, D) f32
    enc_bias = enc_bias_ref[...]                               # (H, Se, Se)
    for l in range(N_LAYERS):
        x = self_attn(x, e_ln0[l], e_wqkv[l], e_wo_attn[l], enc_bias, B, Se)
        x = ffn(x, e_ln1[l], e_wi[l], e_wo[l])
    enc_out_bf = rms(x, enc_final_ln[...]).astype(jnp.bfloat16)

    # -------- decoder --------
    y = embed(dec_ids_ref[...])                                # (B*Sd, D) f32
    dec_bias = dec_bias_ref[...]                               # (H, Sd, Sd), causal folded in
    for l in range(N_LAYERS):
        y = self_attn(y, d_ln0[l], d_sa_wqkv[l], d_sa_wo[l], dec_bias, B, Sd)
        y = cross_attn(y, enc_out_bf, d_ln1[l], d_ca_wq[l], d_ca_wkv[l], d_ca_wo[l],
                       B, Sd, Se)
        y = ffn(y, d_ln2[l], d_wi[l], d_wo[l])

    # -------- LM head (tied embedding, pre-scaled) --------
    h = rms(y, dec_final_ln[...]) * (D_MODEL ** -0.5)
    logits_ref[...] = jnp.dot(h.astype(jnp.bfloat16), shared_t[...],
                              preferred_element_type=jnp.float32)   # (B*Sd, 256) lane-dense


# ---------------- pallas_call wrapper ----------------
def _vspec(shape):
    zeros = (0,) * len(shape)
    return pl.BlockSpec(shape, lambda: zeros)


# ---------------- T5 glue (plain JAX, tiny one-off table math) ----------------
def relative_position_bucket(relative_position, bidirectional, num_buckets, max_distance):
    relative_buckets = jnp.zeros_like(relative_position)
    if bidirectional:
        num_buckets //= 2
        relative_buckets = relative_buckets + (relative_position > 0).astype(jnp.int32) * num_buckets
        relative_position = jnp.abs(relative_position)
    else:
        relative_position = -jnp.minimum(relative_position, 0)
    max_exact = num_buckets // 2
    is_small = relative_position < max_exact
    # clamp before log / float->int cast so out-of-range casts never occur
    rel_pos_f = jnp.maximum(relative_position, 1).astype(jnp.float32)
    rel_large = max_exact + (
        jnp.log(rel_pos_f / max_exact)
        / jnp.log(max_distance / max_exact)
        * (num_buckets - max_exact)
    ).astype(jnp.int32)
    rel_large = jnp.minimum(rel_large, num_buckets - 1)
    return relative_buckets + jnp.where(is_small, relative_position, rel_large)


def compute_position_bias(table, q_len, k_len, bidirectional):
    ctx = jnp.arange(q_len)[:, None]
    mem = jnp.arange(k_len)[None, :]
    buckets = relative_position_bucket(mem - ctx, bidirectional, NUM_BUCKETS, MAX_DISTANCE)
    values = table[buckets]                       # (q, k, H)
    return jnp.transpose(values, (2, 0, 1))       # (H, q, k)  — no batch broadcast


def t5_forward(params, input_ids, decoder_input_ids):
    B, Se = input_ids.shape
    _, Sd = decoder_input_ids.shape

    enc_bias = compute_position_bias(params["enc_rel_bias"], Se, Se, bidirectional=True)
    dec_bias = compute_position_bias(params["dec_rel_bias"], Sd, Sd, bidirectional=False)
    causal = jnp.where(jnp.arange(Sd)[None, :] > jnp.arange(Sd)[:, None],
                       -1e9, 0.0).astype(jnp.float32)
    dec_bias = dec_bias + causal[None]            # (H, Sd, Sd); causal mask folded into bias

    enc_ids = input_ids.reshape(B * Se, 1).astype(jnp.int32)
    dec_ids = decoder_input_ids.reshape(B * Sd, 1).astype(jnp.int32)

    args = [
        enc_ids, dec_ids, params["shared"], enc_bias, dec_bias,
        params["e_ln0"], params["e_wqkv"], params["e_wo_attn"],
        params["e_ln1"], params["e_wi"], params["e_wo"], params["enc_final_ln"],
        params["d_ln0"], params["d_sa_wqkv"], params["d_sa_wo"], params["d_ln1"],
        params["d_ca_wq"], params["d_ca_wkv"], params["d_ca_wo"], params["d_ln2"],
        params["d_wi"], params["d_wo"], params["dec_final_ln"], params["shared_t"],
    ]

    logits = pl.pallas_call(
        functools.partial(_t5_fused_kernel, B=B, Se=Se, Sd=Sd),
        out_shape=jax.ShapeDtypeStruct((B * Sd, VOCAB), jnp.float32),
        in_specs=[_vspec(a.shape) for a in args],
        out_specs=_vspec((B * Sd, VOCAB)),
    )(*args)
    return logits.reshape(B, Sd, VOCAB)


# ---------------- deterministic parameter init ----------------
def init_params(key):
    keys = iter(jax.random.split(key, 64))

    def w(shape, scale=0.02, dtype=jnp.bfloat16):
        return (scale * jax.random.normal(next(keys), shape)).astype(dtype)

    def lns(n):
        return jnp.ones((n, 1, D_MODEL), jnp.float32)

    L = N_LAYERS
    shared = w((VOCAB, D_MODEL), 1.0, jnp.float32)       # embedding table, f32
    params = {
        "shared": shared,
        "shared_t": shared.T.astype(jnp.bfloat16),       # tied LM head, pre-transposed once
        "enc_rel_bias": w((NUM_BUCKETS, N_HEADS), 0.02, jnp.float32),
        "dec_rel_bias": w((NUM_BUCKETS, N_HEADS), 0.02, jnp.float32),
        "enc_final_ln": jnp.ones((1, D_MODEL), jnp.float32),
        "dec_final_ln": jnp.ones((1, D_MODEL), jnp.float32),
        # encoder layers, stacked along a leading layer axis
        "e_ln0": lns(L),
        "e_wqkv": w((L, D_MODEL, 3 * INNER)),            # fused Q|K|V, lane-dense (64,192)
        "e_wo_attn": w((L, INNER, D_MODEL)),
        "e_ln1": lns(L),
        "e_wi": w((L, D_MODEL, D_FF)),
        "e_wo": w((L, D_FF, D_MODEL)),
        # decoder layers, stacked
        "d_ln0": lns(L),
        "d_sa_wqkv": w((L, D_MODEL, 3 * INNER)),
        "d_sa_wo": w((L, INNER, D_MODEL)),
        "d_ln1": lns(L),
        "d_ca_wq": w((L, D_MODEL, INNER)),
        "d_ca_wkv": w((L, D_MODEL, 2 * INNER)),          # fused K|V for cross-attention
        "d_ca_wo": w((L, INNER, D_MODEL)),
        "d_ln2": lns(L),
        "d_wi": w((L, D_MODEL, D_FF)),
        "d_wo": w((L, D_FF, D_MODEL)),
    }
    return params


if __name__ == "__main__":
    key = jax.random.PRNGKey(0)
    pkey, ikey, dkey = jax.random.split(key, 3)
    params = init_params(pkey)
    input_ids = jax.random.randint(ikey, (2, 8), 0, VOCAB, dtype=jnp.int32)
    decoder_input_ids = jax.random.randint(dkey, (2, 8), 0, VOCAB, dtype=jnp.int32)

    logits = jax.jit(t5_forward)(params, input_ids, decoder_input_ids)
    jax.block_until_ready(logits)

    assert logits.shape == (2, 8, VOCAB), logits.shape
    assert bool(jnp.all(jnp.isfinite(logits)))
    print("KERNEL_OK")
</pallas_src>

<mosaic_0001>
module attributes {stable_mosaic.version = 11 : i64} {
  func.func @_t5_fused_kernel(%arg0: memref<16x1xi32, #tpu.memory_space<vmem>>, %arg1: memref<16x1xi32, #tpu.memory_space<vmem>>, %arg2: memref<256x64xf32, #tpu.memory_space<vmem>>, %arg3: memref<4x8x8xf32, #tpu.memory_space<vmem>>, %arg4: memref<4x8x8xf32, #tpu.memory_space<vmem>>, %arg5: memref<2x1x64xf32, #tpu.memory_space<vmem>>, %arg6: memref<2x64x192xbf16, #tpu.memory_space<vmem>>, %arg7: memref<2x64x64xbf16, #tpu.memory_space<vmem>>, %arg8: memref<2x1x64xf32, #tpu.memory_space<vmem>>, %arg9: memref<2x64x128xbf16, #tpu.memory_space<vmem>>, %arg10: memref<2x128x64xbf16, #tpu.memory_space<vmem>>, %arg11: memref<1x64xf32, #tpu.memory_space<vmem>>, %arg12: memref<2x1x64xf32, #tpu.memory_space<vmem>>, %arg13: memref<2x64x192xbf16, #tpu.memory_space<vmem>>, %arg14: memref<2x64x64xbf16, #tpu.memory_space<vmem>>, %arg15: memref<2x1x64xf32, #tpu.memory_space<vmem>>, %arg16: memref<2x64x64xbf16, #tpu.memory_space<vmem>>, %arg17: memref<2x64x128xbf16, #tpu.memory_space<vmem>>, %arg18: memref<2x64x64xbf16, #tpu.memory_space<vmem>>, %arg19: memref<2x1x64xf32, #tpu.memory_space<vmem>>, %arg20: memref<2x64x128xbf16, #tpu.memory_space<vmem>>, %arg21: memref<2x128x64xbf16, #tpu.memory_space<vmem>>, %arg22: memref<1x64xf32, #tpu.memory_space<vmem>>, %arg23: memref<64x256xbf16, #tpu.memory_space<vmem>>, %arg24: memref<16x256xf32, #tpu.memory_space<vmem>>) attributes {dimension_semantics = [], scalar_prefetch = 0 : i64, scratch_operands = 0 : i64, tpu.core_type = #tpu.core_type<tc>} {
    %c0 = arith.constant 0 : index
    %c0_0 = arith.constant 0 : index
    %0 = vector.load %arg2[%c0, %c0_0] : memref<256x64xf32, #tpu.memory_space<vmem>>, vector<256x64xf32>
    %c0_1 = arith.constant 0 : index
    %c0_2 = arith.constant 0 : index
    %1 = vector.load %arg0[%c0_1, %c0_2] : memref<16x1xi32, #tpu.memory_space<vmem>>, vector<16x1xi32>
    %2 = tpu.iota {dimensions = array<i32: 1>} : vector<16x256xi32>
    %3 = vector.broadcast %1 : vector<16x1xi32> to vector<16x256xi32>
    %4 = arith.cmpi eq, %3, %2 : vector<16x256xi32>
    %5 = arith.extui %4 : vector<16x256xi1> to vector<16x256xi32>
    %6 = arith.sitofp %5 : vector<16x256xi32> to vector<16x256xf32>
    %cst = arith.constant dense<0.000000e+00> : vector<16x64xf32>
    %7 = tpu.matmul %6, %0, %cst {dimension_numbers = #tpu.dot_dimension_numbers<[1], [0], [0], [1], [0, 0, 1, 1], [], []>} : vector<16x256xf32>, vector<256x64xf32>, vector<16x64xf32> -> vector<16x64xf32>
    %c0_3 = arith.constant 0 : index
    %c0_4 = arith.constant 0 : index
    %c0_5 = arith.constant 0 : index
    %8 = vector.load %arg3[%c0_3, %c0_4, %c0_5] : memref<4x8x8xf32, #tpu.memory_space<vmem>>, vector<4x8x8xf32>
    %c0_6 = arith.constant 0 : index
    %c0_7 = arith.constant 0 : index
    %c0_8 = arith.constant 0 : index
    %9 = vector.load %arg5[%c0_6, %c0_7, %c0_8] : memref<2x1x64xf32, #tpu.memory_space<vmem>>, vector<1x1x64xf32>
    %10 = vector.shape_cast %9 : vector<1x1x64xf32> to vector<1x64xf32>
    %c0_9 = arith.constant 0 : index
    %c0_10 = arith.constant 0 : index
    %c0_11 = arith.constant 0 : index
    %11 = vector.load %arg6[%c0_9, %c0_10, %c0_11] : memref<2x64x192xbf16, #tpu.memory_space<vmem>>, vector<1x64x192xbf16>
    %12 = vector.shape_cast %11 : vector<1x64x192xbf16> to vector<64x192xbf16>
    %c0_12 = arith.constant 0 : index
    %c0_13 = arith.constant 0 : index
    %c0_14 = arith.constant 0 : index
    %13 = vector.load %arg7[%c0_12, %c0_13, %c0_14] : memref<2x64x64xbf16, #tpu.memory_space<vmem>>, vector<1x64x64xbf16>
    %14 = vector.shape_cast %13 : vector<1x64x64xbf16> to vector<64x64xbf16>
    %15 = arith.mulf %7, %7 : vector<16x64xf32>
    %cst_15 = arith.constant dense<0.000000e+00> : vector<16xf32>
    %16 = vector.multi_reduction <add>, %15, %cst_15 [1] : vector<16x64xf32> to vector<16xf32>
    %17 = vector.shape_cast %16 : vector<16xf32> to vector<16x1xf32>
    %cst_16 = arith.constant 6.400000e+01 : f32
    %18 = vector.broadcast %cst_16 : f32 to vector<16x1xf32>
    %19 = arith.divf %17, %18 : vector<16x1xf32>
    %cst_17 = arith.constant 9.99999997E-7 : f32
    %20 = vector.broadcast %cst_17 : f32 to vector<16x1xf32>
    %21 = arith.addf %19, %20 : vector<16x1xf32>
    %22 = math.rsqrt %21 : vector<16x1xf32>
    %23 = vector.broadcast %22 : vector<16x1xf32> to vector<16x64xf32>
    %24 = arith.mulf %7, %23 : vector<16x64xf32>
    %25 = vector.broadcast %10 : vector<1x64xf32> to vector<16x64xf32>
    %26 = arith.mulf %24, %25 : vector<16x64xf32>
    %27 = arith.truncf %26 : vector<16x64xf32> to vector<16x64xbf16>
    %cst_18 = arith.constant dense<0.000000e+00> : vector<16x192xf32>
    %28 = tpu.matmul %27, %12, %cst_18 {dimension_numbers = #tpu.dot_dimension_numbers<[1], [0], [0], [1], [0, 0, 1, 1], [], []>} : vector<16x64xbf16>, vector<64x192xbf16>, vector<16x192xf32> -> vector<16x192xf32>
    %29 = vector.extract_strided_slice %28 {offsets = [0, 0], sizes = [16, 64], strides = [1, 1]} : vector<16x192xf32> to vector<16x64xf32>
    %30 = vector.extract_strided_slice %28 {offsets = [0, 64], sizes = [16, 64], strides = [1, 1]} : vector<16x192xf32> to vector<16x64xf32>
    %31 = vector.extract_strided_slice %28 {offsets = [0, 128], sizes = [16, 64], strides = [1, 1]} : vector<16x192xf32> to vector<16x64xf32>
    %32 = vector.shape_cast %29 : vector<16x64xf32> to vector<2x8x64xf32>
    %33 = arith.truncf %32 : vector<2x8x64xf32> to vector<2x8x64xbf16>
    %34 = vector.shape_cast %30 : vector<16x64xf32> to vector<2x8x64xf32>
    %35 = arith.truncf %34 : vector<2x8x64xf32> to vector<2x8x64xbf16>
    %36 = vector.shape_cast %31 : vector<16x64xf32> to vector<2x8x64xf32>
    %37 = arith.truncf %36 : vector<2x8x64xf32> to vector<2x8x64xbf16>
    %38 = vector.extract_strided_slice %33 {offsets = [0, 0, 0], sizes = [2, 8, 16], strides = [1, 1, 1]} : vector<2x8x64xbf16> to vector<2x8x16xbf16>
    %39 = vector.extract_strided_slice %35 {offsets = [0, 0, 0], sizes = [2, 8, 16], strides = [1, 1, 1]} : vector<2x8x64xbf16> to vector<2x8x16xbf16>
    "tpu.trace_start"() <{level = 10 : i32, message = "bqd,bkd->bqk"}> : () -> ()
    %cst_19 = arith.constant dense<0.000000e+00> : vector<2x8x8xf32>
    %40 = tpu.matmul %38, %39, %cst_19 {dimension_numbers = #tpu.dot_dimension_numbers<[2], [2], [1], [1], [0, 0, 0, 1, 1, 1], [0], [0]>} : vector<2x8x16xbf16>, vector<2x8x16xbf16>, vector<2x8x8xf32> -> vector<2x8x8xf32>
    "tpu.trace_stop"() : () -> ()
    %41 = vector.extract_strided_slice %8 {offsets = [0, 0, 0], sizes = [1, 8, 8], strides = [1, 1, 1]} : vector<4x8x8xf32> to vector<1x8x8xf32>
    %42 = vector.shape_cast %41 : vector<1x8x8xf32> to vector<8x8xf32>
    %43 = vector.shape_cast %42 : vector<8x8xf32> to vector<1x8x8xf32>
    %44 = vector.broadcast %43 : vector<1x8x8xf32> to vector<2x8x8xf32>
    %45 = arith.addf %40, %44 : vector<2x8x8xf32>
    %cst_20 = arith.constant dense<0xFF800000> : vector<2x8xf32>
    %46 = vector.multi_reduction <maximumf>, %45, %cst_20 [2] : vector<2x8x8xf32> to vector<2x8xf32>
    %47 = vector.shape_cast %46 : vector<2x8xf32> to vector<2x8x1xf32>
    %48 = vector.broadcast %47 : vector<2x8x1xf32> to vector<2x8x8xf32>
    %49 = arith.subf %45, %48 : vector<2x8x8xf32>
    %50 = math.exp %49 : vector<2x8x8xf32>
    %cst_21 = arith.constant dense<0.000000e+00> : vector<2x8xf32>
    %51 = vector.multi_reduction <add>, %50, %cst_21 [2] : vector<2x8x8xf32> to vector<2x8xf32>
    %52 = vector.shape_cast %51 : vector<2x8xf32> to vector<2x8x1xf32>
    %53 = tpu.reciprocal %52 {approx = true} : vector<2x8x1xf32> -> vector<2x8x1xf32>
    %54 = vector.broadcast %53 : vector<2x8x1xf32> to vector<2x8x8xf32>
    %55 = arith.mulf %50, %54 : vector<2x8x8xf32>
    %56 = arith.truncf %55 : vector<2x8x8xf32> to vector<2x8x8xbf16>
    %57 = vector.extract_strided_slice %37 {offsets = [0, 0, 0], sizes = [2, 8, 16], strides = [1, 1, 1]} : vector<2x8x64xbf16> to vector<2x8x16xbf16>
    "tpu.trace_start"() <{level = 10 : i32, message = "bqk,bkd->bqd"}> : () -> ()
    %cst_22 = arith.constant dense<0.000000e+00> : vector<2x8x16xf32>
    %58 = tpu.matmul %56, %57, %cst_22 {dimension_numbers = #tpu.dot_dimension_numbers<[2], [1], [1], [2], [0, 0, 0, 1, 1, 2], [0], [0]>} : vector<2x8x8xbf16>, vector<2x8x16xbf16>, vector<2x8x16xf32> -> vector<2x8x16xf32>
    "tpu.trace_stop"() : () -> ()
    %59 = vector.shape_cast %58 : vector<2x8x16xf32> to vector<16x16xf32>
    %60 = vector.extract_strided_slice %33 {offsets = [0, 0, 16], sizes = [2, 8, 16], strides = [1, 1, 1]} : vector<2x8x64xbf16> to vector<2x8x16xbf16>
    %61 = vector.extract_strided_slice %35 {offsets = [0, 0, 16], sizes = [2, 8, 16], strides = [1, 1, 1]} : vector<2x8x64xbf16> to vector<2x8x16xbf16>
    "tpu.trace_start"() <{level = 10 : i32, message = "bqd,bkd->bqk"}> : () -> ()
    %cst_23 = arith.constant dense<0.000000e+00> : vector<2x8x8xf32>
    %62 = tpu.matmul %60, %61, %cst_23 {dimension_numbers = #tpu.dot_dimension_numbers<[2], [2], [1], [1], [0, 0, 0, 1, 1, 1], [0], [0]>} : vector<2x8x16xbf16>, vector<2x8x16xbf16>, vector<2x8x8xf32> -> vector<2x8x8xf32>
    "tpu.trace_stop"() : () -> ()
    %63 = vector.extract_strided_slice %8 {offsets = [1, 0, 0], sizes = [1, 8, 8], strides = [1, 1, 1]} : vector<4x8x8xf32> to vector<1x8x8xf32>
    %64 = vector.shape_cast %63 : vector<1x8x8xf32> to vector<8x8xf32>
    %65 = vector.shape_cast %64 : vector<8x8xf32> to vector<1x8x8xf32>
    %66 = vector.broadcast %65 : vector<1x8x8xf32> to vector<2x8x8xf32>
    %67 = arith.addf %62, %66 : vector<2x8x8xf32>
    %cst_24 = arith.constant dense<0xFF800000> : vector<2x8xf32>
    %68 = vector.multi_reduction <maximumf>, %67, %cst_24 [2] : vector<2x8x8xf32> to vector<2x8xf32>
    %69 = vector.shape_cast %68 : vector<2x8xf32> to vector<2x8x1xf32>
    %70 = vector.broadcast %69 : vector<2x8x1xf32> to vector<2x8x8xf32>
    %71 = arith.subf %67, %70 : vector<2x8x8xf32>
    %72 = math.exp %71 : vector<2x8x8xf32>
    %cst_25 = arith.constant dense<0.000000e+00> : vector<2x8xf32>
    %73 = vector.multi_reduction <add>, %72, %cst_25 [2] : vector<2x8x8xf32> to vector<2x8xf32>
    %74 = vector.shape_cast %73 : vector<2x8xf32> to vector<2x8x1xf32>
    %75 = tpu.reciprocal %74 {approx = true} : vector<2x8x1xf32> -> vector<2x8x1xf32>
    %76 = vector.broadcast %75 : vector<2x8x1xf32> to vector<2x8x8xf32>
    %77 = arith.mulf %72, %76 : vector<2x8x8xf32>
    %78 = arith.truncf %77 : vector<2x8x8xf32> to vector<2x8x8xbf16>
    %79 = vector.extract_strided_slice %37 {offsets = [0, 0, 16], sizes = [2, 8, 16], strides = [1, 1, 1]} : vector<2x8x64xbf16> to vector<2x8x16xbf16>
    "tpu.trace_start"() <{level = 10 : i32, message = "bqk,bkd->bqd"}> : () -> ()
    %cst_26 = arith.constant dense<0.000000e+00> : vector<2x8x16xf32>
    %80 = tpu.matmul %78, %79, %cst_26 {dimension_numbers = #tpu.dot_dimension_numbers<[2], [1], [1], [2], [0, 0, 0, 1, 1, 2], [0], [0]>} : vector<2x8x8xbf16>, vector<2x8x16xbf16>, vector<2x8x16xf32> -> vector<2x8x16xf32>
    "tpu.trace_stop"() : () -> ()
    %81 = vector.shape_cast %80 : vector<2x8x16xf32> to vector<16x16xf32>
    %82 = vector.extract_strided_slice %33 {offsets = [0, 0, 32], sizes = [2, 8, 16], strides = [1, 1, 1]} : vector<2x8x64xbf16> to vector<2x8x16xbf16>
    %83 = vector.extract_strided_slice %35 {offsets = [0, 0, 32], sizes = [2, 8, 16], strides = [1, 1, 1]} : vector<2x8x64xbf16> to vector<2x8x16xbf16>
    "tpu.trace_start"() <{level = 10 : i32, message = "bqd,bkd->bqk"}> : () -> ()
    %cst_27 = arith.constant dense<0.000000e+00> : vector<2x8x8xf32>
    %84 = tpu.matmul %82, %83, %cst_27 {dimension_numbers = #tpu.dot_dimension_numbers<[2], [2], [1], [1], [0, 0, 0, 1, 1, 1], [0], [0]>} : vector<2x8x16xbf16>, vector<2x8x16xbf16>, vector<2x8x8xf32> -> vector<2x8x8xf32>
    "tpu.trace_stop"() : () -> ()
    %85 = vector.extract_strided_slice %8 {offsets = [2, 0, 0], sizes = [1, 8, 8], strides = [1, 1, 1]} : vector<4x8x8xf32> to vector<1x8x8xf32>
    %86 = vector.shape_cast %85 : vector<1x8x8xf32> to vector<8x8xf32>
    %87 = vector.shape_cast %86 : vector<8x8xf32> to vector<1x8x8xf32>
    %88 = vector.broadcast %87 : vector<1x8x8xf32> to vector<2x8x8xf32>
    %89 = arith.addf %84, %88 : vector<2x8x8xf32>
    %cst_28 = arith.constant dense<0xFF800000> : vector<2x8xf32>
    %90 = vector.multi_reduction <maximumf>, %89, %cst_28 [2] : vector<2x8x8xf32> to vector<2x8xf32>
    %91 = vector.shape_cast %90 : vector<2x8xf32> to vector<2x8x1xf32>
    %92 = vector.broadcast %91 : vector<2x8x1xf32> to vector<2x8x8xf32>
    %93 = arith.subf %89, %92 : vector<2x8x8xf32>
    %94 = math.exp %93 : vector<2x8x8xf32>
    %cst_29 = arith.constant dense<0.000000e+00> : vector<2x8xf32>
    %95 = vector.multi_reduction <add>, %94, %cst_29 [2] : vector<2x8x8xf32> to vector<2x8xf32>
    %96 = vector.shape_cast %95 : vector<2x8xf32> to vector<2x8x1xf32>
    %97 = tpu.reciprocal %96 {approx = true} : vector<2x8x1xf32> -> vector<2x8x1xf32>
    %98 = vector.broadcast %97 : vector<2x8x1xf32> to vector<2x8x8xf32>
    %99 = arith.mulf %94, %98 : vector<2x8x8xf32>
    %100 = arith.truncf %99 : vector<2x8x8xf32> to vector<2x8x8xbf16>
    %101 = vector.extract_strided_slice %37 {offsets = [0, 0, 32], sizes = [2, 8, 16], strides = [1, 1, 1]} : vector<2x8x64xbf16> to vector<2x8x16xbf16>
    "tpu.trace_start"() <{level = 10 : i32, message = "bqk,bkd->bqd"}> : () -> ()
    %cst_30 = arith.constant dense<0.000000e+00> : vector<2x8x16xf32>
    %102 = tpu.matmul %100, %101, %cst_30 {dimension_numbers = #tpu.dot_dimension_numbers<[2], [1], [1], [2], [0, 0, 0, 1, 1, 2], [0], [0]>} : vector<2x8x8xbf16>, vector<2x8x16xbf16>, vector<2x8x16xf32> -> vector<2x8x16xf32>
    "tpu.trace_stop"() : () -> ()
    %103 = vector.shape_cast %102 : vector<2x8x16xf32> to vector<16x16xf32>
    %104 = vector.extract_strided_slice %33 {offsets = [0, 0, 48], sizes = [2, 8, 16], strides = [1, 1, 1]} : vector<2x8x64xbf16> to vector<2x8x16xbf16>
    %105 = vector.extract_strided_slice %35 {offsets = [0, 0, 48], sizes = [2, 8, 16], strides = [1, 1, 1]} : vector<2x8x64xbf16> to vector<2x8x16xbf16>
    "tpu.trace_start"() <{level = 10 : i32, message = "bqd,bkd->bqk"}> : () -> ()
    %cst_31 = arith.constant dense<0.000000e+00> : vector<2x8x8xf32>
    %106 = tpu.matmul %104, %105, %cst_31 {dimension_numbers = #tpu.dot_dimension_numbers<[2], [2], [1], [1], [0, 0, 0, 1, 1, 1], [0], [0]>} : vector<2x8x16xbf16>, vector<2x8x16xbf16>, vector<2x8x8xf32> -> vector<2x8x8xf32>
    "tpu.trace_stop"() : () -> ()
    %107 = vector.extract_strided_slice %8 {offsets = [3, 0, 0], sizes = [1, 8, 8], strides = [1, 1, 1]} : vector<4x8x8xf32> to vector<1x8x8xf32>
    %108 = vector.shape_cast %107 : vector<1x8x8xf32> to vector<8x8xf32>
    %109 = vector.shape_cast %108 : vector<8x8xf32> to vector<1x8x8xf32>
    %110 = vector.broadcast %109 : vector<1x8x8xf32> to vector<2x8x8xf32>
    %111 = arith.addf %106, %110 : vector<2x8x8xf32>
    %cst_32 = arith.constant dense<0xFF800000> : vector<2x8xf32>
    %112 = vector.multi_reduction <maximumf>, %111, %cst_32 [2] : vector<2x8x8xf32> to vector<2x8xf32>
    %113 = vector.shape_cast %112 : vector<2x8xf32> to vector<2x8x1xf32>
    %114 = vector.broadcast %113 : vector<2x8x1xf32> to vector<2x8x8xf32>
    %115 = arith.subf %111, %114 : vector<2x8x8xf32>
    %116 = math.exp %115 : vector<2x8x8xf32>
    %cst_33 = arith.constant dense<0.000000e+00> : vector<2x8xf32>
    %117 = vector.multi_reduction <add>, %116, %cst_33 [2] : vector<2x8x8xf32> to vector<2x8xf32>
    %118 = vector.shape_cast %117 : vector<2x8xf32> to vector<2x8x1xf32>
    %119 = tpu.reciprocal %118 {approx = true} : vector<2x8x1xf32> -> vector<2x8x1xf32>
    %120 = vector.broadcast %119 : vector<2x8x1xf32> to vector<2x8x8xf32>
    %121 = arith.mulf %116, %120 : vector<2x8x8xf32>
    %122 = arith.truncf %121 : vector<2x8x8xf32> to vector<2x8x8xbf16>
    %123 = vector.extract_strided_slice %37 {offsets = [0, 0, 48], sizes = [2, 8, 16], strides = [1, 1, 1]} : vector<2x8x64xbf16> to vector<2x8x16xbf16>
    "tpu.trace_start"() <{level = 10 : i32, message = "bqk,bkd->bqd"}> : () -> ()
    %cst_34 = arith.constant dense<0.000000e+00> : vector<2x8x16xf32>
    %124 = tpu.matmul %122, %123, %cst_34 {dimension_numbers = #tpu.dot_dimension_numbers<[2], [1], [1], [2], [0, 0, 0, 1, 1, 2], [0], [0]>} : vector<2x8x8xbf16>, vector<2x8x16xbf16>, vector<2x8x16xf32> -> vector<2x8x16xf32>
    "tpu.trace_stop"() : () -> ()
    %125 = vector.shape_cast %124 : vector<2x8x16xf32> to vector<16x16xf32>
    %126 = tpu.concatenate %59, %81, %103, %125 in 1 : vector<16x16xf32>, vector<16x16xf32>, vector<16x16xf32>, vector<16x16xf32> -> vector<16x64xf32>
    %127 = arith.truncf %126 : vector<16x64xf32> to vector<16x64xbf16>
    %cst_35 = arith.constant dense<0.000000e+00> : vector<16x64xf32>
    %128 = tpu.matmul %127, %14, %cst_35 {dimension_numbers = #tpu.dot_dimension_numbers<[1], [0], [0], [1], [0, 0, 1, 1], [], []>} : vector<16x64xbf16>, vector<64x64xbf16>, vector<16x64xf32> -> vector<16x64xf32>
    %129 = arith.addf %7, %128 : vector<16x64xf32>
    %c0_36 = arith.constant 0 : index
    %c0_37 = arith.constant 0 : index
    %c0_38 = arith.constant 0 : index
    %130 = vector.load %arg8[%c0_36, %c0_37, %c0_38] : memref<2x1x64xf32, #tpu.memory_space<vmem>>, vector<1x1x64xf32>
    %131 = vector.shape_cast %130 : vector<1x1x64xf32> to vector<1x64xf32>
    %c0_39 = arith.constant 0 : index
    %c0_40 = arith.constant 0 : index
    %c0_41 = arith.constant 0 : index
    %132 = vector.load %arg9[%c0_39, %c0_40, %c0_41] : memref<2x64x128xbf16, #tpu.memory_space<vmem>>, vector<1x64x128xbf16>
    %133 = vector.shape_cast %132 : vector<1x64x128xbf16> to vector<64x128xbf16>
    %c0_42 = arith.constant 0 : index
    %c0_43 = arith.constant 0 : index
    %c0_44 = arith.constant 0 : index
    %134 = vector.load %arg10[%c0_42, %c0_43, %c0_44] : memref<2x128x64xbf16, #tpu.memory_space<vmem>>, vector<1x128x64xbf16>
    %135 = vector.shape_cast %134 : vector<1x128x64xbf16> to vector<128x64xbf16>
    %136 = arith.mulf %129, %129 : vector<16x64xf32>
    %cst_45 = arith.constant dense<0.000000e+00> : vector<16xf32>
    %137 = vector.multi_reduction <add>, %136, %cst_45 [1] : vector<16x64xf32> to vector<16xf32>
    %138 = vector.shape_cast %137 : vector<16xf32> to vector<16x1xf32>
    %cst_46 = arith.constant 6.400000e+01 : f32
    %139 = vector.broadcast %cst_46 : f32 to vector<16x1xf32>
    %140 = arith.divf %138, %139 : vector<16x1xf32>
    %cst_47 = arith.constant 9.99999997E-7 : f32
    %141 = vector.broadcast %cst_47 : f32 to vector<16x1xf32>
    %142 = arith.addf %140, %141 : vector<16x1xf32>
    %143 = math.rsqrt %142 : vector<16x1xf32>
    %144 = vector.broadcast %143 : vector<16x1xf32> to vector<16x64xf32>
    %145 = arith.mulf %129, %144 : vector<16x64xf32>
    %146 = vector.broadcast %131 : vector<1x64xf32> to vector<16x64xf32>
    %147 = arith.mulf %145, %146 : vector<16x64xf32>
    %148 = arith.truncf %147 : vector<16x64xf32> to vector<16x64xbf16>
    %cst_48 = arith.constant dense<0.000000e+00> : vector<16x128xf32>
    %149 = tpu.matmul %148, %133, %cst_48 {dimension_numbers = #tpu.dot_dimension_numbers<[1], [0], [0], [1], [0, 0, 1, 1], [], []>} : vector<16x64xbf16>, vector<64x128xbf16>, vector<16x128xf32> -> vector<16x128xf32>
    %cst_49 = arith.constant 0.000000e+00 : f32
    %150 = vector.broadcast %cst_49 : f32 to vector<16x128xf32>
    %151 = arith.maximumf %149, %150 : vector<16x128xf32>
    %152 = arith.truncf %151 : vector<16x128xf32> to vector<16x128xbf16>
    %cst_50 = arith.constant dense<0.000000e+00> : vector<16x64xf32>
    %153 = tpu.matmul %152, %135, %cst_50 {dimension_numbers = #tpu.dot_dimension_numbers<[1], [0], [0], [1], [0, 0, 1, 1], [], []>} : vector<16x128xbf16>, vector<128x64xbf16>, vector<16x64xf32> -> vector<16x64xf32>
    %154 = arith.addf %129, %153 : vector<16x64xf32>
    %c1 = arith.constant 1 : index
    %c0_51 = arith.constant 0 : index
    %c0_52 = arith.constant 0 : index
    %155 = vector.load %arg5[%c1, %c0_51, %c0_52] : memref<2x1x64xf32, #tpu.memory_space<vmem>>, vector<1x1x64xf32>
    %156 = vector.shape_cast %155 : vector<1x1x64xf32> to vector<1x64xf32>
    %c1_53 = arith.constant 1 : index
    %c0_54 = arith.constant 0 : index
    %c0_55 = arith.constant 0 : index
    %157 = vector.load %arg6[%c1_53, %c0_54, %c0_55] : memref<2x64x192xbf16, #tpu.memory_space<vmem>>, vector<1x64x192xbf16>
    %158 = vector.shape_cast %157 : vector<1x64x192xbf16> to vector<64x192xbf16>
    %c1_56 = arith.constant 1 : index
    %c0_57 = arith.constant 0 : index
    %c0_58 = arith.constant 0 : index
    %159 = vector.load %arg7[%c1_56, %c0_57, %c0_58] : memref<2x64x64xbf16, #tpu.memory_space<vmem>>, vector<1x64x64xbf16>
    %160 = vector.shape_cast %159 : vector<1x64x64xbf16> to vector<64x64xbf16>
    %161 = arith.mulf %154, %154 : vector<16x64xf32>
    %cst_59 = arith.constant dense<0.000000e+00> : vector<16xf32>
    %162 = vector.multi_reduction <add>, %161, %cst_59 [1] : vector<16x64xf32> to vector<16xf32>
    %163 = vector.shape_cast %162 : vector<16xf32> to vector<16x1xf32>
    %cst_60 = arith.constant 6.400000e+01 : f32
    %164 = vector.broadcast %cst_60 : f32 to vector<16x1xf32>
    %165 = arith.divf %163, %164 : vector<16x1xf32>
    %cst_61 = arith.constant 9.99999997E-7 : f32
    %166 = vector.broadcast %cst_61 : f32 to vector<16x1xf32>
    %167 = arith.addf %165, %166 : vector<16x1xf32>
    %168 = math.rsqrt %167 : vector<16x1xf32>
    %169 = vector.broadcast %168 : vector<16x1xf32> to vector<16x64xf32>
    %170 = arith.mulf %154, %169 : vector<16x64xf32>
    %171 = vector.broadcast %156 : vector<1x64xf32> to vector<16x64xf32>
    %172 = arith.mulf %170, %171 : vector<16x64xf32>
    %173 = arith.truncf %172 : vector<16x64xf32> to vector<16x64xbf16>
    %cst_62 = arith.constant dense<0.000000e+00> : vector<16x192xf32>
    %174 = tpu.matmul %173, %158, %cst_62 {dimension_numbers = #tpu.dot_dimension_numbers<[1], [0], [0], [1], [0, 0, 1, 1], [], []>} : vector<16x64xbf16>, vector<64x192xbf16>, vector<16x192xf32> -> vector<16x192xf32>
    %175 = vector.extract_strided_slice %174 {offsets = [0, 0], sizes = [16, 64], strides = [1, 1]} : vector<16x192xf32> to vector<16x64xf32>
    %176 = vector.extract_strided_slice %174 {offsets = [0, 64], sizes = [16, 64], strides = [1, 1]} : vector<16x192xf32> to vector<16x64xf32>
    %177 = vector.extract_strided_slice %174 {offsets = [0, 128], sizes = [16, 64], strides = [1, 1]} : vector<16x192xf32> to vector<16x64xf32>
    %178 = vector.shape_cast %175 : vector<16x64xf32> to vector<2x8x64xf32>
    %179 = arith.truncf %178 : vector<2x8x64xf32> to vector<2x8x64xbf16>
    %180 = vector.shape_cast %176 : vector<16x64xf32> to vector<2x8x64xf32>
    %181 = arith.truncf %180 : vector<2x8x64xf32> to vector<2x8x64xbf16>
    %182 = vector.shape_cast %177 : vector<16x64xf32> to vector<2x8x64xf32>
    %183 = arith.truncf %182 : vector<2x8x64xf32> to vector<2x8x64xbf16>
    %184 = vector.extract_strided_slice %179 {offsets = [0, 0, 0], sizes = [2, 8, 16], strides = [1, 1, 1]} : vector<2x8x64xbf16> to vector<2x8x16xbf16>
    %185 = vector.extract_strided_slice %181 {offsets = [0, 0, 0], sizes = [2, 8, 16], strides = [1, 1, 1]} : vector<2x8x64xbf16> to vector<2x8x16xbf16>
    "tpu.trace_start"() <{level = 10 : i32, message = "bqd,bkd->bqk"}> : () -> ()
    %cst_63 = arith.constant dense<0.000000e+00> : vector<2x8x8xf32>
    %186 = tpu.matmul %184, %185, %cst_63 {dimension_numbers = #tpu.dot_dimension_numbers<[2], [2], [1], [1], [0, 0, 0, 1, 1, 1], [0], [0]>} : vector<2x8x16xbf16>, vector<2x8x16xbf16>, vector<2x8x8xf32> -> vector<2x8x8xf32>
    "tpu.trace_stop"() : () -> ()
    %187 = vector.extract_strided_slice %8 {offsets = [0, 0, 0], sizes = [1, 8, 8], strides = [1, 1, 1]} : vector<4x8x8xf32> to vector<1x8x8xf32>
    %188 = vector.shape_cast %187 : vector<1x8x8xf32> to vector<8x8xf32>
    %189 = vector.shape_cast %188 : vector<8x8xf32> to vector<1x8x8xf32>
    %190 = vector.broadcast %189 : vector<1x8x8xf32> to vector<2x8x8xf32>
    %191 = arith.addf %186, %190 : vector<2x8x8xf32>
    %cst_64 = arith.constant dense<0xFF800000> : vector<2x8xf32>
    %192 = vector.multi_reduction <maximumf>, %191, %cst_64 [2] : vector<2x8x8xf32> to vector<2x8xf32>
    %193 = vector.shape_cast %192 : vector<2x8xf32> to vector<2x8x1xf32>
    %194 = vector.broadcast %193 : vector<2x8x1xf32> to vector<2x8x8xf32>
    %195 = arith.subf %191, %194 : vector<2x8x8xf32>
    %196 = math.exp %195 : vector<2x8x8xf32>
    %cst_65 = arith.constant dense<0.000000e+00> : vector<2x8xf32>
    %197 = vector.multi_reduction <add>, %196, %cst_65 [2] : vector<2x8x8xf32> to vector<2x8xf32>
    %198 = vector.shape_cast %197 : vector<2x8xf32> to vector<2x8x1xf32>
    %199 = tpu.reciprocal %198 {approx = true} : vector<2x8x1xf32> -> vector<2x8x1xf32>
    %200 = vector.broadcast %199 : vector<2x8x1xf32> to vector<2x8x8xf32>
    %201 = arith.mulf %196, %200 : vector<2x8x8xf32>
    %202 = arith.truncf %201 : vector<2x8x8xf32> to vector<2x8x8xbf16>
    %203 = vector.extract_strided_slice %183 {offsets = [0, 0, 0], sizes = [2, 8, 16], strides = [1, 1, 1]} : vector<2x8x64xbf16> to vector<2x8x16xbf16>
    "tpu.trace_start"() <{level = 10 : i32, message = "bqk,bkd->bqd"}> : () -> ()
    %cst_66 = arith.constant dense<0.000000e+00> : vector<2x8x16xf32>
    %204 = tpu.matmul %202, %203, %cst_66 {dimension_numbers = #tpu.dot_dimension_numbers<[2], [1], [1], [2], [0, 0, 0, 1, 1, 2], [0], [0]>} : vector<2x8x8xbf16>, vector<2x8x16xbf16>, vector<2x8x16xf32> -> vector<2x8x16xf32>
    "tpu.trace_stop"() : () -> ()
    %205 = vector.shape_cast %204 : vector<2x8x16xf32> to vector<16x16xf32>
    %206 = vector.extract_strided_slice %179 {offsets = [0, 0, 16], sizes = [2, 8, 16], strides = [1, 1, 1]} : vector<2x8x64xbf16> to vector<2x8x16xbf16>
    %207 = vector.extract_strided_slice %181 {offsets = [0, 0, 16], sizes = [2, 8, 16], strides = [1, 1, 1]} : vector<2x8x64xbf16> to vector<2x8x16xbf16>
    "tpu.trace_start"() <{level = 10 : i32, message = "bqd,bkd->bqk"}> : () -> ()
    %cst_67 = arith.constant dense<0.000000e+00> : vector<2x8x8xf32>
    %208 = tpu.matmul %206, %207, %cst_67 {dimension_numbers = #tpu.dot_dimension_numbers<[2], [2], [1], [1], [0, 0, 0, 1, 1, 1], [0], [0]>} : vector<2x8x16xbf16>, vector<2x8x16xbf16>, vector<2x8x8xf32> -> vector<2x8x8xf32>
    "tpu.trace_stop"() : () -> ()
    %209 = vector.extract_strided_slice %8 {offsets = [1, 0, 0], sizes = [1, 8, 8], strides = [1, 1, 1]} : vector<4x8x8xf32> to vector<1x8x8xf32>
    %210 = vector.shape_cast %209 : vector<1x8x8xf32> to vector<8x8xf32>
    %211 = vector.shape_cast %210 : vector<8x8xf32> to vector<1x8x8xf32>
    %212 = vector.broadcast %211 : vector<1x8x8xf32> to vector<2x8x8xf32>
    %213 = arith.addf %208, %212 : vector<2x8x8xf32>
    %cst_68 = arith.constant dense<0xFF800000> : vector<2x8xf32>
    %214 = vector.multi_reduction <maximumf>, %213, %cst_68 [2] : vector<2x8x8xf32> to vector<2x8xf32>
    %215 = vector.shape_cast %214 : vector<2x8xf32> to vector<2x8x1xf32>
    %216 = vector.broadcast %215 : vector<2x8x1xf32> to vector<2x8x8xf32>
    %217 = arith.subf %213, %216 : vector<2x8x8xf32>
    %218 = math.exp %217 : vector<2x8x8xf32>
    %cst_69 = arith.constant dense<0.000000e+00> : vector<2x8xf32>
    %219 = vector.multi_reduction <add>, %218, %cst_69 [2] : vector<2x8x8xf32> to vector<2x8xf32>
    %220 = vector.shape_cast %219 : vector<2x8xf32> to vector<2x8x1xf32>
    %221 = tpu.reciprocal %220 {approx = true} : vector<2x8x1xf32> -> vector<2x8x1xf32>
    %222 = vector.broadcast %221 : vector<2x8x1xf32> to vector<2x8x8xf32>
    %223 = arith.mulf %218, %222 : vector<2x8x8xf32>
    %224 = arith.truncf %223 : vector<2x8x8xf32> to vector<2x8x8xbf16>
    %225 = vector.extract_strided_slice %183 {offsets = [0, 0, 16], sizes = [2, 8, 16], strides = [1, 1, 1]} : vector<2x8x64xbf16> to vector<2x8x16xbf16>
    "tpu.trace_start"() <{level = 10 : i32, message = "bqk,bkd->bqd"}> : () -> ()
    %cst_70 = arith.constant dense<0.000000e+00> : vector<2x8x16xf32>
    %226 = tpu.matmul %224, %225, %cst_70 {dimension_numbers = #tpu.dot_dimension_numbers<[2], [1], [1], [2], [0, 0, 0, 1, 1, 2], [0], [0]>} : vector<2x8x8xbf16>, vector<2x8x16xbf16>, vector<2x8x16xf32> -> vector<2x8x16xf32>
    "tpu.trace_stop"() : () -> ()
    %227 = vector.shape_cast %226 : vector<2x8x16xf32> to vector<16x16xf32>
    %228 = vector.extract_strided_slice %179 {offsets = [0, 0, 32], sizes = [2, 8, 16], strides = [1, 1, 1]} : vector<2x8x64xbf16> to vector<2x8x16xbf16>
    %229 = vector.extract_strided_slice %181 {offsets = [0, 0, 32], sizes = [2, 8, 16], strides = [1, 1, 1]} : vector<2x8x64xbf16> to vector<2x8x16xbf16>
    "tpu.trace_start"() <{level = 10 : i32, message = "bqd,bkd->bqk"}> : () -> ()
    %cst_71 = arith.constant dense<0.000000e+00> : vector<2x8x8xf32>
    %230 = tpu.matmul %228, %229, %cst_71 {dimension_numbers = #tpu.dot_dimension_numbers<[2], [2], [1], [1], [0, 0, 0, 1, 1, 1], [0], [0]>} : vector<2x8x16xbf16>, vector<2x8x16xbf16>, vector<2x8x8xf32> -> vector<2x8x8xf32>
    "tpu.trace_stop"() : () -> ()
    %231 = vector.extract_strided_slice %8 {offsets = [2, 0, 0], sizes = [1, 8, 8], strides = [1, 1, 1]} : vector<4x8x8xf32> to vector<1x8x8xf32>
    %232 = vector.shape_cast %231 : vector<1x8x8xf32> to vector<8x8xf32>
    %233 = vector.shape_cast %232 : vector<8x8xf32> to vector<1x8x8xf32>
    %234 = vector.broadcast %233 : vector<1x8x8xf32> to vector<2x8x8xf32>
    %235 = arith.addf %230, %234 : vector<2x8x8xf32>
    %cst_72 = arith.constant dense<0xFF800000> : vector<2x8xf32>
    %236 = vector.multi_reduction <maximumf>, %235, %cst_72 [2] : vector<2x8x8xf32> to vector<2x8xf32>
    %237 = vector.shape_cast %236 : vector<2x8xf32> to vector<2x8x1xf32>
    %238 = vector.broadcast %237 : vector<2x8x1xf32> to vector<2x8x8xf32>
    %239 = arith.subf %235, %238 : vector<2x8x8xf32>
    %240 = math.exp %239 : vector<2x8x8xf32>
    %cst_73 = arith.constant dense<0.000000e+00> : vector<2x8xf32>
    %241 = vector.multi_reduction <add>, %240, %cst_73 [2] : vector<2x8x8xf32> to vector<2x8xf32>
    %242 = vector.shape_cast %241 : vector<2x8xf32> to vector<2x8x1xf32>
    %243 = tpu.reciprocal %242 {approx = true} : vector<2x8x1xf32> -> vector<2x8x1xf32>
    %244 = vector.broadcast %243 : vector<2x8x1xf32> to vector<2x8x8xf32>
    %245 = arith.mulf %240, %244 : vector<2x8x8xf32>
    %246 = arith.truncf %245 : vector<2x8x8xf32> to vector<2x8x8xbf16>
    %247 = vector.extract_strided_slice %183 {offsets = [0, 0, 32], sizes = [2, 8, 16], strides = [1, 1, 1]} : vector<2x8x64xbf16> to vector<2x8x16xbf16>
    "tpu.trace_start"() <{level = 10 : i32, message = "bqk,bkd->bqd"}> : () -> ()
    %cst_74 = arith.constant dense<0.000000e+00> : vector<2x8x16xf32>
    %248 = tpu.matmul %246, %247, %cst_74 {dimension_numbers = #tpu.dot_dimension_numbers<[2], [1], [1], [2], [0, 0, 0, 1, 1, 2], [0], [0]>} : vector<2x8x8xbf16>, vector<2x8x16xbf16>, vector<2x8x16xf32> -> vector<2x8x16xf32>
    "tpu.trace_stop"() : () -> ()
    %249 = vector.shape_cast %248 : vector<2x8x16xf32> to vector<16x16xf32>
    %250 = vector.extract_strided_slice %179 {offsets = [0, 0, 48], sizes = [2, 8, 16], strides = [1, 1, 1]} : vector<2x8x64xbf16> to vector<2x8x16xbf16>
    %251 = vector.extract_strided_slice %181 {offsets = [0, 0, 48], sizes = [2, 8, 16], strides = [1, 1, 1]} : vector<2x8x64xbf16> to vector<2x8x16xbf16>
    "tpu.trace_start"() <{level = 10 : i32, message = "bqd,bkd->bqk"}> : () -> ()
    %cst_75 = arith.constant dense<0.000000e+00> : vector<2x8x8xf32>
    %252 = tpu.matmul %250, %251, %cst_75 {dimension_numbers = #tpu.dot_dimension_numbers<[2], [2], [1], [1], [0, 0, 0, 1, 1, 1], [0], [0]>} : vector<2x8x16xbf16>, vector<2x8x16xbf16>, vector<2x8x8xf32> -> vector<2x8x8xf32>
    "tpu.trace_stop"() : () -> ()
    %253 = vector.extract_strided_slice %8 {offsets = [3, 0, 0], sizes = [1, 8, 8], strides = [1, 1, 1]} : vector<4x8x8xf32> to vector<1x8x8xf32>
    %254 = vector.shape_cast %253 : vector<1x8x8xf32> to vector<8x8xf32>
    %255 = vector.shape_cast %254 : vector<8x8xf32> to vector<1x8x8xf32>
    %256 = vector.broadcast %255 : vector<1x8x8xf32> to vector<2x8x8xf32>
    %257 = arith.addf %252, %256 : vector<2x8x8xf32>
    %cst_76 = arith.constant dense<0xFF800000> : vector<2x8xf32>
    %258 = vector.multi_reduction <maximumf>, %257, %cst_76 [2] : vector<2x8x8xf32> to vector<2x8xf32>
    %259 = vector.shape_cast %258 : vector<2x8xf32> to vector<2x8x1xf32>
    %260 = vector.broadcast %259 : vector<2x8x1xf32> to vector<2x8x8xf32>
    %261 = arith.subf %257, %260 : vector<2x8x8xf32>
    %262 = math.exp %261 : vector<2x8x8xf32>
    %cst_77 = arith.constant dense<0.000000e+00> : vector<2x8xf32>
    %263 = vector.multi_reduction <add>, %262, %cst_77 [2] : vector<2x8x8xf32> to vector<2x8xf32>
    %264 = vector.shape_cast %263 : vector<2x8xf32> to vector<2x8x1xf32>
    %265 = tpu.reciprocal %264 {approx = true} : vector<2x8x1xf32> -> vector<2x8x1xf32>
    %266 = vector.broadcast %265 : vector<2x8x1xf32> to vector<2x8x8xf32>
    %267 = arith.mulf %262, %266 : vector<2x8x8xf32>
    %268 = arith.truncf %267 : vector<2x8x8xf32> to vector<2x8x8xbf16>
    %269 = vector.extract_strided_slice %183 {offsets = [0, 0, 48], sizes = [2, 8, 16], strides = [1, 1, 1]} : vector<2x8x64xbf16> to vector<2x8x16xbf16>
    "tpu.trace_start"() <{level = 10 : i32, message = "bqk,bkd->bqd"}> : () -> ()
    %cst_78 = arith.constant dense<0.000000e+00> : vector<2x8x16xf32>
    %270 = tpu.matmul %268, %269, %cst_78 {dimension_numbers = #tpu.dot_dimension_numbers<[2], [1], [1], [2], [0, 0, 0, 1, 1, 2], [0], [0]>} : vector<2x8x8xbf16>, vector<2x8x16xbf16>, vector<2x8x16xf32> -> vector<2x8x16xf32>
    "tpu.trace_stop"() : () -> ()
    %271 = vector.shape_cast %270 : vector<2x8x16xf32> to vector<16x16xf32>
    %272 = tpu.concatenate %205, %227, %249, %271 in 1 : vector<16x16xf32>, vector<16x16xf32>, vector<16x16xf32>, vector<16x16xf32> -> vector<16x64xf32>
    %273 = arith.truncf %272 : vector<16x64xf32> to vector<16x64xbf16>
    %cst_79 = arith.constant dense<0.000000e+00> : vector<16x64xf32>
    %274 = tpu.matmul %273, %160, %cst_79 {dimension_numbers = #tpu.dot_dimension_numbers<[1], [0], [0], [1], [0, 0, 1, 1], [], []>} : vector<16x64xbf16>, vector<64x64xbf16>, vector<16x64xf32> -> vector<16x64xf32>
    %275 = arith.addf %154, %274 : vector<16x64xf32>
    %c1_80 = arith.constant 1 : index
    %c0_81 = arith.constant 0 : index
    %c0_82 = arith.constant 0 : index
    %276 = vector.load %arg8[%c1_80, %c0_81, %c0_82] : memref<2x1x64xf32, #tpu.memory_space<vmem>>, vector<1x1x64xf32>
    %277 = vector.shape_cast %276 : vector<1x1x64xf32> to vector<1x64xf32>
    %c1_83 = arith.constant 1 : index
    %c0_84 = arith.constant 0 : index
    %c0_85 = arith.constant 0 : index
    %278 = vector.load %arg9[%c1_83, %c0_84, %c0_85] : memref<2x64x128xbf16, #tpu.memory_space<vmem>>, vector<1x64x128xbf16>
    %279 = vector.shape_cast %278 : vector<1x64x128xbf16> to vector<64x128xbf16>
    %c1_86 = arith.constant 1 : index
    %c0_87 = arith.constant 0 : index
    %c0_88 = arith.constant 0 : index
    %280 = vector.load %arg10[%c1_86, %c0_87, %c0_88] : memref<2x128x64xbf16, #tpu.memory_space<vmem>>, vector<1x128x64xbf16>
    %281 = vector.shape_cast %280 : vector<1x128x64xbf16> to vector<128x64xbf16>
    %282 = arith.mulf %275, %275 : vector<16x64xf32>
    %cst_89 = arith.constant dense<0.000000e+00> : vector<16xf32>
    %283 = vector.multi_reduction <add>, %282, %cst_89 [1] : vector<16x64xf32> to vector<16xf32>
    %284 = vector.shape_cast %283 : vector<16xf32> to vector<16x1xf32>
    %cst_90 = arith.constant 6.400000e+01 : f32
    %285 = vector.broadcast %cst_90 : f32 to vector<16x1xf32>
    %286 = arith.divf %284, %285 : vector<16x1xf32>
    %cst_91 = arith.constant 9.99999997E-7 : f32
    %287 = vector.broadcast %cst_91 : f32 to vector<16x1xf32>
    %288 = arith.addf %286, %287 : vector<16x1xf32>
    %289 = math.rsqrt %288 : vector<16x1xf32>
    %290 = vector.broadcast %289 : vector<16x1xf32> to vector<16x64xf32>
    %291 = arith.mulf %275, %290 : vector<16x64xf32>
    %292 = vector.broadcast %277 : vector<1x64xf32> to vector<16x64xf32>
    %293 = arith.mulf %291, %292 : vector<16x64xf32>
    %294 = arith.truncf %293 : vector<16x64xf32> to vector<16x64xbf16>
    %cst_92 = arith.constant dense<0.000000e+00> : vector<16x128xf32>
    %295 = tpu.matmul %294, %279, %cst_92 {dimension_numbers = #tpu.dot_dimension_numbers<[1], [0], [0], [1], [0, 0, 1, 1], [], []>} : vector<16x64xbf16>, vector<64x128xbf16>, vector<16x128xf32> -> vector<16x128xf32>
    %cst_93 = arith.constant 0.000000e+00 : f32
    %296 = vector.broadcast %cst_93 : f32 to vector<16x128xf32>
    %297 = arith.maximumf %295, %296 : vector<16x128xf32>
    %298 = arith.truncf %297 : vector<16x128xf32> to vector<16x128xbf16>
    %cst_94 = arith.constant dense<0.000000e+00> : vector<16x64xf32>
    %299 = tpu.matmul %298, %281, %cst_94 {dimension_numbers = #tpu.dot_dimension_numbers<[1], [0], [0], [1], [0, 0, 1, 1], [], []>} : vector<16x128xbf16>, vector<128x64xbf16>, vector<16x64xf32> -> vector<16x64xf32>
    %300 = arith.addf %275, %299 : vector<16x64xf32>
    %c0_95 = arith.constant 0 : index
    %c0_96 = arith.constant 0 : index
    %301 = vector.load %arg11[%c0_95, %c0_96] : memref<1x64xf32, #tpu.memory_space<vmem>>, vector<1x64xf32>
    %302 = arith.mulf %300, %300 : vector<16x64xf32>
    %cst_97 = arith.constant dense<0.000000e+00> : vector<16xf32>
    %303 = vector.multi_reduction <add>, %302, %cst_97 [1] : vector<16x64xf32> to vector<16xf32>
    %304 = vector.shape_cast %303 : vector<16xf32> to vector<16x1xf32>
    %cst_98 = arith.constant 6.400000e+01 : f32
    %305 = vector.broadcast %cst_98 : f32 to vector<16x1xf32>
    %306 = arith.divf %304, %305 : vector<16x1xf32>
    %cst_99 = arith.constant 9.99999997E-7 : f32
    %307 = vector.broadcast %cst_99 : f32 to vector<16x1xf32>
    %308 = arith.addf %306, %307 : vector<16x1xf32>
    %309 = math.rsqrt %308 : vector<16x1xf32>
    %310 = vector.broadcast %309 : vector<16x1xf32> to vector<16x64xf32>
    %311 = arith.mulf %300, %310 : vector<16x64xf32>
    %312 = vector.broadcast %301 : vector<1x64xf32> to vector<16x64xf32>
    %313 = arith.mulf %311, %312 : vector<16x64xf32>
    %314 = arith.truncf %313 : vector<16x64xf32> to vector<16x64xbf16>
    %c0_100 = arith.constant 0 : index
    %c0_101 = arith.constant 0 : index
    %315 = vector.load %arg1[%c0_100, %c0_101] : memref<16x1xi32, #tpu.memory_space<vmem>>, vector<16x1xi32>
    %316 = tpu.iota {dimensions = array<i32: 1>} : vector<16x256xi32>
    %317 = vector.broadcast %315 : vector<16x1xi32> to vector<16x256xi32>
    %318 = arith.cmpi eq, %317, %316 : vector<16x256xi32>
    %319 = arith.extui %318 : vector<16x256xi1> to vector<16x256xi32>
    %320 = arith.sitofp %319 : vector<16x256xi32> to vector<16x256xf32>
    %cst_102 = arith.constant dense<0.000000e+00> : vector<16x64xf32>
    %321 = tpu.matmul %320, %0, %cst_102 {dimension_numbers = #tpu.dot_dimension_numbers<[1], [0], [0], [1], [0, 0, 1, 1], [], []>} : vector<16x256xf32>, vector<256x64xf32>, vector<16x64xf32> -> vector<16x64xf32>
    %c0_103 = arith.constant 0 : index
    %c0_104 = arith.constant 0 : index
    %c0_105 = arith.constant 0 : index
    %322 = vector.load %arg4[%c0_103, %c0_104, %c0_105] : memref<4x8x8xf32, #tpu.memory_space<vmem>>, vector<4x8x8xf32>
    %c0_106 = arith.constant 0 : index
    %c0_107 = arith.constant 0 : index
    %c0_108 = arith.constant 0 : index
    %323 = vector.load %arg12[%c0_106, %c0_107, %c0_108] : memref<2x1x64xf32, #tpu.memory_space<vmem>>, vector<1x1x64xf32>
    %324 = vector.shape_cast %323 : vector<1x1x64xf32> to vector<1x64xf32>
    %c0_109 = arith.constant 0 : index
    %c0_110 = arith.constant 0 : index
    %c0_111 = arith.constant 0 : index
    %325 = vector.load %arg13[%c0_109, %c0_110, %c0_111] : memref<2x64x192xbf16, #tpu.memory_space<vmem>>, vector<1x64x192xbf16>
    %326 = vector.shape_cast %325 : vector<1x64x192xbf16> to vector<64x192xbf16>
    %c0_112 = arith.constant 0 : index
    %c0_113 = arith.constant 0 : index
    %c0_114 = arith.constant 0 : index
    %327 = vector.load %arg14[%c0_112, %c0_113, %c0_114] : memref<2x64x64xbf16, #tpu.memory_space<vmem>>, vector<1x64x64xbf16>
    %328 = vector.shape_cast %327 : vector<1x64x64xbf16> to vector<64x64xbf16>
    %329 = arith.mulf %321, %321 : vector<16x64xf32>
    %cst_115 = arith.constant dense<0.000000e+00> : vector<16xf32>
    %330 = vector.multi_reduction <add>, %329, %cst_115 [1] : vector<16x64xf32> to vector<16xf32>
    %331 = vector.shape_cast %330 : vector<16xf32> to vector<16x1xf32>
    %cst_116 = arith.constant 6.400000e+01 : f32
    %332 = vector.broadcast %cst_116 : f32 to vector<16x1xf32>
    %333 = arith.divf %331, %332 : vector<16x1xf32>
    %cst_117 = arith.constant 9.99999997E-7 : f32
    %334 = vector.broadcast %cst_117 : f32 to vector<16x1xf32>
    %335 = arith.addf %333, %334 : vector<16x1xf32>
    %336 = math.rsqrt %335 : vector<16x1xf32>
    %337 = vector.broadcast %336 : vector<16x1xf32> to vector<16x64xf32>
    %338 = arith.mulf %321, %337 : vector<16x64xf32>
    %339 = vector.broadcast %324 : vector<1x64xf32> to vector<16x64xf32>
    %340 = arith.mulf %338, %339 : vector<16x64xf32>
    %341 = arith.truncf %340 : vector<16x64xf32> to vector<16x64xbf16>
    %cst_118 = arith.constant dense<0.000000e+00> : vector<16x192xf32>
    %342 = tpu.matmul %341, %326, %cst_118 {dimension_numbers = #tpu.dot_dimension_numbers<[1], [0], [0], [1], [0, 0, 1, 1], [], []>} : vector<16x64xbf16>, vector<64x192xbf16>, vector<16x192xf32> -> vector<16x192xf32>
    %343 = vector.extract_strided_slice %342 {offsets = [0, 0], sizes = [16, 64], strides = [1, 1]} : vector<16x192xf32> to vector<16x64xf32>
    %344 = vector.extract_strided_slice %342 {offsets = [0, 64], sizes = [16, 64], strides = [1, 1]} : vector<16x192xf32> to vector<16x64xf32>
    %345 = vector.extract_strided_slice %342 {offsets = [0, 128], sizes = [16, 64], strides = [1, 1]} : vector<16x192xf32> to vector<16x64xf32>
    %346 = vector.shape_cast %343 : vector<16x64xf32> to vector<2x8x64xf32>
    %347 = arith.truncf %346 : vector<2x8x64xf32> to vector<2x8x64xbf16>
    %348 = vector.shape_cast %344 : vector<16x64xf32> to vector<2x8x64xf32>
    %349 = arith.truncf %348 : vector<2x8x64xf32> to vector<2x8x64xbf16>
    %350 = vector.shape_cast %345 : vector<16x64xf32> to vector<2x8x64xf32>
    %351 = arith.truncf %350 : vector<2x8x64xf32> to vector<2x8x64xbf16>
    %352 = vector.extract_strided_slice %347 {offsets = [0, 0, 0], sizes = [2, 8, 16], strides = [1, 1, 1]} : vector<2x8x64xbf16> to vector<2x8x16xbf16>
    %353 = vector.extract_strided_slice %349 {offsets = [0, 0, 0], sizes = [2, 8, 16], strides = [1, 1, 1]} : vector<2x8x64xbf16> to vector<2x8x16xbf16>
    "tpu.trace_start"() <{level = 10 : i32, message = "bqd,bkd->bqk"}> : () -> ()
    %cst_119 = arith.constant dense<0.000000e+00> : vector<2x8x8xf32>
    %354 = tpu.matmul %352, %353, %cst_119 {dimension_numbers = #tpu.dot_dimension_numbers<[2], [2], [1], [1], [0, 0, 0, 1, 1, 1], [0], [0]>} : vector<2x8x16xbf16>, vector<2x8x16xbf16>, vector<2x8x8xf32> -> vector<2x8x8xf32>
    "tpu.trace_stop"() : () -> ()
    %355 = vector.extract_strided_slice %322 {offsets = [0, 0, 0], sizes = [1, 8, 8], strides = [1, 1, 1]} : vector<4x8x8xf32> to vector<1x8x8xf32>
    %356 = vector.shape_cast %355 : vector<1x8x8xf32> to vector<8x8xf32>
    %357 = vector.shape_cast %356 : vector<8x8xf32> to vector<1x8x8xf32>
    %358 = vector.broadcast %357 : vector<1x8x8xf32> to vector<2x8x8xf32>
    %359 = arith.addf %354, %358 : vector<2x8x8xf32>
    %cst_120 = arith.constant dense<0xFF800000> : vector<2x8xf32>
    %360 = vector.multi_reduction <maximumf>, %359, %cst_120 [2] : vector<2x8x8xf32> to vector<2x8xf32>
    %361 = vector.shape_cast %360 : vector<2x8xf32> to vector<2x8x1xf32>
    %362 = vector.broadcast %361 : vector<2x8x1xf32> to vector<2x8x8xf32>
    %363 = arith.subf %359, %362 : vector<2x8x8xf32>
    %364 = math.exp %363 : vector<2x8x8xf32>
    %cst_121 = arith.constant dense<0.000000e+00> : vector<2x8xf32>
    %365 = vector.multi_reduction <add>, %364, %cst_121 [2] : vector<2x8x8xf32> to vector<2x8xf32>
    %366 = vector.shape_cast %365 : vector<2x8xf32> to vector<2x8x1xf32>
    %367 = tpu.reciprocal %366 {approx = true} : vector<2x8x1xf32> -> vector<2x8x1xf32>
    %368 = vector.broadcast %367 : vector<2x8x1xf32> to vector<2x8x8xf32>
    %369 = arith.mulf %364, %368 : vector<2x8x8xf32>
    %370 = arith.truncf %369 : vector<2x8x8xf32> to vector<2x8x8xbf16>
    %371 = vector.extract_strided_slice %351 {offsets = [0, 0, 0], sizes = [2, 8, 16], strides = [1, 1, 1]} : vector<2x8x64xbf16> to vector<2x8x16xbf16>
    "tpu.trace_start"() <{level = 10 : i32, message = "bqk,bkd->bqd"}> : () -> ()
    %cst_122 = arith.constant dense<0.000000e+00> : vector<2x8x16xf32>
    %372 = tpu.matmul %370, %371, %cst_122 {dimension_numbers = #tpu.dot_dimension_numbers<[2], [1], [1], [2], [0, 0, 0, 1, 1, 2], [0], [0]>} : vector<2x8x8xbf16>, vector<2x8x16xbf16>, vector<2x8x16xf32> -> vector<2x8x16xf32>
    "tpu.trace_stop"() : () -> ()
    %373 = vector.shape_cast %372 : vector<2x8x16xf32> to vector<16x16xf32>
    %374 = vector.extract_strided_slice %347 {offsets = [0, 0, 16], sizes = [2, 8, 16], strides = [1, 1, 1]} : vector<2x8x64xbf16> to vector<2x8x16xbf16>
    %375 = vector.extract_strided_slice %349 {offsets = [0, 0, 16], sizes = [2, 8, 16], strides = [1, 1, 1]} : vector<2x8x64xbf16> to vector<2x8x16xbf16>
    "tpu.trace_start"() <{level = 10 : i32, message = "bqd,bkd->bqk"}> : () -> ()
    %cst_123 = arith.constant dense<0.000000e+00> : vector<2x8x8xf32>
    %376 = tpu.matmul %374, %375, %cst_123 {dimension_numbers = #tpu.dot_dimension_numbers<[2], [2], [1], [1], [0, 0, 0, 1, 1, 1], [0], [0]>} : vector<2x8x16xbf16>, vector<2x8x16xbf16>, vector<2x8x8xf32> -> vector<2x8x8xf32>
    "tpu.trace_stop"() : () -> ()
    %377 = vector.extract_strided_slice %322 {offsets = [1, 0, 0], sizes = [1, 8, 8], strides = [1, 1, 1]} : vector<4x8x8xf32> to vector<1x8x8xf32>
    %378 = vector.shape_cast %377 : vector<1x8x8xf32> to vector<8x8xf32>
    %379 = vector.shape_cast %378 : vector<8x8xf32> to vector<1x8x8xf32>
    %380 = vector.broadcast %379 : vector<1x8x8xf32> to vector<2x8x8xf32>
    %381 = arith.addf %376, %380 : vector<2x8x8xf32>
    %cst_124 = arith.constant dense<0xFF800000> : vector<2x8xf32>
    %382 = vector.multi_reduction <maximumf>, %381, %cst_124 [2] : vector<2x8x8xf32> to vector<2x8xf32>
    %383 = vector.shape_cast %382 : vector<2x8xf32> to vector<2x8x1xf32>
    %384 = vector.broadcast %383 : vector<2x8x1xf32> to vector<2x8x8xf32>
    %385 = arith.subf %381, %384 : vector<2x8x8xf32>
    %386 = math.exp %385 : vector<2x8x8xf32>
    %cst_125 = arith.constant dense<0.000000e+00> : vector<2x8xf32>
    %387 = vector.multi_reduction <add>, %386, %cst_125 [2] : vector<2x8x8xf32> to vector<2x8xf32>
    %388 = vector.shape_cast %387 : vector<2x8xf32> to vector<2x8x1xf32>
    %389 = tpu.reciprocal %388 {approx = true} : vector<2x8x1xf32> -> vector<2x8x1xf32>
    %390 = vector.broadcast %389 : vector<2x8x1xf32> to vector<2x8x8xf32>
    %391 = arith.mulf %386, %390 : vector<2x8x8xf32>
    %392 = arith.truncf %391 : vector<2x8x8xf32> to vector<2x8x8xbf16>
    %393 = vector.extract_strided_slice %351 {offsets = [0, 0, 16], sizes = [2, 8, 16], strides = [1, 1, 1]} : vector<2x8x64xbf16> to vector<2x8x16xbf16>
    "tpu.trace_start"() <{level = 10 : i32, message = "bqk,bkd->bqd"}> : () -> ()
    %cst_126 = arith.constant dense<0.000000e+00> : vector<2x8x16xf32>
    %394 = tpu.matmul %392, %393, %cst_126 {dimension_numbers = #tpu.dot_dimension_numbers<[2], [1], [1], [2], [0, 0, 0, 1, 1, 2], [0], [0]>} : vector<2x8x8xbf16>, vector<2x8x16xbf16>, vector<2x8x16xf32> -> vector<2x8x16xf32>
    "tpu.trace_stop"() : () -> ()
    %395 = vector.shape_cast %394 : vector<2x8x16xf32> to vector<16x16xf32>
    %396 = vector.extract_strided_slice %347 {offsets = [0, 0, 32], sizes = [2, 8, 16], strides = [1, 1, 1]} : vector<2x8x64xbf16> to vector<2x8x16xbf16>
    %397 = vector.extract_strided_slice %349 {offsets = [0, 0, 32], sizes = [2, 8, 16], strides = [1, 1, 1]} : vector<2x8x64xbf16> to vector<2x8x16xbf16>
    "tpu.trace_start"() <{level = 10 : i32, message = "bqd,bkd->bqk"}> : () -> ()
    %cst_127 = arith.constant dense<0.000000e+00> : vector<2x8x8xf32>
    %398 = tpu.matmul %396, %397, %cst_127 {dimension_numbers = #tpu.dot_dimension_numbers<[2], [2], [1], [1], [0, 0, 0, 1, 1, 1], [0], [0]>} : vector<2x8x16xbf16>, vector<2x8x16xbf16>, vector<2x8x8xf32> -> vector<2x8x8xf32>
    "tpu.trace_stop"() : () -> ()
    %399 = vector.extract_strided_slice %322 {offsets = [2, 0, 0], sizes = [1, 8, 8], strides = [1, 1, 1]} : vector<4x8x8xf32> to vector<1x8x8xf32>
    %400 = vector.shape_cast %399 : vector<1x8x8xf32> to vector<8x8xf32>
    %401 = vector.shape_cast %400 : vector<8x8xf32> to vector<1x8x8xf32>
    %402 = vector.broadcast %401 : vector<1x8x8xf32> to vector<2x8x8xf32>
    %403 = arith.addf %398, %402 : vector<2x8x8xf32>
    %cst_128 = arith.constant dense<0xFF800000> : vector<2x8xf32>
    %404 = vector.multi_reduction <maximumf>, %403, %cst_128 [2] : vector<2x8x8xf32> to vector<2x8xf32>
    %405 = vector.shape_cast %404 : vector<2x8xf32> to vector<2x8x1xf32>
    %406 = vector.broadcast %405 : vector<2x8x1xf32> to vector<2x8x8xf32>
    %407 = arith.subf %403, %406 : vector<2x8x8xf32>
    %408 = math.exp %407 : vector<2x8x8xf32>
    %cst_129 = arith.constant dense<0.000000e+00> : vector<2x8xf32>
    %409 = vector.multi_reduction <add>, %408, %cst_129 [2] : vector<2x8x8xf32> to vector<2x8xf32>
    %410 = vector.shape_cast %409 : vector<2x8xf32> to vector<2x8x1xf32>
    %411 = tpu.reciprocal %410 {approx = true} : vector<2x8x1xf32> -> vector<2x8x1xf32>
    %412 = vector.broadcast %411 : vector<2x8x1xf32> to vector<2x8x8xf32>
    %413 = arith.mulf %408, %412 : vector<2x8x8xf32>
    %414 = arith.truncf %413 : vector<2x8x8xf32> to vector<2x8x8xbf16>
    %415 = vector.extract_strided_slice %351 {offsets = [0, 0, 32], sizes = [2, 8, 16], strides = [1, 1, 1]} : vector<2x8x64xbf16> to vector<2x8x16xbf16>
    "tpu.trace_start"() <{level = 10 : i32, message = "bqk,bkd->bqd"}> : () -> ()
    %cst_130 = arith.constant dense<0.000000e+00> : vector<2x8x16xf32>
    %416 = tpu.matmul %414, %415, %cst_130 {dimension_numbers = #tpu.dot_dimension_numbers<[2], [1], [1], [2], [0, 0, 0, 1, 1, 2], [0], [0]>} : vector<2x8x8xbf16>, vector<2x8x16xbf16>, vector<2x8x16xf32> -> vector<2x8x16xf32>
    "tpu.trace_stop"() : () -> ()
    %417 = vector.shape_cast %416 : vector<2x8x16xf32> to vector<16x16xf32>
    %418 = vector.extract_strided_slice %347 {offsets = [0, 0, 48], sizes = [2, 8, 16], strides = [1, 1, 1]} : vector<2x8x64xbf16> to vector<2x8x16xbf16>
    %419 = vector.extract_strided_slice %349 {offsets = [0, 0, 48], sizes = [2, 8, 16], strides = [1, 1, 1]} : vector<2x8x64xbf16> to vector<2x8x16xbf16>
    "tpu.trace_start"() <{level = 10 : i32, message = "bqd,bkd->bqk"}> : () -> ()
    %cst_131 = arith.constant dense<0.000000e+00> : vector<2x8x8xf32>
    %420 = tpu.matmul %418, %419, %cst_131 {dimension_numbers = #tpu.dot_dimension_numbers<[2], [2], [1], [1], [0, 0, 0, 1, 1, 1], [0], [0]>} : vector<2x8x16xbf16>, vector<2x8x16xbf16>, vector<2x8x8xf32> -> vector<2x8x8xf32>
    "tpu.trace_stop"() : () -> ()
    %421 = vector.extract_strided_slice %322 {offsets = [3, 0, 0], sizes = [1, 8, 8], strides = [1, 1, 1]} : vector<4x8x8xf32> to vector<1x8x8xf32>
    %422 = vector.shape_cast %421 : vector<1x8x8xf32> to vector<8x8xf32>
    %423 = vector.shape_cast %422 : vector<8x8xf32> to vector<1x8x8xf32>
    %424 = vector.broadcast %423 : vector<1x8x8xf32> to vector<2x8x8xf32>
    %425 = arith.addf %420, %424 : vector<2x8x8xf32>
    %cst_132 = arith.constant dense<0xFF800000> : vector<2x8xf32>
    %426 = vector.multi_reduction <maximumf>, %425, %cst_132 [2] : vector<2x8x8xf32> to vector<2x8xf32>
    %427 = vector.shape_cast %426 : vector<2x8xf32> to vector<2x8x1xf32>
    %428 = vector.broadcast %427 : vector<2x8x1xf32> to vector<2x8x8xf32>
    %429 = arith.subf %425, %428 : vector<2x8x8xf32>
    %430 = math.exp %429 : vector<2x8x8xf32>
    %cst_133 = arith.constant dense<0.000000e+00> : vector<2x8xf32>
    %431 = vector.multi_reduction <add>, %430, %cst_133 [2] : vector<2x8x8xf32> to vector<2x8xf32>
    %432 = vector.shape_cast %431 : vector<2x8xf32> to vector<2x8x1xf32>
    %433 = tpu.reciprocal %432 {approx = true} : vector<2x8x1xf32> -> vector<2x8x1xf32>
    %434 = vector.broadcast %433 : vector<2x8x1xf32> to vector<2x8x8xf32>
    %435 = arith.mulf %430, %434 : vector<2x8x8xf32>
    %436 = arith.truncf %435 : vector<2x8x8xf32> to vector<2x8x8xbf16>
    %437 = vector.extract_strided_slice %351 {offsets = [0, 0, 48], sizes = [2, 8, 16], strides = [1, 1, 1]} : vector<2x8x64xbf16> to vector<2x8x16xbf16>
    "tpu.trace_start"() <{level = 10 : i32, message = "bqk,bkd->bqd"}> : () -> ()
    %cst_134 = arith.constant dense<0.000000e+00> : vector<2x8x16xf32>
    %438 = tpu.matmul %436, %437, %cst_134 {dimension_numbers = #tpu.dot_dimension_numbers<[2], [1], [1], [2], [0, 0, 0, 1, 1, 2], [0], [0]>} : vector<2x8x8xbf16>, vector<2x8x16xbf16>, vector<2x8x16xf32> -> vector<2x8x16xf32>
    "tpu.trace_stop"() : () -> ()
    %439 = vector.shape_cast %438 : vector<2x8x16xf32> to vector<16x16xf32>
    %440 = tpu.concatenate %373, %395, %417, %439 in 1 : vector<16x16xf32>, vector<16x16xf32>, vector<16x16xf32>, vector<16x16xf32> -> vector<16x64xf32>
    %441 = arith.truncf %440 : vector<16x64xf32> to vector<16x64xbf16>
    %cst_135 = arith.constant dense<0.000000e+00> : vector<16x64xf32>
    %442 = tpu.matmul %441, %328, %cst_135 {dimension_numbers = #tpu.dot_dimension_numbers<[1], [0], [0], [1], [0, 0, 1, 1], [], []>} : vector<16x64xbf16>, vector<64x64xbf16>, vector<16x64xf32> -> vector<16x64xf32>
    %443 = arith.addf %321, %442 : vector<16x64xf32>
    %c0_136 = arith.constant 0 : index
    %c0_137 = arith.constant 0 : index
    %c0_138 = arith.constant 0 : index
    %444 = vector.load %arg15[%c0_136, %c0_137, %c0_138] : memref<2x1x64xf32, #tpu.memory_space<vmem>>, vector<1x1x64xf32>
    %445 = vector.shape_cast %444 : vector<1x1x64xf32> to vector<1x64xf32>
    %c0_139 = arith.constant 0 : index
    %c0_140 = arith.constant 0 : index
    %c0_141 = arith.constant 0 : index
    %446 = vector.load %arg16[%c0_139, %c0_140, %c0_141] : memref<2x64x64xbf16, #tpu.memory_space<vmem>>, vector<1x64x64xbf16>
    %447 = vector.shape_cast %446 : vector<1x64x64xbf16> to vector<64x64xbf16>
    %c0_142 = arith.constant 0 : index
    %c0_143 = arith.constant 0 : index
    %c0_144 = arith.constant 0 : index
    %448 = vector.load %arg17[%c0_142, %c0_143, %c0_144] : memref<2x64x128xbf16, #tpu.memory_space<vmem>>, vector<1x64x128xbf16>
    %449 = vector.shape_cast %448 : vector<1x64x128xbf16> to vector<64x128xbf16>
    %c0_145 = arith.constant 0 : index
    %c0_146 = arith.constant 0 : index
    %c0_147 = arith.constant 0 : index
    %450 = vector.load %arg18[%c0_145, %c0_146, %c0_147] : memref<2x64x64xbf16, #tpu.memory_space<vmem>>, vector<1x64x64xbf16>
    %451 = vector.shape_cast %450 : vector<1x64x64xbf16> to vector<64x64xbf16>
    %452 = arith.mulf %443, %443 : vector<16x64xf32>
    %cst_148 = arith.constant dense<0.000000e+00> : vector<16xf32>
    %453 = vector.multi_reduction <add>, %452, %cst_148 [1] : vector<16x64xf32> to vector<16xf32>
    %454 = vector.shape_cast %453 : vector<16xf32> to vector<16x1xf32>
    %cst_149 = arith.constant 6.400000e+01 : f32
    %455 = vector.broadcast %cst_149 : f32 to vector<16x1xf32>
    %456 = arith.divf %454, %455 : vector<16x1xf32>
    %cst_150 = arith.constant 9.99999997E-7 : f32
    %457 = vector.broadcast %cst_150 : f32 to vector<16x1xf32>
    %458 = arith.addf %456, %457 : vector<16x1xf32>
    %459 = math.rsqrt %458 : vector<16x1xf32>
    %460 = vector.broadcast %459 : vector<16x1xf32> to vector<16x64xf32>
    %461 = arith.mulf %443, %460 : vector<16x64xf32>
    %462 = vector.broadcast %445 : vector<1x64xf32> to vector<16x64xf32>
    %463 = arith.mulf %461, %462 : vector<16x64xf32>
    %464 = arith.truncf %463 : vector<16x64xf32> to vector<16x64xbf16>
    %cst_151 = arith.constant dense<0.000000e+00> : vector<16x64xf32>
    %465 = tpu.matmul %464, %447, %cst_151 {dimension_numbers = #tpu.dot_dimension_numbers<[1], [0], [0], [1], [0, 0, 1, 1], [], []>} : vector<16x64xbf16>, vector<64x64xbf16>, vector<16x64xf32> -> vector<16x64xf32>
    %cst_152 = arith.constant dense<0.000000e+00> : vector<16x128xf32>
    %466 = tpu.matmul %314, %449, %cst_152 {dimension_numbers = #tpu.dot_dimension_numbers<[1], [0], [0], [1], [0, 0, 1, 1], [], []>} : vector<16x64xbf16>, vector<64x128xbf16>, vector<16x128xf32> -> vector<16x128xf32>
    %467 = vector.extract_strided_slice %466 {offsets = [0, 0], sizes = [16, 64], strides = [1, 1]} : vector<16x128xf32> to vector<16x64xf32>
    %468 = vector.extract_strided_slice %466 {offsets = [0, 64], sizes = [16, 64], strides = [1, 1]} : vector<16x128xf32> to vector<16x64xf32>
    %469 = vector.shape_cast %465 : vector<16x64xf32> to vector<2x8x64xf32>
    %470 = arith.truncf %469 : vector<2x8x64xf32> to vector<2x8x64xbf16>
    %471 = vector.shape_cast %467 : vector<16x64xf32> to vector<2x8x64xf32>
    %472 = arith.truncf %471 : vector<2x8x64xf32> to vector<2x8x64xbf16>
    %473 = vector.shape_cast %468 : vector<16x64xf32> to vector<2x8x64xf32>
    %474 = arith.truncf %473 : vector<2x8x64xf32> to vector<2x8x64xbf16>
    %475 = vector.extract_strided_slice %470 {offsets = [0, 0, 0], sizes = [2, 8, 16], strides = [1, 1, 1]} : vector<2x8x64xbf16> to vector<2x8x16xbf16>
    %476 = vector.extract_strided_slice %472 {offsets = [0, 0, 0], sizes = [2, 8, 16], strides = [1, 1, 1]} : vector<2x8x64xbf16> to vector<2x8x16xbf16>
    "tpu.trace_start"() <{level = 10 : i32, message = "bqd,bkd->bqk"}> : () -> ()
    %cst_153 = arith.constant dense<0.000000e+00> : vector<2x8x8xf32>
    %477 = tpu.matmul %475, %476, %cst_153 {dimension_numbers = #tpu.dot_dimension_numbers<[2], [2], [1], [1], [0, 0, 0, 1, 1, 1], [0], [0]>} : vector<2x8x16xbf16>, vector<2x8x16xbf16>, vector<2x8x8xf32> -> vector<2x8x8xf32>
    "tpu.trace_stop"() : () -> ()
    %cst_154 = arith.constant dense<0xFF800000> : vector<2x8xf32>
    %478 = vector.multi_reduction <maximumf>, %477, %cst_154 [2] : vector<2x8x8xf32> to vector<2x8xf32>
    %479 = vector.shape_cast %478 : vector<2x8xf32> to vector<2x8x1xf32>
    %480 = vector.broadcast %479 : vector<2x8x1xf32> to vector<2x8x8xf32>
    %481 = arith.subf %477, %480 : vector<2x8x8xf32>
    %482 = math.exp %481 : vector<2x8x8xf32>
    %cst_155 = arith.constant dense<0.000000e+00> : vector<2x8xf32>
    %483 = vector.multi_reduction <add>, %482, %cst_155 [2] : vector<2x8x8xf32> to vector<2x8xf32>
    %484 = vector.shape_cast %483 : vector<2x8xf32> to vector<2x8x1xf32>
    %485 = tpu.reciprocal %484 {approx = true} : vector<2x8x1xf32> -> vector<2x8x1xf32>
    %486 = vector.broadcast %485 : vector<2x8x1xf32> to vector<2x8x8xf32>
    %487 = arith.mulf %482, %486 : vector<2x8x8xf32>
    %488 = arith.truncf %487 : vector<2x8x8xf32> to vector<2x8x8xbf16>
    %489 = vector.extract_strided_slice %474 {offsets = [0, 0, 0], sizes = [2, 8, 16], strides = [1, 1, 1]} : vector<2x8x64xbf16> to vector<2x8x16xbf16>
    "tpu.trace_start"() <{level = 10 : i32, message = "bqk,bkd->bqd"}> : () -> ()
    %cst_156 = arith.constant dense<0.000000e+00> : vector<2x8x16xf32>
    %490 = tpu.matmul %488, %489, %cst_156 {dimension_numbers = #tpu.dot_dimension_numbers<[2], [1], [1], [2], [0, 0, 0, 1, 1, 2], [0], [0]>} : vector<2x8x8xbf16>, vector<2x8x16xbf16>, vector<2x8x16xf32> -> vector<2x8x16xf32>
    "tpu.trace_stop"() : () -> ()
    %491 = vector.shape_cast %490 : vector<2x8x16xf32> to vector<16x16xf32>
    %492 = vector.extract_strided_slice %470 {offsets = [0, 0, 16], sizes = [2, 8, 16], strides = [1, 1, 1]} : vector<2x8x64xbf16> to vector<2x8x16xbf16>
    %493 = vector.extract_strided_slice %472 {offsets = [0, 0, 16], sizes = [2, 8, 16], strides = [1, 1, 1]} : vector<2x8x64xbf16> to vector<2x8x16xbf16>
    "tpu.trace_start"() <{level = 10 : i32, message = "bqd,bkd->bqk"}> : () -> ()
    %cst_157 = arith.constant dense<0.000000e+00> : vector<2x8x8xf32>
    %494 = tpu.matmul %492, %493, %cst_157 {dimension_numbers = #tpu.dot_dimension_numbers<[2], [2], [1], [1], [0, 0, 0, 1, 1, 1], [0], [0]>} : vector<2x8x16xbf16>, vector<2x8x16xbf16>, vector<2x8x8xf32> -> vector<2x8x8xf32>
    "tpu.trace_stop"() : () -> ()
    %cst_158 = arith.constant dense<0xFF800000> : vector<2x8xf32>
    %495 = vector.multi_reduction <maximumf>, %494, %cst_158 [2] : vector<2x8x8xf32> to vector<2x8xf32>
    %496 = vector.shape_cast %495 : vector<2x8xf32> to vector<2x8x1xf32>
    %497 = vector.broadcast %496 : vector<2x8x1xf32> to vector<2x8x8xf32>
    %498 = arith.subf %494, %497 : vector<2x8x8xf32>
    %499 = math.exp %498 : vector<2x8x8xf32>
    %cst_159 = arith.constant dense<0.000000e+00> : vector<2x8xf32>
    %500 = vector.multi_reduction <add>, %499, %cst_159 [2] : vector<2x8x8xf32> to vector<2x8xf32>
    %501 = vector.shape_cast %500 : vector<2x8xf32> to vector<2x8x1xf32>
    %502 = tpu.reciprocal %501 {approx = true} : vector<2x8x1xf32> -> vector<2x8x1xf32>
    %503 = vector.broadcast %502 : vector<2x8x1xf32> to vector<2x8x8xf32>
    %504 = arith.mulf %499, %503 : vector<2x8x8xf32>
    %505 = arith.truncf %504 : vector<2x8x8xf32> to vector<2x8x8xbf16>
    %506 = vector.extract_strided_slice %474 {offsets = [0, 0, 16], sizes = [2, 8, 16], strides = [1, 1, 1]} : vector<2x8x64xbf16> to vector<2x8x16xbf16>
    "tpu.trace_start"() <{level = 10 : i32, message = "bqk,bkd->bqd"}> : () -> ()
    %cst_160 = arith.constant dense<0.000000e+00> : vector<2x8x16xf32>
    %507 = tpu.matmul %505, %506, %cst_160 {dimension_numbers = #tpu.dot_dimension_numbers<[2], [1], [1], [2], [0, 0, 0, 1, 1, 2], [0], [0]>} : vector<2x8x8xbf16>, vector<2x8x16xbf16>, vector<2x8x16xf32> -> vector<2x8x16xf32>
    "tpu.trace_stop"() : () -> ()
    %508 = vector.shape_cast %507 : vector<2x8x16xf32> to vector<16x16xf32>
    %509 = vector.extract_strided_slice %470 {offsets = [0, 0, 32], sizes = [2, 8, 16], strides = [1, 1, 1]} : vector<2x8x64xbf16> to vector<2x8x16xbf16>
    %510 = vector.extract_strided_slice %472 {offsets = [0, 0, 32], sizes = [2, 8, 16], strides = [1, 1, 1]} : vector<2x8x64xbf16> to vector<2x8x16xbf16>
    "tpu.trace_start"() <{level = 10 : i32, message = "bqd,bkd->bqk"}> : () -> ()
    %cst_161 = arith.constant dense<0.000000e+00> : vector<2x8x8xf32>
    %511 = tpu.matmul %509, %510, %cst_161 {dimension_numbers = #tpu.dot_dimension_numbers<[2], [2], [1], [1], [0, 0, 0, 1, 1, 1], [0], [0]>} : vector<2x8x16xbf16>, vector<2x8x16xbf16>, vector<2x8x8xf32> -> vector<2x8x8xf32>
    "tpu.trace_stop"() : () -> ()
    %cst_162 = arith.constant dense<0xFF800000> : vector<2x8xf32>
    %512 = vector.multi_reduction <maximumf>, %511, %cst_162 [2] : vector<2x8x8xf32> to vector<2x8xf32>
    %513 = vector.shape_cast %512 : vector<2x8xf32> to vector<2x8x1xf32>
    %514 = vector.broadcast %513 : vector<2x8x1xf32> to vector<2x8x8xf32>
    %515 = arith.subf %511, %514 : vector<2x8x8xf32>
    %516 = math.exp %515 : vector<2x8x8xf32>
    %cst_163 = arith.constant dense<0.000000e+00> : vector<2x8xf32>
    %517 = vector.multi_reduction <add>, %516, %cst_163 [2] : vector<2x8x8xf32> to vector<2x8xf32>
    %518 = vector.shape_cast %517 : vector<2x8xf32> to vector<2x8x1xf32>
    %519 = tpu.reciprocal %518 {approx = true} : vector<2x8x1xf32> -> vector<2x8x1xf32>
    %520 = vector.broadcast %519 : vector<2x8x1xf32> to vector<2x8x8xf32>
    %521 = arith.mulf %516, %520 : vector<2x8x8xf32>
    %522 = arith.truncf %521 : vector<2x8x8xf32> to vector<2x8x8xbf16>
    %523 = vector.extract_strided_slice %474 {offsets = [0, 0, 32], sizes = [2, 8, 16], strides = [1, 1, 1]} : vector<2x8x64xbf16> to vector<2x8x16xbf16>
    "tpu.trace_start"() <{level = 10 : i32, message = "bqk,bkd->bqd"}> : () -> ()
    %cst_164 = arith.constant dense<0.000000e+00> : vector<2x8x16xf32>
    %524 = tpu.matmul %522, %523, %cst_164 {dimension_numbers = #tpu.dot_dimension_numbers<[2], [1], [1], [2], [0, 0, 0, 1, 1, 2], [0], [0]>} : vector<2x8x8xbf16>, vector<2x8x16xbf16>, vector<2x8x16xf32> -> vector<2x8x16xf32>
    "tpu.trace_stop"() : () -> ()
    %525 = vector.shape_cast %524 : vector<2x8x16xf32> to vector<16x16xf32>
    %526 = vector.extract_strided_slice %470 {offsets = [0, 0, 48], sizes = [2, 8, 16], strides = [1, 1, 1]} : vector<2x8x64xbf16> to vector<2x8x16xbf16>
    %527 = vector.extract_strided_slice %472 {offsets = [0, 0, 48], sizes = [2, 8, 16], strides = [1, 1, 1]} : vector<2x8x64xbf16> to vector<2x8x16xbf16>
    "tpu.trace_start"() <{level = 10 : i32, message = "bqd,bkd->bqk"}> : () -> ()
    %cst_165 = arith.constant dense<0.000000e+00> : vector<2x8x8xf32>
    %528 = tpu.matmul %526, %527, %cst_165 {dimension_numbers = #tpu.dot_dimension_numbers<[2], [2], [1], [1], [0, 0, 0, 1, 1, 1], [0], [0]>} : vector<2x8x16xbf16>, vector<2x8x16xbf16>, vector<2x8x8xf32> -> vector<2x8x8xf32>
    "tpu.trace_stop"() : () -> ()
    %cst_166 = arith.constant dense<0xFF800000> : vector<2x8xf32>
    %529 = vector.multi_reduction <maximumf>, %528, %cst_166 [2] : vector<2x8x8xf32> to vector<2x8xf32>
    %530 = vector.shape_cast %529 : vector<2x8xf32> to vector<2x8x1xf32>
    %531 = vector.broadcast %530 : vector<2x8x1xf32> to vector<2x8x8xf32>
    %532 = arith.subf %528, %531 : vector<2x8x8xf32>
    %533 = math.exp %532 : vector<2x8x8xf32>
    %cst_167 = arith.constant dense<0.000000e+00> : vector<2x8xf32>
    %534 = vector.multi_reduction <add>, %533, %cst_167 [2] : vector<2x8x8xf32> to vector<2x8xf32>
    %535 = vector.shape_cast %534 : vector<2x8xf32> to vector<2x8x1xf32>
    %536 = tpu.reciprocal %535 {approx = true} : vector<2x8x1xf32> -> vector<2x8x1xf32>
    %537 = vector.broadcast %536 : vector<2x8x1xf32> to vector<2x8x8xf32>
    %538 = arith.mulf %533, %537 : vector<2x8x8xf32>
    %539 = arith.truncf %538 : vector<2x8x8xf32> to vector<2x8x8xbf16>
    %540 = vector.extract_strided_slice %474 {offsets = [0, 0, 48], sizes = [2, 8, 16], strides = [1, 1, 1]} : vector<2x8x64xbf16> to vector<2x8x16xbf16>
    "tpu.trace_start"() <{level = 10 : i32, message = "bqk,bkd->bqd"}> : () -> ()
    %cst_168 = arith.constant dense<0.000000e+00> : vector<2x8x16xf32>
    %541 = tpu.matmul %539, %540, %cst_168 {dimension_numbers = #tpu.dot_dimension_numbers<[2], [1], [1], [2], [0, 0, 0, 1, 1, 2], [0], [0]>} : vector<2x8x8xbf16>, vector<2x8x16xbf16>, vector<2x8x16xf32> -> vector<2x8x16xf32>
    "tpu.trace_stop"() : () -> ()
    %542 = vector.shape_cast %541 : vector<2x8x16xf32> to vector<16x16xf32>
    %543 = tpu.concatenate %491, %508, %525, %542 in 1 : vector<16x16xf32>, vector<16x16xf32>, vector<16x16xf32>, vector<16x16xf32> -> vector<16x64xf32>
    %544 = arith.truncf %543 : vector<16x64xf32> to vector<16x64xbf16>
    %cst_169 = arith.constant dense<0.000000e+00> : vector<16x64xf32>
    %545 = tpu.matmul %544, %451, %cst_169 {dimension_numbers = #tpu.dot_dimension_numbers<[1], [0], [0], [1], [0, 0, 1, 1], [], []>} : vector<16x64xbf16>, vector<64x64xbf16>, vector<16x64xf32> -> vector<16x64xf32>
    %546 = arith.addf %443, %545 : vector<16x64xf32>
    %c0_170 = arith.constant 0 : index
    %c0_171 = arith.constant 0 : index
    %c0_172 = arith.constant 0 : index
    %547 = vector.load %arg19[%c0_170, %c0_171, %c0_172] : memref<2x1x64xf32, #tpu.memory_space<vmem>>, vector<1x1x64xf32>
    %548 = vector.shape_cast %547 : vector<1x1x64xf32> to vector<1x64xf32>
    %c0_173 = arith.constant 0 : index
    %c0_174 = arith.constant 0 : index
    %c0_175 = arith.constant 0 : index
    %549 = vector.load %arg20[%c0_173, %c0_174, %c0_175] : memref<2x64x128xbf16, #tpu.memory_space<vmem>>, vector<1x64x128xbf16>
    %550 = vector.shape_cast %549 : vector<1x64x128xbf16> to vector<64x128xbf16>
    %c0_176 = arith.constant 0 : index
    %c0_177 = arith.constant 0 : index
    %c0_178 = arith.constant 0 : index
    %551 = vector.load %arg21[%c0_176, %c0_177, %c0_178] : memref<2x128x64xbf16, #tpu.memory_space<vmem>>, vector<1x128x64xbf16>
    %552 = vector.shape_cast %551 : vector<1x128x64xbf16> to vector<128x64xbf16>
    %553 = arith.mulf %546, %546 : vector<16x64xf32>
    %cst_179 = arith.constant dense<0.000000e+00> : vector<16xf32>
    %554 = vector.multi_reduction <add>, %553, %cst_179 [1] : vector<16x64xf32> to vector<16xf32>
    %555 = vector.shape_cast %554 : vector<16xf32> to vector<16x1xf32>
    %cst_180 = arith.constant 6.400000e+01 : f32
    %556 = vector.broadcast %cst_180 : f32 to vector<16x1xf32>
    %557 = arith.divf %555, %556 : vector<16x1xf32>
    %cst_181 = arith.constant 9.99999997E-7 : f32
    %558 = vector.broadcast %cst_181 : f32 to vector<16x1xf32>
    %559 = arith.addf %557, %558 : vector<16x1xf32>
    %560 = math.rsqrt %559 : vector<16x1xf32>
    %561 = vector.broadcast %560 : vector<16x1xf32> to vector<16x64xf32>
    %562 = arith.mulf %546, %561 : vector<16x64xf32>
    %563 = vector.broadcast %548 : vector<1x64xf32> to vector<16x64xf32>
    %564 = arith.mulf %562, %563 : vector<16x64xf32>
    %565 = arith.truncf %564 : vector<16x64xf32> to vector<16x64xbf16>
    %cst_182 = arith.constant dense<0.000000e+00> : vector<16x128xf32>
    %566 = tpu.matmul %565, %550, %cst_182 {dimension_numbers = #tpu.dot_dimension_numbers<[1], [0], [0], [1], [0, 0, 1, 1], [], []>} : vector<16x64xbf16>, vector<64x128xbf16>, vector<16x128xf32> -> vector<16x128xf32>
    %cst_183 = arith.constant 0.000000e+00 : f32
    %567 = vector.broadcast %cst_183 : f32 to vector<16x128xf32>
    %568 = arith.maximumf %566, %567 : vector<16x128xf32>
    %569 = arith.truncf %568 : vector<16x128xf32> to vector<16x128xbf16>
    %cst_184 = arith.constant dense<0.000000e+00> : vector<16x64xf32>
    %570 = tpu.matmul %569, %552, %cst_184 {dimension_numbers = #tpu.dot_dimension_numbers<[1], [0], [0], [1], [0, 0, 1, 1], [], []>} : vector<16x128xbf16>, vector<128x64xbf16>, vector<16x64xf32> -> vector<16x64xf32>
    %571 = arith.addf %546, %570 : vector<16x64xf32>
    %c1_185 = arith.constant 1 : index
    %c0_186 = arith.constant 0 : index
    %c0_187 = arith.constant 0 : index
    %572 = vector.load %arg12[%c1_185, %c0_186, %c0_187] : memref<2x1x64xf32, #tpu.memory_space<vmem>>, vector<1x1x64xf32>
    %573 = vector.shape_cast %572 : vector<1x1x64xf32> to vector<1x64xf32>
    %c1_188 = arith.constant 1 : index
    %c0_189 = arith.constant 0 : index
    %c0_190 = arith.constant 0 : index
    %574 = vector.load %arg13[%c1_188, %c0_189, %c0_190] : memref<2x64x192xbf16, #tpu.memory_space<vmem>>, vector<1x64x192xbf16>
    %575 = vector.shape_cast %574 : vector<1x64x192xbf16> to vector<64x192xbf16>
    %c1_191 = arith.constant 1 : index
    %c0_192 = arith.constant 0 : index
    %c0_193 = arith.constant 0 : index
    %576 = vector.load %arg14[%c1_191, %c0_192, %c0_193] : memref<2x64x64xbf16, #tpu.memory_space<vmem>>, vector<1x64x64xbf16>
    %577 = vector.shape_cast %576 : vector<1x64x64xbf16> to vector<64x64xbf16>
    %578 = arith.mulf %571, %571 : vector<16x64xf32>
    %cst_194 = arith.constant dense<0.000000e+00> : vector<16xf32>
    %579 = vector.multi_reduction <add>, %578, %cst_194 [1] : vector<16x64xf32> to vector<16xf32>
    %580 = vector.shape_cast %579 : vector<16xf32> to vector<16x1xf32>
    %cst_195 = arith.constant 6.400000e+01 : f32
    %581 = vector.broadcast %cst_195 : f32 to vector<16x1xf32>
    %582 = arith.divf %580, %581 : vector<16x1xf32>
    %cst_196 = arith.constant 9.99999997E-7 : f32
    %583 = vector.broadcast %cst_196 : f32 to vector<16x1xf32>
    %584 = arith.addf %582, %583 : vector<16x1xf32>
    %585 = math.rsqrt %584 : vector<16x1xf32>
    %586 = vector.broadcast %585 : vector<16x1xf32> to vector<16x64xf32>
    %587 = arith.mulf %571, %586 : vector<16x64xf32>
    %588 = vector.broadcast %573 : vector<1x64xf32> to vector<16x64xf32>
    %589 = arith.mulf %587, %588 : vector<16x64xf32>
    %590 = arith.truncf %589 : vector<16x64xf32> to vector<16x64xbf16>
    %cst_197 = arith.constant dense<0.000000e+00> : vector<16x192xf32>
    %591 = tpu.matmul %590, %575, %cst_197 {dimension_numbers = #tpu.dot_dimension_numbers<[1], [0], [0], [1], [0, 0, 1, 1], [], []>} : vector<16x64xbf16>, vector<64x192xbf16>, vector<16x192xf32> -> vector<16x192xf32>
    %592 = vector.extract_strided_slice %591 {offsets = [0, 0], sizes = [16, 64], strides = [1, 1]} : vector<16x192xf32> to vector<16x64xf32>
    %593 = vector.extract_strided_slice %591 {offsets = [0, 64], sizes = [16, 64], strides = [1, 1]} : vector<16x192xf32> to vector<16x64xf32>
    %594 = vector.extract_strided_slice %591 {offsets = [0, 128], sizes = [16, 64], strides = [1, 1]} : vector<16x192xf32> to vector<16x64xf32>
    %595 = vector.shape_cast %592 : vector<16x64xf32> to vector<2x8x64xf32>
    %596 = arith.truncf %595 : vector<2x8x64xf32> to vector<2x8x64xbf16>
    %597 = vector.shape_cast %593 : vector<16x64xf32> to vector<2x8x64xf32>
    %598 = arith.truncf %597 : vector<2x8x64xf32> to vector<2x8x64xbf16>
    %599 = vector.shape_cast %594 : vector<16x64xf32> to vector<2x8x64xf32>
    %600 = arith.truncf %599 : vector<2x8x64xf32> to vector<2x8x64xbf16>
    %601 = vector.extract_strided_slice %596 {offsets = [0, 0, 0], sizes = [2, 8, 16], strides = [1, 1, 1]} : vector<2x8x64xbf16> to vector<2x8x16xbf16>
    %602 = vector.extract_strided_slice %598 {offsets = [0, 0, 0], sizes = [2, 8, 16], strides = [1, 1, 1]} : vector<2x8x64xbf16> to vector<2x8x16xbf16>
    "tpu.trace_start"() <{level = 10 : i32, message = "bqd,bkd->bqk"}> : () -> ()
    %cst_198 = arith.constant dense<0.000000e+00> : vector<2x8x8xf32>
    %603 = tpu.matmul %601, %602, %cst_198 {dimension_numbers = #tpu.dot_dimension_numbers<[2], [2], [1], [1], [0, 0, 0, 1, 1, 1], [0], [0]>} : vector<2x8x16xbf16>, vector<2x8x16xbf16>, vector<2x8x8xf32> -> vector<2x8x8xf32>
    "tpu.trace_stop"() : () -> ()
    %604 = vector.extract_strided_slice %322 {offsets = [0, 0, 0], sizes = [1, 8, 8], strides = [1, 1, 1]} : vector<4x8x8xf32> to vector<1x8x8xf32>
    %605 = vector.shape_cast %604 : vector<1x8x8xf32> to vector<8x8xf32>
    %606 = vector.shape_cast %605 : vector<8x8xf32> to vector<1x8x8xf32>
    %607 = vector.broadcast %606 : vector<1x8x8xf32> to vector<2x8x8xf32>
    %608 = arith.addf %603, %607 : vector<2x8x8xf32>
    %cst_199 = arith.constant dense<0xFF800000> : vector<2x8xf32>
    %609 = vector.multi_reduction <maximumf>, %608, %cst_199 [2] : vector<2x8x8xf32> to vector<2x8xf32>
    %610 = vector.shape_cast %609 : vector<2x8xf32> to vector<2x8x1xf32>
    %611 = vector.broadcast %610 : vector<2x8x1xf32> to vector<2x8x8xf32>
    %612 = arith.subf %608, %611 : vector<2x8x8xf32>
    %613 = math.exp %612 : vector<2x8x8xf32>
    %cst_200 = arith.constant dense<0.000000e+00> : vector<2x8xf32>
    %614 = vector.multi_reduction <add>, %613, %cst_200 [2] : vector<2x8x8xf32> to vector<2x8xf32>
    %615 = vector.shape_cast %614 : vector<2x8xf32> to vector<2x8x1xf32>
    %616 = tpu.reciprocal %615 {approx = true} : vector<2x8x1xf32> -> vector<2x8x1xf32>
    %617 = vector.broadcast %616 : vector<2x8x1xf32> to vector<2x8x8xf32>
    %618 = arith.mulf %613, %617 : vector<2x8x8xf32>
    %619 = arith.truncf %618 : vector<2x8x8xf32> to vector<2x8x8xbf16>
    %620 = vector.extract_strided_slice %600 {offsets = [0, 0, 0], sizes = [2, 8, 16], strides = [1, 1, 1]} : vector<2x8x64xbf16> to vector<2x8x16xbf16>
    "tpu.trace_start"() <{level = 10 : i32, message = "bqk,bkd->bqd"}> : () -> ()
    %cst_201 = arith.constant dense<0.000000e+00> : vector<2x8x16xf32>
    %621 = tpu.matmul %619, %620, %cst_201 {dimension_numbers = #tpu.dot_dimension_numbers<[2], [1], [1], [2], [0, 0, 0, 1, 1, 2], [0], [0]>} : vector<2x8x8xbf16>, vector<2x8x16xbf16>, vector<2x8x16xf32> -> vector<2x8x16xf32>
    "tpu.trace_stop"() : () -> ()
    %622 = vector.shape_cast %621 : vector<2x8x16xf32> to vector<16x16xf32>
    %623 = vector.extract_strided_slice %596 {offsets = [0, 0, 16], sizes = [2, 8, 16], strides = [1, 1, 1]} : vector<2x8x64xbf16> to vector<2x8x16xbf16>
    %624 = vector.extract_strided_slice %598 {offsets = [0, 0, 16], sizes = [2, 8, 16], strides = [1, 1, 1]} : vector<2x8x64xbf16> to vector<2x8x16xbf16>
    "tpu.trace_start"() <{level = 10 : i32, message = "bqd,bkd->bqk"}> : () -> ()
    %cst_202 = arith.constant dense<0.000000e+00> : vector<2x8x8xf32>
    %625 = tpu.matmul %623, %624, %cst_202 {dimension_numbers = #tpu.dot_dimension_numbers<[2], [2], [1], [1], [0, 0, 0, 1, 1, 1], [0], [0]>} : vector<2x8x16xbf16>, vector<2x8x16xbf16>, vector<2x8x8xf32> -> vector<2x8x8xf32>
    "tpu.trace_stop"() : () -> ()
    %626 = vector.extract_strided_slice %322 {offsets = [1, 0, 0], sizes = [1, 8, 8], strides = [1, 1, 1]} : vector<4x8x8xf32> to vector<1x8x8xf32>
    %627 = vector.shape_cast %626 : vector<1x8x8xf32> to vector<8x8xf32>
    %628 = vector.shape_cast %627 : vector<8x8xf32> to vector<1x8x8xf32>
    %629 = vector.broadcast %628 : vector<1x8x8xf32> to vector<2x8x8xf32>
    %630 = arith.addf %625, %629 : vector<2x8x8xf32>
    %cst_203 = arith.constant dense<0xFF800000> : vector<2x8xf32>
    %631 = vector.multi_reduction <maximumf>, %630, %cst_203 [2] : vector<2x8x8xf32> to vector<2x8xf32>
    %632 = vector.shape_cast %631 : vector<2x8xf32> to vector<2x8x1xf32>
    %633 = vector.broadcast %632 : vector<2x8x1xf32> to vector<2x8x8xf32>
    %634 = arith.subf %630, %633 : vector<2x8x8xf32>
    %635 = math.exp %634 : vector<2x8x8xf32>
    %cst_204 = arith.constant dense<0.000000e+00> : vector<2x8xf32>
    %636 = vector.multi_reduction <add>, %635, %cst_204 [2] : vector<2x8x8xf32> to vector<2x8xf32>
    %637 = vector.shape_cast %636 : vector<2x8xf32> to vector<2x8x1xf32>
    %638 = tpu.reciprocal %637 {approx = true} : vector<2x8x1xf32> -> vector<2x8x1xf32>
    %639 = vector.broadcast %638 : vector<2x8x1xf32> to vector<2x8x8xf32>
    %640 = arith.mulf %635, %639 : vector<2x8x8xf32>
    %641 = arith.truncf %640 : vector<2x8x8xf32> to vector<2x8x8xbf16>
    %642 = vector.extract_strided_slice %600 {offsets = [0, 0, 16], sizes = [2, 8, 16], strides = [1, 1, 1]} : vector<2x8x64xbf16> to vector<2x8x16xbf16>
    "tpu.trace_start"() <{level = 10 : i32, message = "bqk,bkd->bqd"}> : () -> ()
    %cst_205 = arith.constant dense<0.000000e+00> : vector<2x8x16xf32>
    %643 = tpu.matmul %641, %642, %cst_205 {dimension_numbers = #tpu.dot_dimension_numbers<[2], [1], [1], [2], [0, 0, 0, 1, 1, 2], [0], [0]>} : vector<2x8x8xbf16>, vector<2x8x16xbf16>, vector<2x8x16xf32> -> vector<2x8x16xf32>
    "tpu.trace_stop"() : () -> ()
    %644 = vector.shape_cast %643 : vector<2x8x16xf32> to vector<16x16xf32>
    %645 = vector.extract_strided_slice %596 {offsets = [0, 0, 32], sizes = [2, 8, 16], strides = [1, 1, 1]} : vector<2x8x64xbf16> to vector<2x8x16xbf16>
    %646 = vector.extract_strided_slice %598 {offsets = [0, 0, 32], sizes = [2, 8, 16], strides = [1, 1, 1]} : vector<2x8x64xbf16> to vector<2x8x16xbf16>
    "tpu.trace_start"() <{level = 10 : i32, message = "bqd,bkd->bqk"}> : () -> ()
    %cst_206 = arith.constant dense<0.000000e+00> : vector<2x8x8xf32>
    %647 = tpu.matmul %645, %646, %cst_206 {dimension_numbers = #tpu.dot_dimension_numbers<[2], [2], [1], [1], [0, 0, 0, 1, 1, 1], [0], [0]>} : vector<2x8x16xbf16>, vector<2x8x16xbf16>, vector<2x8x8xf32> -> vector<2x8x8xf32>
    "tpu.trace_stop"() : () -> ()
    %648 = vector.extract_strided_slice %322 {offsets = [2, 0, 0], sizes = [1, 8, 8], strides = [1, 1, 1]} : vector<4x8x8xf32> to vector<1x8x8xf32>
    %649 = vector.shape_cast %648 : vector<1x8x8xf32> to vector<8x8xf32>
    %650 = vector.shape_cast %649 : vector<8x8xf32> to vector<1x8x8xf32>
    %651 = vector.broadcast %650 : vector<1x8x8xf32> to vector<2x8x8xf32>
    %652 = arith.addf %647, %651 : vector<2x8x8xf32>
    %cst_207 = arith.constant dense<0xFF800000> : vector<2x8xf32>
    %653 = vector.multi_reduction <maximumf>, %652, %cst_207 [2] : vector<2x8x8xf32> to vector<2x8xf32>
    %654 = vector.shape_cast %653 : vector<2x8xf32> to vector<2x8x1xf32>
    %655 = vector.broadcast %654 : vector<2x8x1xf32> to vector<2x8x8xf32>
    %656 = arith.subf %652, %655 : vector<2x8x8xf32>
    %657 = math.exp %656 : vector<2x8x8xf32>
    %cst_208 = arith.constant dense<0.000000e+00> : vector<2x8xf32>
    %658 = vector.multi_reduction <add>, %657, %cst_208 [2] : vector<2x8x8xf32> to vector<2x8xf32>
    %659 = vector.shape_cast %658 : vector<2x8xf32> to vector<2x8x1xf32>
    %660 = tpu.reciprocal %659 {approx = true} : vector<2x8x1xf32> -> vector<2x8x1xf32>
    %661 = vector.broadcast %660 : vector<2x8x1xf32> to vector<2x8x8xf32>
    %662 = arith.mulf %657, %661 : vector<2x8x8xf32>
    %663 = arith.truncf %662 : vector<2x8x8xf32> to vector<2x8x8xbf16>
    %664 = vector.extract_strided_slice %600 {offsets = [0, 0, 32], sizes = [2, 8, 16], strides = [1, 1, 1]} : vector<2x8x64xbf16> to vector<2x8x16xbf16>
    "tpu.trace_start"() <{level = 10 : i32, message = "bqk,bkd->bqd"}> : () -> ()
    %cst_209 = arith.constant dense<0.000000e+00> : vector<2x8x16xf32>
    %665 = tpu.matmul %663, %664, %cst_209 {dimension_numbers = #tpu.dot_dimension_numbers<[2], [1], [1], [2], [0, 0, 0, 1, 1, 2], [0], [0]>} : vector<2x8x8xbf16>, vector<2x8x16xbf16>, vector<2x8x16xf32> -> vector<2x8x16xf32>
    "tpu.trace_stop"() : () -> ()
    %666 = vector.shape_cast %665 : vector<2x8x16xf32> to vector<16x16xf32>
    %667 = vector.extract_strided_slice %596 {offsets = [0, 0, 48], sizes = [2, 8, 16], strides = [1, 1, 1]} : vector<2x8x64xbf16> to vector<2x8x16xbf16>
    %668 = vector.extract_strided_slice %598 {offsets = [0, 0, 48], sizes = [2, 8, 16], strides = [1, 1, 1]} : vector<2x8x64xbf16> to vector<2x8x16xbf16>
    "tpu.trace_start"() <{level = 10 : i32, message = "bqd,bkd->bqk"}> : () -> ()
    %cst_210 = arith.constant dense<0.000000e+00> : vector<2x8x8xf32>
    %669 = tpu.matmul %667, %668, %cst_210 {dimension_numbers = #tpu.dot_dimension_numbers<[2], [2], [1], [1], [0, 0, 0, 1, 1, 1], [0], [0]>} : vector<2x8x16xbf16>, vector<2x8x16xbf16>, vector<2x8x8xf32> -> vector<2x8x8xf32>
    "tpu.trace_stop"() : () -> ()
    %670 = vector.extract_strided_slice %322 {offsets = [3, 0, 0], sizes = [1, 8, 8], strides = [1, 1, 1]} : vector<4x8x8xf32> to vector<1x8x8xf32>
    %671 = vector.shape_cast %670 : vector<1x8x8xf32> to vector<8x8xf32>
    %672 = vector.shape_cast %671 : vector<8x8xf32> to vector<1x8x8xf32>
    %673 = vector.broadcast %672 : vector<1x8x8xf32> to vector<2x8x8xf32>
    %674 = arith.addf %669, %673 : vector<2x8x8xf32>
    %cst_211 = arith.constant dense<0xFF800000> : vector<2x8xf32>
    %675 = vector.multi_reduction <maximumf>, %674, %cst_211 [2] : vector<2x8x8xf32> to vector<2x8xf32>
    %676 = vector.shape_cast %675 : vector<2x8xf32> to vector<2x8x1xf32>
    %677 = vector.broadcast %676 : vector<2x8x1xf32> to vector<2x8x8xf32>
    %678 = arith.subf %674, %677 : vector<2x8x8xf32>
    %679 = math.exp %678 : vector<2x8x8xf32>
    %cst_212 = arith.constant dense<0.000000e+00> : vector<2x8xf32>
    %680 = vector.multi_reduction <add>, %679, %cst_212 [2] : vector<2x8x8xf32> to vector<2x8xf32>
    %681 = vector.shape_cast %680 : vector<2x8xf32> to vector<2x8x1xf32>
    %682 = tpu.reciprocal %681 {approx = true} : vector<2x8x1xf32> -> vector<2x8x1xf32>
    %683 = vector.broadcast %682 : vector<2x8x1xf32> to vector<2x8x8xf32>
    %684 = arith.mulf %679, %683 : vector<2x8x8xf32>
    %685 = arith.truncf %684 : vector<2x8x8xf32> to vector<2x8x8xbf16>
    %686 = vector.extract_strided_slice %600 {offsets = [0, 0, 48], sizes = [2, 8, 16], strides = [1, 1, 1]} : vector<2x8x64xbf16> to vector<2x8x16xbf16>
    "tpu.trace_start"() <{level = 10 : i32, message = "bqk,bkd->bqd"}> : () -> ()
    %cst_213 = arith.constant dense<0.000000e+00> : vector<2x8x16xf32>
    %687 = tpu.matmul %685, %686, %cst_213 {dimension_numbers = #tpu.dot_dimension_numbers<[2], [1], [1], [2], [0, 0, 0, 1, 1, 2], [0], [0]>} : vector<2x8x8xbf16>, vector<2x8x16xbf16>, vector<2x8x16xf32> -> vector<2x8x16xf32>
    "tpu.trace_stop"() : () -> ()
    %688 = vector.shape_cast %687 : vector<2x8x16xf32> to vector<16x16xf32>
    %689 = tpu.concatenate %622, %644, %666, %688 in 1 : vector<16x16xf32>, vector<16x16xf32>, vector<16x16xf32>, vector<16x16xf32> -> vector<16x64xf32>
    %690 = arith.truncf %689 : vector<16x64xf32> to vector<16x64xbf16>
    %cst_214 = arith.constant dense<0.000000e+00> : vector<16x64xf32>
    %691 = tpu.matmul %690, %577, %cst_214 {dimension_numbers = #tpu.dot_dimension_numbers<[1], [0], [0], [1], [0, 0, 1, 1], [], []>} : vector<16x64xbf16>, vector<64x64xbf16>, vector<16x64xf32> -> vector<16x64xf32>
    %692 = arith.addf %571, %691 : vector<16x64xf32>
    %c1_215 = arith.constant 1 : index
    %c0_216 = arith.constant 0 : index
    %c0_217 = arith.constant 0 : index
    %693 = vector.load %arg15[%c1_215, %c0_216, %c0_217] : memref<2x1x64xf32, #tpu.memory_space<vmem>>, vector<1x1x64xf32>
    %694 = vector.shape_cast %693 : vector<1x1x64xf32> to vector<1x64xf32>
    %c1_218 = arith.constant 1 : index
    %c0_219 = arith.constant 0 : index
    %c0_220 = arith.constant 0 : index
    %695 = vector.load %arg16[%c1_218, %c0_219, %c0_220] : memref<2x64x64xbf16, #tpu.memory_space<vmem>>, vector<1x64x64xbf16>
    %696 = vector.shape_cast %695 : vector<1x64x64xbf16> to vector<64x64xbf16>
    %c1_221 = arith.constant 1 : index
    %c0_222 = arith.constant 0 : index
    %c0_223 = arith.constant 0 : index
    %697 = vector.load %arg17[%c1_221, %c0_222, %c0_223] : memref<2x64x128xbf16, #tpu.memory_space<vmem>>, vector<1x64x128xbf16>
    %698 = vector.shape_cast %697 : vector<1x64x128xbf16> to vector<64x128xbf16>
    %c1_224 = arith.constant 1 : index
    %c0_225 = arith.constant 0 : index
    %c0_226 = arith.constant 0 : index
    %699 = vector.load %arg18[%c1_224, %c0_225, %c0_226] : memref<2x64x64xbf16, #tpu.memory_space<vmem>>, vector<1x64x64xbf16>
    %700 = vector.shape_cast %699 : vector<1x64x64xbf16> to vector<64x64xbf16>
    %701 = arith.mulf %692, %692 : vector<16x64xf32>
    %cst_227 = arith.constant dense<0.000000e+00> : vector<16xf32>
    %702 = vector.multi_reduction <add>, %701, %cst_227 [1] : vector<16x64xf32> to vector<16xf32>
    %703 = vector.shape_cast %702 : vector<16xf32> to vector<16x1xf32>
    %cst_228 = arith.constant 6.400000e+01 : f32
    %704 = vector.broadcast %cst_228 : f32 to vector<16x1xf32>
    %705 = arith.divf %703, %704 : vector<16x1xf32>
    %cst_229 = arith.constant 9.99999997E-7 : f32
    %706 = vector.broadcast %cst_229 : f32 to vector<16x1xf32>
    %707 = arith.addf %705, %706 : vector<16x1xf32>
    %708 = math.rsqrt %707 : vector<16x1xf32>
    %709 = vector.broadcast %708 : vector<16x1xf32> to vector<16x64xf32>
    %710 = arith.mulf %692, %709 : vector<16x64xf32>
    %711 = vector.broadcast %694 : vector<1x64xf32> to vector<16x64xf32>
    %712 = arith.mulf %710, %711 : vector<16x64xf32>
    %713 = arith.truncf %712 : vector<16x64xf32> to vector<16x64xbf16>
    %cst_230 = arith.constant dense<0.000000e+00> : vector<16x64xf32>
    %714 = tpu.matmul %713, %696, %cst_230 {dimension_numbers = #tpu.dot_dimension_numbers<[1], [0], [0], [1], [0, 0, 1, 1], [], []>} : vector<16x64xbf16>, vector<64x64xbf16>, vector<16x64xf32> -> vector<16x64xf32>
    %cst_231 = arith.constant dense<0.000000e+00> : vector<16x128xf32>
    %715 = tpu.matmul %314, %698, %cst_231 {dimension_numbers = #tpu.dot_dimension_numbers<[1], [0], [0], [1], [0, 0, 1, 1], [], []>} : vector<16x64xbf16>, vector<64x128xbf16>, vector<16x128xf32> -> vector<16x128xf32>
    %716 = vector.extract_strided_slice %715 {offsets = [0, 0], sizes = [16, 64], strides = [1, 1]} : vector<16x128xf32> to vector<16x64xf32>
    %717 = vector.extract_strided_slice %715 {offsets = [0, 64], sizes = [16, 64], strides = [1, 1]} : vector<16x128xf32> to vector<16x64xf32>
    %718 = vector.shape_cast %714 : vector<16x64xf32> to vector<2x8x64xf32>
    %719 = arith.truncf %718 : vector<2x8x64xf32> to vector<2x8x64xbf16>
    %720 = vector.shape_cast %716 : vector<16x64xf32> to vector<2x8x64xf32>
    %721 = arith.truncf %720 : vector<2x8x64xf32> to vector<2x8x64xbf16>
    %722 = vector.shape_cast %717 : vector<16x64xf32> to vector<2x8x64xf32>
    %723 = arith.truncf %722 : vector<2x8x64xf32> to vector<2x8x64xbf16>
    %724 = vector.extract_strided_slice %719 {offsets = [0, 0, 0], sizes = [2, 8, 16], strides = [1, 1, 1]} : vector<2x8x64xbf16> to vector<2x8x16xbf16>
    %725 = vector.extract_strided_slice %721 {offsets = [0, 0, 0], sizes = [2, 8, 16], strides = [1, 1, 1]} : vector<2x8x64xbf16> to vector<2x8x16xbf16>
    "tpu.trace_start"() <{level = 10 : i32, message = "bqd,bkd->bqk"}> : () -> ()
    %cst_232 = arith.constant dense<0.000000e+00> : vector<2x8x8xf32>
    %726 = tpu.matmul %724, %725, %cst_232 {dimension_numbers = #tpu.dot_dimension_numbers<[2], [2], [1], [1], [0, 0, 0, 1, 1, 1], [0], [0]>} : vector<2x8x16xbf16>, vector<2x8x16xbf16>, vector<2x8x8xf32> -> vector<2x8x8xf32>
    "tpu.trace_stop"() : () -> ()
    %cst_233 = arith.constant dense<0xFF800000> : vector<2x8xf32>
    %727 = vector.multi_reduction <maximumf>, %726, %cst_233 [2] : vector<2x8x8xf32> to vector<2x8xf32>
    %728 = vector.shape_cast %727 : vector<2x8xf32> to vector<2x8x1xf32>
    %729 = vector.broadcast %728 : vector<2x8x1xf32> to vector<2x8x8xf32>
    %730 = arith.subf %726, %729 : vector<2x8x8xf32>
    %731 = math.exp %730 : vector<2x8x8xf32>
    %cst_234 = arith.constant dense<0.000000e+00> : vector<2x8xf32>
    %732 = vector.multi_reduction <add>, %731, %cst_234 [2] : vector<2x8x8xf32> to vector<2x8xf32>
    %733 = vector.shape_cast %732 : vector<2x8xf32> to vector<2x8x1xf32>
    %734 = tpu.reciprocal %733 {approx = true} : vector<2x8x1xf32> -> vector<2x8x1xf32>
    %735 = vector.broadcast %734 : vector<2x8x1xf32> to vector<2x8x8xf32>
    %736 = arith.mulf %731, %735 : vector<2x8x8xf32>
    %737 = arith.truncf %736 : vector<2x8x8xf32> to vector<2x8x8xbf16>
    %738 = vector.extract_strided_slice %723 {offsets = [0, 0, 0], sizes = [2, 8, 16], strides = [1, 1, 1]} : vector<2x8x64xbf16> to vector<2x8x16xbf16>
    "tpu.trace_start"() <{level = 10 : i32, message = "bqk,bkd->bqd"}> : () -> ()
    %cst_235 = arith.constant dense<0.000000e+00> : vector<2x8x16xf32>
    %739 = tpu.matmul %737, %738, %cst_235 {dimension_numbers = #tpu.dot_dimension_numbers<[2], [1], [1], [2], [0, 0, 0, 1, 1, 2], [0], [0]>} : vector<2x8x8xbf16>, vector<2x8x16xbf16>, vector<2x8x16xf32> -> vector<2x8x16xf32>
    "tpu.trace_stop"() : () -> ()
    %740 = vector.shape_cast %739 : vector<2x8x16xf32> to vector<16x16xf32>
    %741 = vector.extract_strided_slice %719 {offsets = [0, 0, 16], sizes = [2, 8, 16], strides = [1, 1, 1]} : vector<2x8x64xbf16> to vector<2x8x16xbf16>
    %742 = vector.extract_strided_slice %721 {offsets = [0, 0, 16], sizes = [2, 8, 16], strides = [1, 1, 1]} : vector<2x8x64xbf16> to vector<2x8x16xbf16>
    "tpu.trace_start"() <{level = 10 : i32, message = "bqd,bkd->bqk"}> : () -> ()
    %cst_236 = arith.constant dense<0.000000e+00> : vector<2x8x8xf32>
    %743 = tpu.matmul %741, %742, %cst_236 {dimension_numbers = #tpu.dot_dimension_numbers<[2], [2], [1], [1], [0, 0, 0, 1, 1, 1], [0], [0]>} : vector<2x8x16xbf16>, vector<2x8x16xbf16>, vector<2x8x8xf32> -> vector<2x8x8xf32>
    "tpu.trace_stop"() : () -> ()
    %cst_237 = arith.constant dense<0xFF800000> : vector<2x8xf32>
    %744 = vector.multi_reduction <maximumf>, %743, %cst_237 [2] : vector<2x8x8xf32> to vector<2x8xf32>
    %745 = vector.shape_cast %744 : vector<2x8xf32> to vector<2x8x1xf32>
    %746 = vector.broadcast %745 : vector<2x8x1xf32> to vector<2x8x8xf32>
    %747 = arith.subf %743, %746 : vector<2x8x8xf32>
    %748 = math.exp %747 : vector<2x8x8xf32>
    %cst_238 = arith.constant dense<0.000000e+00> : vector<2x8xf32>
    %749 = vector.multi_reduction <add>, %748, %cst_238 [2] : vector<2x8x8xf32> to vector<2x8xf32>
    %750 = vector.shape_cast %749 : vector<2x8xf32> to vector<2x8x1xf32>
    %751 = tpu.reciprocal %750 {approx = true} : vector<2x8x1xf32> -> vector<2x8x1xf32>
    %752 = vector.broadcast %751 : vector<2x8x1xf32> to vector<2x8x8xf32>
    %753 = arith.mulf %748, %752 : vector<2x8x8xf32>
    %754 = arith.truncf %753 : vector<2x8x8xf32> to vector<2x8x8xbf16>
    %755 = vector.extract_strided_slice %723 {offsets = [0, 0, 16], sizes = [2, 8, 16], strides = [1, 1, 1]} : vector<2x8x64xbf16> to vector<2x8x16xbf16>
    "tpu.trace_start"() <{level = 10 : i32, message = "bqk,bkd->bqd"}> : () -> ()
    %cst_239 = arith.constant dense<0.000000e+00> : vector<2x8x16xf32>
    %756 = tpu.matmul %754, %755, %cst_239 {dimension_numbers = #tpu.dot_dimension_numbers<[2], [1], [1], [2], [0, 0, 0, 1, 1, 2], [0], [0]>} : vector<2x8x8xbf16>, vector<2x8x16xbf16>, vector<2x8x16xf32> -> vector<2x8x16xf32>
    "tpu.trace_stop"() : () -> ()
    %757 = vector.shape_cast %756 : vector<2x8x16xf32> to vector<16x16xf32>
    %758 = vector.extract_strided_slice %719 {offsets = [0, 0, 32], sizes = [2, 8, 16], strides = [1, 1, 1]} : vector<2x8x64xbf16> to vector<2x8x16xbf16>
    %759 = vector.extract_strided_slice %721 {offsets = [0, 0, 32], sizes = [2, 8, 16], strides = [1, 1, 1]} : vector<2x8x64xbf16> to vector<2x8x16xbf16>
    "tpu.trace_start"() <{level = 10 : i32, message = "bqd,bkd->bqk"}> : () -> ()
    %cst_240 = arith.constant dense<0.000000e+00> : vector<2x8x8xf32>
    %760 = tpu.matmul %758, %759, %cst_240 {dimension_numbers = #tpu.dot_dimension_numbers<[2], [2], [1], [1], [0, 0, 0, 1, 1, 1], [0], [0]>} : vector<2x8x16xbf16>, vector<2x8x16xbf16>, vector<2x8x8xf32> -> vector<2x8x8xf32>
    "tpu.trace_stop"() : () -> ()
    %cst_241 = arith.constant dense<0xFF800000> : vector<2x8xf32>
    %761 = vector.multi_reduction <maximumf>, %760, %cst_241 [2] : vector<2x8x8xf32> to vector<2x8xf32>
    %762 = vector.shape_cast %761 : vector<2x8xf32> to vector<2x8x1xf32>
    %763 = vector.broadcast %762 : vector<2x8x1xf32> to vector<2x8x8xf32>
    %764 = arith.subf %760, %763 : vector<2x8x8xf32>
    %765 = math.exp %764 : vector<2x8x8xf32>
    %cst_242 = arith.constant dense<0.000000e+00> : vector<2x8xf32>
    %766 = vector.multi_reduction <add>, %765, %cst_242 [2] : vector<2x8x8xf32> to vector<2x8xf32>
    %767 = vector.shape_cast %766 : vector<2x8xf32> to vector<2x8x1xf32>
    %768 = tpu.reciprocal %767 {approx = true} : vector<2x8x1xf32> -> vector<2x8x1xf32>
    %769 = vector.broadcast %768 : vector<2x8x1xf32> to vector<2x8x8xf32>
    %770 = arith.mulf %765, %769 : vector<2x8x8xf32>
    %771 = arith.truncf %770 : vector<2x8x8xf32> to vector<2x8x8xbf16>
    %772 = vector.extract_strided_slice %723 {offsets = [0, 0, 32], sizes = [2, 8, 16], strides = [1, 1, 1]} : vector<2x8x64xbf16> to vector<2x8x16xbf16>
    "tpu.trace_start"() <{level = 10 : i32, message = "bqk,bkd->bqd"}> : () -> ()
    %cst_243 = arith.constant dense<0.000000e+00> : vector<2x8x16xf32>
    %773 = tpu.matmul %771, %772, %cst_243 {dimension_numbers = #tpu.dot_dimension_numbers<[2], [1], [1], [2], [0, 0, 0, 1, 1, 2], [0], [0]>} : vector<2x8x8xbf16>, vector<2x8x16xbf16>, vector<2x8x16xf32> -> vector<2x8x16xf32>
    "tpu.trace_stop"() : () -> ()
    %774 = vector.shape_cast %773 : vector<2x8x16xf32> to vector<16x16xf32>
    %775 = vector.extract_strided_slice %719 {offsets = [0, 0, 48], sizes = [2, 8, 16], strides = [1, 1, 1]} : vector<2x8x64xbf16> to vector<2x8x16xbf16>
    %776 = vector.extract_strided_slice %721 {offsets = [0, 0, 48], sizes = [2, 8, 16], strides = [1, 1, 1]} : vector<2x8x64xbf16> to vector<2x8x16xbf16>
    "tpu.trace_start"() <{level = 10 : i32, message = "bqd,bkd->bqk"}> : () -> ()
    %cst_244 = arith.constant dense<0.000000e+00> : vector<2x8x8xf32>
    %777 = tpu.matmul %775, %776, %cst_244 {dimension_numbers = #tpu.dot_dimension_numbers<[2], [2], [1], [1], [0, 0, 0, 1, 1, 1], [0], [0]>} : vector<2x8x16xbf16>, vector<2x8x16xbf16>, vector<2x8x8xf32> -> vector<2x8x8xf32>
    "tpu.trace_stop"() : () -> ()
    %cst_245 = arith.constant dense<0xFF800000> : vector<2x8xf32>
    %778 = vector.multi_reduction <maximumf>, %777, %cst_245 [2] : vector<2x8x8xf32> to vector<2x8xf32>
    %779 = vector.shape_cast %778 : vector<2x8xf32> to vector<2x8x1xf32>
    %780 = vector.broadcast %779 : vector<2x8x1xf32> to vector<2x8x8xf32>
    %781 = arith.subf %777, %780 : vector<2x8x8xf32>
    %782 = math.exp %781 : vector<2x8x8xf32>
    %cst_246 = arith.constant dense<0.000000e+00> : vector<2x8xf32>
    %783 = vector.multi_reduction <add>, %782, %cst_246 [2] : vector<2x8x8xf32> to vector<2x8xf32>
    %784 = vector.shape_cast %783 : vector<2x8xf32> to vector<2x8x1xf32>
    %785 = tpu.reciprocal %784 {approx = true} : vector<2x8x1xf32> -> vector<2x8x1xf32>
    %786 = vector.broadcast %785 : vector<2x8x1xf32> to vector<2x8x8xf32>
    %787 = arith.mulf %782, %786 : vector<2x8x8xf32>
    %788 = arith.truncf %787 : vector<2x8x8xf32> to vector<2x8x8xbf16>
    %789 = vector.extract_strided_slice %723 {offsets = [0, 0, 48], sizes = [2, 8, 16], strides = [1, 1, 1]} : vector<2x8x64xbf16> to vector<2x8x16xbf16>
    "tpu.trace_start"() <{level = 10 : i32, message = "bqk,bkd->bqd"}> : () -> ()
    %cst_247 = arith.constant dense<0.000000e+00> : vector<2x8x16xf32>
    %790 = tpu.matmul %788, %789, %cst_247 {dimension_numbers = #tpu.dot_dimension_numbers<[2], [1], [1], [2], [0, 0, 0, 1, 1, 2], [0], [0]>} : vector<2x8x8xbf16>, vector<2x8x16xbf16>, vector<2x8x16xf32> -> vector<2x8x16xf32>
    "tpu.trace_stop"() : () -> ()
    %791 = vector.shape_cast %790 : vector<2x8x16xf32> to vector<16x16xf32>
    %792 = tpu.concatenate %740, %757, %774, %791 in 1 : vector<16x16xf32>, vector<16x16xf32>, vector<16x16xf32>, vector<16x16xf32> -> vector<16x64xf32>
    %793 = arith.truncf %792 : vector<16x64xf32> to vector<16x64xbf16>
    %cst_248 = arith.constant dense<0.000000e+00> : vector<16x64xf32>
    %794 = tpu.matmul %793, %700, %cst_248 {dimension_numbers = #tpu.dot_dimension_numbers<[1], [0], [0], [1], [0, 0, 1, 1], [], []>} : vector<16x64xbf16>, vector<64x64xbf16>, vector<16x64xf32> -> vector<16x64xf32>
    %795 = arith.addf %692, %794 : vector<16x64xf32>
    %c1_249 = arith.constant 1 : index
    %c0_250 = arith.constant 0 : index
    %c0_251 = arith.constant 0 : index
    %796 = vector.load %arg19[%c1_249, %c0_250, %c0_251] : memref<2x1x64xf32, #tpu.memory_space<vmem>>, vector<1x1x64xf32>
    %797 = vector.shape_cast %796 : vector<1x1x64xf32> to vector<1x64xf32>
    %c1_252 = arith.constant 1 : index
    %c0_253 = arith.constant 0 : index
    %c0_254 = arith.constant 0 : index
    %798 = vector.load %arg20[%c1_252, %c0_253, %c0_254] : memref<2x64x128xbf16, #tpu.memory_space<vmem>>, vector<1x64x128xbf16>
    %799 = vector.shape_cast %798 : vector<1x64x128xbf16> to vector<64x128xbf16>
    %c1_255 = arith.constant 1 : index
    %c0_256 = arith.constant 0 : index
    %c0_257 = arith.constant 0 : index
    %800 = vector.load %arg21[%c1_255, %c0_256, %c0_257] : memref<2x128x64xbf16, #tpu.memory_space<vmem>>, vector<1x128x64xbf16>
    %801 = vector.shape_cast %800 : vector<1x128x64xbf16> to vector<128x64xbf16>
    %802 = arith.mulf %795, %795 : vector<16x64xf32>
    %cst_258 = arith.constant dense<0.000000e+00> : vector<16xf32>
    %803 = vector.multi_reduction <add>, %802, %cst_258 [1] : vector<16x64xf32> to vector<16xf32>
    %804 = vector.shape_cast %803 : vector<16xf32> to vector<16x1xf32>
    %cst_259 = arith.constant 6.400000e+01 : f32
    %805 = vector.broadcast %cst_259 : f32 to vector<16x1xf32>
    %806 = arith.divf %804, %805 : vector<16x1xf32>
    %cst_260 = arith.constant 9.99999997E-7 : f32
    %807 = vector.broadcast %cst_260 : f32 to vector<16x1xf32>
    %808 = arith.addf %806, %807 : vector<16x1xf32>
    %809 = math.rsqrt %808 : vector<16x1xf32>
    %810 = vector.broadcast %809 : vector<16x1xf32> to vector<16x64xf32>
    %811 = arith.mulf %795, %810 : vector<16x64xf32>
    %812 = vector.broadcast %797 : vector<1x64xf32> to vector<16x64xf32>
    %813 = arith.mulf %811, %812 : vector<16x64xf32>
    %814 = arith.truncf %813 : vector<16x64xf32> to vector<16x64xbf16>
    %cst_261 = arith.constant dense<0.000000e+00> : vector<16x128xf32>
    %815 = tpu.matmul %814, %799, %cst_261 {dimension_numbers = #tpu.dot_dimension_numbers<[1], [0], [0], [1], [0, 0, 1, 1], [], []>} : vector<16x64xbf16>, vector<64x128xbf16>, vector<16x128xf32> -> vector<16x128xf32>
    %cst_262 = arith.constant 0.000000e+00 : f32
    %816 = vector.broadcast %cst_262 : f32 to vector<16x128xf32>
    %817 = arith.maximumf %815, %816 : vector<16x128xf32>
    %818 = arith.truncf %817 : vector<16x128xf32> to vector<16x128xbf16>
    %cst_263 = arith.constant dense<0.000000e+00> : vector<16x64xf32>
    %819 = tpu.matmul %818, %801, %cst_263 {dimension_numbers = #tpu.dot_dimension_numbers<[1], [0], [0], [1], [0, 0, 1, 1], [], []>} : vector<16x128xbf16>, vector<128x64xbf16>, vector<16x64xf32> -> vector<16x64xf32>
    %820 = arith.addf %795, %819 : vector<16x64xf32>
    %c0_264 = arith.constant 0 : index
    %c0_265 = arith.constant 0 : index
    %821 = vector.load %arg22[%c0_264, %c0_265] : memref<1x64xf32, #tpu.memory_space<vmem>>, vector<1x64xf32>
    %822 = arith.mulf %820, %820 : vector<16x64xf32>
    %cst_266 = arith.constant dense<0.000000e+00> : vector<16xf32>
    %823 = vector.multi_reduction <add>, %822, %cst_266 [1] : vector<16x64xf32> to vector<16xf32>
    %824 = vector.shape_cast %823 : vector<16xf32> to vector<16x1xf32>
    %cst_267 = arith.constant 6.400000e+01 : f32
    %825 = vector.broadcast %cst_267 : f32 to vector<16x1xf32>
    %826 = arith.divf %824, %825 : vector<16x1xf32>
    %cst_268 = arith.constant 9.99999997E-7 : f32
    %827 = vector.broadcast %cst_268 : f32 to vector<16x1xf32>
    %828 = arith.addf %826, %827 : vector<16x1xf32>
    %829 = math.rsqrt %828 : vector<16x1xf32>
    %830 = vector.broadcast %829 : vector<16x1xf32> to vector<16x64xf32>
    %831 = arith.mulf %820, %830 : vector<16x64xf32>
    %832 = vector.broadcast %821 : vector<1x64xf32> to vector<16x64xf32>
    %833 = arith.mulf %831, %832 : vector<16x64xf32>
    %cst_269 = arith.constant 1.250000e-01 : f32
    %834 = vector.broadcast %cst_269 : f32 to vector<16x64xf32>
    %835 = arith.mulf %833, %834 : vector<16x64xf32>
    %836 = arith.truncf %835 : vector<16x64xf32> to vector<16x64xbf16>
    %c0_270 = arith.constant 0 : index
    %c0_271 = arith.constant 0 : index
    %837 = vector.load %arg23[%c0_270, %c0_271] : memref<64x256xbf16, #tpu.memory_space<vmem>>, vector<64x256xbf16>
    %cst_272 = arith.constant dense<0.000000e+00> : vector<16x256xf32>
    %838 = tpu.matmul %836, %837, %cst_272 {dimension_numbers = #tpu.dot_dimension_numbers<[1], [0], [0], [1], [0, 0, 1, 1], [], []>} : vector<16x64xbf16>, vector<64x256xbf16>, vector<16x256xf32> -> vector<16x256xf32>
    %c0_273 = arith.constant 0 : index
    %c0_274 = arith.constant 0 : index
    %839 = vector.load %arg24[%c0_273, %c0_274] : memref<16x256xf32, #tpu.memory_space<vmem>>, vector<16x256xf32>
    tpu.vector_store %arg24[%c0_273, %c0_274], %838 {strides = array<i32>} : memref<16x256xf32, #tpu.memory_space<vmem>>, vector<16x256xf32>,
    return
  }
}

</mosaic_0001>

<llo_original>
// kernel: t5_forward.1
$region0: #{t5_forward.1}
  #allocation0 [shape = 'u32[]', space=smem, size = 0x4, offset = 0x4, fixed_abs, tag = 'smem constant byte address 0x4 - core index']
  #allocation1 [shape = 'u32[144,128]{1,0:T(1,128)}', space=vmem, size = 0x12000, scoped, tag = 'internal scratch']
  %s0 = inlined_call_operand.vmem [shape: s32[16,1], index: 0, kind: input, shape index: {}]
  %s1 = inlined_call_operand.vmem [shape: s32[16,1], index: 1, kind: input, shape index: {}]
  %s2 = inlined_call_operand.vmem [shape: f32[256,64], index: 2, kind: input, shape index: {}]
  %s3 = inlined_call_operand.vmem [shape: f32[4,8,8], index: 3, kind: input, shape index: {}]
  %s4 = inlined_call_operand.vmem [shape: f32[4,8,8], index: 4, kind: input, shape index: {}]
  %s5 = inlined_call_operand.vmem [shape: f32[2,1,64], index: 5, kind: input, shape index: {}]
  %s6 = inlined_call_operand.vmem [shape: bf16[2,64,192], index: 6, kind: input, shape index: {}]
  %s7 = inlined_call_operand.vmem [shape: bf16[2,64,64], index: 7, kind: input, shape index: {}]
  %s8 = inlined_call_operand.vmem [shape: f32[2,1,64], index: 8, kind: input, shape index: {}]
  %s9 = inlined_call_operand.vmem [shape: bf16[2,64,128], index: 9, kind: input, shape index: {}]
  %s10 = inlined_call_operand.vmem [shape: bf16[2,128,64], index: 10, kind: input, shape index: {}]
  %s11 = inlined_call_operand.vmem [shape: f32[1,64], index: 11, kind: input, shape index: {}]
  %s12 = inlined_call_operand.vmem [shape: f32[2,1,64], index: 12, kind: input, shape index: {}]
  %s13 = inlined_call_operand.vmem [shape: bf16[2,64,192], index: 13, kind: input, shape index: {}]
  %s14 = inlined_call_operand.vmem [shape: bf16[2,64,64], index: 14, kind: input, shape index: {}]
  %s15 = inlined_call_operand.vmem [shape: f32[2,1,64], index: 15, kind: input, shape index: {}]
  %s16 = inlined_call_operand.vmem [shape: bf16[2,64,64], index: 16, kind: input, shape index: {}]
  %s17 = inlined_call_operand.vmem [shape: bf16[2,64,128], index: 17, kind: input, shape index: {}]
  %s18 = inlined_call_operand.vmem [shape: bf16[2,64,64], index: 18, kind: input, shape index: {}]
  %s19 = inlined_call_operand.vmem [shape: f32[2,1,64], index: 19, kind: input, shape index: {}]
  %s20 = inlined_call_operand.vmem [shape: bf16[2,64,128], index: 20, kind: input, shape index: {}]
  %s21 = inlined_call_operand.vmem [shape: bf16[2,128,64], index: 21, kind: input, shape index: {}]
  %s22 = inlined_call_operand.vmem [shape: f32[1,64], index: 22, kind: input, shape index: {}]
  %s23 = inlined_call_operand.vmem [shape: bf16[64,256], index: 23, kind: input, shape index: {}]
  %s24 = inlined_call_operand.hbm [shape: f32[16,256], index: 24, kind: output, shape index: {}]
  %s25 = sld [smem:[#allocation0]]
  $region106: #{t5_forward.1} parent=0
    _
  %s27 = ssub.s32 1, %s25
  %s28 = scalar_select 0, %s27, %s25
  $region1: #{t5_forward.1} parent=0
    #allocation2 [shape = 'u8[16384]{0}', space=vmem, size = 0x4000, scoped, tag = 'output window, operand 0, single buffered']
    #allocation3 [shape = 's32[1]{0}', space=sflag, size = 0x4, scoped, tag = 'scoped memory for t5_forward.1']
    %29 = vsyncpa [#allocation3], 0
    // Predicated region
    $region2: #{t5_forward.1} parent=1 // pred_check
      _
    $region3: #{t5_forward.1} parent=1 // pred_check_branch
      %31 = sbr.rel (0) target = $region5
    $region4: #{t5_forward.1} parent=1 // pred_region
      _
    $region5: #{t5_forward.1} parent=1 // pred_fallthru
      _
    // Predicated region
    $region6: #{t5_forward.1} parent=1 // pred_check
      _
    $region7: #{t5_forward.1} parent=1 // pred_check_branch
      %33 = sbr.rel (0) target = $region9
    $region8: #{t5_forward.1} parent=1 // pred_region
      _
    $region9: #{t5_forward.1} parent=1 // pred_fallthru
      _
    // Predicated region
    $region10: #{t5_forward.1} parent=1 // pred_check
      _
    $region11: #{t5_forward.1} parent=1 // pred_check_branch
      %35 = sbr.rel (0) target = $region13
    $region12: #{t5_forward.1} parent=1 // pred_region
      _
    $region13: #{t5_forward.1} parent=1 // pred_fallthru
      _
    // Predicated region
    $region14: #{t5_forward.1} parent=1 // pred_check
      _
    $region15: #{t5_forward.1} parent=1 // pred_check_branch
      %37 = sbr.rel (0) target = $region17
    $region16: #{t5_forward.1} parent=1 // pred_region
      _
    $region17: #{t5_forward.1} parent=1 // pred_fallthru
      _
    // Predicated region
    $region18: #{t5_forward.1} parent=1 // pred_check
      _
    $region19: #{t5_forward.1} parent=1 // pred_check_branch
      %39 = sbr.rel (0) target = $region21
    $region20: #{t5_forward.1} parent=1 // pred_region
      _
    $region21: #{t5_forward.1} parent=1 // pred_fallthru
      _
    // Predicated region
    $region22: #{t5_forward.1} parent=1 // pred_check
      _
    $region23: #{t5_forward.1} parent=1 // pred_check_branch
      %41 = sbr.rel (0) target = $region25
    $region24: #{t5_forward.1} parent=1 // pred_region
      _
    $region25: #{t5_forward.1} parent=1 // pred_fallthru
      _
    // Predicated region
    $region26: #{t5_forward.1} parent=1 // pred_check
      _
    $region27: #{t5_forward.1} parent=1 // pred_check_branch
      %43 = sbr.rel (0) target = $region29
    $region28: #{t5_forward.1} parent=1 // pred_region
      _
    $region29: #{t5_forward.1} parent=1 // pred_fallthru
      _
    // Predicated region
    $region30: #{t5_forward.1} parent=1 // pred_check
      _
    $region31: #{t5_forward.1} parent=1 // pred_check_branch
      %45 = sbr.rel (0) target = $region33
    $region32: #{t5_forward.1} parent=1 // pred_region
      _
    $region33: #{t5_forward.1} parent=1 // pred_fallthru
      _
    // Predicated region
    $region34: #{t5_forward.1} parent=1 // pred_check
      _
    $region35: #{t5_forward.1} parent=1 // pred_check_branch
      %47 = sbr.rel (0) target = $region37
    $region36: #{t5_forward.1} parent=1 // pred_region
      _
    $region37: #{t5_forward.1} parent=1 // pred_fallthru
      _
    // Predicated region
    $region38: #{t5_forward.1} parent=1 // pred_check
      _
    $region39: #{t5_forward.1} parent=1 // pred_check_branch
      %49 = sbr.rel (0) target = $region41
    $region40: #{t5_forward.1} parent=1 // pred_region
      _
    $region41: #{t5_forward.1} parent=1 // pred_fallthru
      _
    // Predicated region
    $region42: #{t5_forward.1} parent=1 // pred_check
      _
    $region43: #{t5_forward.1} parent=1 // pred_check_branch
      %51 = sbr.rel (0) target = $region45
    $region44: #{t5_forward.1} parent=1 // pred_region
      _
    $region45: #{t5_forward.1} parent=1 // pred_fallthru
      _
    // Predicated region
    $region46: #{t5_forward.1} parent=1 // pred_check
      _
    $region47: #{t5_forward.1} parent=1 // pred_check_branch
      %53 = sbr.rel (0) target = $region49
    $region48: #{t5_forward.1} parent=1 // pred_region
      _
    $region49: #{t5_forward.1} parent=1 // pred_fallthru
      _
    // Predicated region
    $region50: #{t5_forward.1} parent=1 // pred_check
      _
    $region51: #{t5_forward.1} parent=1 // pred_check_branch
      %55 = sbr.rel (0) target = $region53
    $region52: #{t5_forward.1} parent=1 // pred_region
      _
    $region53: #{t5_forward.1} parent=1 // pred_fallthru
      _
    // Predicated region
    $region54: #{t5_forward.1} parent=1 // pred_check
      _
    $region55: #{t5_forward.1} parent=1 // pred_check_branch
      %57 = sbr.rel (0) target = $region57
    $region56: #{t5_forward.1} parent=1 // pred_region
      _
    $region57: #{t5_forward.1} parent=1 // pred_fallthru
      _
    // Predicated region
    $region58: #{t5_forward.1} parent=1 // pred_check
      _
    $region59: #{t5_forward.1} parent=1 // pred_check_branch
      %59 = sbr.rel (0) target = $region61
    $region60: #{t5_forward.1} parent=1 // pred_region
      _
    $region61: #{t5_forward.1} parent=1 // pred_fallthru
      _
    // Predicated region
    $region62: #{t5_forward.1} parent=1 // pred_check
      _
    $region63: #{t5_forward.1} parent=1 // pred_check_branch
      %61 = sbr.rel (0) target = $region65
    $region64: #{t5_forward.1} parent=1 // pred_region
      _
    $region65: #{t5_forward.1} parent=1 // pred_fallthru
      _
    // Predicated region
    $region66: #{t5_forward.1} parent=1 // pred_check
      _
    $region67: #{t5_forward.1} parent=1 // pred_check_branch
      %63 = sbr.rel (0) target = $region69
    $region68: #{t5_forward.1} parent=1 // pred_region
      _
    $region69: #{t5_forward.1} parent=1 // pred_fallthru
      _
    // Predicated region
    $region70: #{t5_forward.1} parent=1 // pred_check
      _
    $region71: #{t5_forward.1} parent=1 // pred_check_branch
      %65 = sbr.rel (0) target = $region73
    $region72: #{t5_forward.1} parent=1 // pred_region
      _
    $region73: #{t5_forward.1} parent=1 // pred_fallthru
      _
    // Predicated region
    $region74: #{t5_forward.1} parent=1 // pred_check
      _
    $region75: #{t5_forward.1} parent=1 // pred_check_branch
      %67 = sbr.rel (0) target = $region77
    $region76: #{t5_forward.1} parent=1 // pred_region
      _
    $region77: #{t5_forward.1} parent=1 // pred_fallthru
      _
    // Predicated region
    $region78: #{t5_forward.1} parent=1 // pred_check
      _
    $region79: #{t5_forward.1} parent=1 // pred_check_branch
      %69 = sbr.rel (0) target = $region81
    $region80: #{t5_forward.1} parent=1 // pred_region
      _
    $region81: #{t5_forward.1} parent=1 // pred_fallthru
      _
    // Predicated region
    $region82: #{t5_forward.1} parent=1 // pred_check
      _
    $region83: #{t5_forward.1} parent=1 // pred_check_branch
      %71 = sbr.rel (0) target = $region85
    $region84: #{t5_forward.1} parent=1 // pred_region
      _
    $region85: #{t5_forward.1} parent=1 // pred_fallthru
      _
    // Predicated region
    $region86: #{t5_forward.1} parent=1 // pred_check
      _
    $region87: #{t5_forward.1} parent=1 // pred_check_branch
      %73 = sbr.rel (0) target = $region89
    $region88: #{t5_forward.1} parent=1 // pred_region
      _
    $region89: #{t5_forward.1} parent=1 // pred_fallthru
      _
    // Predicated region
    $region90: #{t5_forward.1} parent=1 // pred_check
      _
    $region91: #{t5_forward.1} parent=1 // pred_check_branch
      %75 = sbr.rel (0) target = $region93
    $region92: #{t5_forward.1} parent=1 // pred_region
      _
    $region93: #{t5_forward.1} parent=1 // pred_fallthru
      _
    // Predicated region
    $region94: #{t5_forward.1} parent=1 // pred_check
      _
    $region95: #{t5_forward.1} parent=1 // pred_check_branch
      %77 = sbr.rel (0) target = $region97
    $region96: #{t5_forward.1} parent=1 // pred_region
      _
    $region97: #{t5_forward.1} parent=1 // pred_fallthru
      _
    %v79 = vld [vmem:[%s2] sm:$0xff]
    %v80 = vld [vmem:[%s2 + $0x8] sm:$0xff]
    %v81 = vld [vmem:[%s2 + $0x10] sm:$0xff]
    %v82 = vld [vmem:[%s2 + $0x18] sm:$0xff]
    %v83 = vld [vmem:[%s2 + $0x20] sm:$0xff]
    %v84 = vld [vmem:[%s2 + $0x28] sm:$0xff]
    %v85 = vld [vmem:[%s2 + $0x30] sm:$0xff]
    %v86 = vld [vmem:[%s2 + $0x38] sm:$0xff]
    %v87 = vld [vmem:[%s2 + $0x40] sm:$0xff]
    %v88 = vld [vmem:[%s2 + $0x48] sm:$0xff]
    %v89 = vld [vmem:[%s2 + $0x50] sm:$0xff]
    %v90 = vld [vmem:[%s2 + $0x58] sm:$0xff]
    %v91 = vld [vmem:[%s2 + $0x60] sm:$0xff]
    %v92 = vld [vmem:[%s2 + $0x68] sm:$0xff]
    %v93 = vld [vmem:[%s2 + $0x70] sm:$0xff]
    %v94 = vld [vmem:[%s2 + $0x78] sm:$0xff]
    %v95 = vld [vmem:[%s2 + $0x80] sm:$0xff]
    %v96 = vld [vmem:[%s2 + $0x88] sm:$0xff]
    %v97 = vld [vmem:[%s2 + $0x90] sm:$0xff]
    %v98 = vld [vmem:[%s2 + $0x98] sm:$0xff]
    %v99 = vld [vmem:[%s2 + $0xa0] sm:$0xff]
    %v100 = vld [vmem:[%s2 + $0xa8] sm:$0xff]
    %v101 = vld [vmem:[%s2 + $0xb0] sm:$0xff]
    %v102 = vld [vmem:[%s2 + $0xb8] sm:$0xff]
    %v103 = vld [vmem:[%s2 + $0xc0] sm:$0xff]
    %v104 = vld [vmem:[%s2 + $0xc8] sm:$0xff]
    %v105 = vld [vmem:[%s2 + $0xd0] sm:$0xff]
    %v106 = vld [vmem:[%s2 + $0xd8] sm:$0xff]
    %v107 = vld [vmem:[%s2 + $0xe0] sm:$0xff]
    %v108 = vld [vmem:[%s2 + $0xe8] sm:$0xff]
    %v109 = vld [vmem:[%s2 + $0xf0] sm:$0xff]
    %v110 = vld [vmem:[%s2 + $0xf8] sm:$0xff]
    %v111 = vld [vmem:[%s0] sm:$0xff]
    %v112 = vld [vmem:[%s0 + $0x8] sm:$0xff]
    %v113 = vlaneseq
    %v114 = vand.u32 %v113, 127
    %v115 = vadd.s32 %v114, 128
    %116 = vset.pattern.permute.xlu0 0
    %117 = vperm.xlu0 %116, %v111
    %v118 = vpop.permute.xlu0 %117
    %119 = vset.pattern.permute.xlu0 0
    %120 = vperm.xlu0 %119, %v112
    %v121 = vpop.permute.xlu0 %120
    %vm122 = vcmp.eq.s32.totalorder %v118, %v114
    %vm123 = vcmp.eq.s32.totalorder %v118, %v115
    %vm124 = vcmp.eq.s32.totalorder %v121, %v114
    %vm125 = vcmp.eq.s32.totalorder %v121, %v115
    %v126 = vsel %vm122, 1, 0
    %v127 = vsel %vm123, 1, 0
    %v128 = vsel %vm124, 1, 0
    %v129 = vsel %vm125, 1, 0
    %v130 = vcvt.s32.f32 %v126
    %v131 = vcvt.s32.f32 %v127
    %v132 = vcvt.s32.f32 %v128
    %v133 = vcvt.s32.f32 %v129
    %134 = vmatprep.subr.mxu0 0.0
    %135 = vmatpush1.msra.mxu0 %v79
    %136 = vmatprep.subr.mxu0 0.0
    %137 = vmatpush1.msra.mxu0 %v80
    %138 = vmatprep.subr.mxu0 0.0
    %139 = vmatpush1.msra.mxu0 %v81
    %140 = vmatprep.subr.mxu0 0.0
    %141 = vmatpush1.msra.mxu0 %v82
    %142 = vmatprep.subr.mxu0 0.0
    %143 = vmatpush1.msra.mxu0 %v83
    %144 = vmatprep.subr.mxu0 0.0
    %145 = vmatpush1.msra.mxu0 %v84
    %146 = vmatprep.subr.mxu0 0.0
    %147 = vmatpush1.msra.mxu0 %v85
    %148 = vmatprep.subr.mxu0 0.0
    %149 = vmatpush1.msra.mxu0 %v86
    %150 = vmatprep.subr.mxu0 0.0
    %151 = vmatpush1.msra.mxu0 %v87
    %152 = vmatprep.subr.mxu0 0.0
    %153 = vmatpush1.msra.mxu0 %v88
    %154 = vmatprep.subr.mxu0 0.0
    %155 = vmatpush1.msra.mxu0 %v89
    %156 = vmatprep.subr.mxu0 0.0
    %157 = vmatpush1.msra.mxu0 %v90
    %158 = vmatprep.subr.mxu0 0.0
    %159 = vmatpush1.msra.mxu0 %v91
    %160 = vmatprep.subr.mxu0 0.0
    %161 = vmatpush1.msra.mxu0 %v92
    %162 = vmatprep.subr.mxu0 0.0
    %163 = vmatpush1.msra.mxu0 %v93
    %164 = vmatprep.subr.mxu0 0.0
    %165 = vmatpush1.msra.mxu0 %v94
    %166 = vmatprep.subr.mxu0 0.0
    %167 = vmatpush1.msra.mxu0 %v95
    %168 = vmatprep.subr.mxu0 0.0
    %169 = vmatpush1.msra.mxu0 %v96
    %170 = vmatprep.subr.mxu0 0.0
    %171 = vmatpush1.msra.mxu0 %v97
    %172 = vmatprep.subr.mxu0 0.0
    %173 = vmatpush1.msra.mxu0 %v98
    %174 = vmatprep.subr.mxu0 0.0
    %175 = vmatpush1.msra.mxu0 %v99
    %176 = vmatprep.subr.mxu0 0.0
    %177 = vmatpush1.msra.mxu0 %v100
    %178 = vmatprep.subr.mxu0 0.0
    %179 = vmatpush1.msra.mxu0 %v101
    %180 = vmatprep.subr.mxu0 0.0
    %181 = vmatpush1.msra.mxu0 %v102
    %182 = vmatprep.subr.mxu0 0.0
    %183 = vmatpush1.msra.mxu0 %v103
    %184 = vmatprep.subr.mxu0 0.0
    %185 = vmatpush1.msra.mxu0 %v104
    %186 = vmatprep.subr.mxu0 0.0
    %187 = vmatpush1.msra.mxu0 %v105
    %188 = vmatprep.subr.mxu0 0.0
    %189 = vmatpush1.msra.mxu0 %v106
    %190 = vmatprep.subr.mxu0 0.0
    %191 = vmatpush1.msra.mxu0 %v107
    %192 = vmatprep.subr.mxu0 0.0
    %193 = vmatpush1.msra.mxu0 %v108
    %194 = vmatprep.subr.mxu0 0.0
    %195 = vmatpush1.msra.mxu0 %v109
    %196 = vmatprep.subr.mxu0 0.0
    %197 = vmatpush1.msra.mxu0 %v110
    %198 = vmatprep.mubr.f32.mxu0 %v131
    %199 = vmatmul.mubr.f32.gmra.mrb[0].mxu0 %v130
    %v200 = vpop.f32.mrb[0].mxu0
    %v201 = vadd.f32 0.0, %v200
    %v202 = vpop.f32.mrb[0].mxu0
    %203 = vmatprep.mubr.f32.mxu0 %v133
    %204 = vmatmul.mubr.f32.gmra.mrb[0].mxu0 %v132
    %v205 = vpop.f32.mrb[0].mxu0
    %v206 = vadd.f32 0.0, %v205
    %v207 = vpop.f32.mrb[0].mxu0
    %208 = vdwg.mxu0
    %v209 = vld [vmem:[%s3] sm:$0xff]
    %v210 = vld [vmem:[%s3 + $0x8] sm:$0xff]
    %v211 = vld [vmem:[%s3 + $0x10] sm:$0xff]
    %v212 = vld [vmem:[%s3 + $0x18] sm:$0xff]
    %v213 = vld [vmem:[%s5] sm:$0x1]
    %v214 = vld [vmem:[%s6] sm:$0xff]
    %v215 = vld [vmem:[%s6 + $0x8] sm:$0xff]
    %v216 = vld [vmem:[%s6 + $0x10] sm:$0xff]
    %v217 = vld [vmem:[%s6 + $0x18] sm:$0xff]
    %v218 = vld [vmem:[%s6 + $0x20] sm:$0xff]
    %v219 = vld [vmem:[%s6 + $0x28] sm:$0xff]
    %v220 = vld [vmem:[%s6 + $0x30] sm:$0xff]
    %v221 = vld [vmem:[%s6 + $0x38] sm:$0xff]
    %v222 = vld [vmem:[%s7] sm:$0xf]
    %v223 = vld [vmem:[%s7 + $0x4] sm:$0xf]
    %v224 = vld [vmem:[%s7 + $0x8] sm:$0xf]
    %v225 = vld [vmem:[%s7 + $0xc] sm:$0xf]
    %v226 = vld [vmem:[%s7 + $0x10] sm:$0xf]
    %v227 = vld [vmem:[%s7 + $0x14] sm:$0xf]
    %v228 = vld [vmem:[%s7 + $0x18] sm:$0xf]
    %v229 = vld [vmem:[%s7 + $0x1c] sm:$0xf]
    %v230 = vmul.f32 %v201, %v201
    %v231 = vmul.f32 %v206, %v206
    %vm232 = vcmask 523264
    %v233 = vsel %vm232, %v230, 0.0
    %234 = vadd.xlane.f32.xlu0 %v233
    %v235 = vpop.xlane.xlu0 %234
    %v236 = vsel %vm232, %v231, 0.0
    %237 = vadd.xlane.f32.xlu0 %v236
    %v238 = vpop.xlane.xlu0 %237
    %v239 = vrcp.pop 64.0
    %v240 = vmul.f32 %v235, %v239
    %v241 = vmul.f32 %v238, %v239
    %v242 = vadd.f32 %v240, 1e-06
    %v243 = vadd.f32 %v241, 1e-06
    %v244 = vrsqrt.pop %v242
    %v245 = vrsqrt.pop %v243
    %v246 = vmul.f32 %v201, %v244
    %v247 = vmul.f32 %v206, %v245
    %v249 = vlaneseq
    %v250 = vshrl.u32 %v249, 7
    %v251 = vsub.s32 0, %v250
    %v252 = vrot.slane %v213, %v251
    %v254 = vmul.f32 %v246, %v252
    %v255 = vmul.f32 %v247, %v252
    %v256 = vpack.c.bf16 %v255, %v254
    %v265 = vunpack.c.l.b16 %v214
    %v266 = vunpack.c.h.b16 %v214
    %v267 = vunpack.c.l.b16 %v215
    %v268 = vunpack.c.h.b16 %v215
    %v269 = vunpack.c.l.b16 %v216
    %v270 = vunpack.c.h.b16 %v216
    %v271 = vunpack.c.l.b16 %v217
    %v272 = vunpack.c.h.b16 %v217
    %v273 = vunpack.c.l.b16 %v218
    %v274 = vunpack.c.h.b16 %v218
    %v275 = vunpack.c.l.b16 %v219
    %v276 = vunpack.c.h.b16 %v219
    %v277 = vunpack.c.l.b16 %v220
    %v278 = vunpack.c.h.b16 %v220
    %v279 = vunpack.c.l.b16 %v221
    %v280 = vunpack.c.h.b16 %v221
    %v281 = vpack.c.b16 %v267, %v265
    %v282 = vpack.c.b16 %v268, %v266
    %v283 = vpack.c.b16 %v271, %v269
    %v284 = vpack.c.b16 %v272, %v270
    %v285 = vpack.c.b16 %v275, %v273
    %v286 = vpack.c.b16 %v276, %v274
    %v287 = vpack.c.b16 %v279, %v277
    %v288 = vpack.c.b16 %v280, %v278
    %v298 = vsel %vm232, %v256, 0
    %300 = vmatprep.subr.bf16.mxu0 %v282
    %301 = vmatpush1.bf16.msra.mxu0 %v281
    %302 = vmatprep.subr.bf16.mxu0 %v284
    %303 = vmatpush1.bf16.msra.mxu0 %v283
    %304 = vmatprep.subr.bf16.mxu0 %v286
    %305 = vmatpush1.bf16.msra.mxu0 %v285
    %306 = vmatprep.subr.bf16.mxu0 %v288
    %307 = vmatpush1.bf16.msra.mxu0 %v287
    %308 = vmatprep.subr.bf16.mxu0 0
    %309 = vmatpush1.bf16.msra.mxu0 0
    %310 = vmatprep.subr.bf16.mxu0 0
    %311 = vmatpush1.bf16.msra.mxu0 0
    %312 = vmatprep.subr.bf16.mxu0 0
    %313 = vmatpush1.bf16.msra.mxu0 0
    %314 = vmatprep.subr.bf16.mxu0 0
    %315 = vmatpush1.bf16.msra.mxu0 0
    %316 = vmatprep.subr.bf16.mxu0 0
    %317 = vmatpush1.bf16.msra.mxu0 0
    %318 = vmatprep.subr.bf16.mxu0 0
    %319 = vmatpush1.bf16.msra.mxu0 0
    %320 = vmatprep.subr.bf16.mxu0 0
    %321 = vmatpush1.bf16.msra.mxu0 0
    %322 = vmatprep.subr.bf16.mxu0 0
    %323 = vmatpush1.bf16.msra.mxu0 0
    %324 = vmatprep.subr.bf16.mxu0 0
    %325 = vmatpush1.bf16.msra.mxu0 0
    %326 = vmatprep.subr.bf16.mxu0 0
    %327 = vmatpush1.bf16.msra.mxu0 0
    %328 = vmatprep.subr.bf16.mxu0 0
    %329 = vmatpush1.bf16.msra.mxu0 0
    %330 = vmatprep.subr.bf16.mxu0 0
    %331 = vmatpush1.bf16.msra.mxu0 0
    %332 = vmatprep.mubr.bf16.mxu0 0
    %333 = vmatmul.mubr.bf16.gmra.mrb[0].mxu0 %v298
    %v334 = vpop.f32.mrb[0].mxu0
    %v335 = vadd.f32 0.0, %v334
    %v336 = vpop.f32.mrb[0].mxu0
    %v337 = vadd.f32 0.0, %v336
    %v338 = vpop.f32.mrb[0].mxu0
    %v339 = vadd.f32 0.0, %v338
    %v340 = vpop.f32.mrb[0].mxu0
    %v341 = vadd.f32 0.0, %v340
    %342 = vdwg.mxu0
    %v343 = vpack.c.bf16 %v335, %v335
    %v344 = vpack.c.bf16 %v339, %v339
    %v345 = vpack.c.bf16 %v337, %v337
    %v346 = vpack.c.bf16 %v341, %v341
    %348 = vrot.lane.b32.xlu0 %v343, 64
    %v349 = vpop.permute.xlu0 %348
    %vm350 = vcmask 130048
    %v352 = vsel %vm350, %v343, 0
    %v355 = vsel %vm350, %v349, 0
    %357 = vmatprep.subr.bf16.mxu0 0
    %358 = vmatpush1.bf16.xpose.msra.mxu0 %v355
    %359 = vmatprep.subr.bf16.mxu0 0
    %360 = vmatpush1.bf16.xpose.msra.mxu0 0
    %361 = vmatprep.subr.bf16.mxu0 0
    %362 = vmatpush1.bf16.xpose.msra.mxu0 0
    %363 = vmatprep.subr.bf16.mxu0 0
    %364 = vmatpush1.bf16.xpose.msra.mxu0 0
    %365 = vmatprep.subr.bf16.mxu0 0
    %366 = vmatpush1.bf16.xpose.msra.mxu0 0
    %367 = vmatprep.subr.bf16.mxu0 0
    %368 = vmatpush1.bf16.xpose.msra.mxu0 0
    %369 = vmatprep.subr.bf16.mxu0 0
    %370 = vmatpush1.bf16.xpose.msra.mxu0 0
    %371 = vmatprep.subr.bf16.mxu0 0
    %372 = vmatpush1.bf16.xpose.msra.mxu0 0
    %373 = vmatprep.subr.bf16.mxu0 0
    %374 = vmatpush1.bf16.xpose.msra.mxu0 0
    %375 = vmatprep.subr.bf16.mxu0 0
    %376 = vmatpush1.bf16.xpose.msra.mxu0 0
    %377 = vmatprep.subr.bf16.mxu0 0
    %378 = vmatpush1.bf16.xpose.msra.mxu0 0
    %379 = vmatprep.subr.bf16.mxu0 0
    %380 = vmatpush1.bf16.xpose.msra.mxu0 0
    %381 = vmatprep.subr.bf16.mxu0 0
    %382 = vmatpush1.bf16.xpose.msra.mxu0 0
    %383 = vmatprep.subr.bf16.mxu0 0
    %384 = vmatpush1.bf16.xpose.msra.mxu0 0
    %385 = vmatprep.subr.bf16.mxu0 0
    %386 = vmatpush1.bf16.xpose.msra.mxu0 0
    %387 = vmatprep.subr.bf16.mxu0 0
    %388 = vmatpush1.bf16.xpose.msra.mxu0 0
    %389 = vmatprep.mubr.bf16.mxu0 0
    %390 = vmatmul.mubr.bf16.gmra.mrb[0].mxu0 %v352
    %v391 = vpop.f32.mrb[0].mxu0
    %v392 = vadd.f32 %v209, %v391
    %v393 = vpop.f32.mrb[0].mxu0
    %v394 = vpop.f32.mrb[0].mxu0
    %v395 = vpop.f32.mrb[0].mxu0
    %396 = vdwg.mxu0
    %398 = vrot.lane.b32.xlu0 %v344, 64
    %v399 = vpop.permute.xlu0 %398
    %v401 = vsel %vm350, %v344, 0
    %v404 = vsel %vm350, %v399, 0
    %406 = vmatprep.subr.bf16.mxu0 0
    %407 = vmatpush1.bf16.xpose.msra.mxu0 %v404
    %408 = vmatprep.subr.bf16.mxu0 0
    %409 = vmatpush1.bf16.xpose.msra.mxu0 0
    %410 = vmatprep.subr.bf16.mxu0 0
    %411 = vmatpush1.bf16.xpose.msra.mxu0 0
    %412 = vmatprep.subr.bf16.mxu0 0
    %413 = vmatpush1.bf16.xpose.msra.mxu0 0
    %414 = vmatprep.subr.bf16.mxu0 0
    %415 = vmatpush1.bf16.xpose.msra.mxu0 0
    %416 = vmatprep.subr.bf16.mxu0 0
    %417 = vmatpush1.bf16.xpose.msra.mxu0 0
    %418 = vmatprep.subr.bf16.mxu0 0
    %419 = vmatpush1.bf16.xpose.msra.mxu0 0
    %420 = vmatprep.subr.bf16.mxu0 0
    %421 = vmatpush1.bf16.xpose.msra.mxu0 0
    %422 = vmatprep.subr.bf16.mxu0 0
    %423 = vmatpush1.bf16.xpose.msra.mxu0 0
    %424 = vmatprep.subr.bf16.mxu0 0
    %425 = vmatpush1.bf16.xpose.msra.mxu0 0
    %426 = vmatprep.subr.bf16.mxu0 0
    %427 = vmatpush1.bf16.xpose.msra.mxu0 0
    %428 = vmatprep.subr.bf16.mxu0 0
    %429 = vmatpush1.bf16.xpose.msra.mxu0 0
    %430 = vmatprep.subr.bf16.mxu0 0
    %431 = vmatpush1.bf16.xpose.msra.mxu0 0
    %432 = vmatprep.subr.bf16.mxu0 0
    %433 = vmatpush1.bf16.xpose.msra.mxu0 0
    %434 = vmatprep.subr.bf16.mxu0 0
    %435 = vmatpush1.bf16.xpose.msra.mxu0 0
    %436 = vmatprep.subr.bf16.mxu0 0
    %437 = vmatpush1.bf16.xpose.msra.mxu0 0
    %438 = vmatprep.mubr.bf16.mxu0 0
    %439 = vmatmul.mubr.bf16.gmra.mrb[0].mxu0 %v401
    %v440 = vpop.f32.mrb[0].mxu0
    %v441 = vadd.f32 %v209, %v440
    %v442 = vpop.f32.mrb[0].mxu0
    %v443 = vpop.f32.mrb[0].mxu0
    %v444 = vpop.f32.mrb[0].mxu0
    %445 = vdwg.mxu0
    %vm446 = vcmask 64512
    %v447 = vsel %vm446, %v392, -inf
    %448 = vmax.xlane.f32.xlu0 %v447
    %v449 = vpop.xlane.xlu0 %448
    %v450 = vsel %vm446, %v441, -inf
    %451 = vmax.xlane.f32.xlu0 %v450
    %v452 = vpop.xlane.xlu0 %451
    %v453 = vsub.f32 %v392, %v449
    %v454 = vsub.f32 %v441, %v452
    %v455 = vmul.f32 %v453, 1.442695
    %v456 = vpow.pop %v455
    %v457 = vmul.f32 %v454, 1.442695
    %v458 = vpow.pop %v457
    %v459 = vsel %vm446, %v456, 0.0
    %460 = vadd.xlane.f32.xlu0 %v459
    %v461 = vpop.xlane.xlu0 %460
    %v462 = vsel %vm446, %v458, 0.0
    %463 = vadd.xlane.f32.xlu0 %v462
    %v464 = vpop.xlane.xlu0 %463
    %v465 = vrcp.pop %v461
    %v466 = vrcp.pop %v464
    %v467 = vmul.f32 %v456, %v465
    %v468 = vmul.f32 %v458, %v466
    %v469 = vpack.c.bf16 %v467, %v467
    %v470 = vpack.c.bf16 %v468, %v468
    %v472 = vsel %vm446, %v469, 0
    %vm474 = vcmask 1043456
    %v476 = vsel %vm474, %v345, 0
    %478 = vmatprep.subr.bf16.mxu0 0
    %479 = vmatpush1.bf16.msra.mxu0 %v476
    %480 = vmatprep.subr.bf16.mxu0 0
    %481 = vmatpush1.bf16.msra.mxu0 0
    %482 = vmatprep.subr.bf16.mxu0 0
    %483 = vmatpush1.bf16.msra.mxu0 0
    %484 = vmatprep.subr.bf16.mxu0 0
    %485 = vmatpush1.bf16.msra.mxu0 0
    %486 = vmatprep.subr.bf16.mxu0 0
    %487 = vmatpush1.bf16.msra.mxu0 0
    %488 = vmatprep.subr.bf16.mxu0 0
    %489 = vmatpush1.bf16.msra.mxu0 0
    %490 = vmatprep.subr.bf16.mxu0 0
    %491 = vmatpush1.bf16.msra.mxu0 0
    %492 = vmatprep.subr.bf16.mxu0 0
    %493 = vmatpush1.bf16.msra.mxu0 0
    %494 = vmatprep.subr.bf16.mxu0 0
    %495 = vmatpush1.bf16.msra.mxu0 0
    %496 = vmatprep.subr.bf16.mxu0 0
    %497 = vmatpush1.bf16.msra.mxu0 0
    %498 = vmatprep.subr.bf16.mxu0 0
    %499 = vmatpush1.bf16.msra.mxu0 0
    %500 = vmatprep.subr.bf16.mxu0 0
    %501 = vmatpush1.bf16.msra.mxu0 0
    %502 = vmatprep.subr.bf16.mxu0 0
    %503 = vmatpush1.bf16.msra.mxu0 0
    %504 = vmatprep.subr.bf16.mxu0 0
    %505 = vmatpush1.bf16.msra.mxu0 0
    %506 = vmatprep.subr.bf16.mxu0 0
    %507 = vmatpush1.bf16.msra.mxu0 0
    %508 = vmatprep.subr.bf16.mxu0 0
    %509 = vmatpush1.bf16.msra.mxu0 0
    %510 = vmatprep.mubr.bf16.mxu0 0
    %511 = vmatmul.mubr.bf16.gmra.mrb[0].mxu0 %v472
    %v512 = vpop.f32.mrb[0].mxu0
    %v513 = vadd.f32 0.0, %v512
    %v514 = vpop.f32.mrb[0].mxu0
    %v515 = vpop.f32.mrb[0].mxu0
    %v516 = vpop.f32.mrb[0].mxu0
    %517 = vdwg.mxu0
    %v519 = vsel %vm446, %v470, 0
    %v522 = vsel %vm474, %v346, 0
    %524 = vmatprep.subr.bf16.mxu0 0
    %525 = vmatpush1.bf16.msra.mxu0 %v522
    %526 = vmatprep.subr.bf16.mxu0 0
    %527 = vmatpush1.bf16.msra.mxu0 0
    %528 = vmatprep.subr.bf16.mxu0 0
    %529 = vmatpush1.bf16.msra.mxu0 0
    %530 = vmatprep.subr.bf16.mxu0 0
    %531 = vmatpush1.bf16.msra.mxu0 0
    %532 = vmatprep.subr.bf16.mxu0 0
    %533 = vmatpush1.bf16.msra.mxu0 0
    %534 = vmatprep.subr.bf16.mxu0 0
    %535 = vmatpush1.bf16.msra.mxu0 0
    %536 = vmatprep.subr.bf16.mxu0 0
    %537 = vmatpush1.bf16.msra.mxu0 0
    %538 = vmatprep.subr.bf16.mxu0 0
    %539 = vmatpush1.bf16.msra.mxu0 0
    %540 = vmatprep.subr.bf16.mxu0 0
    %541 = vmatpush1.bf16.msra.mxu0 0
    %542 = vmatprep.subr.bf16.mxu0 0
    %543 = vmatpush1.bf16.msra.mxu0 0
    %544 = vmatprep.subr.bf16.mxu0 0
    %545 = vmatpush1.bf16.msra.mxu0 0
    %546 = vmatprep.subr.bf16.mxu0 0
    %547 = vmatpush1.bf16.msra.mxu0 0
    %548 = vmatprep.subr.bf16.mxu0 0
    %549 = vmatpush1.bf16.msra.mxu0 0
    %550 = vmatprep.subr.bf16.mxu0 0
    %551 = vmatpush1.bf16.msra.mxu0 0
    %552 = vmatprep.subr.bf16.mxu0 0
    %553 = vmatpush1.bf16.msra.mxu0 0
    %554 = vmatprep.subr.bf16.mxu0 0
    %555 = vmatpush1.bf16.msra.mxu0 0
    %556 = vmatprep.mubr.bf16.mxu0 0
    %557 = vmatmul.mubr.bf16.gmra.mrb[0].mxu0 %v519
    %v558 = vpop.f32.mrb[0].mxu0
    %v559 = vadd.f32 0.0, %v558
    %v560 = vpop.f32.mrb[0].mxu0
    %v561 = vpop.f32.mrb[0].mxu0
    %v562 = vpop.f32.mrb[0].mxu0
    %563 = vdwg.mxu0
    %564 = vrot.lane.b32.xlu0 %v343, 112
    %v565 = vpop.permute.xlu0 %564
    %566 = vrot.lane.b32.xlu0 %v343, 48
    %v567 = vpop.permute.xlu0 %566
    %v569 = vsel %vm350, %v565, 0
    %v572 = vsel %vm350, %v567, 0
    %574 = vmatprep.subr.bf16.mxu0 0
    %575 = vmatpush1.bf16.xpose.msra.mxu0 %v572
    %576 = vmatprep.subr.bf16.mxu0 0
    %577 = vmatpush1.bf16.xpose.msra.mxu0 0
    %578 = vmatprep.subr.bf16.mxu0 0
    %579 = vmatpush1.bf16.xpose.msra.mxu0 0
    %580 = vmatprep.subr.bf16.mxu0 0
    %581 = vmatpush1.bf16.xpose.msra.mxu0 0
    %582 = vmatprep.subr.bf16.mxu0 0
    %583 = vmatpush1.bf16.xpose.msra.mxu0 0
    %584 = vmatprep.subr.bf16.mxu0 0
    %585 = vmatpush1.bf16.xpose.msra.mxu0 0
    %586 = vmatprep.subr.bf16.mxu0 0
    %587 = vmatpush1.bf16.xpose.msra.mxu0 0
    %588 = vmatprep.subr.bf16.mxu0 0
    %589 = vmatpush1.bf16.xpose.msra.mxu0 0
    %590 = vmatprep.subr.bf16.mxu0 0
    %591 = vmatpush1.bf16.xpose.msra.mxu0 0
    %592 = vmatprep.subr.bf16.mxu0 0
    %593 = vmatpush1.bf16.xpose.msra.mxu0 0
    %594 = vmatprep.subr.bf16.mxu0 0
    %595 = vmatpush1.bf16.xpose.msra.mxu0 0
    %596 = vmatprep.subr.bf16.mxu0 0
    %597 = vmatpush1.bf16.xpose.msra.mxu0 0
    %598 = vmatprep.subr.bf16.mxu0 0
    %599 = vmatpush1.bf16.xpose.msra.mxu0 0
    %600 = vmatprep.subr.bf16.mxu0 0
    %601 = vmatpush1.bf16.xpose.msra.mxu0 0
    %602 = vmatprep.subr.bf16.mxu0 0
    %603 = vmatpush1.bf16.xpose.msra.mxu0 0
    %604 = vmatprep.subr.bf16.mxu0 0
    %605 = vmatpush1.bf16.xpose.msra.mxu0 0
    %606 = vmatprep.mubr.bf16.mxu0 0
    %607 = vmatmul.mubr.bf16.gmra.mrb[0].mxu0 %v569
    %v608 = vpop.f32.mrb[0].mxu0
    %v609 = vadd.f32 %v210, %v608
    %v610 = vpop.f32.mrb[0].mxu0
    %v611 = vpop.f32.mrb[0].mxu0
    %v612 = vpop.f32.mrb[0].mxu0
    %613 = vdwg.mxu0
    %614 = vrot.lane.b32.xlu0 %v344, 112
    %v615 = vpop.permute.xlu0 %614
    %616 = vrot.lane.b32.xlu0 %v344, 48
    %v617 = vpop.permute.xlu0 %616
    %v619 = vsel %vm350, %v615, 0
    %v622 = vsel %vm350, %v617, 0
    %624 = vmatprep.subr.bf16.mxu0 0
    %625 = vmatpush1.bf16.xpose.msra.mxu0 %v622
    %626 = vmatprep.subr.bf16.mxu0 0
    %627 = vmatpush1.bf16.xpose.msra.mxu0 0
    %628 = vmatprep.subr.bf16.mxu0 0
    %629 = vmatpush1.bf16.xpose.msra.mxu0 0
    %630 = vmatprep.subr.bf16.mxu0 0
    %631 = vmatpush1.bf16.xpose.msra.mxu0 0
    %632 = vmatprep.subr.bf16.mxu0 0
    %633 = vmatpush1.bf16.xpose.msra.mxu0 0
    %634 = vmatprep.subr.bf16.mxu0 0
    %635 = vmatpush1.bf16.xpose.msra.mxu0 0
    %636 = vmatprep.subr.bf16.mxu0 0
    %637 = vmatpush1.bf16.xpose.msra.mxu0 0
    %638 = vmatprep.subr.bf16.mxu0 0
    %639 = vmatpush1.bf16.xpose.msra.mxu0 0
    %640 = vmatprep.subr.bf16.mxu0 0
    %641 = vmatpush1.bf16.xpose.msra.mxu0 0
    %642 = vmatprep.subr.bf16.mxu0 0
    %643 = vmatpush1.bf16.xpose.msra.mxu0 0
    %644 = vmatprep.subr.bf16.mxu0 0
    %645 = vmatpush1.bf16.xpose.msra.mxu0 0
    %646 = vmatprep.subr.bf16.mxu0 0
    %647 = vmatpush1.bf16.xpose.msra.mxu0 0
    %648 = vmatprep.subr.bf16.mxu0 0
    %649 = vmatpush1.bf16.xpose.msra.mxu0 0
    %650 = vmatprep.subr.bf16.mxu0 0
    %651 = vmatpush1.bf16.xpose.msra.mxu0 0
    %652 = vmatprep.subr.bf16.mxu0 0
    %653 = vmatpush1.bf16.xpose.msra.mxu0 0
    %654 = vmatprep.subr.bf16.mxu0 0
    %655 = vmatpush1.bf16.xpose.msra.mxu0 0
    %656 = vmatprep.mubr.bf16.mxu0 0
    %657 = vmatmul.mubr.bf16.gmra.mrb[0].mxu0 %v619
    %v658 = vpop.f32.mrb[0].mxu0
    %v659 = vadd.f32 %v210, %v658
    %v660 = vpop.f32.mrb[0].mxu0
    %v661 = vpop.f32.mrb[0].mxu0
    %v662 = vpop.f32.mrb[0].mxu0
    %663 = vdwg.mxu0
    %v664 = vsel %vm446, %v609, -inf
    %665 = vmax.xlane.f32.xlu0 %v664
    %v666 = vpop.xlane.xlu0 %665
    %v667 = vsel %vm446, %v659, -inf
    %668 = vmax.xlane.f32.xlu0 %v667
    %v669 = vpop.xlane.xlu0 %668
    %v670 = vsub.f32 %v609, %v666
    %v671 = vsub.f32 %v659, %v669
    %v672 = vmul.f32 %v670, 1.442695
    %v673 = vpow.pop %v672
    %v674 = vmul.f32 %v671, 1.442695
    %v675 = vpow.pop %v674
    %v676 = vsel %vm446, %v673, 0.0
    %677 = vadd.xlane.f32.xlu0 %v676
    %v678 = vpop.xlane.xlu0 %677
    %v679 = vsel %vm446, %v675, 0.0
    %680 = vadd.xlane.f32.xlu0 %v679
    %v681 = vpop.xlane.xlu0 %680
    %v682 = vrcp.pop %v678
    %v683 = vrcp.pop %v681
    %v684 = vmul.f32 %v673, %v682
    %v685 = vmul.f32 %v675, %v683
    %v686 = vpack.c.bf16 %v684, %v684
    %v687 = vpack.c.bf16 %v685, %v685
    %689 = vrot.lane.b32.xlu0 %v345, 112
    %v690 = vpop.permute.xlu0 %689
    %v692 = vsel %vm446, %v686, 0
    %v695 = vsel %vm474, %v690, 0
    %697 = vmatprep.subr.bf16.mxu0 0
    %698 = vmatpush1.bf16.msra.mxu0 %v695
    %699 = vmatprep.subr.bf16.mxu0 0
    %700 = vmatpush1.bf16.msra.mxu0 0
    %701 = vmatprep.subr.bf16.mxu0 0
    %702 = vmatpush1.bf16.msra.mxu0 0
    %703 = vmatprep.subr.bf16.mxu0 0
    %704 = vmatpush1.bf16.msra.mxu0 0
    %705 = vmatprep.subr.bf16.mxu0 0
    %706 = vmatpush1.bf16.msra.mxu0 0
    %707 = vmatprep.subr.bf16.mxu0 0
    %708 = vmatpush1.bf16.msra.mxu0 0
    %709 = vmatprep.subr.bf16.mxu0 0
    %710 = vmatpush1.bf16.msra.mxu0 0
    %711 = vmatprep.subr.bf16.mxu0 0
    %712 = vmatpush1.bf16.msra.mxu0 0
    %713 = vmatprep.subr.bf16.mxu0 0
    %714 = vmatpush1.bf16.msra.mxu0 0
    %715 = vmatprep.subr.bf16.mxu0 0
    %716 = vmatpush1.bf16.msra.mxu0 0
    %717 = vmatprep.subr.bf16.mxu0 0
    %718 = vmatpush1.bf16.msra.mxu0 0
    %719 = vmatprep.subr.bf16.mxu0 0
    %720 = vmatpush1.bf16.msra.mxu0 0
    %721 = vmatprep.subr.bf16.mxu0 0
    %722 = vmatpush1.bf16.msra.mxu0 0
    %723 = vmatprep.subr.bf16.mxu0 0
    %724 = vmatpush1.bf16.msra.mxu0 0
    %725 = vmatprep.subr.bf16.mxu0 0
    %726 = vmatpush1.bf16.msra.mxu0 0
    %727 = vmatprep.subr.bf16.mxu0 0
    %728 = vmatpush1.bf16.msra.mxu0 0
    %729 = vmatprep.mubr.bf16.mxu0 0
    %730 = vmatmul.mubr.bf16.gmra.mrb[0].mxu0 %v692
    %v731 = vpop.f32.mrb[0].mxu0
    %v732 = vadd.f32 0.0, %v731
    %v733 = vpop.f32.mrb[0].mxu0
    %v734 = vpop.f32.mrb[0].mxu0
    %v735 = vpop.f32.mrb[0].mxu0
    %736 = vdwg.mxu0
    %738 = vrot.lane.b32.xlu0 %v346, 112
    %v739 = vpop.permute.xlu0 %738
    %v741 = vsel %vm446, %v687, 0
    %v744 = vsel %vm474, %v739, 0
    %746 = vmatprep.subr.bf16.mxu0 0
    %747 = vmatpush1.bf16.msra.mxu0 %v744
    %748 = vmatprep.subr.bf16.mxu0 0
    %749 = vmatpush1.bf16.msra.mxu0 0
    %750 = vmatprep.subr.bf16.mxu0 0
    %751 = vmatpush1.bf16.msra.mxu0 0
    %752 = vmatprep.subr.bf16.mxu0 0
    %753 = vmatpush1.bf16.msra.mxu0 0
    %754 = vmatprep.subr.bf16.mxu0 0
    %755 = vmatpush1.bf16.msra.mxu0 0
    %756 = vmatprep.subr.bf16.mxu0 0
    %757 = vmatpush1.bf16.msra.mxu0 0
    %758 = vmatprep.subr.bf16.mxu0 0
    %759 = vmatpush1.bf16.msra.mxu0 0
    %760 = vmatprep.subr.bf16.mxu0 0
    %761 = vmatpush1.bf16.msra.mxu0 0
    %762 = vmatprep.subr.bf16.mxu0 0
    %763 = vmatpush1.bf16.msra.mxu0 0
    %764 = vmatprep.subr.bf16.mxu0 0
    %765 = vmatpush1.bf16.msra.mxu0 0
    %766 = vmatprep.subr.bf16.mxu0 0
    %767 = vmatpush1.bf16.msra.mxu0 0
    %768 = vmatprep.subr.bf16.mxu0 0
    %769 = vmatpush1.bf16.msra.mxu0 0
    %770 = vmatprep.subr.bf16.mxu0 0
    %771 = vmatpush1.bf16.msra.mxu0 0
    %772 = vmatprep.subr.bf16.mxu0 0
    %773 = vmatpush1.bf16.msra.mxu0 0
    %774 = vmatprep.subr.bf16.mxu0 0
    %775 = vmatpush1.bf16.msra.mxu0 0
    %776 = vmatprep.subr.bf16.mxu0 0
    %777 = vmatpush1.bf16.msra.mxu0 0
    %778 = vmatprep.mubr.bf16.mxu0 0
    %779 = vmatmul.mubr.bf16.gmra.mrb[0].mxu0 %v741
    %v780 = vpop.f32.mrb[0].mxu0
    %v781 = vadd.f32 0.0, %v780
    %v782 = vpop.f32.mrb[0].mxu0
    %v783 = vpop.f32.mrb[0].mxu0
    %v784 = vpop.f32.mrb[0].mxu0
    %785 = vdwg.mxu0
    %786 = vrot.lane.b32.xlu0 %v343, 96
    %v787 = vpop.permute.xlu0 %786
    %788 = vrot.lane.b32.xlu0 %v343, 32
    %v789 = vpop.permute.xlu0 %788
    %v791 = vsel %vm350, %v787, 0
    %v794 = vsel %vm350, %v789, 0
    %796 = vmatprep.subr.bf16.mxu0 0
    %797 = vmatpush1.bf16.xpose.msra.mxu0 %v794
    %798 = vmatprep.subr.bf16.mxu0 0
    %799 = vmatpush1.bf16.xpose.msra.mxu0 0
    %800 = vmatprep.subr.bf16.mxu0 0
    %801 = vmatpush1.bf16.xpose.msra.mxu0 0
    %802 = vmatprep.subr.bf16.mxu0 0
    %803 = vmatpush1.bf16.xpose.msra.mxu0 0
    %804 = vmatprep.subr.bf16.mxu0 0
    %805 = vmatpush1.bf16.xpose.msra.mxu0 0
    %806 = vmatprep.subr.bf16.mxu0 0
    %807 = vmatpush1.bf16.xpose.msra.mxu0 0
    %808 = vmatprep.subr.bf16.mxu0 0
    %809 = vmatpush1.bf16.xpose.msra.mxu0 0
    %810 = vmatprep.subr.bf16.mxu0 0
    %811 = vmatpush1.bf16.xpose.msra.mxu0 0
    %812 = vmatprep.subr.bf16.mxu0 0
    %813 = vmatpush1.bf16.xpose.msra.mxu0 0
    %814 = vmatprep.subr.bf16.mxu0 0
    %815 = vmatpush1.bf16.xpose.msra.mxu0 0
    %816 = vmatprep.subr.bf16.mxu0 0
    %817 = vmatpush1.bf16.xpose.msra.mxu0 0
    %818 = vmatprep.subr.bf16.mxu0 0
    %819 = vmatpush1.bf16.xpose.msra.mxu0 0
    %820 = vmatprep.subr.bf16.mxu0 0
    %821 = vmatpush1.bf16.xpose.msra.mxu0 0
    %822 = vmatprep.subr.bf16.mxu0 0
    %823 = vmatpush1.bf16.xpose.msra.mxu0 0
    %824 = vmatprep.subr.bf16.mxu0 0
    %825 = vmatpush1.bf16.xpose.msra.mxu0 0
    %826 = vmatprep.subr.bf16.mxu0 0
    %827 = vmatpush1.bf16.xpose.msra.mxu0 0
    %828 = vmatprep.mubr.bf16.mxu0 0
    %829 = vmatmul.mubr.bf16.gmra.mrb[0].mxu0 %v791
    %v830 = vpop.f32.mrb[0].mxu0
    %v831 = vadd.f32 %v211, %v830
    %v832 = vpop.f32.mrb[0].mxu0
    %v833 = vpop.f32.mrb[0].mxu0
    %v834 = vpop.f32.mrb[0].mxu0
    %835 = vdwg.mxu0
    %836 = vrot.lane.b32.xlu0 %v344, 96
    %v837 = vpop.permute.xlu0 %836
    %838 = vrot.lane.b32.xlu0 %v344, 32
    %v839 = vpop.permute.xlu0 %838
    %v841 = vsel %vm350, %v837, 0
    %v844 = vsel %vm350, %v839, 0
    %846 = vmatprep.subr.bf16.mxu0 0
    %847 = vmatpush1.bf16.xpose.msra.mxu0 %v844
    %848 = vmatprep.subr.bf16.mxu0 0
    %849 = vmatpush1.bf16.xpose.msra.mxu0 0
    %850 = vmatprep.subr.bf16.mxu0 0
    %851 = vmatpush1.bf16.xpose.msra.mxu0 0
    %852 = vmatprep.subr.bf16.mxu0 0
    %853 = vmatpush1.bf16.xpose.msra.mxu0 0
    %854 = vmatprep.subr.bf16.mxu0 0
    %855 = vmatpush1.bf16.xpose.msra.mxu0 0
    %856 = vmatprep.subr.bf16.mxu0 0
    %857 = vmatpush1.bf16.xpose.msra.mxu0 0
    %858 = vmatprep.subr.bf16.mxu0 0
    %859 = vmatpush1.bf16.xpose.msra.mxu0 0
    %860 = vmatprep.subr.bf16.mxu0 0
    %861 = vmatpush1.bf16.xpose.msra.mxu0 0
    %862 = vmatprep.subr.bf16.mxu0 0
    %863 = vmatpush1.bf16.xpose.msra.mxu0 0
    %864 = vmatprep.subr.bf16.mxu0 0
    %865 = vmatpush1.bf16.xpose.msra.mxu0 0
    %866 = vmatprep.subr.bf16.mxu0 0
    %867 = vmatpush1.bf16.xpose.msra.mxu0 0
    %868 = vmatprep.subr.bf16.mxu0 0
    %869 = vmatpush1.bf16.xpose.msra.mxu0 0
    %870 = vmatprep.subr.bf16.mxu0 0
    %871 = vmatpush1.bf16.xpose.msra.mxu0 0
    %872 = vmatprep.subr.bf16.mxu0 0
    %873 = vmatpush1.bf16.xpose.msra.mxu0 0
    %874 = vmatprep.subr.bf16.mxu0 0
    %875 = vmatpush1.bf16.xpose.msra.mxu0 0
    %876 = vmatprep.subr.bf16.mxu0 0
    %877 = vmatpush1.bf16.xpose.msra.mxu0 0
    %878 = vmatprep.mubr.bf16.mxu0 0
    %879 = vmatmul.mubr.bf16.gmra.mrb[0].mxu0 %v841
    %v880 = vpop.f32.mrb[0].mxu0
    %v881 = vadd.f32 %v211, %v880
    %v882 = vpop.f32.mrb[0].mxu0
    %v883 = vpop.f32.mrb[0].mxu0
    %v884 = vpop.f32.mrb[0].mxu0
    %885 = vdwg.mxu0
    %v886 = vsel %vm446, %v831, -inf
    %887 = vmax.xlane.f32.xlu0 %v886
    %v888 = vpop.xlane.xlu0 %887
    %v889 = vsel %vm446, %v881, -inf
    %890 = vmax.xlane.f32.xlu0 %v889
    %v891 = vpop.xlane.xlu0 %890
    %v892 = vsub.f32 %v831, %v888
    %v893 = vsub.f32 %v881, %v891
    %v894 = vmul.f32 %v892, 1.442695
    %v895 = vpow.pop %v894
    %v896 = vmul.f32 %v893, 1.442695
    %v897 = vpow.pop %v896
    %v898 = vsel %vm446, %v895, 0.0
    %899 = vadd.xlane.f32.xlu0 %v898
    %v900 = vpop.xlane.xlu0 %899
    %v901 = vsel %vm446, %v897, 0.0
    %902 = vadd.xlane.f32.xlu0 %v901
    %v903 = vpop.xlane.xlu0 %902
    %v904 = vrcp.pop %v900
    %v905 = vrcp.pop %v903
    %v906 = vmul.f32 %v895, %v904
    %v907 = vmul.f32 %v897, %v905
    %v908 = vpack.c.bf16 %v906, %v906
    %v909 = vpack.c.bf16 %v907, %v907
    %910 = vrot.lane.b32.xlu0 %v345, 96
    %v911 = vpop.permute.xlu0 %910
    %v913 = vsel %vm446, %v908, 0
    %v916 = vsel %vm474, %v911, 0
    %918 = vmatprep.subr.bf16.mxu0 0
    %919 = vmatpush1.bf16.msra.mxu0 %v916
    %920 = vmatprep.subr.bf16.mxu0 0
    %921 = vmatpush1.bf16.msra.mxu0 0
    %922 = vmatprep.subr.bf16.mxu0 0
    %923 = vmatpush1.bf16.msra.mxu0 0
    %924 = vmatprep.subr.bf16.mxu0 0
    %925 = vmatpush1.bf16.msra.mxu0 0
    %926 = vmatprep.subr.bf16.mxu0 0
    %927 = vmatpush1.bf16.msra.mxu0 0
    %928 = vmatprep.subr.bf16.mxu0 0
    %929 = vmatpush1.bf16.msra.mxu0 0
    %930 = vmatprep.subr.bf16.mxu0 0
    %931 = vmatpush1.bf16.msra.mxu0 0
    %932 = vmatprep.subr.bf16.mxu0 0
    %933 = vmatpush1.bf16.msra.mxu0 0
    %934 = vmatprep.subr.bf16.mxu0 0
    %935 = vmatpush1.bf16.msra.mxu0 0
    %936 = vmatprep.subr.bf16.mxu0 0
    %937 = vmatpush1.bf16.msra.mxu0 0
    %938 = vmatprep.subr.bf16.mxu0 0
    %939 = vmatpush1.bf16.msra.mxu0 0
    %940 = vmatprep.subr.bf16.mxu0 0
    %941 = vmatpush1.bf16.msra.mxu0 0
    %942 = vmatprep.subr.bf16.mxu0 0
    %943 = vmatpush1.bf16.msra.mxu0 0
    %944 = vmatprep.subr.bf16.mxu0 0
    %945 = vmatpush1.bf16.msra.mxu0 0
    %946 = vmatprep.subr.bf16.mxu0 0
    %947 = vmatpush1.bf16.msra.mxu0 0
    %948 = vmatprep.subr.bf16.mxu0 0
    %949 = vmatpush1.bf16.msra.mxu0 0
    %950 = vmatprep.mubr.bf16.mxu0 0
    %951 = vmatmul.mubr.bf16.gmra.mrb[0].mxu0 %v913
    %v952 = vpop.f32.mrb[0].mxu0
    %v953 = vadd.f32 0.0, %v952
    %v954 = vpop.f32.mrb[0].mxu0
    %v955 = vpop.f32.mrb[0].mxu0
    %v956 = vpop.f32.mrb[0].mxu0
    %957 = vdwg.mxu0
    %958 = vrot.lane.b32.xlu0 %v346, 96
    %v959 = vpop.permute.xlu0 %958
    %v961 = vsel %vm446, %v909, 0
    %v964 = vsel %vm474, %v959, 0
    %966 = vmatprep.subr.bf16.mxu0 0
    %967 = vmatpush1.bf16.msra.mxu0 %v964
    %968 = vmatprep.subr.bf16.mxu0 0
    %969 = vmatpush1.bf16.msra.mxu0 0
    %970 = vmatprep.subr.bf16.mxu0 0
    %971 = vmatpush1.bf16.msra.mxu0 0
    %972 = vmatprep.subr.bf16.mxu0 0
    %973 = vmatpush1.bf16.msra.mxu0 0
    %974 = vmatprep.subr.bf16.mxu0 0
    %975 = vmatpush1.bf16.msra.mxu0 0
    %976 = vmatprep.subr.bf16.mxu0 0
    %977 = vmatpush1.bf16.msra.mxu0 0
    %978 = vmatprep.subr.bf16.mxu0 0
    %979 = vmatpush1.bf16.msra.mxu0 0
    %980 = vmatprep.subr.bf16.mxu0 0
    %981 = vmatpush1.bf16.msra.mxu0 0
    %982 = vmatprep.subr.bf16.mxu0 0
    %983 = vmatpush1.bf16.msra.mxu0 0
    %984 = vmatprep.subr.bf16.mxu0 0
    %985 = vmatpush1.bf16.msra.mxu0 0
    %986 = vmatprep.subr.bf16.mxu0 0
    %987 = vmatpush1.bf16.msra.mxu0 0
    %988 = vmatprep.subr.bf16.mxu0 0
    %989 = vmatpush1.bf16.msra.mxu0 0
    %990 = vmatprep.subr.bf16.mxu0 0
    %991 = vmatpush1.bf16.msra.mxu0 0
    %992 = vmatprep.subr.bf16.mxu0 0
    %993 = vmatpush1.bf16.msra.mxu0 0
    %994 = vmatprep.subr.bf16.mxu0 0
    %995 = vmatpush1.bf16.msra.mxu0 0
    %996 = vmatprep.subr.bf16.mxu0 0
    %997 = vmatpush1.bf16.msra.mxu0 0
    %998 = vmatprep.mubr.bf16.mxu0 0
    %999 = vmatmul.mubr.bf16.gmra.mrb[0].mxu0 %v961
    %v1000 = vpop.f32.mrb[0].mxu0
    %v1001 = vadd.f32 0.0, %v1000
    %v1002 = vpop.f32.mrb[0].mxu0
    %v1003 = vpop.f32.mrb[0].mxu0
    %v1004 = vpop.f32.mrb[0].mxu0
    %1005 = vdwg.mxu0
    %1006 = vrot.lane.b32.xlu0 %v343, 80
    %v1007 = vpop.permute.xlu0 %1006
    %1008 = vrot.lane.b32.xlu0 %v343, 16
    %v1009 = vpop.permute.xlu0 %1008
    %v1011 = vsel %vm350, %v1007, 0
    %v1014 = vsel %vm350, %v1009, 0
    %1016 = vmatprep.subr.bf16.mxu0 0
    %1017 = vmatpush1.bf16.xpose.msra.mxu0 %v1014
    %1018 = vmatprep.subr.bf16.mxu0 0
    %1019 = vmatpush1.bf16.xpose.msra.mxu0 0
    %1020 = vmatprep.subr.bf16.mxu0 0
    %1021 = vmatpush1.bf16.xpose.msra.mxu0 0
    %1022 = vmatprep.subr.bf16.mxu0 0
    %1023 = vmatpush1.bf16.xpose.msra.mxu0 0
    %1024 = vmatprep.subr.bf16.mxu0 0
    %1025 = vmatpush1.bf16.xpose.msra.mxu0 0
    %1026 = vmatprep.subr.bf16.mxu0 0
    %1027 = vmatpush1.bf16.xpose.msra.mxu0 0
    %1028 = vmatprep.subr.bf16.mxu0 0
    %1029 = vmatpush1.bf16.xpose.msra.mxu0 0
    %1030 = vmatprep.subr.bf16.mxu0 0
    %1031 = vmatpush1.bf16.xpose.msra.mxu0 0
    %1032 = vmatprep.subr.bf16.mxu0 0
    %1033 = vmatpush1.bf16.xpose.msra.mxu0 0
    %1034 = vmatprep.subr.bf16.mxu0 0
    %1035 = vmatpush1.bf16.xpose.msra.mxu0 0
    %1036 = vmatprep.subr.bf16.mxu0 0
    %1037 = vmatpush1.bf16.xpose.msra.mxu0 0
    %1038 = vmatprep.subr.bf16.mxu0 0
    %1039 = vmatpush1.bf16.xpose.msra.mxu0 0
    %1040 = vmatprep.subr.bf16.mxu0 0
    %1041 = vmatpush1.bf16.xpose.msra.mxu0 0
    %1042 = vmatprep.subr.bf16.mxu0 0
    %1043 = vmatpush1.bf16.xpose.msra.mxu0 0
    %1044 = vmatprep.subr.bf16.mxu0 0
    %1045 = vmatpush1.bf16.xpose.msra.mxu0 0
    %1046 = vmatprep.subr.bf16.mxu0 0
    %1047 = vmatpush1.bf16.xpose.msra.mxu0 0
    %1048 = vmatprep.mubr.bf16.mxu0 0
    %1049 = vmatmul.mubr.bf16.gmra.mrb[0].mxu0 %v1011
    %v1050 = vpop.f32.mrb[0].mxu0
    %v1051 = vadd.f32 %v212, %v1050
    %v1052 = vpop.f32.mrb[0].mxu0
    %v1053 = vpop.f32.mrb[0].mxu0
    %v1054 = vpop.f32.mrb[0].mxu0
    %1055 = vdwg.mxu0
    %1056 = vrot.lane.b32.xlu0 %v344, 80
    %v1057 = vpop.permute.xlu0 %1056
    %1058 = vrot.lane.b32.xlu0 %v344, 16
    %v1059 = vpop.permute.xlu0 %1058
    %v1061 = vsel %vm350, %v1057, 0
    %v1064 = vsel %vm350, %v1059, 0
    %1066 = vmatprep.subr.bf16.mxu0 0
    %1067 = vmatpush1.bf16.xpose.msra.mxu0 %v1064
    %1068 = vmatprep.subr.bf16.mxu0 0
    %1069 = vmatpush1.bf16.xpose.msra.mxu0 0
    %1070 = vmatprep.subr.bf16.mxu0 0
    %1071 = vmatpush1.bf16.xpose.msra.mxu0 0
    %1072 = vmatprep.subr.bf16.mxu0 0
    %1073 = vmatpush1.bf16.xpose.msra.mxu0 0
    %1074 = vmatprep.subr.bf16.mxu0 0
    %1075 = vmatpush1.bf16.xpose.msra.mxu0 0
    %1076 = vmatprep.subr.bf16.mxu0 0
    %1077 = vmatpush1.bf16.xpose.msra.mxu0 0
    %1078 = vmatprep.subr.bf16.mxu0 0
    %1079 = vmatpush1.bf16.xpose.msra.mxu0 0
    %1080 = vmatprep.subr.bf16.mxu0 0
    %1081 = vmatpush1.bf16.xpose.msra.mxu0 0
    %1082 = vmatprep.subr.bf16.mxu0 0
    %1083 = vmatpush1.bf16.xpose.msra.mxu0 0
    %1084 = vmatprep.subr.bf16.mxu0 0
    %1085 = vmatpush1.bf16.xpose.msra.mxu0 0
    %1086 = vmatprep.subr.bf16.mxu0 0
    %1087 = vmatpush1.bf16.xpose.msra.mxu0 0
    %1088 = vmatprep.subr.bf16.mxu0 0
    %1089 = vmatpush1.bf16.xpose.msra.mxu0 0
    %1090 = vmatprep.subr.bf16.mxu0 0
    %1091 = vmatpush1.bf16.xpose.msra.mxu0 0
    %1092 = vmatprep.subr.bf16.mxu0 0
    %1093 = vmatpush1.bf16.xpose.msra.mxu0 0
    %1094 = vmatprep.subr.bf16.mxu0 0
    %1095 = vmatpush1.bf16.xpose.msra.mxu0 0
    %1096 = vmatprep.subr.bf16.mxu0 0
    %1097 = vmatpush1.bf16.xpose.msra.mxu0 0
    %1098 = vmatprep.mubr.bf16.mxu0 0
    %1099 = vmatmul.mubr.bf16.gmra.mrb[0].mxu0 %v1061
    %v1100 = vpop.f32.mrb[0].mxu0
    %v1101 = vadd.f32 %v212, %v1100
    %v1102 = vpop.f32.mrb[0].mxu0
    %v1103 = vpop.f32.mrb[0].mxu0
    %v1104 = vpop.f32.mrb[0].mxu0
    %1105 = vdwg.mxu0
    %v1106 = vsel %vm446, %v1051, -inf
    %1107 = vmax.xlane.f32.xlu0 %v1106
    %v1108 = vpop.xlane.xlu0 %1107
    %v1109 = vsel %vm446, %v1101, -inf
    %1110 = vmax.xlane.f32.xlu0 %v1109
    %v1111 = vpop.xlane.xlu0 %1110
    %v1112 = vsub.f32 %v1051, %v1108
    %v1113 = vsub.f32 %v1101, %v1111
    %v1114 = vmul.f32 %v1112, 1.442695
    %v1115 = vpow.pop %v1114
    %v1116 = vmul.f32 %v1113, 1.442695
    %v1117 = vpow.pop %v1116
    %v1118 = vsel %vm446, %v1115, 0.0
    %1119 = vadd.xlane.f32.xlu0 %v1118
    %v1120 = vpop.xlane.xlu0 %1119
    %v1121 = vsel %vm446, %v1117, 0.0
    %1122 = vadd.xlane.f32.xlu0 %v1121
    %v1123 = vpop.xlane.xlu0 %1122
    %v1124 = vrcp.pop %v1120
    %v1125 = vrcp.pop %v1123
    %v1126 = vmul.f32 %v1115, %v1124
    %v1127 = vmul.f32 %v1117, %v1125
    %v1128 = vpack.c.bf16 %v1126, %v1126
    %v1129 = vpack.c.bf16 %v1127, %v1127
    %1130 = vrot.lane.b32.xlu0 %v345, 80
    %v1131 = vpop.permute.xlu0 %1130
    %v1133 = vsel %vm446, %v1128, 0
    %v1136 = vsel %vm474, %v1131, 0
    %1138 = vmatprep.subr.bf16.mxu0 0
    %1139 = vmatpush1.bf16.msra.mxu0 %v1136
    %1140 = vmatprep.subr.bf16.mxu0 0
    %1141 = vmatpush1.bf16.msra.mxu0 0
    %1142 = vmatprep.subr.bf16.mxu0 0
    %1143 = vmatpush1.bf16.msra.mxu0 0
    %1144 = vmatprep.subr.bf16.mxu0 0
    %1145 = vmatpush1.bf16.msra.mxu0 0
    %1146 = vmatprep.subr.bf16.mxu0 0
    %1147 = vmatpush1.bf16.msra.mxu0 0
    %1148 = vmatprep.subr.bf16.mxu0 0
    %1149 = vmatpush1.bf16.msra.mxu0 0
    %1150 = vmatprep.subr.bf16.mxu0 0
    %1151 = vmatpush1.bf16.msra.mxu0 0
    %1152 = vmatprep.subr.bf16.mxu0 0
    %1153 = vmatpush1.bf16.msra.mxu0 0
    %1154 = vmatprep.subr.bf16.mxu0 0
    %1155 = vmatpush1.bf16.msra.mxu0 0
    %1156 = vmatprep.subr.bf16.mxu0 0
    %1157 = vmatpush1.bf16.msra.mxu0 0
    %1158 = vmatprep.subr.bf16.mxu0 0
    %1159 = vmatpush1.bf16.msra.mxu0 0
    %1160 = vmatprep.subr.bf16.mxu0 0
    %1161 = vmatpush1.bf16.msra.mxu0 0
    %1162 = vmatprep.subr.bf16.mxu0 0
    %1163 = vmatpush1.bf16.msra.mxu0 0
    %1164 = vmatprep.subr.bf16.mxu0 0
    %1165 = vmatpush1.bf16.msra.mxu0 0
    %1166 = vmatprep.subr.bf16.mxu0 0
    %1167 = vmatpush1.bf16.msra.mxu0 0
    %1168 = vmatprep.subr.bf16.mxu0 0
    %1169 = vmatpush1.bf16.msra.mxu0 0
    %1170 = vmatprep.mubr.bf16.mxu0 0
    %1171 = vmatmul.mubr.bf16.gmra.mrb[0].mxu0 %v1133
    %v1172 = vpop.f32.mrb[0].mxu0
    %v1173 = vadd.f32 0.0, %v1172
    %v1174 = vpop.f32.mrb[0].mxu0
    %v1175 = vpop.f32.mrb[0].mxu0
    %v1176 = vpop.f32.mrb[0].mxu0
    %1177 = vdwg.mxu0
    %1178 = vrot.lane.b32.xlu0 %v346, 80
    %v1179 = vpop.permute.xlu0 %1178
    %v1181 = vsel %vm446, %v1129, 0
    %v1184 = vsel %vm474, %v1179, 0
    %1186 = vmatprep.subr.bf16.mxu0 0
    %1187 = vmatpush1.bf16.msra.mxu0 %v1184
    %1188 = vmatprep.subr.bf16.mxu0 0
    %1189 = vmatpush1.bf16.msra.mxu0 0
    %1190 = vmatprep.subr.bf16.mxu0 0
    %1191 = vmatpush1.bf16.msra.mxu0 0
    %1192 = vmatprep.subr.bf16.mxu0 0
    %1193 = vmatpush1.bf16.msra.mxu0 0
    %1194 = vmatprep.subr.bf16.mxu0 0
    %1195 = vmatpush1.bf16.msra.mxu0 0
    %1196 = vmatprep.subr.bf16.mxu0 0
    %1197 = vmatpush1.bf16.msra.mxu0 0
    %1198 = vmatprep.subr.bf16.mxu0 0
    %1199 = vmatpush1.bf16.msra.mxu0 0
    %1200 = vmatprep.subr.bf16.mxu0 0
    %1201 = vmatpush1.bf16.msra.mxu0 0
    %1202 = vmatprep.subr.bf16.mxu0 0
    %1203 = vmatpush1.bf16.msra.mxu0 0
    %1204 = vmatprep.subr.bf16.mxu0 0
    %1205 = vmatpush1.bf16.msra.mxu0 0
    %1206 = vmatprep.subr.bf16.mxu0 0
    %1207 = vmatpush1.bf16.msra.mxu0 0
    %1208 = vmatprep.subr.bf16.mxu0 0
    %1209 = vmatpush1.bf16.msra.mxu0 0
    %1210 = vmatprep.subr.bf16.mxu0 0
    %1211 = vmatpush1.bf16.msra.mxu0 0
    %1212 = vmatprep.subr.bf16.mxu0 0
    %1213 = vmatpush1.bf16.msra.mxu0 0
    %1214 = vmatprep.subr.bf16.mxu0 0
    %1215 = vmatpush1.bf16.msra.mxu0 0
    %1216 = vmatprep.subr.bf16.mxu0 0
    %1217 = vmatpush1.bf16.msra.mxu0 0
    %1218 = vmatprep.mubr.bf16.mxu0 0
    %1219 = vmatmul.mubr.bf16.gmra.mrb[0].mxu0 %v1181
    %v1220 = vpop.f32.mrb[0].mxu0
    %v1221 = vadd.f32 0.0, %v1220
    %v1222 = vpop.f32.mrb[0].mxu0
    %v1223 = vpop.f32.mrb[0].mxu0
    %v1224 = vpop.f32.mrb[0].mxu0
    %1225 = vdwg.mxu0
    %1228 = vrot.lane.b32.xlu0 %v732, 16
    %v1229 = vpop.permute.xlu0 %1228
    %1230 = vrot.lane.b32.xlu0 %v781, 16
    %v1231 = vpop.permute.xlu0 %1230
    %1236 = vrot.lane.b32.xlu0 %v953, 32
    %v1237 = vpop.permute.xlu0 %1236
    %1238 = vrot.lane.b32.xlu0 %v1001, 32
    %v1239 = vpop.permute.xlu0 %1238
    %1244 = vrot.lane.b32.xlu0 %v1173, 48
    %v1245 = vpop.permute.xlu0 %1244
    %1246 = vrot.lane.b32.xlu0 %v1221, 48
    %v1247 = vpop.permute.xlu0 %1246
    %v1250 = vsel %vm350, %v513, %v1229
    %v1251 = vsel %vm350, %v559, %v1231
    %vm1252 = vcmask 261120
    %v1253 = vsel %vm1252, %v1250, %v1237
    %v1254 = vsel %vm1252, %v1251, %v1239
    %vm1255 = vcmask 392192
    %v1256 = vsel %vm1255, %v1253, %v1245
    %v1257 = vsel %vm1255, %v1254, %v1247
    %v1258 = vpack.c.bf16 %v1257, %v1256
    %v1267 = vunpack.c.l.b16 %v222
    %v1268 = vunpack.c.l.b16 %v223
    %v1269 = vunpack.c.l.b16 %v224
    %v1270 = vunpack.c.l.b16 %v225
    %v1271 = vunpack.c.l.b16 %v226
    %v1272 = vunpack.c.l.b16 %v227
    %v1273 = vunpack.c.l.b16 %v228
    %v1274 = vunpack.c.l.b16 %v229
    %v1275 = vpack.c.b16 %v1268, %v1267
    %v1276 = vpack.c.b16 %v1270, %v1269
    %v1277 = vpack.c.b16 %v1272, %v1271
    %v1278 = vpack.c.b16 %v1274, %v1273
    %v1284 = vsel %vm232, %v1258, 0
    %1286 = vmatprep.subr.bf16.mxu0 0
    %1287 = vmatpush1.bf16.msra.mxu0 %v1275
    %1288 = vmatprep.subr.bf16.mxu0 0
    %1289 = vmatpush1.bf16.msra.mxu0 %v1276
    %1290 = vmatprep.subr.bf16.mxu0 0
    %1291 = vmatpush1.bf16.msra.mxu0 %v1277
    %1292 = vmatprep.subr.bf16.mxu0 0
    %1293 = vmatpush1.bf16.msra.mxu0 %v1278
    %1294 = vmatprep.subr.bf16.mxu0 0
    %1295 = vmatpush1.bf16.msra.mxu0 0
    %1296 = vmatprep.subr.bf16.mxu0 0
    %1297 = vmatpush1.bf16.msra.mxu0 0
    %1298 = vmatprep.subr.bf16.mxu0 0
    %1299 = vmatpush1.bf16.msra.mxu0 0
    %1300 = vmatprep.subr.bf16.mxu0 0
    %1301 = vmatpush1.bf16.msra.mxu0 0
    %1302 = vmatprep.subr.bf16.mxu0 0
    %1303 = vmatpush1.bf16.msra.mxu0 0
    %1304 = vmatprep.subr.bf16.mxu0 0
    %1305 = vmatpush1.bf16.msra.mxu0 0
    %1306 = vmatprep.subr.bf16.mxu0 0
    %1307 = vmatpush1.bf16.msra.mxu0 0
    %1308 = vmatprep.subr.bf16.mxu0 0
    %1309 = vmatpush1.bf16.msra.mxu0 0
    %1310 = vmatprep.subr.bf16.mxu0 0
    %1311 = vmatpush1.bf16.msra.mxu0 0
    %1312 = vmatprep.subr.bf16.mxu0 0
    %1313 = vmatpush1.bf16.msra.mxu0 0
    %1314 = vmatprep.subr.bf16.mxu0 0
    %1315 = vmatpush1.bf16.msra.mxu0 0
    %1316 = vmatprep.subr.bf16.mxu0 0
    %1317 = vmatpush1.bf16.msra.mxu0 0
    %1318 = vmatprep.mubr.bf16.mxu0 0
    %1319 = vmatmul.mubr.bf16.gmra.mrb[0].mxu0 %v1284
    %v1320 = vpop.f32.mrb[0].mxu0
    %v1321 = vadd.f32 0.0, %v1320
    %v1322 = vpop.f32.mrb[0].mxu0
    %v1323 = vpop.f32.mrb[0].mxu0
    %v1324 = vadd.f32 0.0, %v1323
    %v1325 = vpop.f32.mrb[0].mxu0
    %1326 = vdwg.mxu0
    %v1327 = vadd.f32 %v201, %v1321
    %v1328 = vadd.f32 %v206, %v1324
    %v1329 = vld [vmem:[%s8] sm:$0x1]
    %v1330 = vld [vmem:[%s9] sm:$0xf]
    %v1331 = vld [vmem:[%s9 + $0x4] sm:$0xf]
    %v1332 = vld [vmem:[%s9 + $0x8] sm:$0xf]
    %v1333 = vld [vmem:[%s9 + $0xc] sm:$0xf]
    %v1334 = vld [vmem:[%s9 + $0x10] sm:$0xf]
    %v1335 = vld [vmem:[%s9 + $0x14] sm:$0xf]
    %v1336 = vld [vmem:[%s9 + $0x18] sm:$0xf]
    %v1337 = vld [vmem:[%s9 + $0x1c] sm:$0xf]
    %v1338 = vld [vmem:[%s10] sm:$0xf]
    %v1339 = vld [vmem:[%s10 + $0x4] sm:$0xf]
    %v1340 = vld [vmem:[%s10 + $0x8] sm:$0xf]
    %v1341 = vld [vmem:[%s10 + $0xc] sm:$0xf]
    %v1342 = vld [vmem:[%s10 + $0x10] sm:$0xf]
    %v1343 = vld [vmem:[%s10 + $0x14] sm:$0xf]
    %v1344 = vld [vmem:[%s10 + $0x18] sm:$0xf]
    %v1345 = vld [vmem:[%s10 + $0x1c] sm:$0xf]
    %v1346 = vld [vmem:[%s10 + $0x20] sm:$0xf]
    %v1347 = vld [vmem:[%s10 + $0x24] sm:$0xf]
    %v1348 = vld [vmem:[%s10 + $0x28] sm:$0xf]
    %v1349 = vld [vmem:[%s10 + $0x2c] sm:$0xf]
    %v1350 = vld [vmem:[%s10 + $0x30] sm:$0xf]
    %v1351 = vld [vmem:[%s10 + $0x34] sm:$0xf]
    %v1352 = vld [vmem:[%s10 + $0x38] sm:$0xf]
    %v1353 = vld [vmem:[%s10 + $0x3c] sm:$0xf]
    %v1354 = vmul.f32 %v1327, %v1327
    %v1355 = vmul.f32 %v1328, %v1328
    %v1356 = vsel %vm232, %v1354, 0.0
    %1357 = vadd.xlane.f32.xlu0 %v1356
    %v1358 = vpop.xlane.xlu0 %1357
    %v1359 = vsel %vm232, %v1355, 0.0
    %1360 = vadd.xlane.f32.xlu0 %v1359
    %v1361 = vpop.xlane.xlu0 %1360
    %v1362 = vmul.f32 %v1358, %v239
    %v1363 = vmul.f32 %v1361, %v239
    %v1364 = vadd.f32 %v1362, 1e-06
    %v1365 = vadd.f32 %v1363, 1e-06
    %v1366 = vrsqrt.pop %v1364
    %v1367 = vrsqrt.pop %v1365
    %v1368 = vmul.f32 %v1327, %v1366
    %v1369 = vmul.f32 %v1328, %v1367
    %v1371 = vlaneseq
    %v1372 = vshrl.u32 %v1371, 7
    %v1373 = vsub.s32 0, %v1372
    %v1374 = vrot.slane %v1329, %v1373
    %v1376 = vmul.f32 %v1368, %v1374
    %v1377 = vmul.f32 %v1369, %v1374
    %v1378 = vpack.c.bf16 %v1377, %v1376
    %v1387 = vunpack.c.l.b16 %v1330
    %v1388 = vunpack.c.l.b16 %v1331
    %v1389 = vunpack.c.l.b16 %v1332
    %v1390 = vunpack.c.l.b16 %v1333
    %v1391 = vunpack.c.l.b16 %v1334
    %v1392 = vunpack.c.l.b16 %v1335
    %v1393 = vunpack.c.l.b16 %v1336
    %v1394 = vunpack.c.l.b16 %v1337
    %v1395 = vpack.c.b16 %v1388, %v1387
    %v1396 = vpack.c.b16 %v1390, %v1389
    %v1397 = vpack.c.b16 %v1392, %v1391
    %v1398 = vpack.c.b16 %v1394, %v1393
    %v1404 = vsel %vm232, %v1378, 0
    %1406 = vmatprep.subr.bf16.mxu0 0
    %1407 = vmatpush1.bf16.msra.mxu0 %v1395
    %1408 = vmatprep.subr.bf16.mxu0 0
    %1409 = vmatpush1.bf16.msra.mxu0 %v1396
    %1410 = vmatprep.subr.bf16.mxu0 0
    %1411 = vmatpush1.bf16.msra.mxu0 %v1397
    %1412 = vmatprep.subr.bf16.mxu0 0
    %1413 = vmatpush1.bf16.msra.mxu0 %v1398
    %1414 = vmatprep.subr.bf16.mxu0 0
    %1415 = vmatpush1.bf16.msra.mxu0 0
    %1416 = vmatprep.subr.bf16.mxu0 0
    %1417 = vmatpush1.bf16.msra.mxu0 0
    %1418 = vmatprep.subr.bf16.mxu0 0
    %1419 = vmatpush1.bf16.msra.mxu0 0
    %1420 = vmatprep.subr.bf16.mxu0 0
    %1421 = vmatpush1.bf16.msra.mxu0 0
    %1422 = vmatprep.subr.bf16.mxu0 0
    %1423 = vmatpush1.bf16.msra.mxu0 0
    %1424 = vmatprep.subr.bf16.mxu0 0
    %1425 = vmatpush1.bf16.msra.mxu0 0
    %1426 = vmatprep.subr.bf16.mxu0 0
    %1427 = vmatpush1.bf16.msra.mxu0 0
    %1428 = vmatprep.subr.bf16.mxu0 0
    %1429 = vmatpush1.bf16.msra.mxu0 0
    %1430 = vmatprep.subr.bf16.mxu0 0
    %1431 = vmatpush1.bf16.msra.mxu0 0
    %1432 = vmatprep.subr.bf16.mxu0 0
    %1433 = vmatpush1.bf16.msra.mxu0 0
    %1434 = vmatprep.subr.bf16.mxu0 0
    %1435 = vmatpush1.bf16.msra.mxu0 0
    %1436 = vmatprep.subr.bf16.mxu0 0
    %1437 = vmatpush1.bf16.msra.mxu0 0
    %1438 = vmatprep.mubr.bf16.mxu0 0
    %1439 = vmatmul.mubr.bf16.gmra.mrb[0].mxu0 %v1404
    %v1440 = vpop.f32.mrb[0].mxu0
    %v1441 = vadd.f32 0.0, %v1440
    %v1442 = vpop.f32.mrb[0].mxu0
    %v1443 = vpop.f32.mrb[0].mxu0
    %v1444 = vadd.f32 0.0, %v1443
    %v1445 = vpop.f32.mrb[0].mxu0
    %1446 = vdwg.mxu0
    %v1447 = vmax.f32 %v1441, 0.0
    %v1448 = vmax.f32 %v1444, 0.0
    %v1449 = vpack.c.bf16 %v1448, %v1447
    %v1466 = vunpack.c.l.b16 %v1338
    %v1467 = vunpack.c.l.b16 %v1339
    %v1468 = vunpack.c.l.b16 %v1340
    %v1469 = vunpack.c.l.b16 %v1341
    %v1470 = vunpack.c.l.b16 %v1342
    %v1471 = vunpack.c.l.b16 %v1343
    %v1472 = vunpack.c.l.b16 %v1344
    %v1473 = vunpack.c.l.b16 %v1345
    %v1474 = vunpack.c.l.b16 %v1346
    %v1475 = vunpack.c.l.b16 %v1347
    %v1476 = vunpack.c.l.b16 %v1348
    %v1477 = vunpack.c.l.b16 %v1349
    %v1478 = vunpack.c.l.b16 %v1350
    %v1479 = vunpack.c.l.b16 %v1351
    %v1480 = vunpack.c.l.b16 %v1352
    %v1481 = vunpack.c.l.b16 %v1353
    %v1482 = vpack.c.b16 %v1467, %v1466
    %v1483 = vpack.c.b16 %v1469, %v1468
    %v1484 = vpack.c.b16 %v1471, %v1470
    %v1485 = vpack.c.b16 %v1473, %v1472
    %v1486 = vpack.c.b16 %v1475, %v1474
    %v1487 = vpack.c.b16 %v1477, %v1476
    %v1488 = vpack.c.b16 %v1479, %v1478
    %v1489 = vpack.c.b16 %v1481, %v1480
    %1498 = vmatprep.subr.bf16.mxu0 0
    %1499 = vmatpush1.bf16.msra.mxu0 %v1482
    %1500 = vmatprep.subr.bf16.mxu0 0
    %1501 = vmatpush1.bf16.msra.mxu0 %v1483
    %1502 = vmatprep.subr.bf16.mxu0 0
    %1503 = vmatpush1.bf16.msra.mxu0 %v1484
    %1504 = vmatprep.subr.bf16.mxu0 0
    %1505 = vmatpush1.bf16.msra.mxu0 %v1485
    %1506 = vmatprep.subr.bf16.mxu0 0
    %1507 = vmatpush1.bf16.msra.mxu0 %v1486
    %1508 = vmatprep.subr.bf16.mxu0 0
    %1509 = vmatpush1.bf16.msra.mxu0 %v1487
    %1510 = vmatprep.subr.bf16.mxu0 0
    %1511 = vmatpush1.bf16.msra.mxu0 %v1488
    %1512 = vmatprep.subr.bf16.mxu0 0
    %1513 = vmatpush1.bf16.msra.mxu0 %v1489
    %1514 = vmatprep.subr.bf16.mxu0 0
    %1515 = vmatpush1.bf16.msra.mxu0 0
    %1516 = vmatprep.subr.bf16.mxu0 0
    %1517 = vmatpush1.bf16.msra.mxu0 0
    %1518 = vmatprep.subr.bf16.mxu0 0
    %1519 = vmatpush1.bf16.msra.mxu0 0
    %1520 = vmatprep.subr.bf16.mxu0 0
    %1521 = vmatpush1.bf16.msra.mxu0 0
    %1522 = vmatprep.subr.bf16.mxu0 0
    %1523 = vmatpush1.bf16.msra.mxu0 0
    %1524 = vmatprep.subr.bf16.mxu0 0
    %1525 = vmatpush1.bf16.msra.mxu0 0
    %1526 = vmatprep.subr.bf16.mxu0 0
    %1527 = vmatpush1.bf16.msra.mxu0 0
    %1528 = vmatprep.subr.bf16.mxu0 0
    %1529 = vmatpush1.bf16.msra.mxu0 0
    %1530 = vmatprep.mubr.bf16.mxu0 0
    %1531 = vmatmul.mubr.bf16.gmra.mrb[0].mxu0 %v1449
    %v1532 = vpop.f32.mrb[0].mxu0
    %v1533 = vadd.f32 0.0, %v1532
    %v1534 = vpop.f32.mrb[0].mxu0
    %v1535 = vpop.f32.mrb[0].mxu0
    %v1536 = vadd.f32 0.0, %v1535
    %v1537 = vpop.f32.mrb[0].mxu0
    %1538 = vdwg.mxu0
    %v1539 = vadd.f32 %v1327, %v1533
    %v1540 = vadd.f32 %v1328, %v1536
    %s1541 = scalar_lea.vmem %s5, 1
    %v1542 = vld [vmem:[%s1541] sm:$0x1]
    %s1543 = scalar_lea.vmem %s6, 64
    %v1544 = vld [vmem:[%s1543] sm:$0xff]
    %v1545 = vld [vmem:[%s1543 + $0x8] sm:$0xff]
    %v1546 = vld [vmem:[%s1543 + $0x10] sm:$0xff]
    %v1547 = vld [vmem:[%s1543 + $0x18] sm:$0xff]
    %v1548 = vld [vmem:[%s1543 + $0x20] sm:$0xff]
    %v1549 = vld [vmem:[%s1543 + $0x28] sm:$0xff]
    %v1550 = vld [vmem:[%s1543 + $0x30] sm:$0xff]
    %v1551 = vld [vmem:[%s1543 + $0x38] sm:$0xff]
    %s1552 = scalar_lea.vmem %s7, 32
    %v1553 = vld [vmem:[%s1552] sm:$0xf]
    %v1554 = vld [vmem:[%s1552 + $0x4] sm:$0xf]
    %v1555 = vld [vmem:[%s1552 + $0x8] sm:$0xf]
    %v1556 = vld [vmem:[%s1552 + $0xc] sm:$0xf]
    %v1557 = vld [vmem:[%s1552 + $0x10] sm:$0xf]
    %v1558 = vld [vmem:[%s1552 + $0x14] sm:$0xf]
    %v1559 = vld [vmem:[%s1552 + $0x18] sm:$0xf]
    %v1560 = vld [vmem:[%s1552 + $0x1c] sm:$0xf]
    %v1561 = vmul.f32 %v1539, %v1539
    %v1562 = vmul.f32 %v1540, %v1540
    %v1563 = vsel %vm232, %v1561, 0.0
    %1564 = vadd.xlane.f32.xlu0 %v1563
    %v1565 = vpop.xlane.xlu0 %1564
    %v1566 = vsel %vm232, %v1562, 0.0
    %1567 = vadd.xlane.f32.xlu0 %v1566
    %v1568 = vpop.xlane.xlu0 %1567
    %v1569 = vmul.f32 %v1565, %v239
    %v1570 = vmul.f32 %v1568, %v239
    %v1571 = vadd.f32 %v1569, 1e-06
    %v1572 = vadd.f32 %v1570, 1e-06
    %v1573 = vrsqrt.pop %v1571
    %v1574 = vrsqrt.pop %v1572
    %v1575 = vmul.f32 %v1539, %v1573
    %v1576 = vmul.f32 %v1540, %v1574
    %v1578 = vlaneseq
    %v1579 = vshrl.u32 %v1578, 7
    %v1580 = vsub.s32 0, %v1579
    %v1581 = vrot.slane %v1542, %v1580
    %v1583 = vmul.f32 %v1575, %v1581
    %v1584 = vmul.f32 %v1576, %v1581
    %v1585 = vpack.c.bf16 %v1584, %v1583
    %v1594 = vunpack.c.l.b16 %v1544
    %v1595 = vunpack.c.h.b16 %v1544
    %v1596 = vunpack.c.l.b16 %v1545
    %v1597 = vunpack.c.h.b16 %v1545
    %v1598 = vunpack.c.l.b16 %v1546
    %v1599 = vunpack.c.h.b16 %v1546
    %v1600 = vunpack.c.l.b16 %v1547
    %v1601 = vunpack.c.h.b16 %v1547
    %v1602 = vunpack.c.l.b16 %v1548
    %v1603 = vunpack.c.h.b16 %v1548
    %v1604 = vunpack.c.l.b16 %v1549
    %v1605 = vunpack.c.h.b16 %v1549
    %v1606 = vunpack.c.l.b16 %v1550
    %v1607 = vunpack.c.h.b16 %v1550
    %v1608 = vunpack.c.l.b16 %v1551
    %v1609 = vunpack.c.h.b16 %v1551
    %v1610 = vpack.c.b16 %v1596, %v1594
    %v1611 = vpack.c.b16 %v1597, %v1595
    %v1612 = vpack.c.b16 %v1600, %v1598
    %v1613 = vpack.c.b16 %v1601, %v1599
    %v1614 = vpack.c.b16 %v1604, %v1602
    %v1615 = vpack.c.b16 %v1605, %v1603
    %v1616 = vpack.c.b16 %v1608, %v1606
    %v1617 = vpack.c.b16 %v1609, %v1607
    %v1627 = vsel %vm232, %v1585, 0
    %1629 = vmatprep.subr.bf16.mxu0 %v1611
    %1630 = vmatpush1.bf16.msra.mxu0 %v1610
    %1631 = vmatprep.subr.bf16.mxu0 %v1613
    %1632 = vmatpush1.bf16.msra.mxu0 %v1612
    %1633 = vmatprep.subr.bf16.mxu0 %v1615
    %1634 = vmatpush1.bf16.msra.mxu0 %v1614
    %1635 = vmatprep.subr.bf16.mxu0 %v1617
    %1636 = vmatpush1.bf16.msra.mxu0 %v1616
    %1637 = vmatprep.subr.bf16.mxu0 0
    %1638 = vmatpush1.bf16.msra.mxu0 0
    %1639 = vmatprep.subr.bf16.mxu0 0
    %1640 = vmatpush1.bf16.msra.mxu0 0
    %1641 = vmatprep.subr.bf16.mxu0 0
    %1642 = vmatpush1.bf16.msra.mxu0 0
    %1643 = vmatprep.subr.bf16.mxu0 0
    %1644 = vmatpush1.bf16.msra.mxu0 0
    %1645 = vmatprep.subr.bf16.mxu0 0
    %1646 = vmatpush1.bf16.msra.mxu0 0
    %1647 = vmatprep.subr.bf16.mxu0 0
    %1648 = vmatpush1.bf16.msra.mxu0 0
    %1649 = vmatprep.subr.bf16.mxu0 0
    %1650 = vmatpush1.bf16.msra.mxu0 0
    %1651 = vmatprep.subr.bf16.mxu0 0
    %1652 = vmatpush1.bf16.msra.mxu0 0
    %1653 = vmatprep.subr.bf16.mxu0 0
    %1654 = vmatpush1.bf16.msra.mxu0 0
    %1655 = vmatprep.subr.bf16.mxu0 0
    %1656 = vmatpush1.bf16.msra.mxu0 0
    %1657 = vmatprep.subr.bf16.mxu0 0
    %1658 = vmatpush1.bf16.msra.mxu0 0
    %1659 = vmatprep.subr.bf16.mxu0 0
    %1660 = vmatpush1.bf16.msra.mxu0 0
    %1661 = vmatprep.mubr.bf16.mxu0 0
    %1662 = vmatmul.mubr.bf16.gmra.mrb[0].mxu0 %v1627
    %v1663 = vpop.f32.mrb[0].mxu0
    %v1664 = vadd.f32 0.0, %v1663
    %v1665 = vpop.f32.mrb[0].mxu0
    %v1666 = vadd.f32 0.0, %v1665
    %v1667 = vpop.f32.mrb[0].mxu0
    %v1668 = vadd.f32 0.0, %v1667
    %v1669 = vpop.f32.mrb[0].mxu0
    %v1670 = vadd.f32 0.0, %v1669
    %1671 = vdwg.mxu0
    %v1672 = vpack.c.bf16 %v1664, %v1664
    %v1673 = vpack.c.bf16 %v1668, %v1668
    %v1674 = vpack.c.bf16 %v1666, %v1666
    %v1675 = vpack.c.bf16 %v1670, %v1670
    %1677 = vrot.lane.b32.xlu0 %v1672, 64
    %v1678 = vpop.permute.xlu0 %1677
    %v1680 = vsel %vm350, %v1672, 0
    %v1683 = vsel %vm350, %v1678, 0
    %1685 = vmatprep.subr.bf16.mxu0 0
    %1686 = vmatpush1.bf16.xpose.msra.mxu0 %v1683
    %1687 = vmatprep.subr.bf16.mxu0 0
    %1688 = vmatpush1.bf16.xpose.msra.mxu0 0
    %1689 = vmatprep.subr.bf16.mxu0 0
    %1690 = vmatpush1.bf16.xpose.msra.mxu0 0
    %1691 = vmatprep.subr.bf16.mxu0 0
    %1692 = vmatpush1.bf16.xpose.msra.mxu0 0
    %1693 = vmatprep.subr.bf16.mxu0 0
    %1694 = vmatpush1.bf16.xpose.msra.mxu0 0
    %1695 = vmatprep.subr.bf16.mxu0 0
    %1696 = vmatpush1.bf16.xpose.msra.mxu0 0
    %1697 = vmatprep.subr.bf16.mxu0 0
    %1698 = vmatpush1.bf16.xpose.msra.mxu0 0
    %1699 = vmatprep.subr.bf16.mxu0 0
    %1700 = vmatpush1.bf16.xpose.msra.mxu0 0
    %1701 = vmatprep.subr.bf16.mxu0 0
    %1702 = vmatpush1.bf16.xpose.msra.mxu0 0
    %1703 = vmatprep.subr.bf16.mxu0 0
    %1704 = vmatpush1.bf16.xpose.msra.mxu0 0
    %1705 = vmatprep.subr.bf16.mxu0 0
    %1706 = vmatpush1.bf16.xpose.msra.mxu0 0
    %1707 = vmatprep.subr.bf16.mxu0 0
    %1708 = vmatpush1.bf16.xpose.msra.mxu0 0
    %1709 = vmatprep.subr.bf16.mxu0 0
    %1710 = vmatpush1.bf16.xpose.msra.mxu0 0
    %1711 = vmatprep.subr.bf16.mxu0 0
    %1712 = vmatpush1.bf16.xpose.msra.mxu0 0
    %1713 = vmatprep.subr.bf16.mxu0 0
    %1714 = vmatpush1.bf16.xpose.msra.mxu0 0
    %1715 = vmatprep.subr.bf16.mxu0 0
    %1716 = vmatpush1.bf16.xpose.msra.mxu0 0
    %1717 = vmatprep.mubr.bf16.mxu0 0
    %1718 = vmatmul.mubr.bf16.gmra.mrb[0].mxu0 %v1680
    %v1719 = vpop.f32.mrb[0].mxu0
    %v1720 = vadd.f32 %v209, %v1719
    %v1721 = vpop.f32.mrb[0].mxu0
    %v1722 = vpop.f32.mrb[0].mxu0
    %v1723 = vpop.f32.mrb[0].mxu0
    %1724 = vdwg.mxu0
    %1726 = vrot.lane.b32.xlu0 %v1673, 64
    %v1727 = vpop.permute.xlu0 %1726
    %v1729 = vsel %vm350, %v1673, 0
    %v1732 = vsel %vm350, %v1727, 0
    %1734 = vmatprep.subr.bf16.mxu0 0
    %1735 = vmatpush1.bf16.xpose.msra.mxu0 %v1732
    %1736 = vmatprep.subr.bf16.mxu0 0
    %1737 = vmatpush1.bf16.xpose.msra.mxu0 0
    %1738 = vmatprep.subr.bf16.mxu0 0
    %1739 = vmatpush1.bf16.xpose.msra.mxu0 0
    %1740 = vmatprep.subr.bf16.mxu0 0
    %1741 = vmatpush1.bf16.xpose.msra.mxu0 0
    %1742 = vmatprep.subr.bf16.mxu0 0
    %1743 = vmatpush1.bf16.xpose.msra.mxu0 0
    %1744 = vmatprep.subr.bf16.mxu0 0
    %1745 = vmatpush1.bf16.xpose.msra.mxu0 0
    %1746 = vmatprep.subr.bf16.mxu0 0
    %1747 = vmatpush1.bf16.xpose.msra.mxu0 0
    %1748 = vmatprep.subr.bf16.mxu0 0
    %1749 = vmatpush1.bf16.xpose.msra.mxu0 0
    %1750 = vmatprep.subr.bf16.mxu0 0
    %1751 = vmatpush1.bf16.xpose.msra.mxu0 0
    %1752 = vmatprep.subr.bf16.mxu0 0
    %1753 = vmatpush1.bf16.xpose.msra.mxu0 0
    %1754 = vmatprep.subr.bf16.mxu0 0
    %1755 = vmatpush1.bf16.xpose.msra.mxu0 0
    %1756 = vmatprep.subr.bf16.mxu0 0
    %1757 = vmatpush1.bf16.xpose.msra.mxu0 0
    %1758 = vmatprep.subr.bf16.mxu0 0
    %1759 = vmatpush1.bf16.xpose.msra.mxu0 0
    %1760 = vmatprep.subr.bf16.mxu0 0
    %1761 = vmatpush1.bf16.xpose.msra.mxu0 0
    %1762 = vmatprep.subr.bf16.mxu0 0
    %1763 = vmatpush1.bf16.xpose.msra.mxu0 0
    %1764 = vmatprep.subr.bf16.mxu0 0
    %1765 = vmatpush1.bf16.xpose.msra.mxu0 0
    %1766 = vmatprep.mubr.bf16.mxu0 0
    %1767 = vmatmul.mubr.bf16.gmra.mrb[0].mxu0 %v1729
    %v1768 = vpop.f32.mrb[0].mxu0
    %v1769 = vadd.f32 %v209, %v1768
    %v1770 = vpop.f32.mrb[0].mxu0
    %v1771 = vpop.f32.mrb[0].mxu0
    %v1772 = vpop.f32.mrb[0].mxu0
    %1773 = vdwg.mxu0
    %v1774 = vsel %vm446, %v1720, -inf
    %1775 = vmax.xlane.f32.xlu0 %v1774
    %v1776 = vpop.xlane.xlu0 %1775
    %v1777 = vsel %vm446, %v1769, -inf
    %1778 = vmax.xlane.f32.xlu0 %v1777
    %v1779 = vpop.xlane.xlu0 %1778
    %v1780 = vsub.f32 %v1720, %v1776
    %v1781 = vsub.f32 %v1769, %v1779
    %v1782 = vmul.f32 %v1780, 1.442695
    %v1783 = vpow.pop %v1782
    %v1784 = vmul.f32 %v1781, 1.442695
    %v1785 = vpow.pop %v1784
    %v1786 = vsel %vm446, %v1783, 0.0
    %1787 = vadd.xlane.f32.xlu0 %v1786
    %v1788 = vpop.xlane.xlu0 %1787
    %v1789 = vsel %vm446, %v1785, 0.0
    %1790 = vadd.xlane.f32.xlu0 %v1789
    %v1791 = vpop.xlane.xlu0 %1790
    %v1792 = vrcp.pop %v1788
    %v1793 = vrcp.pop %v1791
    %v1794 = vmul.f32 %v1783, %v1792
    %v1795 = vmul.f32 %v1785, %v1793
    %v1796 = vpack.c.bf16 %v1794, %v1794
    %v1797 = vpack.c.bf16 %v1795, %v1795
    %v1799 = vsel %vm446, %v1796, 0
    %v1802 = vsel %vm474, %v1674, 0
    %1804 = vmatprep.subr.bf16.mxu0 0
    %1805 = vmatpush1.bf16.msra.mxu0 %v1802
    %1806 = vmatprep.subr.bf16.mxu0 0
    %1807 = vmatpush1.bf16.msra.mxu0 0
    %1808 = vmatprep.subr.bf16.mxu0 0
    %1809 = vmatpush1.bf16.msra.mxu0 0
    %1810 = vmatprep.subr.bf16.mxu0 0
    %1811 = vmatpush1.bf16.msra.mxu0 0
    %1812 = vmatprep.subr.bf16.mxu0 0
    %1813 = vmatpush1.bf16.msra.mxu0 0
    %1814 = vmatprep.subr.bf16.mxu0 0
    %1815 = vmatpush1.bf16.msra.mxu0 0
    %1816 = vmatprep.subr.bf16.mxu0 0
    %1817 = vmatpush1.bf16.msra.mxu0 0
    %1818 = vmatprep.subr.bf16.mxu0 0
    %1819 = vmatpush1.bf16.msra.mxu0 0
    %1820 = vmatprep.subr.bf16.mxu0 0
    %1821 = vmatpush1.bf16.msra.mxu0 0
    %1822 = vmatprep.subr.bf16.mxu0 0
    %1823 = vmatpush1.bf16.msra.mxu0 0
    %1824 = vmatprep.subr.bf16.mxu0 0
    %1825 = vmatpush1.bf16.msra.mxu0 0
    %1826 = vmatprep.subr.bf16.mxu0 0
    %1827 = vmatpush1.bf16.msra.mxu0 0
    %1828 = vmatprep.subr.bf16.mxu0 0
    %1829 = vmatpush1.bf16.msra.mxu0 0
    %1830 = vmatprep.subr.bf16.mxu0 0
    %1831 = vmatpush1.bf16.msra.mxu0 0
    %1832 = vmatprep.subr.bf16.mxu0 0
    %1833 = vmatpush1.bf16.msra.mxu0 0
    %1834 = vmatprep.subr.bf16.mxu0 0
    %1835 = vmatpush1.bf16.msra.mxu0 0
    %1836 = vmatprep.mubr.bf16.mxu0 0
    %1837 = vmatmul.mubr.bf16.gmra.mrb[0].mxu0 %v1799
    %v1838 = vpop.f32.mrb[0].mxu0
    %v1839 = vadd.f32 0.0, %v1838
    %v1840 = vpop.f32.mrb[0].mxu0
    %v1841 = vpop.f32.mrb[0].mxu0
    %v1842 = vpop.f32.mrb[0].mxu0
    %1843 = vdwg.mxu0
    %v1845 = vsel %vm446, %v1797, 0
    %v1848 = vsel %vm474, %v1675, 0
    %1850 = vmatprep.subr.bf16.mxu0 0
    %1851 = vmatpush1.bf16.msra.mxu0 %v1848
    %1852 = vmatprep.subr.bf16.mxu0 0
    %1853 = vmatpush1.bf16.msra.mxu0 0
    %1854 = vmatprep.subr.bf16.mxu0 0
    %1855 = vmatpush1.bf16.msra.mxu0 0
    %1856 = vmatprep.subr.bf16.mxu0 0
    %1857 = vmatpush1.bf16.msra.mxu0 0
    %1858 = vmatprep.subr.bf16.mxu0 0
    %1859 = vmatpush1.bf16.msra.mxu0 0
    %1860 = vmatprep.subr.bf16.mxu0 0
    %1861 = vmatpush1.bf16.msra.mxu0 0
    %1862 = vmatprep.subr.bf16.mxu0 0
    %1863 = vmatpush1.bf16.msra.mxu0 0
    %1864 = vmatprep.subr.bf16.mxu0 0
    %1865 = vmatpush1.bf16.msra.mxu0 0
    %1866 = vmatprep.subr.bf16.mxu0 0
    %1867 = vmatpush1.bf16.msra.mxu0 0
    %1868 = vmatprep.subr.bf16.mxu0 0
    %1869 = vmatpush1.bf16.msra.mxu0 0
    %1870 = vmatprep.subr.bf16.mxu0 0
    %1871 = vmatpush1.bf16.msra.mxu0 0
    %1872 = vmatprep.subr.bf16.mxu0 0
    %1873 = vmatpush1.bf16.msra.mxu0 0
    %1874 = vmatprep.subr.bf16.mxu0 0
    %1875 = vmatpush1.bf16.msra.mxu0 0
    %1876 = vmatprep.subr.bf16.mxu0 0
    %1877 = vmatpush1.bf16.msra.mxu0 0
    %1878 = vmatprep.subr.bf16.mxu0 0
    %1879 = vmatpush1.bf16.msra.mxu0 0
    %1880 = vmatprep.subr.bf16.mxu0 0
    %1881 = vmatpush1.bf16.msra.mxu0 0
    %1882 = vmatprep.mubr.bf16.mxu0 0
    %1883 = vmatmul.mubr.bf16.gmra.mrb[0].mxu0 %v1845
    %v1884 = vpop.f32.mrb[0].mxu0
    %v1885 = vadd.f32 0.0, %v1884
    %v1886 = vpop.f32.mrb[0].mxu0
    %v1887 = vpop.f32.mrb[0].mxu0
    %v1888 = vpop.f32.mrb[0].mxu0
    %1889 = vdwg.mxu0
    %1890 = vrot.lane.b32.xlu0 %v1672, 112
    %v1891 = vpop.permute.xlu0 %1890
    %1892 = vrot.lane.b32.xlu0 %v1672, 48
    %v1893 = vpop.permute.xlu0 %1892
    %v1895 = vsel %vm350, %v1891, 0
    %v1898 = vsel %vm350, %v1893, 0
    %1900 = vmatprep.subr.bf16.mxu0 0
    %1901 = vmatpush1.bf16.xpose.msra.mxu0 %v1898
    %1902 = vmatprep.subr.bf16.mxu0 0
    %1903 = vmatpush1.bf16.xpose.msra.mxu0 0
    %1904 = vmatprep.subr.bf16.mxu0 0
    %1905 = vmatpush1.bf16.xpose.msra.mxu0 0
    %1906 = vmatprep.subr.bf16.mxu0 0
    %1907 = vmatpush1.bf16.xpose.msra.mxu0 0
    %1908 = vmatprep.subr.bf16.mxu0 0
    %1909 = vmatpush1.bf16.xpose.msra.mxu0 0
    %1910 = vmatprep.subr.bf16.mxu0 0
    %1911 = vmatpush1.bf16.xpose.msra.mxu0 0
    %1912 = vmatprep.subr.bf16.mxu0 0
    %1913 = vmatpush1.bf16.xpose.msra.mxu0 0
    %1914 = vmatprep.subr.bf16.mxu0 0
    %1915 = vmatpush1.bf16.xpose.msra.mxu0 0
    %1916 = vmatprep.subr.bf16.mxu0 0
    %1917 = vmatpush1.bf16.xpose.msra.mxu0 0
    %1918 = vmatprep.subr.bf16.mxu0 0
    %1919 = vmatpush1.bf16.xpose.msra.mxu0 0
    %1920 = vmatprep.subr.bf16.mxu0 0
    %1921 = vmatpush1.bf16.xpose.msra.mxu0 0
    %1922 = vmatprep.subr.bf16.mxu0 0
    %1923 = vmatpush1.bf16.xpose.msra.mxu0 0
    %1924 = vmatprep.subr.bf16.mxu0 0
    %1925 = vmatpush1.bf16.xpose.msra.mxu0 0
    %1926 = vmatprep.subr.bf16.mxu0 0
    %1927 = vmatpush1.bf16.xpose.msra.mxu0 0
    %1928 = vmatprep.subr.bf16.mxu0 0
    %1929 = vmatpush1.bf16.xpose.msra.mxu0 0
    %1930 = vmatprep.subr.bf16.mxu0 0
    %1931 = vmatpush1.bf16.xpose.msra.mxu0 0
    %1932 = vmatprep.mubr.bf16.mxu0 0
    %1933 = vmatmul.mubr.bf16.gmra.mrb[0].mxu0 %v1895
    %v1934 = vpop.f32.mrb[0].mxu0
    %v1935 = vadd.f32 %v210, %v1934
    %v1936 = vpop.f32.mrb[0].mxu0
    %v1937 = vpop.f32.mrb[0].mxu0
    %v1938 = vpop.f32.mrb[0].mxu0
    %1939 = vdwg.mxu0
    %1940 = vrot.lane.b32.xlu0 %v1673, 112
    %v1941 = vpop.permute.xlu0 %1940
    %1942 = vrot.lane.b32.xlu0 %v1673, 48
    %v1943 = vpop.permute.xlu0 %1942
    %v1945 = vsel %vm350, %v1941, 0
    %v1948 = vsel %vm350, %v1943, 0
    %1950 = vmatprep.subr.bf16.mxu0 0
    %1951 = vmatpush1.bf16.xpose.msra.mxu0 %v1948
    %1952 = vmatprep.subr.bf16.mxu0 0
    %1953 = vmatpush1.bf16.xpose.msra.mxu0 0
    %1954 = vmatprep.subr.bf16.mxu0 0
    %1955 = vmatpush1.bf16.xpose.msra.mxu0 0
    %1956 = vmatprep.subr.bf16.mxu0 0
    %1957 = vmatpush1.bf16.xpose.msra.mxu0 0
    %1958 = vmatprep.subr.bf16.mxu0 0
    %1959 = vmatpush1.bf16.xpose.msra.mxu0 0
    %1960 = vmatprep.subr.bf16.mxu0 0
    %1961 = vmatpush1.bf16.xpose.msra.mxu0 0
    %1962 = vmatprep.subr.bf16.mxu0 0
    %1963 = vmatpush1.bf16.xpose.msra.mxu0 0
    %1964 = vmatprep.subr.bf16.mxu0 0
    %1965 = vmatpush1.bf16.xpose.msra.mxu0 0
    %1966 = vmatprep.subr.bf16.mxu0 0
    %1967 = vmatpush1.bf16.xpose.msra.mxu0 0
    %1968 = vmatprep.subr.bf16.mxu0 0
    %1969 = vmatpush1.bf16.xpose.msra.mxu0 0
    %1970 = vmatprep.subr.bf16.mxu0 0
    %1971 = vmatpush1.bf16.xpose.msra.mxu0 0
    %1972 = vmatprep.subr.bf16.mxu0 0
    %1973 = vmatpush1.bf16.xpose.msra.mxu0 0
    %1974 = vmatprep.subr.bf16.mxu0 0
    %1975 = vmatpush1.bf16.xpose.msra.mxu0 0
    %1976 = vmatprep.subr.bf16.mxu0 0
    %1977 = vmatpush1.bf16.xpose.msra.mxu0 0
    %1978 = vmatprep.subr.bf16.mxu0 0
    %1979 = vmatpush1.bf16.xpose.msra.mxu0 0
    %1980 = vmatprep.subr.bf16.mxu0 0
    %1981 = vmatpush1.bf16.xpose.msra.mxu0 0
    %1982 = vmatprep.mubr.bf16.mxu0 0
    %1983 = vmatmul.mubr.bf16.gmra.mrb[0].mxu0 %v1945
    %v1984 = vpop.f32.mrb[0].mxu0
    %v1985 = vadd.f32 %v210, %v1984
    %v1986 = vpop.f32.mrb[0].mxu0
    %v1987 = vpop.f32.mrb[0].mxu0
    %v1988 = vpop.f32.mrb[0].mxu0
    %1989 = vdwg.mxu0
    %v1990 = vsel %vm446, %v1935, -inf
    %1991 = vmax.xlane.f32.xlu0 %v1990
    %v1992 = vpop.xlane.xlu0 %1991
    %v1993 = vsel %vm446, %v1985, -inf
    %1994 = vmax.xlane.f32.xlu0 %v1993
    %v1995 = vpop.xlane.xlu0 %1994
    %v1996 = vsub.f32 %v1935, %v1992
    %v1997 = vsub.f32 %v1985, %v1995
    %v1998 = vmul.f32 %v1996, 1.442695
    %v1999 = vpow.pop %v1998
    %v2000 = vmul.f32 %v1997, 1.442695
    %v2001 = vpow.pop %v2000
    %v2002 = vsel %vm446, %v1999, 0.0
    %2003 = vadd.xlane.f32.xlu0 %v2002
    %v2004 = vpop.xlane.xlu0 %2003
    %v2005 = vsel %vm446, %v2001, 0.0
    %2006 = vadd.xlane.f32.xlu0 %v2005
    %v2007 = vpop.xlane.xlu0 %2006
    %v2008 = vrcp.pop %v2004
    %v2009 = vrcp.pop %v2007
    %v2010 = vmul.f32 %v1999, %v2008
    %v2011 = vmul.f32 %v2001, %v2009
    %v2012 = vpack.c.bf16 %v2010, %v2010
    %v2013 = vpack.c.bf16 %v2011, %v2011
    %2015 = vrot.lane.b32.xlu0 %v1674, 112
    %v2016 = vpop.permute.xlu0 %2015
    %v2018 = vsel %vm446, %v2012, 0
    %v2021 = vsel %vm474, %v2016, 0
    %2023 = vmatprep.subr.bf16.mxu0 0
    %2024 = vmatpush1.bf16.msra.mxu0 %v2021
    %2025 = vmatprep.subr.bf16.mxu0 0
    %2026 = vmatpush1.bf16.msra.mxu0 0
    %2027 = vmatprep.subr.bf16.mxu0 0
    %2028 = vmatpush1.bf16.msra.mxu0 0
    %2029 = vmatprep.subr.bf16.mxu0 0
    %2030 = vmatpush1.bf16.msra.mxu0 0
    %2031 = vmatprep.subr.bf16.mxu0 0
    %2032 = vmatpush1.bf16.msra.mxu0 0
    %2033 = vmatprep.subr.bf16.mxu0 0
    %2034 = vmatpush1.bf16.msra.mxu0 0
    %2035 = vmatprep.subr.bf16.mxu0 0
    %2036 = vmatpush1.bf16.msra.mxu0 0
    %2037 = vmatprep.subr.bf16.mxu0 0
    %2038 = vmatpush1.bf16.msra.mxu0 0
    %2039 = vmatprep.subr.bf16.mxu0 0
    %2040 = vmatpush1.bf16.msra.mxu0 0
    %2041 = vmatprep.subr.bf16.mxu0 0
    %2042 = vmatpush1.bf16.msra.mxu0 0
    %2043 = vmatprep.subr.bf16.mxu0 0
    %2044 = vmatpush1.bf16.msra.mxu0 0
    %2045 = vmatprep.subr.bf16.mxu0 0
    %2046 = vmatpush1.bf16.msra.mxu0 0
    %2047 = vmatprep.subr.bf16.mxu0 0
    %2048 = vmatpush1.bf16.msra.mxu0 0
    %2049 = vmatprep.subr.bf16.mxu0 0
    %2050 = vmatpush1.bf16.msra.mxu0 0
    %2051 = vmatprep.subr.bf16.mxu0 0
    %2052 = vmatpush1.bf16.msra.mxu0 0
    %2053 = vmatprep.subr.bf16.mxu0 0
    %2054 = vmatpush1.bf16.msra.mxu0 0
    %2055 = vmatprep.mubr.bf16.mxu0 0
    %2056 = vmatmul.mubr.bf16.gmra.mrb[0].mxu0 %v2018
    %v2057 = vpop.f32.mrb[0].mxu0
    %v2058 = vadd.f32 0.0, %v2057
    %v2059 = vpop.f32.mrb[0].mxu0
    %v2060 = vpop.f32.mrb[0].mxu0
    %v2061 = vpop.f32.mrb[0].mxu0
    %2062 = vdwg.mxu0
    %2064 = vrot.lane.b32.xlu0 %v1675, 112
    %v2065 = vpop.permute.xlu0 %2064
    %v2067 = vsel %vm446, %v2013, 0
    %v2070 = vsel %vm474, %v2065, 0
    %2072 = vmatprep.subr.bf16.mxu0 0
    %2073 = vmatpush1.bf16.msra.mxu0 %v2070
    %2074 = vmatprep.subr.bf16.mxu0 0
    %2075 = vmatpush1.bf16.msra.mxu0 0
    %2076 = vmatprep.subr.bf16.mxu0 0
    %2077 = vmatpush1.bf16.msra.mxu0 0
    %2078 = vmatprep.subr.bf16.mxu0 0
    %2079 = vmatpush1.bf16.msra.mxu0 0
    %2080 = vmatprep.subr.bf16.mxu0 0
    %2081 = vmatpush1.bf16.msra.mxu0 0
    %2082 = vmatprep.subr.bf16.mxu0 0
    %2083 = vmatpush1.bf16.msra.mxu0 0
    %2084 = vmatprep.subr.bf16.mxu0 0
    %2085 = vmatpush1.bf16.msra.mxu0 0
    %2086 = vmatprep.subr.bf16.mxu0 0
    %2087 = vmatpush1.bf16.msra.mxu0 0
    %2088 = vmatprep.subr.bf16.mxu0 0
    %2089 = vmatpush1.bf16.msra.mxu0 0
    %2090 = vmatprep.subr.bf16.mxu0 0
    %2091 = vmatpush1.bf16.msra.mxu0 0
    %2092 = vmatprep.subr.bf16.mxu0 0
    %2093 = vmatpush1.bf16.msra.mxu0 0
    %2094 = vmatprep.subr.bf16.mxu0 0
    %2095 = vmatpush1.bf16.msra.mxu0 0
    %2096 = vmatprep.subr.bf16.mxu0 0
    %2097 = vmatpush1.bf16.msra.mxu0 0
    %2098 = vmatprep.subr.bf16.mxu0 0
    %2099 = vmatpush1.bf16.msra.mxu0 0
    %2100 = vmatprep.subr.bf16.mxu0 0
    %2101 = vmatpush1.bf16.msra.mxu0 0
    %2102 = vmatprep.subr.bf16.mxu0 0
    %2103 = vmatpush1.bf16.msra.mxu0 0
    %2104 = vmatprep.mubr.bf16.mxu0 0
    %2105 = vmatmul.mubr.bf16.gmra.mrb[0].mxu0 %v2067
    %v2106 = vpop.f32.mrb[0].mxu0
    %v2107 = vadd.f32 0.0, %v2106
    %v2108 = vpop.f32.mrb[0].mxu0
    %v2109 = vpop.f32.mrb[0].mxu0
    %v2110 = vpop.f32.mrb[0].mxu0
    %2111 = vdwg.mxu0
    %2112 = vrot.lane.b32.xlu0 %v1672, 96
    %v2113 = vpop.permute.xlu0 %2112
    %2114 = vrot.lane.b32.xlu0 %v1672, 32
    %v2115 = vpop.permute.xlu0 %2114
    %v2117 = vsel %vm350, %v2113, 0
    %v2120 = vsel %vm350, %v2115, 0
    %2122 = vmatprep.subr.bf16.mxu0 0
    %2123 = vmatpush1.bf16.xpose.msra.mxu0 %v2120
    %2124 = vmatprep.subr.bf16.mxu0 0
    %2125 = vmatpush1.bf16.xpose.msra.mxu0 0
    %2126 = vmatprep.subr.bf16.mxu0 0
    %2127 = vmatpush1.bf16.xpose.msra.mxu0 0
    %2128 = vmatprep.subr.bf16.mxu0 0
    %2129 = vmatpush1.bf16.xpose.msra.mxu0 0
    %2130 = vmatprep.subr.bf16.mxu0 0
    %2131 = vmatpush1.bf16.xpose.msra.mxu0 0
    %2132 = vmatprep.subr.bf16.mxu0 0
    %2133 = vmatpush1.bf16.xpose.msra.mxu0 0
    %2134 = vmatprep.subr.bf16.mxu0 0
    %2135 = vmatpush1.bf16.xpose.msra.mxu0 0
    %2136 = vmatprep.subr.bf16.mxu0 0
    %2137 = vmatpush1.bf16.xpose.msra.mxu0 0
    %2138 = vmatprep.subr.bf16.mxu0 0
    %2139 = vmatpush1.bf16.xpose.msra.mxu0 0
    %2140 = vmatprep.subr.bf16.mxu0 0
    %2141 = vmatpush1.bf16.xpose.msra.mxu0 0
    %2142 = vmatprep.subr.bf16.mxu0 0
    %2143 = vmatpush1.bf16.xpose.msra.mxu0 0
    %2144 = vmatprep.subr.bf16.mxu0 0
    %2145 = vmatpush1.bf16.xpose.msra.mxu0 0
    %2146 = vmatprep.subr.bf16.mxu0 0
    %2147 = vmatpush1.bf16.xpose.msra.mxu0 0
    %2148 = vmatprep.subr.bf16.mxu0 0
    %2149 = vmatpush1.bf16.xpose.msra.mxu0 0
    %2150 = vmatprep.subr.bf16.mxu0 0
    %2151 = vmatpush1.bf16.xpose.msra.mxu0 0
    %2152 = vmatprep.subr.bf16.mxu0 0
    %2153 = vmatpush1.bf16.xpose.msra.mxu0 0
    %2154 = vmatprep.mubr.bf16.mxu0 0
    %2155 = vmatmul.mubr.bf16.gmra.mrb[0].mxu0 %v2117
    %v2156 = vpop.f32.mrb[0].mxu0
    %v2157 = vadd.f32 %v211, %v2156
    %v2158 = vpop.f32.mrb[0].mxu0
    %v2159 = vpop.f32.mrb[0].mxu0
    %v2160 = vpop.f32.mrb[0].mxu0
    %2161 = vdwg.mxu0
    %2162 = vrot.lane.b32.xlu0 %v1673, 96
    %v2163 = vpop.permute.xlu0 %2162
    %2164 = vrot.lane.b32.xlu0 %v1673, 32
    %v2165 = vpop.permute.xlu0 %2164
    %v2167 = vsel %vm350, %v2163, 0
    %v2170 = vsel %vm350, %v2165, 0
    %2172 = vmatprep.subr.bf16.mxu0 0
    %2173 = vmatpush1.bf16.xpose.msra.mxu0 %v2170
    %2174 = vmatprep.subr.bf16.mxu0 0
    %2175 = vmatpush1.bf16.xpose.msra.mxu0 0
    %2176 = vmatprep.subr.bf16.mxu0 0
    %2177 = vmatpush1.bf16.xpose.msra.mxu0 0
    %2178 = vmatprep.subr.bf16.mxu0 0
    %2179 = vmatpush1.bf16.xpose.msra.mxu0 0
    %2180 = vmatprep.subr.bf16.mxu0 0
    %2181 = vmatpush1.bf16.xpose.msra.mxu0 0
    %2182 = vmatprep.subr.bf16.mxu0 0
    %2183 = vmatpush1.bf16.xpose.msra.mxu0 0
    %2184 = vmatprep.subr.bf16.mxu0 0
    %2185 = vmatpush1.bf16.xpose.msra.mxu0 0
    %2186 = vmatprep.subr.bf16.mxu0 0
    %2187 = vmatpush1.bf16.xpose.msra.mxu0 0
    %2188 = vmatprep.subr.bf16.mxu0 0
    %2189 = vmatpush1.bf16.xpose.msra.mxu0 0
    %2190 = vmatprep.subr.bf16.mxu0 0
    %2191 = vmatpush1.bf16.xpose.msra.mxu0 0
    %2192 = vmatprep.subr.bf16.mxu0 0
    %2193 = vmatpush1.bf16.xpose.msra.mxu0 0
    %2194 = vmatprep.subr.bf16.mxu0 0
    %2195 = vmatpush1.bf16.xpose.msra.mxu0 0
    %2196 = vmatprep.subr.bf16.mxu0 0
    %2197 = vmatpush1.bf16.xpose.msra.mxu0 0
    %2198 = vmatprep.subr.bf16.mxu0 0
    %2199 = vmatpush1.bf16.xpose.msra.mxu0 0
    %2200 = vmatprep.subr.bf16.mxu0 0
    %2201 = vmatpush1.bf16.xpose.msra.mxu0 0
    %2202 = vmatprep.subr.bf16.mxu0 0
    %2203 = vmatpush1.bf16.xpose.msra.mxu0 0
    %2204 = vmatprep.mubr.bf16.mxu0 0
    %2205 = vmatmul.mubr.bf16.gmra.mrb[0].mxu0 %v2167
    %v2206 = vpop.f32.mrb[0].mxu0
    %v2207 = vadd.f32 %v211, %v2206
    %v2208 = vpop.f32.mrb[0].mxu0
    %v2209 = vpop.f32.mrb[0].mxu0
    %v2210 = vpop.f32.mrb[0].mxu0
    %2211 = vdwg.mxu0
    %v2212 = vsel %vm446, %v2157, -inf
    %2213 = vmax.xlane.f32.xlu0 %v2212
    %v2214 = vpop.xlane.xlu0 %2213
    %v2215 = vsel %vm446, %v2207, -inf
    %2216 = vmax.xlane.f32.xlu0 %v2215
    %v2217 = vpop.xlane.xlu0 %2216
    %v2218 = vsub.f32 %v2157, %v2214
    %v2219 = vsub.f32 %v2207, %v2217
    %v2220 = vmul.f32 %v2218, 1.442695
    %v2221 = vpow.pop %v2220
    %v2222 = vmul.f32 %v2219, 1.442695
    %v2223 = vpow.pop %v2222
    %v2224 = vsel %vm446, %v2221, 0.0
    %2225 = vadd.xlane.f32.xlu0 %v2224
    %v2226 = vpop.xlane.xlu0 %2225
    %v2227 = vsel %vm446, %v2223, 0.0
    %2228 = vadd.xlane.f32.xlu0 %v2227
    %v2229 = vpop.xlane.xlu0 %2228
    %v2230 = vrcp.pop %v2226
    %v2231 = vrcp.pop %v2229
    %v2232 = vmul.f32 %v2221, %v2230
    %v2233 = vmul.f32 %v2223, %v2231
    %v2234 = vpack.c.bf16 %v2232, %v2232
    %v2235 = vpack.c.bf16 %v2233, %v2233
    %2236 = vrot.lane.b32.xlu0 %v1674, 96
    %v2237 = vpop.permute.xlu0 %2236
    %v2239 = vsel %vm446, %v2234, 0
    %v2242 = vsel %vm474, %v2237, 0
    %2244 = vmatprep.subr.bf16.mxu0 0
    %2245 = vmatpush1.bf16.msra.mxu0 %v2242
    %2246 = vmatprep.subr.bf16.mxu0 0
    %2247 = vmatpush1.bf16.msra.mxu0 0
    %2248 = vmatprep.subr.bf16.mxu0 0
    %2249 = vmatpush1.bf16.msra.mxu0 0
    %2250 = vmatprep.subr.bf16.mxu0 0
    %2251 = vmatpush1.bf16.msra.mxu0 0
    %2252 = vmatprep.subr.bf16.mxu0 0
    %2253 = vmatpush1.bf16.msra.mxu0 0
    %2254 = vmatprep.subr.bf16.mxu0 0
    %2255 = vmatpush1.bf16.msra.mxu0 0
    %2256 = vmatprep.subr.bf16.mxu0 0
    %2257 = vmatpush1.bf16.msra.mxu0 0
    %2258 = vmatprep.subr.bf16.mxu0 0
    %2259 = vmatpush1.bf16.msra.mxu0 0
    %2260 = vmatprep.subr.bf16.mxu0 0
    %2261 = vmatpush1.bf16.msra.mxu0 0
    %2262 = vmatprep.subr.bf16.mxu0 0
    %2263 = vmatpush1.bf16.msra.mxu0 0
    %2264 = vmatprep.subr.bf16.mxu0 0
    %2265 = vmatpush1.bf16.msra.mxu0 0
    %2266 = vmatprep.subr.bf16.mxu0 0
    %2267 = vmatpush1.bf16.msra.mxu0 0
    %2268 = vmatprep.subr.bf16.mxu0 0
    %2269 = vmatpush1.bf16.msra.mxu0 0
    %2270 = vmatprep.subr.bf16.mxu0 0
    %2271 = vmatpush1.bf16.msra.mxu0 0
    %2272 = vmatprep.subr.bf16.mxu0 0
    %2273 = vmatpush1.bf16.msra.mxu0 0
    %2274 = vmatprep.subr.bf16.mxu0 0
    %2275 = vmatpush1.bf16.msra.mxu0 0
    %2276 = vmatprep.mubr.bf16.mxu0 0
    %2277 = vmatmul.mubr.bf16.gmra.mrb[0].mxu0 %v2239
    %v2278 = vpop.f32.mrb[0].mxu0
    %v2279 = vadd.f32 0.0, %v2278
    %v2280 = vpop.f32.mrb[0].mxu0
    %v2281 = vpop.f32.mrb[0].mxu0
    %v2282 = vpop.f32.mrb[0].mxu0
    %2283 = vdwg.mxu0
    %2284 = vrot.lane.b32.xlu0 %v1675, 96
    %v2285 = vpop.permute.xlu0 %2284
    %v2287 = vsel %vm446, %v2235, 0
    %v2290 = vsel %vm474, %v2285, 0
    %2292 = vmatprep.subr.bf16.mxu0 0
    %2293 = vmatpush1.bf16.msra.mxu0 %v2290
    %2294 = vmatprep.subr.bf16.mxu0 0
    %2295 = vmatpush1.bf16.msra.mxu0 0
    %2296 = vmatprep.subr.bf16.mxu0 0
    %2297 = vmatpush1.bf16.msra.mxu0 0
    %2298 = vmatprep.subr.bf16.mxu0 0
    %2299 = vmatpush1.bf16.msra.mxu0 0
    %2300 = vmatprep.subr.bf16.mxu0 0
    %2301 = vmatpush1.bf16.msra.mxu0 0
    %2302 = vmatprep.subr.bf16.mxu0 0
    %2303 = vmatpush1.bf16.msra.mxu0 0
    %2304 = vmatprep.subr.bf16.mxu0 0
    %2305 = vmatpush1.bf16.msra.mxu0 0
    %2306 = vmatprep.subr.bf16.mxu0 0
    %2307 = vmatpush1.bf16.msra.mxu0 0
    %2308 = vmatprep.subr.bf16.mxu0 0
    %2309 = vmatpush1.bf16.msra.mxu0 0
    %2310 = vmatprep.subr.bf16.mxu0 0
    %2311 = vmatpush1.bf16.msra.mxu0 0
    %2312 = vmatprep.subr.bf16.mxu0 0
    %2313 = vmatpush1.bf16.msra.mxu0 0
    %2314 = vmatprep.subr.bf16.mxu0 0
    %2315 = vmatpush1.bf16.msra.mxu0 0
    %2316 = vmatprep.subr.bf16.mxu0 0
    %2317 = vmatpush1.bf16.msra.mxu0 0
    %2318 = vmatprep.subr.bf16.mxu0 0
    %2319 = vmatpush1.bf16.msra.mxu0 0
    %2320 = vmatprep.subr.bf16.mxu0 0
    %2321 = vmatpush1.bf16.msra.mxu0 0
    %2322 = vmatprep.subr.bf16.mxu0 0
    %2323 = vmatpush1.bf16.msra.mxu0 0
    %2324 = vmatprep.mubr.bf16.mxu0 0
    %2325 = vmatmul.mubr.bf16.gmra.mrb[0].mxu0 %v2287
    %v2326 = vpop.f32.mrb[0].mxu0
    %v2327 = vadd.f32 0.0, %v2326
    %v2328 = vpop.f32.mrb[0].mxu0
    %v2329 = vpop.f32.mrb[0].mxu0
    %v2330 = vpop.f32.mrb[0].mxu0
    %2331 = vdwg.mxu0
    %2332 = vrot.lane.b32.xlu0 %v1672, 80
    %v2333 = vpop.permute.xlu0 %2332
    %2334 = vrot.lane.b32.xlu0 %v1672, 16
    %v2335 = vpop.permute.xlu0 %2334
    %v2337 = vsel %vm350, %v2333, 0
    %v2340 = vsel %vm350, %v2335, 0
    %2342 = vmatprep.subr.bf16.mxu0 0
    %2343 = vmatpush1.bf16.xpose.msra.mxu0 %v2340
    %2344 = vmatprep.subr.bf16.mxu0 0
    %2345 = vmatpush1.bf16.xpose.msra.mxu0 0
    %2346 = vmatprep.subr.bf16.mxu0 0
    %2347 = vmatpush1.bf16.xpose.msra.mxu0 0
    %2348 = vmatprep.subr.bf16.mxu0 0
    %2349 = vmatpush1.bf16.xpose.msra.mxu0 0
    %2350 = vmatprep.subr.bf16.mxu0 0
    %2351 = vmatpush1.bf16.xpose.msra.mxu0 0
    %2352 = vmatprep.subr.bf16.mxu0 0
    %2353 = vmatpush1.bf16.xpose.msra.mxu0 0
    %2354 = vmatprep.subr.bf16.mxu0 0
    %2355 = vmatpush1.bf16.xpose.msra.mxu0 0
    %2356 = vmatprep.subr.bf16.mxu0 0
    %2357 = vmatpush1.bf16.xpose.msra.mxu0 0
    %2358 = vmatprep.subr.bf16.mxu0 0
    %2359 = vmatpush1.bf16.xpose.msra.mxu0 0
    %2360 = vmatprep.subr.bf16.mxu0 0
    %2361 = vmatpush1.bf16.xpose.msra.mxu0 0
    %2362 = vmatprep.subr.bf16.mxu0 0
    %2363 = vmatpush1.bf16.xpose.msra.mxu0 0
    %2364 = vmatprep.subr.bf16.mxu0 0
    %2365 = vmatpush1.bf16.xpose.msra.mxu0 0
    %2366 = vmatprep.subr.bf16.mxu0 0
    %2367 = vmatpush1.bf16.xpose.msra.mxu0 0
    %2368 = vmatprep.subr.bf16.mxu0 0
    %2369 = vmatpush1.bf16.xpose.msra.mxu0 0
    %2370 = vmatprep.subr.bf16.mxu0 0
    %2371 = vmatpush1.bf16.xpose.msra.mxu0 0
    %2372 = vmatprep.subr.bf16.mxu0 0
    %2373 = vmatpush1.bf16.xpose.msra.mxu0 0
    %2374 = vmatprep.mubr.bf16.mxu0 0
    %2375 = vmatmul.mubr.bf16.gmra.mrb[0].mxu0 %v2337
    %v2376 = vpop.f32.mrb[0].mxu0
    %v2377 = vadd.f32 %v212, %v2376
    %v2378 = vpop.f32.mrb[0].mxu0
    %v2379 = vpop.f32.mrb[0].mxu0
    %v2380 = vpop.f32.mrb[0].mxu0
    %2381 = vdwg.mxu0
    %2382 = vrot.lane.b32.xlu0 %v1673, 80
    %v2383 = vpop.permute.xlu0 %2382
    %2384 = vrot.lane.b32.xlu0 %v1673, 16
    %v2385 = vpop.permute.xlu0 %2384
    %v2387 = vsel %vm350, %v2383, 0
    %v2390 = vsel %vm350, %v2385, 0
    %2392 = vmatprep.subr.bf16.mxu0 0
    %2393 = vmatpush1.bf16.xpose.msra.mxu0 %v2390
    %2394 = vmatprep.subr.bf16.mxu0 0
    %2395 = vmatpush1.bf16.xpose.msra.mxu0 0
    %2396 = vmatprep.subr.bf16.mxu0 0
    %2397 = vmatpush1.bf16.xpose.msra.mxu0 0
    %2398 = vmatprep.subr.bf16.mxu0 0
    %2399 = vmatpush1.bf16.xpose.msra.mxu0 0
    %2400 = vmatprep.subr.bf16.mxu0 0
    %2401 = vmatpush1.bf16.xpose.msra.mxu0 0
    %2402 = vmatprep.subr.bf16.mxu0 0
    %2403 = vmatpush1.bf16.xpose.msra.mxu0 0
    %2404 = vmatprep.subr.bf16.mxu0 0
    %2405 = vmatpush1.bf16.xpose.msra.mxu0 0
    %2406 = vmatprep.subr.bf16.mxu0 0
    %2407 = vmatpush1.bf16.xpose.msra.mxu0 0
    %2408 = vmatprep.subr.bf16.mxu0 0
    %2409 = vmatpush1.bf16.xpose.msra.mxu0 0
    %2410 = vmatprep.subr.bf16.mxu0 0
    %2411 = vmatpush1.bf16.xpose.msra.mxu0 0
    %2412 = vmatprep.subr.bf16.mxu0 0
    %2413 = vmatpush1.bf16.xpose.msra.mxu0 0
    %2414 = vmatprep.subr.bf16.mxu0 0
    %2415 = vmatpush1.bf16.xpose.msra.mxu0 0
    %2416 = vmatprep.subr.bf16.mxu0 0
    %2417 = vmatpush1.bf16.xpose.msra.mxu0 0
    %2418 = vmatprep.subr.bf16.mxu0 0
    %2419 = vmatpush1.bf16.xpose.msra.mxu0 0
    %2420 = vmatprep.subr.bf16.mxu0 0
    %2421 = vmatpush1.bf16.xpose.msra.mxu0 0
    %2422 = vmatprep.subr.bf16.mxu0 0
    %2423 = vmatpush1.bf16.xpose.msra.mxu0 0
    %2424 = vmatprep.mubr.bf16.mxu0 0
    %2425 = vmatmul.mubr.bf16.gmra.mrb[0].mxu0 %v2387
    %v2426 = vpop.f32.mrb[0].mxu0
    %v2427 = vadd.f32 %v212, %v2426
    %v2428 = vpop.f32.mrb[0].mxu0
    %v2429 = vpop.f32.mrb[0].mxu0
    %v2430 = vpop.f32.mrb[0].mxu0
    %2431 = vdwg.mxu0
    %v2432 = vsel %vm446, %v2377, -inf
    %2433 = vmax.xlane.f32.xlu0 %v2432
    %v2434 = vpop.xlane.xlu0 %2433
    %v2435 = vsel %vm446, %v2427, -inf
    %2436 = vmax.xlane.f32.xlu0 %v2435
    %v2437 = vpop.xlane.xlu0 %2436
    %v2438 = vsub.f32 %v2377, %v2434
    %v2439 = vsub.f32 %v2427, %v2437
    %v2440 = vmul.f32 %v2438, 1.442695
    %v2441 = vpow.pop %v2440
    %v2442 = vmul.f32 %v2439, 1.442695
    %v2443 = vpow.pop %v2442
    %v2444 = vsel %vm446, %v2441, 0.0
    %2445 = vadd.xlane.f32.xlu0 %v2444
    %v2446 = vpop.xlane.xlu0 %2445
    %v2447 = vsel %vm446, %v2443, 0.0
    %2448 = vadd.xlane.f32.xlu0 %v2447
    %v2449 = vpop.xlane.xlu0 %2448
    %v2450 = vrcp.pop %v2446
    %v2451 = vrcp.pop %v2449
    %v2452 = vmul.f32 %v2441, %v2450
    %v2453 = vmul.f32 %v2443, %v2451
    %v2454 = vpack.c.bf16 %v2452, %v2452
    %v2455 = vpack.c.bf16 %v2453, %v2453
    %2456 = vrot.lane.b32.xlu0 %v1674, 80
    %v2457 = vpop.permute.xlu0 %2456
    %v2459 = vsel %vm446, %v2454, 0
    %v2462 = vsel %vm474, %v2457, 0
    %2464 = vmatprep.subr.bf16.mxu0 0
    %2465 = vmatpush1.bf16.msra.mxu0 %v2462
    %2466 = vmatprep.subr.bf16.mxu0 0
    %2467 = vmatpush1.bf16.msra.mxu0 0
    %2468 = vmatprep.subr.bf16.mxu0 0
    %2469 = vmatpush1.bf16.msra.mxu0 0
    %2470 = vmatprep.subr.bf16.mxu0 0
    %2471 = vmatpush1.bf16.msra.mxu0 0
    %2472 = vmatprep.subr.bf16.mxu0 0
    %2473 = vmatpush1.bf16.msra.mxu0 0
    %2474 = vmatprep.subr.bf16.mxu0 0
    %2475 = vmatpush1.bf16.msra.mxu0 0
    %2476 = vmatprep.subr.bf16.mxu0 0
    %2477 = vmatpush1.bf16.msra.mxu0 0
    %2478 = vmatprep.subr.bf16.mxu0 0
    %2479 = vmatpush1.bf16.msra.mxu0 0
    %2480 = vmatprep.subr.bf16.mxu0 0
    %2481 = vmatpush1.bf16.msra.mxu0 0
    %2482 = vmatprep.subr.bf16.mxu0 0
    %2483 = vmatpush1.bf16.msra.mxu0 0
    %2484 = vmatprep.subr.bf16.mxu0 0
    %2485 = vmatpush1.bf16.msra.mxu0 0
    %2486 = vmatprep.subr.bf16.mxu0 0
    %2487 = vmatpush1.bf16.msra.mxu0 0
    %2488 = vmatprep.subr.bf16.mxu0 0
    %2489 = vmatpush1.bf16.msra.mxu0 0
    %2490 = vmatprep.subr.bf16.mxu0 0
    %2491 = vmatpush1.bf16.msra.mxu0 0
    %2492 = vmatprep.subr.bf16.mxu0 0
    %2493 = vmatpush1.bf16.msra.mxu0 0
    %2494 = vmatprep.subr.bf16.mxu0 0
    %2495 = vmatpush1.bf16.msra.mxu0 0
    %2496 = vmatprep.mubr.bf16.mxu0 0
    %2497 = vmatmul.mubr.bf16.gmra.mrb[0].mxu0 %v2459
    %v2498 = vpop.f32.mrb[0].mxu0
    %v2499 = vadd.f32 0.0, %v2498
    %v2500 = vpop.f32.mrb[0].mxu0
    %v2501 = vpop.f32.mrb[0].mxu0
    %v2502 = vpop.f32.mrb[0].mxu0
    %2503 = vdwg.mxu0
    %2504 = vrot.lane.b32.xlu0 %v1675, 80
    %v2505 = vpop.permute.xlu0 %2504
    %v2507 = vsel %vm446, %v2455, 0
    %v2510 = vsel %vm474, %v2505, 0
    %2512 = vmatprep.subr.bf16.mxu0 0
    %2513 = vmatpush1.bf16.msra.mxu0 %v2510
    %2514 = vmatprep.subr.bf16.mxu0 0
    %2515 = vmatpush1.bf16.msra.mxu0 0
    %2516 = vmatprep.subr.bf16.mxu0 0
    %2517 = vmatpush1.bf16.msra.mxu0 0
    %2518 = vmatprep.subr.bf16.mxu0 0
    %2519 = vmatpush1.bf16.msra.mxu0 0
    %2520 = vmatprep.subr.bf16.mxu0 0
    %2521 = vmatpush1.bf16.msra.mxu0 0
    %2522 = vmatprep.subr.bf16.mxu0 0
    %2523 = vmatpush1.bf16.msra.mxu0 0
    %2524 = vmatprep.subr.bf16.mxu0 0
    %2525 = vmatpush1.bf16.msra.mxu0 0
    %2526 = vmatprep.subr.bf16.mxu0 0
    %2527 = vmatpush1.bf16.msra.mxu0 0
    %2528 = vmatprep.subr.bf16.mxu0 0
    %2529 = vmatpush1.bf16.msra.mxu0 0
    %2530 = vmatprep.subr.bf16.mxu0 0
    %2531 = vmatpush1.bf16.msra.mxu0 0
    %2532 = vmatprep.subr.bf16.mxu0 0
    %2533 = vmatpush1.bf16.msra.mxu0 0
    %2534 = vmatprep.subr.bf16.mxu0 0
    %2535 = vmatpush1.bf16.msra.mxu0 0
    %2536 = vmatprep.subr.bf16.mxu0 0
    %2537 = vmatpush1.bf16.msra.mxu0 0
    %2538 = vmatprep.subr.bf16.mxu0 0
    %2539 = vmatpush1.bf16.msra.mxu0 0
    %2540 = vmatprep.subr.bf16.mxu0 0
    %2541 = vmatpush1.bf16.msra.mxu0 0
    %2542 = vmatprep.subr.bf16.mxu0 0
    %2543 = vmatpush1.bf16.msra.mxu0 0
    %2544 = vmatprep.mubr.bf16.mxu0 0
    %2545 = vmatmul.mubr.bf16.gmra.mrb[0].mxu0 %v2507
    %v2546 = vpop.f32.mrb[0].mxu0
    %v2547 = vadd.f32 0.0, %v2546
    %v2548 = vpop.f32.mrb[0].mxu0
    %v2549 = vpop.f32.mrb[0].mxu0
    %v2550 = vpop.f32.mrb[0].mxu0
    %2551 = vdwg.mxu0
    %2554 = vrot.lane.b32.xlu0 %v2058, 16
    %v2555 = vpop.permute.xlu0 %2554
    %2556 = vrot.lane.b32.xlu0 %v2107, 16
    %v2557 = vpop.permute.xlu0 %2556
    %2562 = vrot.lane.b32.xlu0 %v2279, 32
    %v2563 = vpop.permute.xlu0 %2562
    %2564 = vrot.lane.b32.xlu0 %v2327, 32
    %v2565 = vpop.permute.xlu0 %2564
    %2570 = vrot.lane.b32.xlu0 %v2499, 48
    %v2571 = vpop.permute.xlu0 %2570
    %2572 = vrot.lane.b32.xlu0 %v2547, 48
    %v2573 = vpop.permute.xlu0 %2572
    %v2576 = vsel %vm350, %v1839, %v2555
    %v2577 = vsel %vm350, %v1885, %v2557
    %v2578 = vsel %vm1252, %v2576, %v2563
    %v2579 = vsel %vm1252, %v2577, %v2565
    %v2580 = vsel %vm1255, %v2578, %v2571
    %v2581 = vsel %vm1255, %v2579, %v2573
    %v2582 = vpack.c.bf16 %v2581, %v2580
    %v2591 = vunpack.c.l.b16 %v1553
    %v2592 = vunpack.c.l.b16 %v1554
    %v2593 = vunpack.c.l.b16 %v1555
    %v2594 = vunpack.c.l.b16 %v1556
    %v2595 = vunpack.c.l.b16 %v1557
    %v2596 = vunpack.c.l.b16 %v1558
    %v2597 = vunpack.c.l.b16 %v1559
    %v2598 = vunpack.c.l.b16 %v1560
    %v2599 = vpack.c.b16 %v2592, %v2591
    %v2600 = vpack.c.b16 %v2594, %v2593
    %v2601 = vpack.c.b16 %v2596, %v2595
    %v2602 = vpack.c.b16 %v2598, %v2597
    %v2608 = vsel %vm232, %v2582, 0
    %2610 = vmatprep.subr.bf16.mxu0 0
    %2611 = vmatpush1.bf16.msra.mxu0 %v2599
    %2612 = vmatprep.subr.bf16.mxu0 0
    %2613 = vmatpush1.bf16.msra.mxu0 %v2600
    %2614 = vmatprep.subr.bf16.mxu0 0
    %2615 = vmatpush1.bf16.msra.mxu0 %v2601
    %2616 = vmatprep.subr.bf16.mxu0 0
    %2617 = vmatpush1.bf16.msra.mxu0 %v2602
    %2618 = vmatprep.subr.bf16.mxu0 0
    %2619 = vmatpush1.bf16.msra.mxu0 0
    %2620 = vmatprep.subr.bf16.mxu0 0
    %2621 = vmatpush1.bf16.msra.mxu0 0
    %2622 = vmatprep.subr.bf16.mxu0 0
    %2623 = vmatpush1.bf16.msra.mxu0 0
    %2624 = vmatprep.subr.bf16.mxu0 0
    %2625 = vmatpush1.bf16.msra.mxu0 0
    %2626 = vmatprep.subr.bf16.mxu0 0
    %2627 = vmatpush1.bf16.msra.mxu0 0
    %2628 = vmatprep.subr.bf16.mxu0 0
    %2629 = vmatpush1.bf16.msra.mxu0 0
    %2630 = vmatprep.subr.bf16.mxu0 0
    %2631 = vmatpush1.bf16.msra.mxu0 0
    %2632 = vmatprep.subr.bf16.mxu0 0
    %2633 = vmatpush1.bf16.msra.mxu0 0
    %2634 = vmatprep.subr.bf16.mxu0 0
    %2635 = vmatpush1.bf16.msra.mxu0 0
    %2636 = vmatprep.subr.bf16.mxu0 0
    %2637 = vmatpush1.bf16.msra.mxu0 0
    %2638 = vmatprep.subr.bf16.mxu0 0
    %2639 = vmatpush1.bf16.msra.mxu0 0
    %2640 = vmatprep.subr.bf16.mxu0 0
    %2641 = vmatpush1.bf16.msra.mxu0 0
    %2642 = vmatprep.mubr.bf16.mxu0 0
    %2643 = vmatmul.mubr.bf16.gmra.mrb[0].mxu0 %v2608
    %v2644 = vpop.f32.mrb[0].mxu0
    %v2645 = vadd.f32 0.0, %v2644
    %v2646 = vpop.f32.mrb[0].mxu0
    %v2647 = vpop.f32.mrb[0].mxu0
    %v2648 = vadd.f32 0.0, %v2647
    %v2649 = vpop.f32.mrb[0].mxu0
    %2650 = vdwg.mxu0
    %v2651 = vadd.f32 %v1539, %v2645
    %v2652 = vadd.f32 %v1540, %v2648
    %s2653 = scalar_lea.vmem %s8, 1
    %v2654 = vld [vmem:[%s2653] sm:$0x1]
    %s2655 = scalar_lea.vmem %s9, 32
    %v2656 = vld [vmem:[%s2655] sm:$0xf]
    %v2657 = vld [vmem:[%s2655 + $0x4] sm:$0xf]
    %v2658 = vld [vmem:[%s2655 + $0x8] sm:$0xf]
    %v2659 = vld [vmem:[%s2655 + $0xc] sm:$0xf]
    %v2660 = vld [vmem:[%s2655 + $0x10] sm:$0xf]
    %v2661 = vld [vmem:[%s2655 + $0x14] sm:$0xf]
    %v2662 = vld [vmem:[%s2655 + $0x18] sm:$0xf]
    %v2663 = vld [vmem:[%s2655 + $0x1c] sm:$0xf]
    %s2664 = scalar_lea.vmem %s10, 64
    %v2665 = vld [vmem:[%s2664] sm:$0xf]
    %v2666 = vld [vmem:[%s2664 + $0x4] sm:$0xf]
    %v2667 = vld [vmem:[%s2664 + $0x8] sm:$0xf]
    %v2668 = vld [vmem:[%s2664 + $0xc] sm:$0xf]
    %v2669 = vld [vmem:[%s2664 + $0x10] sm:$0xf]
    %v2670 = vld [vmem:[%s2664 + $0x14] sm:$0xf]
    %v2671 = vld [vmem:[%s2664 + $0x18] sm:$0xf]
    %v2672 = vld [vmem:[%s2664 + $0x1c] sm:$0xf]
    %v2673 = vld [vmem:[%s2664 + $0x20] sm:$0xf]
    %v2674 = vld [vmem:[%s2664 + $0x24] sm:$0xf]
    %v2675 = vld [vmem:[%s2664 + $0x28] sm:$0xf]
    %v2676 = vld [vmem:[%s2664 + $0x2c] sm:$0xf]
    %v2677 = vld [vmem:[%s2664 + $0x30] sm:$0xf]
    %v2678 = vld [vmem:[%s2664 + $0x34] sm:$0xf]
    %v2679 = vld [vmem:[%s2664 + $0x38] sm:$0xf]
    %v2680 = vld [vmem:[%s2664 + $0x3c] sm:$0xf]
    %v2681 = vmul.f32 %v2651, %v2651
    %v2682 = vmul.f32 %v2652, %v2652
    %v2683 = vsel %vm232, %v2681, 0.0
    %2684 = vadd.xlane.f32.xlu0 %v2683
    %v2685 = vpop.xlane.xlu0 %2684
    %v2686 = vsel %vm232, %v2682, 0.0
    %2687 = vadd.xlane.f32.xlu0 %v2686
    %v2688 = vpop.xlane.xlu0 %2687
    %v2689 = vmul.f32 %v2685, %v239
    %v2690 = vmul.f32 %v2688, %v239
    %v2691 = vadd.f32 %v2689, 1e-06
    %v2692 = vadd.f32 %v2690, 1e-06
    %v2693 = vrsqrt.pop %v2691
    %v2694 = vrsqrt.pop %v2692
    %v2695 = vmul.f32 %v2651, %v2693
    %v2696 = vmul.f32 %v2652, %v2694
    %v2698 = vlaneseq
    %v2699 = vshrl.u32 %v2698, 7
    %v2700 = vsub.s32 0, %v2699
    %v2701 = vrot.slane %v2654, %v2700
    %v2703 = vmul.f32 %v2695, %v2701
    %v2704 = vmul.f32 %v2696, %v2701
    %v2705 = vpack.c.bf16 %v2704, %v2703
    %v2714 = vunpack.c.l.b16 %v2656
    %v2715 = vunpack.c.l.b16 %v2657
    %v2716 = vunpack.c.l.b16 %v2658
    %v2717 = vunpack.c.l.b16 %v2659
    %v2718 = vunpack.c.l.b16 %v2660
    %v2719 = vunpack.c.l.b16 %v2661
    %v2720 = vunpack.c.l.b16 %v2662
    %v2721 = vunpack.c.l.b16 %v2663
    %v2722 = vpack.c.b16 %v2715, %v2714
    %v2723 = vpack.c.b16 %v2717, %v2716
    %v2724 = vpack.c.b16 %v2719, %v2718
    %v2725 = vpack.c.b16 %v2721, %v2720
    %v2731 = vsel %vm232, %v2705, 0
    %2733 = vmatprep.subr.bf16.mxu0 0
    %2734 = vmatpush1.bf16.msra.mxu0 %v2722
    %2735 = vmatprep.subr.bf16.mxu0 0
    %2736 = vmatpush1.bf16.msra.mxu0 %v2723
    %2737 = vmatprep.subr.bf16.mxu0 0
    %2738 = vmatpush1.bf16.msra.mxu0 %v2724
    %2739 = vmatprep.subr.bf16.mxu0 0
    %2740 = vmatpush1.bf16.msra.mxu0 %v2725
    %2741 = vmatprep.subr.bf16.mxu0 0
    %2742 = vmatpush1.bf16.msra.mxu0 0
    %2743 = vmatprep.subr.bf16.mxu0 0
    %2744 = vmatpush1.bf16.msra.mxu0 0
    %2745 = vmatprep.subr.bf16.mxu0 0
    %2746 = vmatpush1.bf16.msra.mxu0 0
    %2747 = vmatprep.subr.bf16.mxu0 0
    %2748 = vmatpush1.bf16.msra.mxu0 0
    %2749 = vmatprep.subr.bf16.mxu0 0
    %2750 = vmatpush1.bf16.msra.mxu0 0
    %2751 = vmatprep.subr.bf16.mxu0 0
    %2752 = vmatpush1.bf16.msra.mxu0 0
    %2753 = vmatprep.subr.bf16.mxu0 0
    %2754 = vmatpush1.bf16.msra.mxu0 0
    %2755 = vmatprep.subr.bf16.mxu0 0
    %2756 = vmatpush1.bf16.msra.mxu0 0
    %2757 = vmatprep.subr.bf16.mxu0 0
    %2758 = vmatpush1.bf16.msra.mxu0 0
    %2759 = vmatprep.subr.bf16.mxu0 0
    %2760 = vmatpush1.bf16.msra.mxu0 0
    %2761 = vmatprep.subr.bf16.mxu0 0
    %2762 = vmatpush1.bf16.msra.mxu0 0
    %2763 = vmatprep.subr.bf16.mxu0 0
    %2764 = vmatpush1.bf16.msra.mxu0 0
    %2765 = vmatprep.mubr.bf16.mxu0 0
    %2766 = vmatmul.mubr.bf16.gmra.mrb[0].mxu0 %v2731
    %v2767 = vpop.f32.mrb[0].mxu0
    %v2768 = vadd.f32 0.0, %v2767
    %v2769 = vpop.f32.mrb[0].mxu0
    %v2770 = vpop.f32.mrb[0].mxu0
    %v2771 = vadd.f32 0.0, %v2770
    %v2772 = vpop.f32.mrb[0].mxu0
    %2773 = vdwg.mxu0
    %v2774 = vmax.f32 %v2768, 0.0
    %v2775 = vmax.f32 %v2771, 0.0
    %v2776 = vpack.c.bf16 %v2775, %v2774
    %v2793 = vunpack.c.l.b16 %v2665
    %v2794 = vunpack.c.l.b16 %v2666
    %v2795 = vunpack.c.l.b16 %v2667
    %v2796 = vunpack.c.l.b16 %v2668
    %v2797 = vunpack.c.l.b16 %v2669
    %v2798 = vunpack.c.l.b16 %v2670
    %v2799 = vunpack.c.l.b16 %v2671
    %v2800 = vunpack.c.l.b16 %v2672
    %v2801 = vunpack.c.l.b16 %v2673
    %v2802 = vunpack.c.l.b16 %v2674
    %v2803 = vunpack.c.l.b16 %v2675
    %v2804 = vunpack.c.l.b16 %v2676
    %v2805 = vunpack.c.l.b16 %v2677
    %v2806 = vunpack.c.l.b16 %v2678
    %v2807 = vunpack.c.l.b16 %v2679
    %v2808 = vunpack.c.l.b16 %v2680
    %v2809 = vpack.c.b16 %v2794, %v2793
    %v2810 = vpack.c.b16 %v2796, %v2795
    %v2811 = vpack.c.b16 %v2798, %v2797
    %v2812 = vpack.c.b16 %v2800, %v2799
    %v2813 = vpack.c.b16 %v2802, %v2801
    %v2814 = vpack.c.b16 %v2804, %v2803
    %v2815 = vpack.c.b16 %v2806, %v2805
    %v2816 = vpack.c.b16 %v2808, %v2807
    %2825 = vmatprep.subr.bf16.mxu0 0
    %2826 = vmatpush1.bf16.msra.mxu0 %v2809
    %2827 = vmatprep.subr.bf16.mxu0 0
    %2828 = vmatpush1.bf16.msra.mxu0 %v2810
    %2829 = vmatprep.subr.bf16.mxu0 0
    %2830 = vmatpush1.bf16.msra.mxu0 %v2811
    %2831 = vmatprep.subr.bf16.mxu0 0
    %2832 = vmatpush1.bf16.msra.mxu0 %v2812
    %2833 = vmatprep.subr.bf16.mxu0 0
    %2834 = vmatpush1.bf16.msra.mxu0 %v2813
    %2835 = vmatprep.subr.bf16.mxu0 0
    %2836 = vmatpush1.bf16.msra.mxu0 %v2814
    %2837 = vmatprep.subr.bf16.mxu0 0
    %2838 = vmatpush1.bf16.msra.mxu0 %v2815
    %2839 = vmatprep.subr.bf16.mxu0 0
    %2840 = vmatpush1.bf16.msra.mxu0 %v2816
    %2841 = vmatprep.subr.bf16.mxu0 0
    %2842 = vmatpush1.bf16.msra.mxu0 0
    %2843 = vmatprep.subr.bf16.mxu0 0
    %2844 = vmatpush1.bf16.msra.mxu0 0
    %2845 = vmatprep.subr.bf16.mxu0 0
    %2846 = vmatpush1.bf16.msra.mxu0 0
    %2847 = vmatprep.subr.bf16.mxu0 0
    %2848 = vmatpush1.bf16.msra.mxu0 0
    %2849 = vmatprep.subr.bf16.mxu0 0
    %2850 = vmatpush1.bf16.msra.mxu0 0
    %2851 = vmatprep.subr.bf16.mxu0 0
    %2852 = vmatpush1.bf16.msra.mxu0 0
    %2853 = vmatprep.subr.bf16.mxu0 0
    %2854 = vmatpush1.bf16.msra.mxu0 0
    %2855 = vmatprep.subr.bf16.mxu0 0
    %2856 = vmatpush1.bf16.msra.mxu0 0
    %2857 = vmatprep.mubr.bf16.mxu0 0
    %2858 = vmatmul.mubr.bf16.gmra.mrb[0].mxu0 %v2776
    %v2859 = vpop.f32.mrb[0].mxu0
    %v2860 = vadd.f32 0.0, %v2859
    %v2861 = vpop.f32.mrb[0].mxu0
    %v2862 = vpop.f32.mrb[0].mxu0
    %v2863 = vadd.f32 0.0, %v2862
    %v2864 = vpop.f32.mrb[0].mxu0
    %2865 = vdwg.mxu0
    %v2866 = vadd.f32 %v2651, %v2860
    %v2867 = vadd.f32 %v2652, %v2863
    %v2868 = vld [vmem:[%s11] sm:$0x1]
    %v2869 = vmul.f32 %v2866, %v2866
    %v2870 = vmul.f32 %v2867, %v2867
    %v2871 = vsel %vm232, %v2869, 0.0
    %2872 = vadd.xlane.f32.xlu0 %v2871
    %v2873 = vpop.xlane.xlu0 %2872
    %v2874 = vsel %vm232, %v2870, 0.0
    %2875 = vadd.xlane.f32.xlu0 %v2874
    %v2876 = vpop.xlane.xlu0 %2875
    %v2877 = vmul.f32 %v2873, %v239
    %v2878 = vmul.f32 %v2876, %v239
    %v2879 = vadd.f32 %v2877, 1e-06
    %v2880 = vadd.f32 %v2878, 1e-06
    %v2881 = vrsqrt.pop %v2879
    %v2882 = vrsqrt.pop %v2880
    %v2883 = vmul.f32 %v2866, %v2881
    %v2884 = vmul.f32 %v2867, %v2882
    %v2886 = vlaneseq
    %v2887 = vshrl.u32 %v2886, 7
    %v2888 = vsub.s32 0, %v2887
    %v2889 = vrot.slane %v2868, %v2888
    %v2891 = vmul.f32 %v2883, %v2889
    %v2892 = vmul.f32 %v2884, %v2889
    %v2893 = vpack.c.bf16 %v2892, %v2891
    %v2894 = vld [vmem:[%s1] sm:$0xff]
    %v2895 = vld [vmem:[%s1 + $0x8] sm:$0xff]
    %2896 = vset.pattern.permute.xlu0 0
    %2897 = vperm.xlu0 %2896, %v2894
    %v2898 = vpop.permute.xlu0 %2897
    %2899 = vset.pattern.permute.xlu0 0
    %2900 = vperm.xlu0 %2899, %v2895
    %v2901 = vpop.permute.xlu0 %2900
    %vm2902 = vcmp.eq.s32.totalorder %v2898, %v114
    %vm2903 = vcmp.eq.s32.totalorder %v2898, %v115
    %vm2904 = vcmp.eq.s32.totalorder %v2901, %v114
    %vm2905 = vcmp.eq.s32.totalorder %v2901, %v115
    %v2906 = vsel %vm2902, 1, 0
    %v2907 = vsel %vm2903, 1, 0
    %v2908 = vsel %vm2904, 1, 0
    %v2909 = vsel %vm2905, 1, 0
    %v2910 = vcvt.s32.f32 %v2906
    %v2911 = vcvt.s32.f32 %v2907
    %v2912 = vcvt.s32.f32 %v2908
    %v2913 = vcvt.s32.f32 %v2909
    %2914 = vmatprep.subr.mxu0 0.0
    %2915 = vmatpush1.msra.mxu0 %v79
    %2916 = vmatprep.subr.mxu0 0.0
    %2917 = vmatpush1.msra.mxu0 %v80
    %2918 = vmatprep.subr.mxu0 0.0
    %2919 = vmatpush1.msra.mxu0 %v81
    %2920 = vmatprep.subr.mxu0 0.0
    %2921 = vmatpush1.msra.mxu0 %v82
    %2922 = vmatprep.subr.mxu0 0.0
    %2923 = vmatpush1.msra.mxu0 %v83
    %2924 = vmatprep.subr.mxu0 0.0
    %2925 = vmatpush1.msra.mxu0 %v84
    %2926 = vmatprep.subr.mxu0 0.0
    %2927 = vmatpush1.msra.mxu0 %v85
    %2928 = vmatprep.subr.mxu0 0.0
    %2929 = vmatpush1.msra.mxu0 %v86
    %2930 = vmatprep.subr.mxu0 0.0
    %2931 = vmatpush1.msra.mxu0 %v87
    %2932 = vmatprep.subr.mxu0 0.0
    %2933 = vmatpush1.msra.mxu0 %v88
    %2934 = vmatprep.subr.mxu0 0.0
    %2935 = vmatpush1.msra.mxu0 %v89
    %2936 = vmatprep.subr.mxu0 0.0
    %2937 = vmatpush1.msra.mxu0 %v90
    %2938 = vmatprep.subr.mxu0 0.0
    %2939 = vmatpush1.msra.mxu0 %v91
    %2940 = vmatprep.subr.mxu0 0.0
    %2941 = vmatpush1.msra.mxu0 %v92
    %2942 = vmatprep.subr.mxu0 0.0
    %2943 = vmatpush1.msra.mxu0 %v93
    %2944 = vmatprep.subr.mxu0 0.0
    %2945 = vmatpush1.msra.mxu0 %v94
    %2946 = vmatprep.subr.mxu0 0.0
    %2947 = vmatpush1.msra.mxu0 %v95
    %2948 = vmatprep.subr.mxu0 0.0
    %2949 = vmatpush1.msra.mxu0 %v96
    %2950 = vmatprep.subr.mxu0 0.0
    %2951 = vmatpush1.msra.mxu0 %v97
    %2952 = vmatprep.subr.mxu0 0.0
    %2953 = vmatpush1.msra.mxu0 %v98
    %2954 = vmatprep.subr.mxu0 0.0
    %2955 = vmatpush1.msra.mxu0 %v99
    %2956 = vmatprep.subr.mxu0 0.0
    %2957 = vmatpush1.msra.mxu0 %v100
    %2958 = vmatprep.subr.mxu0 0.0
    %2959 = vmatpush1.msra.mxu0 %v101
    %2960 = vmatprep.subr.mxu0 0.0
    %2961 = vmatpush1.msra.mxu0 %v102
    %2962 = vmatprep.subr.mxu0 0.0
    %2963 = vmatpush1.msra.mxu0 %v103
    %2964 = vmatprep.subr.mxu0 0.0
    %2965 = vmatpush1.msra.mxu0 %v104
    %2966 = vmatprep.subr.mxu0 0.0
    %2967 = vmatpush1.msra.mxu0 %v105
    %2968 = vmatprep.subr.mxu0 0.0
    %2969 = vmatpush1.msra.mxu0 %v106
    %2970 = vmatprep.subr.mxu0 0.0
    %2971 = vmatpush1.msra.mxu0 %v107
    %2972 = vmatprep.subr.mxu0 0.0
    %2973 = vmatpush1.msra.mxu0 %v108
    %2974 = vmatprep.subr.mxu0 0.0
    %2975 = vmatpush1.msra.mxu0 %v109
    %2976 = vmatprep.subr.mxu0 0.0
    %2977 = vmatpush1.msra.mxu0 %v110
    %2978 = vmatprep.mubr.f32.mxu0 %v2911
    %2979 = vmatmul.mubr.f32.gmra.mrb[0].mxu0 %v2910
    %v2980 = vpop.f32.mrb[0].mxu0
    %v2981 = vadd.f32 0.0, %v2980
    %v2982 = vpop.f32.mrb[0].mxu0
    %2983 = vmatprep.mubr.f32.mxu0 %v2913
    %2984 = vmatmul.mubr.f32.gmra.mrb[0].mxu0 %v2912
    %v2985 = vpop.f32.mrb[0].mxu0
    %v2986 = vadd.f32 0.0, %v2985
    %v2987 = vpop.f32.mrb[0].mxu0
    %2988 = vdwg.mxu0
    %v2989 = vld [vmem:[%s4] sm:$0xff]
    %v2990 = vld [vmem:[%s4 + $0x8] sm:$0xff]
    %v2991 = vld [vmem:[%s4 + $0x10] sm:$0xff]
    %v2992 = vld [vmem:[%s4 + $0x18] sm:$0xff]
    %v2993 = vld [vmem:[%s12] sm:$0x1]
    %v2994 = vld [vmem:[%s13] sm:$0xff]
    %v2995 = vld [vmem:[%s13 + $0x8] sm:$0xff]
    %v2996 = vld [vmem:[%s13 + $0x10] sm:$0xff]
    %v2997 = vld [vmem:[%s13 + $0x18] sm:$0xff]
    %v2998 = vld [vmem:[%s13 + $0x20] sm:$0xff]
    %v2999 = vld [vmem:[%s13 + $0x28] sm:$0xff]
    %v3000 = vld [vmem:[%s13 + $0x30] sm:$0xff]
    %v3001 = vld [vmem:[%s13 + $0x38] sm:$0xff]
    %v3002 = vld [vmem:[%s14] sm:$0xf]
    %v3003 = vld [vmem:[%s14 + $0x4] sm:$0xf]
    %v3004 = vld [vmem:[%s14 + $0x8] sm:$0xf]
    %v3005 = vld [vmem:[%s14 + $0xc] sm:$0xf]
    %v3006 = vld [vmem:[%s14 + $0x10] sm:$0xf]
    %v3007 = vld [vmem:[%s14 + $0x14] sm:$0xf]
    %v3008 = vld [vmem:[%s14 + $0x18] sm:$0xf]
    %v3009 = vld [vmem:[%s14 + $0x1c] sm:$0xf]
    %v3010 = vmul.f32 %v2981, %v2981
    %v3011 = vmul.f32 %v2986, %v2986
    %v3012 = vsel %vm232, %v3010, 0.0
    %3013 = vadd.xlane.f32.xlu0 %v3012
    %v3014 = vpop.xlane.xlu0 %3013
    %v3015 = vsel %vm232, %v3011, 0.0
    %3016 = vadd.xlane.f32.xlu0 %v3015
    %v3017 = vpop.xlane.xlu0 %3016
    %v3018 = vmul.f32 %v3014, %v239
    %v3019 = vmul.f32 %v3017, %v239
    %v3020 = vadd.f32 %v3018, 1e-06
    %v3021 = vadd.f32 %v3019, 1e-06
    %v3022 = vrsqrt.pop %v3020
    %v3023 = vrsqrt.pop %v3021
    %v3024 = vmul.f32 %v2981, %v3022
    %v3025 = vmul.f32 %v2986, %v3023
    %v3027 = vlaneseq
    %v3028 = vshrl.u32 %v3027, 7
    %v3029 = vsub.s32 0, %v3028
    %v3030 = vrot.slane %v2993, %v3029
    %v3032 = vmul.f32 %v3024, %v3030
    %v3033 = vmul.f32 %v3025, %v3030
    %v3034 = vpack.c.bf16 %v3033, %v3032
    %v3043 = vunpack.c.l.b16 %v2994
    %v3044 = vunpack.c.h.b16 %v2994
    %v3045 = vunpack.c.l.b16 %v2995
    %v3046 = vunpack.c.h.b16 %v2995
    %v3047 = vunpack.c.l.b16 %v2996
    %v3048 = vunpack.c.h.b16 %v2996
    %v3049 = vunpack.c.l.b16 %v2997
    %v3050 = vunpack.c.h.b16 %v2997
    %v3051 = vunpack.c.l.b16 %v2998
    %v3052 = vunpack.c.h.b16 %v2998
    %v3053 = vunpack.c.l.b16 %v2999
    %v3054 = vunpack.c.h.b16 %v2999
    %v3055 = vunpack.c.l.b16 %v3000
    %v3056 = vunpack.c.h.b16 %v3000
    %v3057 = vunpack.c.l.b16 %v3001
    %v3058 = vunpack.c.h.b16 %v3001
    %v3059 = vpack.c.b16 %v3045, %v3043
    %v3060 = vpack.c.b16 %v3046, %v3044
    %v3061 = vpack.c.b16 %v3049, %v3047
    %v3062 = vpack.c.b16 %v3050, %v3048
    %v3063 = vpack.c.b16 %v3053, %v3051
    %v3064 = vpack.c.b16 %v3054, %v3052
    %v3065 = vpack.c.b16 %v3057, %v3055
    %v3066 = vpack.c.b16 %v3058, %v3056
    %v3076 = vsel %vm232, %v3034, 0
    %3078 = vmatprep.subr.bf16.mxu0 %v3060
    %3079 = vmatpush1.bf16.msra.mxu0 %v3059
    %3080 = vmatprep.subr.bf16.mxu0 %v3062
    %3081 = vmatpush1.bf16.msra.mxu0 %v3061
    %3082 = vmatprep.subr.bf16.mxu0 %v3064
    %3083 = vmatpush1.bf16.msra.mxu0 %v3063
    %3084 = vmatprep.subr.bf16.mxu0 %v3066
    %3085 = vmatpush1.bf16.msra.mxu0 %v3065
    %3086 = vmatprep.subr.bf16.mxu0 0
    %3087 = vmatpush1.bf16.msra.mxu0 0
    %3088 = vmatprep.subr.bf16.mxu0 0
    %3089 = vmatpush1.bf16.msra.mxu0 0
    %3090 = vmatprep.subr.bf16.mxu0 0
    %3091 = vmatpush1.bf16.msra.mxu0 0
    %3092 = vmatprep.subr.bf16.mxu0 0
    %3093 = vmatpush1.bf16.msra.mxu0 0
    %3094 = vmatprep.subr.bf16.mxu0 0
    %3095 = vmatpush1.bf16.msra.mxu0 0
    %3096 = vmatprep.subr.bf16.mxu0 0
    %3097 = vmatpush1.bf16.msra.mxu0 0
    %3098 = vmatprep.subr.bf16.mxu0 0
    %3099 = vmatpush1.bf16.msra.mxu0 0
    %3100 = vmatprep.subr.bf16.mxu0 0
    %3101 = vmatpush1.bf16.msra.mxu0 0
    %3102 = vmatprep.subr.bf16.mxu0 0
    %3103 = vmatpush1.bf16.msra.mxu0 0
    %3104 = vmatprep.subr.bf16.mxu0 0
    %3105 = vmatpush1.bf16.msra.mxu0 0
    %3106 = vmatprep.subr.bf16.mxu0 0
    %3107 = vmatpush1.bf16.msra.mxu0 0
    %3108 = vmatprep.subr.bf16.mxu0 0
    %3109 = vmatpush1.bf16.msra.mxu0 0
    %3110 = vmatprep.mubr.bf16.mxu0 0
    %3111 = vmatmul.mubr.bf16.gmra.mrb[0].mxu0 %v3076
    %v3112 = vpop.f32.mrb[0].mxu0
    %v3113 = vadd.f32 0.0, %v3112
    %v3114 = vpop.f32.mrb[0].mxu0
    %v3115 = vadd.f32 0.0, %v3114
    %v3116 = vpop.f32.mrb[0].mxu0
    %v3117 = vadd.f32 0.0, %v3116
    %v3118 = vpop.f32.mrb[0].mxu0
    %v3119 = vadd.f32 0.0, %v3118
    %3120 = vdwg.mxu0
    %v3121 = vpack.c.bf16 %v3113, %v3113
    %v3122 = vpack.c.bf16 %v3117, %v3117
    %v3123 = vpack.c.bf16 %v3115, %v3115
    %v3124 = vpack.c.bf16 %v3119, %v3119
    %3126 = vrot.lane.b32.xlu0 %v3121, 64
    %v3127 = vpop.permute.xlu0 %3126
    %v3129 = vsel %vm350, %v3121, 0
    %v3132 = vsel %vm350, %v3127, 0
    %3134 = vmatprep.subr.bf16.mxu0 0
    %3135 = vmatpush1.bf16.xpose.msra.mxu0 %v3132
    %3136 = vmatprep.subr.bf16.mxu0 0
    %3137 = vmatpush1.bf16.xpose.msra.mxu0 0
    %3138 = vmatprep.subr.bf16.mxu0 0
    %3139 = vmatpush1.bf16.xpose.msra.mxu0 0
    %3140 = vmatprep.subr.bf16.mxu0 0
    %3141 = vmatpush1.bf16.xpose.msra.mxu0 0
    %3142 = vmatprep.subr.bf16.mxu0 0
    %3143 = vmatpush1.bf16.xpose.msra.mxu0 0
    %3144 = vmatprep.subr.bf16.mxu0 0
    %3145 = vmatpush1.bf16.xpose.msra.mxu0 0
    %3146 = vmatprep.subr.bf16.mxu0 0
    %3147 = vmatpush1.bf16.xpose.msra.mxu0 0
    %3148 = vmatprep.subr.bf16.mxu0 0
    %3149 = vmatpush1.bf16.xpose.msra.mxu0 0
    %3150 = vmatprep.subr.bf16.mxu0 0
    %3151 = vmatpush1.bf16.xpose.msra.mxu0 0
    %3152 = vmatprep.subr.bf16.mxu0 0
    %3153 = vmatpush1.bf16.xpose.msra.mxu0 0
    %3154 = vmatprep.subr.bf16.mxu0 0
    %3155 = vmatpush1.bf16.xpose.msra.mxu0 0
    %3156 = vmatprep.subr.bf16.mxu0 0
    %3157 = vmatpush1.bf16.xpose.msra.mxu0 0
    %3158 = vmatprep.subr.bf16.mxu0 0
    %3159 = vmatpush1.bf16.xpose.msra.mxu0 0
    %3160 = vmatprep.subr.bf16.mxu0 0
    %3161 = vmatpush1.bf16.xpose.msra.mxu0 0
    %3162 = vmatprep.subr.bf16.mxu0 0
    %3163 = vmatpush1.bf16.xpose.msra.mxu0 0
    %3164 = vmatprep.subr.bf16.mxu0 0
    %3165 = vmatpush1.bf16.xpose.msra.mxu0 0
    %3166 = vmatprep.mubr.bf16.mxu0 0
    %3167 = vmatmul.mubr.bf16.gmra.mrb[0].mxu0 %v3129
    %v3168 = vpop.f32.mrb[0].mxu0
    %v3169 = vadd.f32 %v2989, %v3168
    %v3170 = vpop.f32.mrb[0].mxu0
    %v3171 = vpop.f32.mrb[0].mxu0
    %v3172 = vpop.f32.mrb[0].mxu0
    %3173 = vdwg.mxu0
    %3175 = vrot.lane.b32.xlu0 %v3122, 64
    %v3176 = vpop.permute.xlu0 %3175
    %v3178 = vsel %vm350, %v3122, 0
    %v3181 = vsel %vm350, %v3176, 0
    %3183 = vmatprep.subr.bf16.mxu0 0
    %3184 = vmatpush1.bf16.xpose.msra.mxu0 %v3181
    %3185 = vmatprep.subr.bf16.mxu0 0
    %3186 = vmatpush1.bf16.xpose.msra.mxu0 0
    %3187 = vmatprep.subr.bf16.mxu0 0
    %3188 = vmatpush1.bf16.xpose.msra.mxu0 0
    %3189 = vmatprep.subr.bf16.mxu0 0
    %3190 = vmatpush1.bf16.xpose.msra.mxu0 0
    %3191 = vmatprep.subr.bf16.mxu0 0
    %3192 = vmatpush1.bf16.xpose.msra.mxu0 0
    %3193 = vmatprep.subr.bf16.mxu0 0
    %3194 = vmatpush1.bf16.xpose.msra.mxu0 0
    %3195 = vmatprep.subr.bf16.mxu0 0
    %3196 = vmatpush1.bf16.xpose.msra.mxu0 0
    %3197 = vmatprep.subr.bf16.mxu0 0
    %3198 = vmatpush1.bf16.xpose.msra.mxu0 0
    %3199 = vmatprep.subr.bf16.mxu0 0
    %3200 = vmatpush1.bf16.xpose.msra.mxu0 0
    %3201 = vmatprep.subr.bf16.mxu0 0
    %3202 = vmatpush1.bf16.xpose.msra.mxu0 0
    %3203 = vmatprep.subr.bf16.mxu0 0
    %3204 = vmatpush1.bf16.xpose.msra.mxu0 0
    %3205 = vmatprep.subr.bf16.mxu0 0
    %3206 = vmatpush1.bf16.xpose.msra.mxu0 0
    %3207 = vmatprep.subr.bf16.mxu0 0
    %3208 = vmatpush1.bf16.xpose.msra.mxu0 0
    %3209 = vmatprep.subr.bf16.mxu0 0
    %3210 = vmatpush1.bf16.xpose.msra.mxu0 0
    %3211 = vmatprep.subr.bf16.mxu0 0
    %3212 = vmatpush1.bf16.xpose.msra.mxu0 0
    %3213 = vmatprep.subr.bf16.mxu0 0
    %3214 = vmatpush1.bf16.xpose.msra.mxu0 0
    %3215 = vmatprep.mubr.bf16.mxu0 0
    %3216 = vmatmul.mubr.bf16.gmra.mrb[0].mxu0 %v3178
    %v3217 = vpop.f32.mrb[0].mxu0
    %v3218 = vadd.f32 %v2989, %v3217
    %v3219 = vpop.f32.mrb[0].mxu0
    %v3220 = vpop.f32.mrb[0].mxu0
    %v3221 = vpop.f32.mrb[0].mxu0
    %3222 = vdwg.mxu0
    %v3223 = vsel %vm446, %v3169, -inf
    %3224 = vmax.xlane.f32.xlu0 %v3223
    %v3225 = vpop.xlane.xlu0 %3224
    %v3226 = vsel %vm446, %v3218, -inf
    %3227 = vmax.xlane.f32.xlu0 %v3226
    %v3228 = vpop.xlane.xlu0 %3227
    %v3229 = vsub.f32 %v3169, %v3225
    %v3230 = vsub.f32 %v3218, %v3228
    %v3231 = vmul.f32 %v3229, 1.442695
    %v3232 = vpow.pop %v3231
    %v3233 = vmul.f32 %v3230, 1.442695
    %v3234 = vpow.pop %v3233
    %v3235 = vsel %vm446, %v3232, 0.0
    %3236 = vadd.xlane.f32.xlu0 %v3235
    %v3237 = vpop.xlane.xlu0 %3236
    %v3238 = vsel %vm446, %v3234, 0.0
    %3239 = vadd.xlane.f32.xlu0 %v3238
    %v3240 = vpop.xlane.xlu0 %3239
    %v3241 = vrcp.pop %v3237
    %v3242 = vrcp.pop %v3240
    %v3243 = vmul.f32 %v3232, %v3241
    %v3244 = vmul.f32 %v3234, %v3242
    %v3245 = vpack.c.bf16 %v3243, %v3243
    %v3246 = vpack.c.bf16 %v3244, %v3244
    %v3248 = vsel %vm446, %v3245, 0
    %v3251 = vsel %vm474, %v3123, 0
    %3253 = vmatprep.subr.bf16.mxu0 0
    %3254 = vmatpush1.bf16.msra.mxu0 %v3251
    %3255 = vmatprep.subr.bf16.mxu0 0
    %3256 = vmatpush1.bf16.msra.mxu0 0
    %3257 = vmatprep.subr.bf16.mxu0 0
    %3258 = vmatpush1.bf16.msra.mxu0 0
    %3259 = vmatprep.subr.bf16.mxu0 0
    %3260 = vmatpush1.bf16.msra.mxu0 0
    %3261 = vmatprep.subr.bf16.mxu0 0
    %3262 = vmatpush1.bf16.msra.mxu0 0
    %3263 = vmatprep.subr.bf16.mxu0 0
    %3264 = vmatpush1.bf16.msra.mxu0 0
    %3265 = vmatprep.subr.bf16.mxu0 0
    %3266 = vmatpush1.bf16.msra.mxu0 0
    %3267 = vmatprep.subr.bf16.mxu0 0
    %3268 = vmatpush1.bf16.msra.mxu0 0
    %3269 = vmatprep.subr.bf16.mxu0 0
    %3270 = vmatpush1.bf16.msra.mxu0 0
    %3271 = vmatprep.subr.bf16.mxu0 0
    %3272 = vmatpush1.bf16.msra.mxu0 0
    %3273 = vmatprep.subr.bf16.mxu0 0
    %3274 = vmatpush1.bf16.msra.mxu0 0
    %3275 = vmatprep.subr.bf16.mxu0 0
    %3276 = vmatpush1.bf16.msra.mxu0 0
    %3277 = vmatprep.subr.bf16.mxu0 0
    %3278 = vmatpush1.bf16.msra.mxu0 0
    %3279 = vmatprep.subr.bf16.mxu0 0
    %3280 = vmatpush1.bf16.msra.mxu0 0
    %3281 = vmatprep.subr.bf16.mxu0 0
    %3282 = vmatpush1.bf16.msra.mxu0 0
    %3283 = vmatprep.subr.bf16.mxu0 0
    %3284 = vmatpush1.bf16.msra.mxu0 0
    %3285 = vmatprep.mubr.bf16.mxu0 0
    %3286 = vmatmul.mubr.bf16.gmra.mrb[0].mxu0 %v3248
    %v3287 = vpop.f32.mrb[0].mxu0
    %v3288 = vadd.f32 0.0, %v3287
    %v3289 = vpop.f32.mrb[0].mxu0
    %v3290 = vpop.f32.mrb[0].mxu0
    %v3291 = vpop.f32.mrb[0].mxu0
    %3292 = vdwg.mxu0
    %v3294 = vsel %vm446, %v3246, 0
    %v3297 = vsel %vm474, %v3124, 0
    %3299 = vmatprep.subr.bf16.mxu0 0
    %3300 = vmatpush1.bf16.msra.mxu0 %v3297
    %3301 = vmatprep.subr.bf16.mxu0 0
    %3302 = vmatpush1.bf16.msra.mxu0 0
    %3303 = vmatprep.subr.bf16.mxu0 0
    %3304 = vmatpush1.bf16.msra.mxu0 0
    %3305 = vmatprep.subr.bf16.mxu0 0
    %3306 = vmatpush1.bf16.msra.mxu0 0
    %3307 = vmatprep.subr.bf16.mxu0 0
    %3308 = vmatpush1.bf16.msra.mxu0 0
    %3309 = vmatprep.subr.bf16.mxu0 0
    %3310 = vmatpush1.bf16.msra.mxu0 0
    %3311 = vmatprep.subr.bf16.mxu0 0
    %3312 = vmatpush1.bf16.msra.mxu0 0
    %3313 = vmatprep.subr.bf16.mxu0 0
    %3314 = vmatpush1.bf16.msra.mxu0 0
    %3315 = vmatprep.subr.bf16.mxu0 0
    %3316 = vmatpush1.bf16.msra.mxu0 0
    %3317 = vmatprep.subr.bf16.mxu0 0
    %3318 = vmatpush1.bf16.msra.mxu0 0
    %3319 = vmatprep.subr.bf16.mxu0 0
    %3320 = vmatpush1.bf16.msra.mxu0 0
    %3321 = vmatprep.subr.bf16.mxu0 0
    %3322 = vmatpush1.bf16.msra.mxu0 0
    %3323 = vmatprep.subr.bf16.mxu0 0
    %3324 = vmatpush1.bf16.msra.mxu0 0
    %3325 = vmatprep.subr.bf16.mxu0 0
    %3326 = vmatpush1.bf16.msra.mxu0 0
    %3327 = vmatprep.subr.bf16.mxu0 0
    %3328 = vmatpush1.bf16.msra.mxu0 0
    %3329 = vmatprep.subr.bf16.mxu0 0
    %3330 = vmatpush1.bf16.msra.mxu0 0
    %3331 = vmatprep.mubr.bf16.mxu0 0
    %3332 = vmatmul.mubr.bf16.gmra.mrb[0].mxu0 %v3294
    %v3333 = vpop.f32.mrb[0].mxu0
    %v3334 = vadd.f32 0.0, %v3333
    %v3335 = vpop.f32.mrb[0].mxu0
    %v3336 = vpop.f32.mrb[0].mxu0
    %v3337 = vpop.f32.mrb[0].mxu0
    %3338 = vdwg.mxu0
    %3339 = vrot.lane.b32.xlu0 %v3121, 112
    %v3340 = vpop.permute.xlu0 %3339
    %3341 = vrot.lane.b32.xlu0 %v3121, 48
    %v3342 = vpop.permute.xlu0 %3341
    %v3344 = vsel %vm350, %v3340, 0
    %v3347 = vsel %vm350, %v3342, 0
    %3349 = vmatprep.subr.bf16.mxu0 0
    %3350 = vmatpush1.bf16.xpose.msra.mxu0 %v3347
    %3351 = vmatprep.subr.bf16.mxu0 0
    %3352 = vmatpush1.bf16.xpose.msra.mxu0 0
    %3353 = vmatprep.subr.bf16.mxu0 0
    %3354 = vmatpush1.bf16.xpose.msra.mxu0 0
    %3355 = vmatprep.subr.bf16.mxu0 0
    %3356 = vmatpush1.bf16.xpose.msra.mxu0 0
    %3357 = vmatprep.subr.bf16.mxu0 0
    %3358 = vmatpush1.bf16.xpose.msra.mxu0 0
    %3359 = vmatprep.subr.bf16.mxu0 0
    %3360 = vmatpush1.bf16.xpose.msra.mxu0 0
    %3361 = vmatprep.subr.bf16.mxu0 0
    %3362 = vmatpush1.bf16.xpose.msra.mxu0 0
    %3363 = vmatprep.subr.bf16.mxu0 0
    %3364 = vmatpush1.bf16.xpose.msra.mxu0 0
    %3365 = vmatprep.subr.bf16.mxu0 0
    %3366 = vmatpush1.bf16.xpose.msra.mxu0 0
    %3367 = vmatprep.subr.bf16.mxu0 0
    %3368 = vmatpush1.bf16.xpose.msra.mxu0 0
    %3369 = vmatprep.subr.bf16.mxu0 0
    %3370 = vmatpush1.bf16.xpose.msra.mxu0 0
    %3371 = vmatprep.subr.bf16.mxu0 0
    %3372 = vmatpush1.bf16.xpose.msra.mxu0 0
    %3373 = vmatprep.subr.bf16.mxu0 0
    %3374 = vmatpush1.bf16.xpose.msra.mxu0 0
    %3375 = vmatprep.subr.bf16.mxu0 0
    %3376 = vmatpush1.bf16.xpose.msra.mxu0 0
    %3377 = vmatprep.subr.bf16.mxu0 0
    %3378 = vmatpush1.bf16.xpose.msra.mxu0 0
    %3379 = vmatprep.subr.bf16.mxu0 0
    %3380 = vmatpush1.bf16.xpose.msra.mxu0 0
    %3381 = vmatprep.mubr.bf16.mxu0 0
    %3382 = vmatmul.mubr.bf16.gmra.mrb[0].mxu0 %v3344
    %v3383 = vpop.f32.mrb[0].mxu0
    %v3384 = vadd.f32 %v2990, %v3383
    %v3385 = vpop.f32.mrb[0].mxu0
    %v3386 = vpop.f32.mrb[0].mxu0
    %v3387 = vpop.f32.mrb[0].mxu0
    %3388 = vdwg.mxu0
    %3389 = vrot.lane.b32.xlu0 %v3122, 112
    %v3390 = vpop.permute.xlu0 %3389
    %3391 = vrot.lane.b32.xlu0 %v3122, 48
    %v3392 = vpop.permute.xlu0 %3391
    %v3394 = vsel %vm350, %v3390, 0
    %v3397 = vsel %vm350, %v3392, 0
    %3399 = vmatprep.subr.bf16.mxu0 0
    %3400 = vmatpush1.bf16.xpose.msra.mxu0 %v3397
    %3401 = vmatprep.subr.bf16.mxu0 0
    %3402 = vmatpush1.bf16.xpose.msra.mxu0 0
    %3403 = vmatprep.subr.bf16.mxu0 0
    %3404 = vmatpush1.bf16.xpose.msra.mxu0 0
    %3405 = vmatprep.subr.bf16.mxu0 0
    %3406 = vmatpush1.bf16.xpose.msra.mxu0 0
    %3407 = vmatprep.subr.bf16.mxu0 0
    %3408 = vmatpush1.bf16.xpose.msra.mxu0 0
    %3409 = vmatprep.subr.bf16.mxu0 0
    %3410 = vmatpush1.bf16.xpose.msra.mxu0 0
    %3411 = vmatprep.subr.bf16.mxu0 0
    %3412 = vmatpush1.bf16.xpose.msra.mxu0 0
    %3413 = vmatprep.subr.bf16.mxu0 0
    %3414 = vmatpush1.bf16.xpose.msra.mxu0 0
    %3415 = vmatprep.subr.bf16.mxu0 0
    %3416 = vmatpush1.bf16.xpose.msra.mxu0 0
    %3417 = vmatprep.subr.bf16.mxu0 0
    %3418 = vmatpush1.bf16.xpose.msra.mxu0 0
    %3419 = vmatprep.subr.bf16.mxu0 0
    %3420 = vmatpush1.bf16.xpose.msra.mxu0 0
    %3421 = vmatprep.subr.bf16.mxu0 0
    %3422 = vmatpush1.bf16.xpose.msra.mxu0 0
    %3423 = vmatprep.subr.bf16.mxu0 0
    %3424 = vmatpush1.bf16.xpose.msra.mxu0 0
    %3425 = vmatprep.subr.bf16.mxu0 0
    %3426 = vmatpush1.bf16.xpose.msra.mxu0 0
    %3427 = vmatprep.subr.bf16.mxu0 0
    %3428 = vmatpush1.bf16.xpose.msra.mxu0 0
    %3429 = vmatprep.subr.bf16.mxu0 0
    %3430 = vmatpush1.bf16.xpose.msra.mxu0 0
    %3431 = vmatprep.mubr.bf16.mxu0 0
    %3432 = vmatmul.mubr.bf16.gmra.mrb[0].mxu0 %v3394
    %v3433 = vpop.f32.mrb[0].mxu0
    %v3434 = vadd.f32 %v2990, %v3433
    %v3435 = vpop.f32.mrb[0].mxu0
    %v3436 = vpop.f32.mrb[0].mxu0
    %v3437 = vpop.f32.mrb[0].mxu0
    %3438 = vdwg.mxu0
    %v3439 = vsel %vm446, %v3384, -inf
    %3440 = vmax.xlane.f32.xlu0 %v3439
    %v3441 = vpop.xlane.xlu0 %3440
    %v3442 = vsel %vm446, %v3434, -inf
    %3443 = vmax.xlane.f32.xlu0 %v3442
    %v3444 = vpop.xlane.xlu0 %3443
    %v3445 = vsub.f32 %v3384, %v3441
    %v3446 = vsub.f32 %v3434, %v3444
    %v3447 = vmul.f32 %v3445, 1.442695
    %v3448 = vpow.pop %v3447
    %v3449 = vmul.f32 %v3446, 1.442695
    %v3450 = vpow.pop %v3449
    %v3451 = vsel %vm446, %v3448, 0.0
    %3452 = vadd.xlane.f32.xlu0 %v3451
    %v3453 = vpop.xlane.xlu0 %3452
    %v3454 = vsel %vm446, %v3450, 0.0
    %3455 = vadd.xlane.f32.xlu0 %v3454
    %v3456 = vpop.xlane.xlu0 %3455
    %v3457 = vrcp.pop %v3453
    %v3458 = vrcp.pop %v3456
    %v3459 = vmul.f32 %v3448, %v3457
    %v3460 = vmul.f32 %v3450, %v3458
    %v3461 = vpack.c.bf16 %v3459, %v3459
    %v3462 = vpack.c.bf16 %v3460, %v3460
    %3464 = vrot.lane.b32.xlu0 %v3123, 112
    %v3465 = vpop.permute.xlu0 %3464
    %v3467 = vsel %vm446, %v3461, 0
    %v3470 = vsel %vm474, %v3465, 0
    %3472 = vmatprep.subr.bf16.mxu0 0
    %3473 = vmatpush1.bf16.msra.mxu0 %v3470
    %3474 = vmatprep.subr.bf16.mxu0 0
    %3475 = vmatpush1.bf16.msra.mxu0 0
    %3476 = vmatprep.subr.bf16.mxu0 0
    %3477 = vmatpush1.bf16.msra.mxu0 0
    %3478 = vmatprep.subr.bf16.mxu0 0
    %3479 = vmatpush1.bf16.msra.mxu0 0
    %3480 = vmatprep.subr.bf16.mxu0 0
    %3481 = vmatpush1.bf16.msra.mxu0 0
    %3482 = vmatprep.subr.bf16.mxu0 0
    %3483 = vmatpush1.bf16.msra.mxu0 0
    %3484 = vmatprep.subr.bf16.mxu0 0
    %3485 = vmatpush1.bf16.msra.mxu0 0
    %3486 = vmatprep.subr.bf16.mxu0 0
    %3487 = vmatpush1.bf16.msra.mxu0 0
    %3488 = vmatprep.subr.bf16.mxu0 0
    %3489 = vmatpush1.bf16.msra.mxu0 0
    %3490 = vmatprep.subr.bf16.mxu0 0
    %3491 = vmatpush1.bf16.msra.mxu0 0
    %3492 = vmatprep.subr.bf16.mxu0 0
    %3493 = vmatpush1.bf16.msra.mxu0 0
    %3494 = vmatprep.subr.bf16.mxu0 0
    %3495 = vmatpush1.bf16.msra.mxu0 0
    %3496 = vmatprep.subr.bf16.mxu0 0
    %3497 = vmatpush1.bf16.msra.mxu0 0
    %3498 = vmatprep.subr.bf16.mxu0 0
    %3499 = vmatpush1.bf16.msra.mxu0 0
    %3500 = vmatprep.subr.bf16.mxu0 0
    %3501 = vmatpush1.bf16.msra.mxu0 0
    %3502 = vmatprep.subr.bf16.mxu0 0
    %3503 = vmatpush1.bf16.msra.mxu0 0
    %3504 = vmatprep.mubr.bf16.mxu0 0
    %3505 = vmatmul.mubr.bf16.gmra.mrb[0].mxu0 %v3467
    %v3506 = vpop.f32.mrb[0].mxu0
    %v3507 = vadd.f32 0.0, %v3506
    %v3508 = vpop.f32.mrb[0].mxu0
    %v3509 = vpop.f32.mrb[0].mxu0
    %v3510 = vpop.f32.mrb[0].mxu0
    %3511 = vdwg.mxu0
    %3513 = vrot.lane.b32.xlu0 %v3124, 112
    %v3514 = vpop.permute.xlu0 %3513
    %v3516 = vsel %vm446, %v3462, 0
    %v3519 = vsel %vm474, %v3514, 0
    %3521 = vmatprep.subr.bf16.mxu0 0
    %3522 = vmatpush1.bf16.msra.mxu0 %v3519
    %3523 = vmatprep.subr.bf16.mxu0 0
    %3524 = vmatpush1.bf16.msra.mxu0 0
    %3525 = vmatprep.subr.bf16.mxu0 0
    %3526 = vmatpush1.bf16.msra.mxu0 0
    %3527 = vmatprep.subr.bf16.mxu0 0
    %3528 = vmatpush1.bf16.msra.mxu0 0
    %3529 = vmatprep.subr.bf16.mxu0 0
    %3530 = vmatpush1.bf16.msra.mxu0 0
    %3531 = vmatprep.subr.bf16.mxu0 0
    %3532 = vmatpush1.bf16.msra.mxu0 0
    %3533 = vmatprep.subr.bf16.mxu0 0
    %3534 = vmatpush1.bf16.msra.mxu0 0
    %3535 = vmatprep.subr.bf16.mxu0 0
    %3536 = vmatpush1.bf16.msra.mxu0 0
    %3537 = vmatprep.subr.bf16.mxu0 0
    %3538 = vmatpush1.bf16.msra.mxu0 0
    %3539 = vmatprep.subr.bf16.mxu0 0
    %3540 = vmatpush1.bf16.msra.mxu0 0
    %3541 = vmatprep.subr.bf16.mxu0 0
    %3542 = vmatpush1.bf16.msra.mxu0 0
    %3543 = vmatprep.subr.bf16.mxu0 0
    %3544 = vmatpush1.bf16.msra.mxu0 0
    %3545 = vmatprep.subr.bf16.mxu0 0
    %3546 = vmatpush1.bf16.msra.mxu0 0
    %3547 = vmatprep.subr.bf16.mxu0 0
    %3548 = vmatpush1.bf16.msra.mxu0 0
    %3549 = vmatprep.subr.bf16.mxu0 0
    %3550 = vmatpush1.bf16.msra.mxu0 0
    %3551 = vmatprep.subr.bf16.mxu0 0
    %3552 = vmatpush1.bf16.msra.mxu0 0
    %3553 = vmatprep.mubr.bf16.mxu0 0
    %3554 = vmatmul.mubr.bf16.gmra.mrb[0].mxu0 %v3516
    %v3555 = vpop.f32.mrb[0].mxu0
    %v3556 = vadd.f32 0.0, %v3555
    %v3557 = vpop.f32.mrb[0].mxu0
    %v3558 = vpop.f32.mrb[0].mxu0
    %v3559 = vpop.f32.mrb[0].mxu0
    %3560 = vdwg.mxu0
    %3561 = vrot.lane.b32.xlu0 %v3121, 96
    %v3562 = vpop.permute.xlu0 %3561
    %3563 = vrot.lane.b32.xlu0 %v3121, 32
    %v3564 = vpop.permute.xlu0 %3563
    %v3566 = vsel %vm350, %v3562, 0
    %v3569 = vsel %vm350, %v3564, 0
    %3571 = vmatprep.subr.bf16.mxu0 0
    %3572 = vmatpush1.bf16.xpose.msra.mxu0 %v3569
    %3573 = vmatprep.subr.bf16.mxu0 0
    %3574 = vmatpush1.bf16.xpose.msra.mxu0 0
    %3575 = vmatprep.subr.bf16.mxu0 0
    %3576 = vmatpush1.bf16.xpose.msra.mxu0 0
    %3577 = vmatprep.subr.bf16.mxu0 0
    %3578 = vmatpush1.bf16.xpose.msra.mxu0 0
    %3579 = vmatprep.subr.bf16.mxu0 0
    %3580 = vmatpush1.bf16.xpose.msra.mxu0 0
    %3581 = vmatprep.subr.bf16.mxu0 0
    %3582 = vmatpush1.bf16.xpose.msra.mxu0 0
    %3583 = vmatprep.subr.bf16.mxu0 0
    %3584 = vmatpush1.bf16.xpose.msra.mxu0 0
    %3585 = vmatprep.subr.bf16.mxu0 0
    %3586 = vmatpush1.bf16.xpose.msra.mxu0 0
    %3587 = vmatprep.subr.bf16.mxu0 0
    %3588 = vmatpush1.bf16.xpose.msra.mxu0 0
    %3589 = vmatprep.subr.bf16.mxu0 0
    %3590 = vmatpush1.bf16.xpose.msra.mxu0 0
    %3591 = vmatprep.subr.bf16.mxu0 0
    %3592 = vmatpush1.bf16.xpose.msra.mxu0 0
    %3593 = vmatprep.subr.bf16.mxu0 0
    %3594 = vmatpush1.bf16.xpose.msra.mxu0 0
    %3595 = vmatprep.subr.bf16.mxu0 0
    %3596 = vmatpush1.bf16.xpose.msra.mxu0 0
    %3597 = vmatprep.subr.bf16.mxu0 0
    %3598 = vmatpush1.bf16.xpose.msra.mxu0 0
    %3599 = vmatprep.subr.bf16.mxu0 0
    %3600 = vmatpush1.bf16.xpose.msra.mxu0 0
    %3601 = vmatprep.subr.bf16.mxu0 0
    %3602 = vmatpush1.bf16.xpose.msra.mxu0 0
    %3603 = vmatprep.mubr.bf16.mxu0 0
    %3604 = vmatmul.mubr.bf16.gmra.mrb[0].mxu0 %v3566
    %v3605 = vpop.f32.mrb[0].mxu0
    %v3606 = vadd.f32 %v2991, %v3605
    %v3607 = vpop.f32.mrb[0].mxu0
    %v3608 = vpop.f32.mrb[0].mxu0
    %v3609 = vpop.f32.mrb[0].mxu0
    %3610 = vdwg.mxu0
    %3611 = vrot.lane.b32.xlu0 %v3122, 96
    %v3612 = vpop.permute.xlu0 %3611
    %3613 = vrot.lane.b32.xlu0 %v3122, 32
    %v3614 = vpop.permute.xlu0 %3613
    %v3616 = vsel %vm350, %v3612, 0
    %v3619 = vsel %vm350, %v3614, 0
    %3621 = vmatprep.subr.bf16.mxu0 0
    %3622 = vmatpush1.bf16.xpose.msra.mxu0 %v3619
    %3623 = vmatprep.subr.bf16.mxu0 0
    %3624 = vmatpush1.bf16.xpose.msra.mxu0 0
    %3625 = vmatprep.subr.bf16.mxu0 0
    %3626 = vmatpush1.bf16.xpose.msra.mxu0 0
    %3627 = vmatprep.subr.bf16.mxu0 0
    %3628 = vmatpush1.bf16.xpose.msra.mxu0 0
    %3629 = vmatprep.subr.bf16.mxu0 0
    %3630 = vmatpush1.bf16.xpose.msra.mxu0 0
    %3631 = vmatprep.subr.bf16.mxu0 0
    %3632 = vmatpush1.bf16.xpose.msra.mxu0 0
    %3633 = vmatprep.subr.bf16.mxu0 0
    %3634 = vmatpush1.bf16.xpose.msra.mxu0 0
    %3635 = vmatprep.subr.bf16.mxu0 0
    %3636 = vmatpush1.bf16.xpose.msra.mxu0 0
    %3637 = vmatprep.subr.bf16.mxu0 0
    %3638 = vmatpush1.bf16.xpose.msra.mxu0 0
    %3639 = vmatprep.subr.bf16.mxu0 0
    %3640 = vmatpush1.bf16.xpose.msra.mxu0 0
    %3641 = vmatprep.subr.bf16.mxu0 0
    %3642 = vmatpush1.bf16.xpose.msra.mxu0 0
    %3643 = vmatprep.subr.bf16.mxu0 0
    %3644 = vmatpush1.bf16.xpose.msra.mxu0 0
    %3645 = vmatprep.subr.bf16.mxu0 0
    %3646 = vmatpush1.bf16.xpose.msra.mxu0 0
    %3647 = vmatprep.subr.bf16.mxu0 0
    %3648 = vmatpush1.bf16.xpose.msra.mxu0 0
    %3649 = vmatprep.subr.bf16.mxu0 0
    %3650 = vmatpush1.bf16.xpose.msra.mxu0 0
    %3651 = vmatprep.subr.bf16.mxu0 0
    %3652 = vmatpush1.bf16.xpose.msra.mxu0 0
    %3653 = vmatprep.mubr.bf16.mxu0 0
    %3654 = vmatmul.mubr.bf16.gmra.mrb[0].mxu0 %v3616
    %v3655 = vpop.f32.mrb[0].mxu0
    %v3656 = vadd.f32 %v2991, %v3655
    %v3657 = vpop.f32.mrb[0].mxu0
    %v3658 = vpop.f32.mrb[0].mxu0
    %v3659 = vpop.f32.mrb[0].mxu0
    %3660 = vdwg.mxu0
    %v3661 = vsel %vm446, %v3606, -inf
    %3662 = vmax.xlane.f32.xlu0 %v3661
    %v3663 = vpop.xlane.xlu0 %3662
    %v3664 = vsel %vm446, %v3656, -inf
    %3665 = vmax.xlane.f32.xlu0 %v3664
    %v3666 = vpop.xlane.xlu0 %3665
    %v3667 = vsub.f32 %v3606, %v3663
    %v3668 = vsub.f32 %v3656, %v3666
    %v3669 = vmul.f32 %v3667, 1.442695
    %v3670 = vpow.pop %v3669
    %v3671 = vmul.f32 %v3668, 1.442695
    %v3672 = vpow.pop %v3671
    %v3673 = vsel %vm446, %v3670, 0.0
    %3674 = vadd.xlane.f32.xlu0 %v3673
    %v3675 = vpop.xlane.xlu0 %3674
    %v3676 = vsel %vm446, %v3672, 0.0
    %3677 = vadd.xlane.f32.xlu0 %v3676
    %v3678 = vpop.xlane.xlu0 %3677
    %v3679 = vrcp.pop %v3675
    %v3680 = vrcp.pop %v3678
    %v3681 = vmul.f32 %v3670, %v3679
    %v3682 = vmul.f32 %v3672, %v3680
    %v3683 = vpack.c.bf16 %v3681, %v3681
    %v3684 = vpack.c.bf16 %v3682, %v3682
    %3685 = vrot.lane.b32.xlu0 %v3123, 96
    %v3686 = vpop.permute.xlu0 %3685
    %v3688 = vsel %vm446, %v3683, 0
    %v3691 = vsel %vm474, %v3686, 0
    %3693 = vmatprep.subr.bf16.mxu0 0
    %3694 = vmatpush1.bf16.msra.mxu0 %v3691
    %3695 = vmatprep.subr.bf16.mxu0 0
    %3696 = vmatpush1.bf16.msra.mxu0 0
    %3697 = vmatprep.subr.bf16.mxu0 0
    %3698 = vmatpush1.bf16.msra.mxu0 0
    %3699 = vmatprep.subr.bf16.mxu0 0
    %3700 = vmatpush1.bf16.msra.mxu0 0
    %3701 = vmatprep.subr.bf16.mxu0 0
    %3702 = vmatpush1.bf16.msra.mxu0 0
    %3703 = vmatprep.subr.bf16.mxu0 0
    %3704 = vmatpush1.bf16.msra.mxu0 0
    %3705 = vmatprep.subr.bf16.mxu0 0
    %3706 = vmatpush1.bf16.msra.mxu0 0
    %3707 = vmatprep.subr.bf16.mxu0 0
    %3708 = vmatpush1.bf16.msra.mxu0 0
    %3709 = vmatprep.subr.bf16.mxu0 0
    %3710 = vmatpush1.bf16.msra.mxu0 0
    %3711 = vmatprep.subr.bf16.mxu0 0
    %3712 = vmatpush1.bf16.msra.mxu0 0
    %3713 = vmatprep.subr.bf16.mxu0 0
    %3714 = vmatpush1.bf16.msra.mxu0 0
    %3715 = vmatprep.subr.bf16.mxu0 0
    %3716 = vmatpush1.bf16.msra.mxu0 0
    %3717 = vmatprep.subr.bf16.mxu0 0
    %3718 = vmatpush1.bf16.msra.mxu0 0
    %3719 = vmatprep.subr.bf16.mxu0 0
    %3720 = vmatpush1.bf16.msra.mxu0 0
    %3721 = vmatprep.subr.bf16.mxu0 0
    %3722 = vmatpush1.bf16.msra.mxu0 0
    %3723 = vmatprep.subr.bf16.mxu0 0
    %3724 = vmatpush1.bf16.msra.mxu0 0
    %3725 = vmatprep.mubr.bf16.mxu0 0
    %3726 = vmatmul.mubr.bf16.gmra.mrb[0].mxu0 %v3688
    %v3727 = vpop.f32.mrb[0].mxu0
    %v3728 = vadd.f32 0.0, %v3727
    %v3729 = vpop.f32.mrb[0].mxu0
    %v3730 = vpop.f32.mrb[0].mxu0
    %v3731 = vpop.f32.mrb[0].mxu0
    %3732 = vdwg.mxu0
    %3733 = vrot.lane.b32.xlu0 %v3124, 96
    %v3734 = vpop.permute.xlu0 %3733
    %v3736 = vsel %vm446, %v3684, 0
    %v3739 = vsel %vm474, %v3734, 0
    %3741 = vmatprep.subr.bf16.mxu0 0
    %3742 = vmatpush1.bf16.msra.mxu0 %v3739
    %3743 = vmatprep.subr.bf16.mxu0 0
    %3744 = vmatpush1.bf16.msra.mxu0 0
    %3745 = vmatprep.subr.bf16.mxu0 0
    %3746 = vmatpush1.bf16.msra.mxu0 0
    %3747 = vmatprep.subr.bf16.mxu0 0
    %3748 = vmatpush1.bf16.msra.mxu0 0
    %3749 = vmatprep.subr.bf16.mxu0 0
    %3750 = vmatpush1.bf16.msra.mxu0 0
    %3751 = vmatprep.subr.bf16.mxu0 0
    %3752 = vmatpush1.bf16.msra.mxu0 0
    %3753 = vmatprep.subr.bf16.mxu0 0
    %3754 = vmatpush1.bf16.msra.mxu0 0
    %3755 = vmatprep.subr.bf16.mxu0 0
    %3756 = vmatpush1.bf16.msra.mxu0 0
    %3757 = vmatprep.subr.bf16.mxu0 0
    %3758 = vmatpush1.bf16.msra.mxu0 0
    %3759 = vmatprep.subr.bf16.mxu0 0
    %3760 = vmatpush1.bf16.msra.mxu0 0
    %3761 = vmatprep.subr.bf16.mxu0 0
    %3762 = vmatpush1.bf16.msra.mxu0 0
    %3763 = vmatprep.subr.bf16.mxu0 0
    %3764 = vmatpush1.bf16.msra.mxu0 0
    %3765 = vmatprep.subr.bf16.mxu0 0
    %3766 = vmatpush1.bf16.msra.mxu0 0
    %3767 = vmatprep.subr.bf16.mxu0 0
    %3768 = vmatpush1.bf16.msra.mxu0 0
    %3769 = vmatprep.subr.bf16.mxu0 0
    %3770 = vmatpush1.bf16.msra.mxu0 0
    %3771 = vmatprep.subr.bf16.mxu0 0
    %3772 = vmatpush1.bf16.msra.mxu0 0
    %3773 = vmatprep.mubr.bf16.mxu0 0
    %3774 = vmatmul.mubr.bf16.gmra.mrb[0].mxu0 %v3736
    %v3775 = vpop.f32.mrb[0].mxu0
    %v3776 = vadd.f32 0.0, %v3775
    %v3777 = vpop.f32.mrb[0].mxu0
    %v3778 = vpop.f32.mrb[0].mxu0
    %v3779 = vpop.f32.mrb[0].mxu0
    %3780 = vdwg.mxu0
    %3781 = vrot.lane.b32.xlu0 %v3121, 80
    %v3782 = vpop.permute.xlu0 %3781
    %3783 = vrot.lane.b32.xlu0 %v3121, 16
    %v3784 = vpop.permute.xlu0 %3783
    %v3786 = vsel %vm350, %v3782, 0
    %v3789 = vsel %vm350, %v3784, 0
    %3791 = vmatprep.subr.bf16.mxu0 0
    %3792 = vmatpush1.bf16.xpose.msra.mxu0 %v3789
    %3793 = vmatprep.subr.bf16.mxu0 0
    %3794 = vmatpush1.bf16.xpose.msra.mxu0 0
    %3795 = vmatprep.subr.bf16.mxu0 0
    %3796 = vmatpush1.bf16.xpose.msra.mxu0 0
    %3797 = vmatprep.subr.bf16.mxu0 0
    %3798 = vmatpush1.bf16.xpose.msra.mxu0 0
    %3799 = vmatprep.subr.bf16.mxu0 0
    %3800 = vmatpush1.bf16.xpose.msra.mxu0 0
    %3801 = vmatprep.subr.bf16.mxu0 0
    %3802 = vmatpush1.bf16.xpose.msra.mxu0 0
    %3803 = vmatprep.subr.bf16.mxu0 0
    %3804 = vmatpush1.bf16.xpose.msra.mxu0 0
    %3805 = vmatprep.subr.bf16.mxu0 0
    %3806 = vmatpush1.bf16.xpose.msra.mxu0 0
    %3807 = vmatprep.subr.bf16.mxu0 0
    %3808 = vmatpush1.bf16.xpose.msra.mxu0 0
    %3809 = vmatprep.subr.bf16.mxu0 0
    %3810 = vmatpush1.bf16.xpose.msra.mxu0 0
    %3811 = vmatprep.subr.bf16.mxu0 0
    %3812 = vmatpush1.bf16.xpose.msra.mxu0 0
    %3813 = vmatprep.subr.bf16.mxu0 0
    %3814 = vmatpush1.bf16.xpose.msra.mxu0 0
    %3815 = vmatprep.subr.bf16.mxu0 0
    %3816 = vmatpush1.bf16.xpose.msra.mxu0 0
    %3817 = vmatprep.subr.bf16.mxu0 0
    %3818 = vmatpush1.bf16.xpose.msra.mxu0 0
    %3819 = vmatprep.subr.bf16.mxu0 0
    %3820 = vmatpush1.bf16.xpose.msra.mxu0 0
    %3821 = vmatprep.subr.bf16.mxu0 0
    %3822 = vmatpush1.bf16.xpose.msra.mxu0 0
    %3823 = vmatprep.mubr.bf16.mxu0 0
    %3824 = vmatmul.mubr.bf16.gmra.mrb[0].mxu0 %v3786
    %v3825 = vpop.f32.mrb[0].mxu0
    %v3826 = vadd.f32 %v2992, %v3825
    %v3827 = vpop.f32.mrb[0].mxu0
    %v3828 = vpop.f32.mrb[0].mxu0
    %v3829 = vpop.f32.mrb[0].mxu0
    %3830 = vdwg.mxu0
    %3831 = vrot.lane.b32.xlu0 %v3122, 80
    %v3832 = vpop.permute.xlu0 %3831
    %3833 = vrot.lane.b32.xlu0 %v3122, 16
    %v3834 = vpop.permute.xlu0 %3833
    %v3836 = vsel %vm350, %v3832, 0
    %v3839 = vsel %vm350, %v3834, 0
    %3841 = vmatprep.subr.bf16.mxu0 0
    %3842 = vmatpush1.bf16.xpose.msra.mxu0 %v3839
    %3843 = vmatprep.subr.bf16.mxu0 0
    %3844 = vmatpush1.bf16.xpose.msra.mxu0 0
    %3845 = vmatprep.subr.bf16.mxu0 0
    %3846 = vmatpush1.bf16.xpose.msra.mxu0 0
    %3847 = vmatprep.subr.bf16.mxu0 0
    %3848 = vmatpush1.bf16.xpose.msra.mxu0 0
    %3849 = vmatprep.subr.bf16.mxu0 0
    %3850 = vmatpush1.bf16.xpose.msra.mxu0 0
    %3851 = vmatprep.subr.bf16.mxu0 0
    %3852 = vmatpush1.bf16.xpose.msra.mxu0 0
    %3853 = vmatprep.subr.bf16.mxu0 0
    %3854 = vmatpush1.bf16.xpose.msra.mxu0 0
    %3855 = vmatprep.subr.bf16.mxu0 0
    %3856 = vmatpush1.bf16.xpose.msra.mxu0 0
    %3857 = vmatprep.subr.bf16.mxu0 0
    %3858 = vmatpush1.bf16.xpose.msra.mxu0 0
    %3859 = vmatprep.subr.bf16.mxu0 0
    %3860 = vmatpush1.bf16.xpose.msra.mxu0 0
    %3861 = vmatprep.subr.bf16.mxu0 0
    %3862 = vmatpush1.bf16.xpose.msra.mxu0 0
    %3863 = vmatprep.subr.bf16.mxu0 0
    %3864 = vmatpush1.bf16.xpose.msra.mxu0 0
    %3865 = vmatprep.subr.bf16.mxu0 0
    %3866 = vmatpush1.bf16.xpose.msra.mxu0 0
    %3867 = vmatprep.subr.bf16.mxu0 0
    %3868 = vmatpush1.bf16.xpose.msra.mxu0 0
    %3869 = vmatprep.subr.bf16.mxu0 0
    %3870 = vmatpush1.bf16.xpose.msra.mxu0 0
    %3871 = vmatprep.subr.bf16.mxu0 0
    %3872 = vmatpush1.bf16.xpose.msra.mxu0 0
    %3873 = vmatprep.mubr.bf16.mxu0 0
    %3874 = vmatmul.mubr.bf16.gmra.mrb[0].mxu0 %v3836
    %v3875 = vpop.f32.mrb[0].mxu0
    %v3876 = vadd.f32 %v2992, %v3875
    %v3877 = vpop.f32.mrb[0].mxu0
    %v3878 = vpop.f32.mrb[0].mxu0
    %v3879 = vpop.f32.mrb[0].mxu0
    %3880 = vdwg.mxu0
    %v3881 = vsel %vm446, %v3826, -inf
    %3882 = vmax.xlane.f32.xlu0 %v3881
    %v3883 = vpop.xlane.xlu0 %3882
    %v3884 = vsel %vm446, %v3876, -inf
    %3885 = vmax.xlane.f32.xlu0 %v3884
    %v3886 = vpop.xlane.xlu0 %3885
    %v3887 = vsub.f32 %v3826, %v3883
    %v3888 = vsub.f32 %v3876, %v3886
    %v3889 = vmul.f32 %v3887, 1.442695
    %v3890 = vpow.pop %v3889
    %v3891 = vmul.f32 %v3888, 1.442695
    %v3892 = vpow.pop %v3891
    %v3893 = vsel %vm446, %v3890, 0.0
    %3894 = vadd.xlane.f32.xlu0 %v3893
    %v3895 = vpop.xlane.xlu0 %3894
    %v3896 = vsel %vm446, %v3892, 0.0
    %3897 = vadd.xlane.f32.xlu0 %v3896
    %v3898 = vpop.xlane.xlu0 %3897
    %v3899 = vrcp.pop %v3895
    %v3900 = vrcp.pop %v3898
    %v3901 = vmul.f32 %v3890, %v3899
    %v3902 = vmul.f32 %v3892, %v3900
    %v3903 = vpack.c.bf16 %v3901, %v3901
    %v3904 = vpack.c.bf16 %v3902, %v3902
    %3905 = vrot.lane.b32.xlu0 %v3123, 80
    %v3906 = vpop.permute.xlu0 %3905
    %v3908 = vsel %vm446, %v3903, 0
    %v3911 = vsel %vm474, %v3906, 0
    %3913 = vmatprep.subr.bf16.mxu0 0
    %3914 = vmatpush1.bf16.msra.mxu0 %v3911
    %3915 = vmatprep.subr.bf16.mxu0 0
    %3916 = vmatpush1.bf16.msra.mxu0 0
    %3917 = vmatprep.subr.bf16.mxu0 0
    %3918 = vmatpush1.bf16.msra.mxu0 0
    %3919 = vmatprep.subr.bf16.mxu0 0
    %3920 = vmatpush1.bf16.msra.mxu0 0
    %3921 = vmatprep.subr.bf16.mxu0 0
    %3922 = vmatpush1.bf16.msra.mxu0 0
    %3923 = vmatprep.subr.bf16.mxu0 0
    %3924 = vmatpush1.bf16.msra.mxu0 0
    %3925 = vmatprep.subr.bf16.mxu0 0
    %3926 = vmatpush1.bf16.msra.mxu0 0
    %3927 = vmatprep.subr.bf16.mxu0 0
    %3928 = vmatpush1.bf16.msra.mxu0 0
    %3929 = vmatprep.subr.bf16.mxu0 0
    %3930 = vmatpush1.bf16.msra.mxu0 0
    %3931 = vmatprep.subr.bf16.mxu0 0
    %3932 = vmatpush1.bf16.msra.mxu0 0
    %3933 = vmatprep.subr.bf16.mxu0 0
    %3934 = vmatpush1.bf16.msra.mxu0 0
    %3935 = vmatprep.subr.bf16.mxu0 0
    %3936 = vmatpush1.bf16.msra.mxu0 0
    %3937 = vmatprep.subr.bf16.mxu0 0
    %3938 = vmatpush1.bf16.msra.mxu0 0
    %3939 = vmatprep.subr.bf16.mxu0 0
    %3940 = vmatpush1.bf16.msra.mxu0 0
    %3941 = vmatprep.subr.bf16.mxu0 0
    %3942 = vmatpush1.bf16.msra.mxu0 0
    %3943 = vmatprep.subr.bf16.mxu0 0
    %3944 = vmatpush1.bf16.msra.mxu0 0
    %3945 = vmatprep.mubr.bf16.mxu0 0
    %3946 = vmatmul.mubr.bf16.gmra.mrb[0].mxu0 %v3908
    %v3947 = vpop.f32.mrb[0].mxu0
    %v3948 = vadd.f32 0.0, %v3947
    %v3949 = vpop.f32.mrb[0].mxu0
    %v3950 = vpop.f32.mrb[0].mxu0
    %v3951 = vpop.f32.mrb[0].mxu0
    %3952 = vdwg.mxu0
    %3953 = vrot.lane.b32.xlu0 %v3124, 80
    %v3954 = vpop.permute.xlu0 %3953
    %v3956 = vsel %vm446, %v3904, 0
    %v3959 = vsel %vm474, %v3954, 0
    %3961 = vmatprep.subr.bf16.mxu0 0
    %3962 = vmatpush1.bf16.msra.mxu0 %v3959
    %3963 = vmatprep.subr.bf16.mxu0 0
    %3964 = vmatpush1.bf16.msra.mxu0 0
    %3965 = vmatprep.subr.bf16.mxu0 0
    %3966 = vmatpush1.bf16.msra.mxu0 0
    %3967 = vmatprep.subr.bf16.mxu0 0
    %3968 = vmatpush1.bf16.msra.mxu0 0
    %3969 = vmatprep.subr.bf16.mxu0 0
    %3970 = vmatpush1.bf16.msra.mxu0 0
    %3971 = vmatprep.subr.bf16.mxu0 0
    %3972 = vmatpush1.bf16.msra.mxu0 0
    %3973 = vmatprep.subr.bf16.mxu0 0
    %3974 = vmatpush1.bf16.msra.mxu0 0
    %3975 = vmatprep.subr.bf16.mxu0 0
    %3976 = vmatpush1.bf16.msra.mxu0 0
    %3977 = vmatprep.subr.bf16.mxu0 0
    %3978 = vmatpush1.bf16.msra.mxu0 0
    %3979 = vmatprep.subr.bf16.mxu0 0
    %3980 = vmatpush1.bf16.msra.mxu0 0
    %3981 = vmatprep.subr.bf16.mxu0 0
    %3982 = vmatpush1.bf16.msra.mxu0 0
    %3983 = vmatprep.subr.bf16.mxu0 0
    %3984 = vmatpush1.bf16.msra.mxu0 0
    %3985 = vmatprep.subr.bf16.mxu0 0
    %3986 = vmatpush1.bf16.msra.mxu0 0
    %3987 = vmatprep.subr.bf16.mxu0 0
    %3988 = vmatpush1.bf16.msra.mxu0 0
    %3989 = vmatprep.subr.bf16.mxu0 0
    %3990 = vmatpush1.bf16.msra.mxu0 0
    %3991 = vmatprep.subr.bf16.mxu0 0
    %3992 = vmatpush1.bf16.msra.mxu0 0
    %3993 = vmatprep.mubr.bf16.mxu0 0
    %3994 = vmatmul.mubr.bf16.gmra.mrb[0].mxu0 %v3956
    %v3995 = vpop.f32.mrb[0].mxu0
    %v3996 = vadd.f32 0.0, %v3995
    %v3997 = vpop.f32.mrb[0].mxu0
    %v3998 = vpop.f32.mrb[0].mxu0
    %v3999 = vpop.f32.mrb[0].mxu0
    %4000 = vdwg.mxu0
    %4003 = vrot.lane.b32.xlu0 %v3507, 16
    %v4004 = vpop.permute.xlu0 %4003
    %4005 = vrot.lane.b32.xlu0 %v3556, 16
    %v4006 = vpop.permute.xlu0 %4005
    %4011 = vrot.lane.b32.xlu0 %v3728, 32
    %v4012 = vpop.permute.xlu0 %4011
    %4013 = vrot.lane.b32.xlu0 %v3776, 32
    %v4014 = vpop.permute.xlu0 %4013
    %4019 = vrot.lane.b32.xlu0 %v3948, 48
    %v4020 = vpop.permute.xlu0 %4019
    %4021 = vrot.lane.b32.xlu0 %v3996, 48
    %v4022 = vpop.permute.xlu0 %4021
    %v4025 = vsel %vm350, %v3288, %v4004
    %v4026 = vsel %vm350, %v3334, %v4006
    %v4027 = vsel %vm1252, %v4025, %v4012
    %v4028 = vsel %vm1252, %v4026, %v4014
    %v4029 = vsel %vm1255, %v4027, %v4020
    %v4030 = vsel %vm1255, %v4028, %v4022
    %v4031 = vpack.c.bf16 %v4030, %v4029
    %v4040 = vunpack.c.l.b16 %v3002
    %v4041 = vunpack.c.l.b16 %v3003
    %v4042 = vunpack.c.l.b16 %v3004
    %v4043 = vunpack.c.l.b16 %v3005
    %v4044 = vunpack.c.l.b16 %v3006
    %v4045 = vunpack.c.l.b16 %v3007
    %v4046 = vunpack.c.l.b16 %v3008
    %v4047 = vunpack.c.l.b16 %v3009
    %v4048 = vpack.c.b16 %v4041, %v4040
    %v4049 = vpack.c.b16 %v4043, %v4042
    %v4050 = vpack.c.b16 %v4045, %v4044
    %v4051 = vpack.c.b16 %v4047, %v4046
    %v4057 = vsel %vm232, %v4031, 0
    %4059 = vmatprep.subr.bf16.mxu0 0
    %4060 = vmatpush1.bf16.msra.mxu0 %v4048
    %4061 = vmatprep.subr.bf16.mxu0 0
    %4062 = vmatpush1.bf16.msra.mxu0 %v4049
    %4063 = vmatprep.subr.bf16.mxu0 0
    %4064 = vmatpush1.bf16.msra.mxu0 %v4050
    %4065 = vmatprep.subr.bf16.mxu0 0
    %4066 = vmatpush1.bf16.msra.mxu0 %v4051
    %4067 = vmatprep.subr.bf16.mxu0 0
    %4068 = vmatpush1.bf16.msra.mxu0 0
    %4069 = vmatprep.subr.bf16.mxu0 0
    %4070 = vmatpush1.bf16.msra.mxu0 0
    %4071 = vmatprep.subr.bf16.mxu0 0
    %4072 = vmatpush1.bf16.msra.mxu0 0
    %4073 = vmatprep.subr.bf16.mxu0 0
    %4074 = vmatpush1.bf16.msra.mxu0 0
    %4075 = vmatprep.subr.bf16.mxu0 0
    %4076 = vmatpush1.bf16.msra.mxu0 0
    %4077 = vmatprep.subr.bf16.mxu0 0
    %4078 = vmatpush1.bf16.msra.mxu0 0
    %4079 = vmatprep.subr.bf16.mxu0 0
    %4080 = vmatpush1.bf16.msra.mxu0 0
    %4081 = vmatprep.subr.bf16.mxu0 0
    %4082 = vmatpush1.bf16.msra.mxu0 0
    %4083 = vmatprep.subr.bf16.mxu0 0
    %4084 = vmatpush1.bf16.msra.mxu0 0
    %4085 = vmatprep.subr.bf16.mxu0 0
    %4086 = vmatpush1.bf16.msra.mxu0 0
    %4087 = vmatprep.subr.bf16.mxu0 0
    %4088 = vmatpush1.bf16.msra.mxu0 0
    %4089 = vmatprep.subr.bf16.mxu0 0
    %4090 = vmatpush1.bf16.msra.mxu0 0
    %4091 = vmatprep.mubr.bf16.mxu0 0
    %4092 = vmatmul.mubr.bf16.gmra.mrb[0].mxu0 %v4057
    %v4093 = vpop.f32.mrb[0].mxu0
    %v4094 = vadd.f32 0.0, %v4093
    %v4095 = vpop.f32.mrb[0].mxu0
    %v4096 = vpop.f32.mrb[0].mxu0
    %v4097 = vadd.f32 0.0, %v4096
    %v4098 = vpop.f32.mrb[0].mxu0
    %4099 = vdwg.mxu0
    %v4100 = vadd.f32 %v2981, %v4094
    %v4101 = vadd.f32 %v2986, %v4097
    %v4102 = vld [vmem:[%s15] sm:$0x1]
    %v4103 = vld [vmem:[%s16] sm:$0xf]
    %v4104 = vld [vmem:[%s16 + $0x4] sm:$0xf]
    %v4105 = vld [vmem:[%s16 + $0x8] sm:$0xf]
    %v4106 = vld [vmem:[%s16 + $0xc] sm:$0xf]
    %v4107 = vld [vmem:[%s16 + $0x10] sm:$0xf]
    %v4108 = vld [vmem:[%s16 + $0x14] sm:$0xf]
    %v4109 = vld [vmem:[%s16 + $0x18] sm:$0xf]
    %v4110 = vld [vmem:[%s16 + $0x1c] sm:$0xf]
    %v4111 = vld [vmem:[%s17] sm:$0xf]
    %v4112 = vld [vmem:[%s17 + $0x4] sm:$0xf]
    %v4113 = vld [vmem:[%s17 + $0x8] sm:$0xf]
    %v4114 = vld [vmem:[%s17 + $0xc] sm:$0xf]
    %v4115 = vld [vmem:[%s17 + $0x10] sm:$0xf]
    %v4116 = vld [vmem:[%s17 + $0x14] sm:$0xf]
    %v4117 = vld [vmem:[%s17 + $0x18] sm:$0xf]
    %v4118 = vld [vmem:[%s17 + $0x1c] sm:$0xf]
    %v4119 = vld [vmem:[%s18] sm:$0xf]
    %v4120 = vld [vmem:[%s18 + $0x4] sm:$0xf]
    %v4121 = vld [vmem:[%s18 + $0x8] sm:$0xf]
    %v4122 = vld [vmem:[%s18 + $0xc] sm:$0xf]
    %v4123 = vld [vmem:[%s18 + $0x10] sm:$0xf]
    %v4124 = vld [vmem:[%s18 + $0x14] sm:$0xf]
    %v4125 = vld [vmem:[%s18 + $0x18] sm:$0xf]
    %v4126 = vld [vmem:[%s18 + $0x1c] sm:$0xf]
    %v4127 = vmul.f32 %v4100, %v4100
    %v4128 = vmul.f32 %v4101, %v4101
    %v4129 = vsel %vm232, %v4127, 0.0
    %4130 = vadd.xlane.f32.xlu0 %v4129
    %v4131 = vpop.xlane.xlu0 %4130
    %v4132 = vsel %vm232, %v4128, 0.0
    %4133 = vadd.xlane.f32.xlu0 %v4132
    %v4134 = vpop.xlane.xlu0 %4133
    %v4135 = vmul.f32 %v4131, %v239
    %v4136 = vmul.f32 %v4134, %v239
    %v4137 = vadd.f32 %v4135, 1e-06
    %v4138 = vadd.f32 %v4136, 1e-06
    %v4139 = vrsqrt.pop %v4137
    %v4140 = vrsqrt.pop %v4138
    %v4141 = vmul.f32 %v4100, %v4139
    %v4142 = vmul.f32 %v4101, %v4140
    %v4144 = vlaneseq
    %v4145 = vshrl.u32 %v4144, 7
    %v4146 = vsub.s32 0, %v4145
    %v4147 = vrot.slane %v4102, %v4146
    %v4149 = vmul.f32 %v4141, %v4147
    %v4150 = vmul.f32 %v4142, %v4147
    %v4151 = vpack.c.bf16 %v4150, %v4149
    %v4160 = vunpack.c.l.b16 %v4103
    %v4161 = vunpack.c.l.b16 %v4104
    %v4162 = vunpack.c.l.b16 %v4105
    %v4163 = vunpack.c.l.b16 %v4106
    %v4164 = vunpack.c.l.b16 %v4107
    %v4165 = vunpack.c.l.b16 %v4108
    %v4166 = vunpack.c.l.b16 %v4109
    %v4167 = vunpack.c.l.b16 %v4110
    %v4168 = vpack.c.b16 %v4161, %v4160
    %v4169 = vpack.c.b16 %v4163, %v4162
    %v4170 = vpack.c.b16 %v4165, %v4164
    %v4171 = vpack.c.b16 %v4167, %v4166
    %v4177 = vsel %vm232, %v4151, 0
    %4179 = vmatprep.subr.bf16.mxu0 0
    %4180 = vmatpush1.bf16.msra.mxu0 %v4168
    %4181 = vmatprep.subr.bf16.mxu0 0
    %4182 = vmatpush1.bf16.msra.mxu0 %v4169
    %4183 = vmatprep.subr.bf16.mxu0 0
    %4184 = vmatpush1.bf16.msra.mxu0 %v4170
    %4185 = vmatprep.subr.bf16.mxu0 0
    %4186 = vmatpush1.bf16.msra.mxu0 %v4171
    %4187 = vmatprep.subr.bf16.mxu0 0
    %4188 = vmatpush1.bf16.msra.mxu0 0
    %4189 = vmatprep.subr.bf16.mxu0 0
    %4190 = vmatpush1.bf16.msra.mxu0 0
    %4191 = vmatprep.subr.bf16.mxu0 0
    %4192 = vmatpush1.bf16.msra.mxu0 0
    %4193 = vmatprep.subr.bf16.mxu0 0
    %4194 = vmatpush1.bf16.msra.mxu0 0
    %4195 = vmatprep.subr.bf16.mxu0 0
    %4196 = vmatpush1.bf16.msra.mxu0 0
    %4197 = vmatprep.subr.bf16.mxu0 0
    %4198 = vmatpush1.bf16.msra.mxu0 0
    %4199 = vmatprep.subr.bf16.mxu0 0
    %4200 = vmatpush1.bf16.msra.mxu0 0
    %4201 = vmatprep.subr.bf16.mxu0 0
    %4202 = vmatpush1.bf16.msra.mxu0 0
    %4203 = vmatprep.subr.bf16.mxu0 0
    %4204 = vmatpush1.bf16.msra.mxu0 0
    %4205 = vmatprep.subr.bf16.mxu0 0
    %4206 = vmatpush1.bf16.msra.mxu0 0
    %4207 = vmatprep.subr.bf16.mxu0 0
    %4208 = vmatpush1.bf16.msra.mxu0 0
    %4209 = vmatprep.subr.bf16.mxu0 0
    %4210 = vmatpush1.bf16.msra.mxu0 0
    %4211 = vmatprep.mubr.bf16.mxu0 0
    %4212 = vmatmul.mubr.bf16.gmra.mrb[0].mxu0 %v4177
    %v4213 = vpop.f32.mrb[0].mxu0
    %v4214 = vadd.f32 0.0, %v4213
    %v4215 = vpop.f32.mrb[0].mxu0
    %v4216 = vpop.f32.mrb[0].mxu0
    %v4217 = vadd.f32 0.0, %v4216
    %v4218 = vpop.f32.mrb[0].mxu0
    %4219 = vdwg.mxu0
    %v4228 = vunpack.c.l.b16 %v4111
    %v4229 = vunpack.c.l.b16 %v4112
    %v4230 = vunpack.c.l.b16 %v4113
    %v4231 = vunpack.c.l.b16 %v4114
    %v4232 = vunpack.c.l.b16 %v4115
    %v4233 = vunpack.c.l.b16 %v4116
    %v4234 = vunpack.c.l.b16 %v4117
    %v4235 = vunpack.c.l.b16 %v4118
    %v4236 = vpack.c.b16 %v4229, %v4228
    %v4237 = vpack.c.b16 %v4231, %v4230
    %v4238 = vpack.c.b16 %v4233, %v4232
    %v4239 = vpack.c.b16 %v4235, %v4234
    %v4245 = vsel %vm232, %v2893, 0
    %4247 = vmatprep.subr.bf16.mxu0 0
    %4248 = vmatpush1.bf16.msra.mxu0 %v4236
    %4249 = vmatprep.subr.bf16.mxu0 0
    %4250 = vmatpush1.bf16.msra.mxu0 %v4237
    %4251 = vmatprep.subr.bf16.mxu0 0
    %4252 = vmatpush1.bf16.msra.mxu0 %v4238
    %4253 = vmatprep.subr.bf16.mxu0 0
    %4254 = vmatpush1.bf16.msra.mxu0 %v4239
    %4255 = vmatprep.subr.bf16.mxu0 0
    %4256 = vmatpush1.bf16.msra.mxu0 0
    %4257 = vmatprep.subr.bf16.mxu0 0
    %4258 = vmatpush1.bf16.msra.mxu0 0
    %4259 = vmatprep.subr.bf16.mxu0 0
    %4260 = vmatpush1.bf16.msra.mxu0 0
    %4261 = vmatprep.subr.bf16.mxu0 0
    %4262 = vmatpush1.bf16.msra.mxu0 0
    %4263 = vmatprep.subr.bf16.mxu0 0
    %4264 = vmatpush1.bf16.msra.mxu0 0
    %4265 = vmatprep.subr.bf16.mxu0 0
    %4266 = vmatpush1.bf16.msra.mxu0 0
    %4267 = vmatprep.subr.bf16.mxu0 0
    %4268 = vmatpush1.bf16.msra.mxu0 0
    %4269 = vmatprep.subr.bf16.mxu0 0
    %4270 = vmatpush1.bf16.msra.mxu0 0
    %4271 = vmatprep.subr.bf16.mxu0 0
    %4272 = vmatpush1.bf16.msra.mxu0 0
    %4273 = vmatprep.subr.bf16.mxu0 0
    %4274 = vmatpush1.bf16.msra.mxu0 0
    %4275 = vmatprep.subr.bf16.mxu0 0
    %4276 = vmatpush1.bf16.msra.mxu0 0
    %4277 = vmatprep.subr.bf16.mxu0 0
    %4278 = vmatpush1.bf16.msra.mxu0 0
    %4279 = vmatprep.mubr.bf16.mxu0 0
    %4280 = vmatmul.mubr.bf16.gmra.mrb[0].mxu0 %v4245
    %v4281 = vpop.f32.mrb[0].mxu0
    %v4282 = vadd.f32 0.0, %v4281
    %v4283 = vpop.f32.mrb[0].mxu0
    %v4284 = vpop.f32.mrb[0].mxu0
    %v4285 = vadd.f32 0.0, %v4284
    %v4286 = vpop.f32.mrb[0].mxu0
    %4287 = vdwg.mxu0
    %v4288 = vpack.c.bf16 %v4214, %v4214
    %v4289 = vpack.c.bf16 %v4217, %v4217
    %v4290 = vpack.c.bf16 %v4282, %v4282
    %v4291 = vpack.c.bf16 %v4285, %v4285
    %v4293 = vsel %vm350, %v4288, 0
    %v4296 = vsel %vm350, %v4290, 0
    %4298 = vmatprep.subr.bf16.mxu0 0
    %4299 = vmatpush1.bf16.xpose.msra.mxu0 %v4296
    %4300 = vmatprep.subr.bf16.mxu0 0
    %4301 = vmatpush1.bf16.xpose.msra.mxu0 0
    %4302 = vmatprep.subr.bf16.mxu0 0
    %4303 = vmatpush1.bf16.xpose.msra.mxu0 0
    %4304 = vmatprep.subr.bf16.mxu0 0
    %4305 = vmatpush1.bf16.xpose.msra.mxu0 0
    %4306 = vmatprep.subr.bf16.mxu0 0
    %4307 = vmatpush1.bf16.xpose.msra.mxu0 0
    %4308 = vmatprep.subr.bf16.mxu0 0
    %4309 = vmatpush1.bf16.xpose.msra.mxu0 0
    %4310 = vmatprep.subr.bf16.mxu0 0
    %4311 = vmatpush1.bf16.xpose.msra.mxu0 0
    %4312 = vmatprep.subr.bf16.mxu0 0
    %4313 = vmatpush1.bf16.xpose.msra.mxu0 0
    %4314 = vmatprep.subr.bf16.mxu0 0
    %4315 = vmatpush1.bf16.xpose.msra.mxu0 0
    %4316 = vmatprep.subr.bf16.mxu0 0
    %4317 = vmatpush1.bf16.xpose.msra.mxu0 0
    %4318 = vmatprep.subr.bf16.mxu0 0
    %4319 = vmatpush1.bf16.xpose.msra.mxu0 0
    %4320 = vmatprep.subr.bf16.mxu0 0
    %4321 = vmatpush1.bf16.xpose.msra.mxu0 0
    %4322 = vmatprep.subr.bf16.mxu0 0
    %4323 = vmatpush1.bf16.xpose.msra.mxu0 0
    %4324 = vmatprep.subr.bf16.mxu0 0
    %4325 = vmatpush1.bf16.xpose.msra.mxu0 0
    %4326 = vmatprep.subr.bf16.mxu0 0
    %4327 = vmatpush1.bf16.xpose.msra.mxu0 0
    %4328 = vmatprep.subr.bf16.mxu0 0
    %4329 = vmatpush1.bf16.xpose.msra.mxu0 0
    %4330 = vmatprep.mubr.bf16.mxu0 0
    %4331 = vmatmul.mubr.bf16.gmra.mrb[0].mxu0 %v4293
    %v4332 = vpop.f32.mrb[0].mxu0
    %v4333 = vadd.f32 0.0, %v4332
    %v4334 = vpop.f32.mrb[0].mxu0
    %v4335 = vpop.f32.mrb[0].mxu0
    %v4336 = vpop.f32.mrb[0].mxu0
    %4337 = vdwg.mxu0
    %v4339 = vsel %vm350, %v4289, 0
    %v4342 = vsel %vm350, %v4291, 0
    %4344 = vmatprep.subr.bf16.mxu0 0
    %4345 = vmatpush1.bf16.xpose.msra.mxu0 %v4342
    %4346 = vmatprep.subr.bf16.mxu0 0
    %4347 = vmatpush1.bf16.xpose.msra.mxu0 0
    %4348 = vmatprep.subr.bf16.mxu0 0
    %4349 = vmatpush1.bf16.xpose.msra.mxu0 0
    %4350 = vmatprep.subr.bf16.mxu0 0
    %4351 = vmatpush1.bf16.xpose.msra.mxu0 0
    %4352 = vmatprep.subr.bf16.mxu0 0
    %4353 = vmatpush1.bf16.xpose.msra.mxu0 0
    %4354 = vmatprep.subr.bf16.mxu0 0
    %4355 = vmatpush1.bf16.xpose.msra.mxu0 0
    %4356 = vmatprep.subr.bf16.mxu0 0
    %4357 = vmatpush1.bf16.xpose.msra.mxu0 0
    %4358 = vmatprep.subr.bf16.mxu0 0
    %4359 = vmatpush1.bf16.xpose.msra.mxu0 0
    %4360 = vmatprep.subr.bf16.mxu0 0
    %4361 = vmatpush1.bf16.xpose.msra.mxu0 0
    %4362 = vmatprep.subr.bf16.mxu0 0
    %4363 = vmatpush1.bf16.xpose.msra.mxu0 0
    %4364 = vmatprep.subr.bf16.mxu0 0
    %4365 = vmatpush1.bf16.xpose.msra.mxu0 0
    %4366 = vmatprep.subr.bf16.mxu0 0
    %4367 = vmatpush1.bf16.xpose.msra.mxu0 0
    %4368 = vmatprep.subr.bf16.mxu0 0
    %4369 = vmatpush1.bf16.xpose.msra.mxu0 0
    %4370 = vmatprep.subr.bf16.mxu0 0
    %4371 = vmatpush1.bf16.xpose.msra.mxu0 0
    %4372 = vmatprep.subr.bf16.mxu0 0
    %4373 = vmatpush1.bf16.xpose.msra.mxu0 0
    %4374 = vmatprep.subr.bf16.mxu0 0
    %4375 = vmatpush1.bf16.xpose.msra.mxu0 0
    %4376 = vmatprep.mubr.bf16.mxu0 0
    %4377 = vmatmul.mubr.bf16.gmra.mrb[0].mxu0 %v4339
    %v4378 = vpop.f32.mrb[0].mxu0
    %v4379 = vadd.f32 0.0, %v4378
    %v4380 = vpop.f32.mrb[0].mxu0
    %v4381 = vpop.f32.mrb[0].mxu0
    %v4382 = vpop.f32.mrb[0].mxu0
    %4383 = vdwg.mxu0
    %v4384 = vsel %vm446, %v4333, -inf
    %4385 = vmax.xlane.f32.xlu0 %v4384
    %v4386 = vpop.xlane.xlu0 %4385
    %v4387 = vsel %vm446, %v4379, -inf
    %4388 = vmax.xlane.f32.xlu0 %v4387
    %v4389 = vpop.xlane.xlu0 %4388
    %v4390 = vsub.f32 %v4333, %v4386
    %v4391 = vsub.f32 %v4379, %v4389
    %v4392 = vmul.f32 %v4390, 1.442695
    %v4393 = vpow.pop %v4392
    %v4394 = vmul.f32 %v4391, 1.442695
    %v4395 = vpow.pop %v4394
    %v4396 = vsel %vm446, %v4393, 0.0
    %4397 = vadd.xlane.f32.xlu0 %v4396
    %v4398 = vpop.xlane.xlu0 %4397
    %v4399 = vsel %vm446, %v4395, 0.0
    %4400 = vadd.xlane.f32.xlu0 %v4399
    %v4401 = vpop.xlane.xlu0 %4400
    %v4402 = vrcp.pop %v4398
    %v4403 = vrcp.pop %v4401
    %v4404 = vmul.f32 %v4393, %v4402
    %v4405 = vmul.f32 %v4395, %v4403
    %v4406 = vpack.c.bf16 %v4404, %v4404
    %v4407 = vpack.c.bf16 %v4405, %v4405
    %4409 = vrot.lane.b32.xlu0 %v4290, 64
    %v4410 = vpop.permute.xlu0 %4409
    %v4412 = vsel %vm446, %v4406, 0
    %v4415 = vsel %vm474, %v4410, 0
    %4417 = vmatprep.subr.bf16.mxu0 0
    %4418 = vmatpush1.bf16.msra.mxu0 %v4415
    %4419 = vmatprep.subr.bf16.mxu0 0
    %4420 = vmatpush1.bf16.msra.mxu0 0
    %4421 = vmatprep.subr.bf16.mxu0 0
    %4422 = vmatpush1.bf16.msra.mxu0 0
    %4423 = vmatprep.subr.bf16.mxu0 0
    %4424 = vmatpush1.bf16.msra.mxu0 0
    %4425 = vmatprep.subr.bf16.mxu0 0
    %4426 = vmatpush1.bf16.msra.mxu0 0
    %4427 = vmatprep.subr.bf16.mxu0 0
    %4428 = vmatpush1.bf16.msra.mxu0 0
    %4429 = vmatprep.subr.bf16.mxu0 0
    %4430 = vmatpush1.bf16.msra.mxu0 0
    %4431 = vmatprep.subr.bf16.mxu0 0
    %4432 = vmatpush1.bf16.msra.mxu0 0
    %4433 = vmatprep.subr.bf16.mxu0 0
    %4434 = vmatpush1.bf16.msra.mxu0 0
    %4435 = vmatprep.subr.bf16.mxu0 0
    %4436 = vmatpush1.bf16.msra.mxu0 0
    %4437 = vmatprep.subr.bf16.mxu0 0
    %4438 = vmatpush1.bf16.msra.mxu0 0
    %4439 = vmatprep.subr.bf16.mxu0 0
    %4440 = vmatpush1.bf16.msra.mxu0 0
    %4441 = vmatprep.subr.bf16.mxu0 0
    %4442 = vmatpush1.bf16.msra.mxu0 0
    %4443 = vmatprep.subr.bf16.mxu0 0
    %4444 = vmatpush1.bf16.msra.mxu0 0
    %4445 = vmatprep.subr.bf16.mxu0 0
    %4446 = vmatpush1.bf16.msra.mxu0 0
    %4447 = vmatprep.subr.bf16.mxu0 0
    %4448 = vmatpush1.bf16.msra.mxu0 0
    %4449 = vmatprep.mubr.bf16.mxu0 0
    %4450 = vmatmul.mubr.bf16.gmra.mrb[0].mxu0 %v4412
    %v4451 = vpop.f32.mrb[0].mxu0
    %v4452 = vadd.f32 0.0, %v4451
    %v4453 = vpop.f32.mrb[0].mxu0
    %v4454 = vpop.f32.mrb[0].mxu0
    %v4455 = vpop.f32.mrb[0].mxu0
    %4456 = vdwg.mxu0
    %4458 = vrot.lane.b32.xlu0 %v4291, 64
    %v4459 = vpop.permute.xlu0 %4458
    %v4461 = vsel %vm446, %v4407, 0
    %v4464 = vsel %vm474, %v4459, 0
    %4466 = vmatprep.subr.bf16.mxu0 0
    %4467 = vmatpush1.bf16.msra.mxu0 %v4464
    %4468 = vmatprep.subr.bf16.mxu0 0
    %4469 = vmatpush1.bf16.msra.mxu0 0
    %4470 = vmatprep.subr.bf16.mxu0 0
    %4471 = vmatpush1.bf16.msra.mxu0 0
    %4472 = vmatprep.subr.bf16.mxu0 0
    %4473 = vmatpush1.bf16.msra.mxu0 0
    %4474 = vmatprep.subr.bf16.mxu0 0
    %4475 = vmatpush1.bf16.msra.mxu0 0
    %4476 = vmatprep.subr.bf16.mxu0 0
    %4477 = vmatpush1.bf16.msra.mxu0 0
    %4478 = vmatprep.subr.bf16.mxu0 0
    %4479 = vmatpush1.bf16.msra.mxu0 0
    %4480 = vmatprep.subr.bf16.mxu0 0
    %4481 = vmatpush1.bf16.msra.mxu0 0
    %4482 = vmatprep.subr.bf16.mxu0 0
    %4483 = vmatpush1.bf16.msra.mxu0 0
    %4484 = vmatprep.subr.bf16.mxu0 0
    %4485 = vmatpush1.bf16.msra.mxu0 0
    %4486 = vmatprep.subr.bf16.mxu0 0
    %4487 = vmatpush1.bf16.msra.mxu0 0
    %4488 = vmatprep.subr.bf16.mxu0 0
    %4489 = vmatpush1.bf16.msra.mxu0 0
    %4490 = vmatprep.subr.bf16.mxu0 0
    %4491 = vmatpush1.bf16.msra.mxu0 0
    %4492 = vmatprep.subr.bf16.mxu0 0
    %4493 = vmatpush1.bf16.msra.mxu0 0
    %4494 = vmatprep.subr.bf16.mxu0 0
    %4495 = vmatpush1.bf16.msra.mxu0 0
    %4496 = vmatprep.subr.bf16.mxu0 0
    %4497 = vmatpush1.bf16.msra.mxu0 0
    %4498 = vmatprep.mubr.bf16.mxu0 0
    %4499 = vmatmul.mubr.bf16.gmra.mrb[0].mxu0 %v4461
    %v4500 = vpop.f32.mrb[0].mxu0
    %v4501 = vadd.f32 0.0, %v4500
    %v4502 = vpop.f32.mrb[0].mxu0
    %v4503 = vpop.f32.mrb[0].mxu0
    %v4504 = vpop.f32.mrb[0].mxu0
    %4505 = vdwg.mxu0
    %4507 = vrot.lane.b32.xlu0 %v4288, 112
    %v4508 = vpop.permute.xlu0 %4507
    %4509 = vrot.lane.b32.xlu0 %v4290, 112
    %v4510 = vpop.permute.xlu0 %4509
    %v4512 = vsel %vm350, %v4508, 0
    %v4515 = vsel %vm350, %v4510, 0
    %4517 = vmatprep.subr.bf16.mxu0 0
    %4518 = vmatpush1.bf16.xpose.msra.mxu0 %v4515
    %4519 = vmatprep.subr.bf16.mxu0 0
    %4520 = vmatpush1.bf16.xpose.msra.mxu0 0
    %4521 = vmatprep.subr.bf16.mxu0 0
    %4522 = vmatpush1.bf16.xpose.msra.mxu0 0
    %4523 = vmatprep.subr.bf16.mxu0 0
    %4524 = vmatpush1.bf16.xpose.msra.mxu0 0
    %4525 = vmatprep.subr.bf16.mxu0 0
    %4526 = vmatpush1.bf16.xpose.msra.mxu0 0
    %4527 = vmatprep.subr.bf16.mxu0 0
    %4528 = vmatpush1.bf16.xpose.msra.mxu0 0
    %4529 = vmatprep.subr.bf16.mxu0 0
    %4530 = vmatpush1.bf16.xpose.msra.mxu0 0
    %4531 = vmatprep.subr.bf16.mxu0 0
    %4532 = vmatpush1.bf16.xpose.msra.mxu0 0
    %4533 = vmatprep.subr.bf16.mxu0 0
    %4534 = vmatpush1.bf16.xpose.msra.mxu0 0
    %4535 = vmatprep.subr.bf16.mxu0 0
    %4536 = vmatpush1.bf16.xpose.msra.mxu0 0
    %4537 = vmatprep.subr.bf16.mxu0 0
    %4538 = vmatpush1.bf16.xpose.msra.mxu0 0
    %4539 = vmatprep.subr.bf16.mxu0 0
    %4540 = vmatpush1.bf16.xpose.msra.mxu0 0
    %4541 = vmatprep.subr.bf16.mxu0 0
    %4542 = vmatpush1.bf16.xpose.msra.mxu0 0
    %4543 = vmatprep.subr.bf16.mxu0 0
    %4544 = vmatpush1.bf16.xpose.msra.mxu0 0
    %4545 = vmatprep.subr.bf16.mxu0 0
    %4546 = vmatpush1.bf16.xpose.msra.mxu0 0
    %4547 = vmatprep.subr.bf16.mxu0 0
    %4548 = vmatpush1.bf16.xpose.msra.mxu0 0
    %4549 = vmatprep.mubr.bf16.mxu0 0
    %4550 = vmatmul.mubr.bf16.gmra.mrb[0].mxu0 %v4512
    %v4551 = vpop.f32.mrb[0].mxu0
    %v4552 = vadd.f32 0.0, %v4551
    %v4553 = vpop.f32.mrb[0].mxu0
    %v4554 = vpop.f32.mrb[0].mxu0
    %v4555 = vpop.f32.mrb[0].mxu0
    %4556 = vdwg.mxu0
    %4558 = vrot.lane.b32.xlu0 %v4289, 112
    %v4559 = vpop.permute.xlu0 %4558
    %4560 = vrot.lane.b32.xlu0 %v4291, 112
    %v4561 = vpop.permute.xlu0 %4560
    %v4563 = vsel %vm350, %v4559, 0
    %v4566 = vsel %vm350, %v4561, 0
    %4568 = vmatprep.subr.bf16.mxu0 0
    %4569 = vmatpush1.bf16.xpose.msra.mxu0 %v4566
    %4570 = vmatprep.subr.bf16.mxu0 0
    %4571 = vmatpush1.bf16.xpose.msra.mxu0 0
    %4572 = vmatprep.subr.bf16.mxu0 0
    %4573 = vmatpush1.bf16.xpose.msra.mxu0 0
    %4574 = vmatprep.subr.bf16.mxu0 0
    %4575 = vmatpush1.bf16.xpose.msra.mxu0 0
    %4576 = vmatprep.subr.bf16.mxu0 0
    %4577 = vmatpush1.bf16.xpose.msra.mxu0 0
    %4578 = vmatprep.subr.bf16.mxu0 0
    %4579 = vmatpush1.bf16.xpose.msra.mxu0 0
    %4580 = vmatprep.subr.bf16.mxu0 0
    %4581 = vmatpush1.bf16.xpose.msra.mxu0 0
    %4582 = vmatprep.subr.bf16.mxu0 0
    %4583 = vmatpush1.bf16.xpose.msra.mxu0 0
    %4584 = vmatprep.subr.bf16.mxu0 0
    %4585 = vmatpush1.bf16.xpose.msra.mxu0 0
    %4586 = vmatprep.subr.bf16.mxu0 0
    %4587 = vmatpush1.bf16.xpose.msra.mxu0 0
    %4588 = vmatprep.subr.bf16.mxu0 0
    %4589 = vmatpush1.bf16.xpose.msra.mxu0 0
    %4590 = vmatprep.subr.bf16.mxu0 0
    %4591 = vmatpush1.bf16.xpose.msra.mxu0 0
    %4592 = vmatprep.subr.bf16.mxu0 0
    %4593 = vmatpush1.bf16.xpose.msra.mxu0 0
    %4594 = vmatprep.subr.bf16.mxu0 0
    %4595 = vmatpush1.bf16.xpose.msra.mxu0 0
    %4596 = vmatprep.subr.bf16.mxu0 0
    %4597 = vmatpush1.bf16.xpose.msra.mxu0 0
    %4598 = vmatprep.subr.bf16.mxu0 0
    %4599 = vmatpush1.bf16.xpose.msra.mxu0 0
    %4600 = vmatprep.mubr.bf16.mxu0 0
    %4601 = vmatmul.mubr.bf16.gmra.mrb[0].mxu0 %v4563
    %v4602 = vpop.f32.mrb[0].mxu0
    %v4603 = vadd.f32 0.0, %v4602
    %v4604 = vpop.f32.mrb[0].mxu0
    %v4605 = vpop.f32.mrb[0].mxu0
    %v4606 = vpop.f32.mrb[0].mxu0
    %4607 = vdwg.mxu0
    %v4608 = vsel %vm446, %v4552, -inf
    %4609 = vmax.xlane.f32.xlu0 %v4608
    %v4610 = vpop.xlane.xlu0 %4609
    %v4611 = vsel %vm446, %v4603, -inf
    %4612 = vmax.xlane.f32.xlu0 %v4611
    %v4613 = vpop.xlane.xlu0 %4612
    %v4614 = vsub.f32 %v4552, %v4610
    %v4615 = vsub.f32 %v4603, %v4613
    %v4616 = vmul.f32 %v4614, 1.442695
    %v4617 = vpow.pop %v4616
    %v4618 = vmul.f32 %v4615, 1.442695
    %v4619 = vpow.pop %v4618
    %v4620 = vsel %vm446, %v4617, 0.0
    %4621 = vadd.xlane.f32.xlu0 %v4620
    %v4622 = vpop.xlane.xlu0 %4621
    %v4623 = vsel %vm446, %v4619, 0.0
    %4624 = vadd.xlane.f32.xlu0 %v4623
    %v4625 = vpop.xlane.xlu0 %4624
    %v4626 = vrcp.pop %v4622
    %v4627 = vrcp.pop %v4625
    %v4628 = vmul.f32 %v4617, %v4626
    %v4629 = vmul.f32 %v4619, %v4627
    %v4630 = vpack.c.bf16 %v4628, %v4628
    %v4631 = vpack.c.bf16 %v4629, %v4629
    %4632 = vrot.lane.b32.xlu0 %v4290, 48
    %v4633 = vpop.permute.xlu0 %4632
    %v4635 = vsel %vm446, %v4630, 0
    %v4638 = vsel %vm474, %v4633, 0
    %4640 = vmatprep.subr.bf16.mxu0 0
    %4641 = vmatpush1.bf16.msra.mxu0 %v4638
    %4642 = vmatprep.subr.bf16.mxu0 0
    %4643 = vmatpush1.bf16.msra.mxu0 0
    %4644 = vmatprep.subr.bf16.mxu0 0
    %4645 = vmatpush1.bf16.msra.mxu0 0
    %4646 = vmatprep.subr.bf16.mxu0 0
    %4647 = vmatpush1.bf16.msra.mxu0 0
    %4648 = vmatprep.subr.bf16.mxu0 0
    %4649 = vmatpush1.bf16.msra.mxu0 0
    %4650 = vmatprep.subr.bf16.mxu0 0
    %4651 = vmatpush1.bf16.msra.mxu0 0
    %4652 = vmatprep.subr.bf16.mxu0 0
    %4653 = vmatpush1.bf16.msra.mxu0 0
    %4654 = vmatprep.subr.bf16.mxu0 0
    %4655 = vmatpush1.bf16.msra.mxu0 0
    %4656 = vmatprep.subr.bf16.mxu0 0
    %4657 = vmatpush1.bf16.msra.mxu0 0
    %4658 = vmatprep.subr.bf16.mxu0 0
    %4659 = vmatpush1.bf16.msra.mxu0 0
    %4660 = vmatprep.subr.bf16.mxu0 0
    %4661 = vmatpush1.bf16.msra.mxu0 0
    %4662 = vmatprep.subr.bf16.mxu0 0
    %4663 = vmatpush1.bf16.msra.mxu0 0
    %4664 = vmatprep.subr.bf16.mxu0 0
    %4665 = vmatpush1.bf16.msra.mxu0 0
    %4666 = vmatprep.subr.bf16.mxu0 0
    %4667 = vmatpush1.bf16.msra.mxu0 0
    %4668 = vmatprep.subr.bf16.mxu0 0
    %4669 = vmatpush1.bf16.msra.mxu0 0
    %4670 = vmatprep.subr.bf16.mxu0 0
    %4671 = vmatpush1.bf16.msra.mxu0 0
    %4672 = vmatprep.mubr.bf16.mxu0 0
    %4673 = vmatmul.mubr.bf16.gmra.mrb[0].mxu0 %v4635
    %v4674 = vpop.f32.mrb[0].mxu0
    %v4675 = vadd.f32 0.0, %v4674
    %v4676 = vpop.f32.mrb[0].mxu0
    %v4677 = vpop.f32.mrb[0].mxu0
    %v4678 = vpop.f32.mrb[0].mxu0
    %4679 = vdwg.mxu0
    %4680 = vrot.lane.b32.xlu0 %v4291, 48
    %v4681 = vpop.permute.xlu0 %4680
    %v4683 = vsel %vm446, %v4631, 0
    %v4686 = vsel %vm474, %v4681, 0
    %4688 = vmatprep.subr.bf16.mxu0 0
    %4689 = vmatpush1.bf16.msra.mxu0 %v4686
    %4690 = vmatprep.subr.bf16.mxu0 0
    %4691 = vmatpush1.bf16.msra.mxu0 0
    %4692 = vmatprep.subr.bf16.mxu0 0
    %4693 = vmatpush1.bf16.msra.mxu0 0
    %4694 = vmatprep.subr.bf16.mxu0 0
    %4695 = vmatpush1.bf16.msra.mxu0 0
    %4696 = vmatprep.subr.bf16.mxu0 0
    %4697 = vmatpush1.bf16.msra.mxu0 0
    %4698 = vmatprep.subr.bf16.mxu0 0
    %4699 = vmatpush1.bf16.msra.mxu0 0
    %4700 = vmatprep.subr.bf16.mxu0 0
    %4701 = vmatpush1.bf16.msra.mxu0 0
    %4702 = vmatprep.subr.bf16.mxu0 0
    %4703 = vmatpush1.bf16.msra.mxu0 0
    %4704 = vmatprep.subr.bf16.mxu0 0
    %4705 = vmatpush1.bf16.msra.mxu0 0
    %4706 = vmatprep.subr.bf16.mxu0 0
    %4707 = vmatpush1.bf16.msra.mxu0 0
    %4708 = vmatprep.subr.bf16.mxu0 0
    %4709 = vmatpush1.bf16.msra.mxu0 0
    %4710 = vmatprep.subr.bf16.mxu0 0
    %4711 = vmatpush1.bf16.msra.mxu0 0
    %4712 = vmatprep.subr.bf16.mxu0 0
    %4713 = vmatpush1.bf16.msra.mxu0 0
    %4714 = vmatprep.subr.bf16.mxu0 0
    %4715 = vmatpush1.bf16.msra.mxu0 0
    %4716 = vmatprep.subr.bf16.mxu0 0
    %4717 = vmatpush1.bf16.msra.mxu0 0
    %4718 = vmatprep.subr.bf16.mxu0 0
    %4719 = vmatpush1.bf16.msra.mxu0 0
    %4720 = vmatprep.mubr.bf16.mxu0 0
    %4721 = vmatmul.mubr.bf16.gmra.mrb[0].mxu0 %v4683
    %v4722 = vpop.f32.mrb[0].mxu0
    %v4723 = vadd.f32 0.0, %v4722
    %v4724 = vpop.f32.mrb[0].mxu0
    %v4725 = vpop.f32.mrb[0].mxu0
    %v4726 = vpop.f32.mrb[0].mxu0
    %4727 = vdwg.mxu0
    %4728 = vrot.lane.b32.xlu0 %v4288, 96
    %v4729 = vpop.permute.xlu0 %4728
    %4730 = vrot.lane.b32.xlu0 %v4290, 96
    %v4731 = vpop.permute.xlu0 %4730
    %v4733 = vsel %vm350, %v4729, 0
    %v4736 = vsel %vm350, %v4731, 0
    %4738 = vmatprep.subr.bf16.mxu0 0
    %4739 = vmatpush1.bf16.xpose.msra.mxu0 %v4736
    %4740 = vmatprep.subr.bf16.mxu0 0
    %4741 = vmatpush1.bf16.xpose.msra.mxu0 0
    %4742 = vmatprep.subr.bf16.mxu0 0
    %4743 = vmatpush1.bf16.xpose.msra.mxu0 0
    %4744 = vmatprep.subr.bf16.mxu0 0
    %4745 = vmatpush1.bf16.xpose.msra.mxu0 0
    %4746 = vmatprep.subr.bf16.mxu0 0
    %4747 = vmatpush1.bf16.xpose.msra.mxu0 0
    %4748 = vmatprep.subr.bf16.mxu0 0
    %4749 = vmatpush1.bf16.xpose.msra.mxu0 0
    %4750 = vmatprep.subr.bf16.mxu0 0
    %4751 = vmatpush1.bf16.xpose.msra.mxu0 0
    %4752 = vmatprep.subr.bf16.mxu0 0
    %4753 = vmatpush1.bf16.xpose.msra.mxu0 0
    %4754 = vmatprep.subr.bf16.mxu0 0
    %4755 = vmatpush1.bf16.xpose.msra.mxu0 0
    %4756 = vmatprep.subr.bf16.mxu0 0
    %4757 = vmatpush1.bf16.xpose.msra.mxu0 0
    %4758 = vmatprep.subr.bf16.mxu0 0
    %4759 = vmatpush1.bf16.xpose.msra.mxu0 0
    %4760 = vmatprep.subr.bf16.mxu0 0
    %4761 = vmatpush1.bf16.xpose.msra.mxu0 0
    %4762 = vmatprep.subr.bf16.mxu0 0
    %4763 = vmatpush1.bf16.xpose.msra.mxu0 0
    %4764 = vmatprep.subr.bf16.mxu0 0
    %4765 = vmatpush1.bf16.xpose.msra.mxu0 0
    %4766 = vmatprep.subr.bf16.mxu0 0
    %4767 = vmatpush1.bf16.xpose.msra.mxu0 0
    %4768 = vmatprep.subr.bf16.mxu0 0
    %4769 = vmatpush1.bf16.xpose.msra.mxu0 0
    %4770 = vmatprep.mubr.bf16.mxu0 0
    %4771 = vmatmul.mubr.bf16.gmra.mrb[0].mxu0 %v4733
    %v4772 = vpop.f32.mrb[0].mxu0
    %v4773 = vadd.f32 0.0, %v4772
    %v4774 = vpop.f32.mrb[0].mxu0
    %v4775 = vpop.f32.mrb[0].mxu0
    %v4776 = vpop.f32.mrb[0].mxu0
    %4777 = vdwg.mxu0
    %4778 = vrot.lane.b32.xlu0 %v4289, 96
    %v4779 = vpop.permute.xlu0 %4778
    %4780 = vrot.lane.b32.xlu0 %v4291, 96
    %v4781 = vpop.permute.xlu0 %4780
    %v4783 = vsel %vm350, %v4779, 0
    %v4786 = vsel %vm350, %v4781, 0
    %4788 = vmatprep.subr.bf16.mxu0 0
    %4789 = vmatpush1.bf16.xpose.msra.mxu0 %v4786
    %4790 = vmatprep.subr.bf16.mxu0 0
    %4791 = vmatpush1.bf16.xpose.msra.mxu0 0
    %4792 = vmatprep.subr.bf16.mxu0 0
    %4793 = vmatpush1.bf16.xpose.msra.mxu0 0
    %4794 = vmatprep.subr.bf16.mxu0 0
    %4795 = vmatpush1.bf16.xpose.msra.mxu0 0
    %4796 = vmatprep.subr.bf16.mxu0 0
    %4797 = vmatpush1.bf16.xpose.msra.mxu0 0
    %4798 = vmatprep.subr.bf16.mxu0 0
    %4799 = vmatpush1.bf16.xpose.msra.mxu0 0
    %4800 = vmatprep.subr.bf16.mxu0 0
    %4801 = vmatpush1.bf16.xpose.msra.mxu0 0
    %4802 = vmatprep.subr.bf16.mxu0 0
    %4803 = vmatpush1.bf16.xpose.msra.mxu0 0
    %4804 = vmatprep.subr.bf16.mxu0 0
    %4805 = vmatpush1.bf16.xpose.msra.mxu0 0
    %4806 = vmatprep.subr.bf16.mxu0 0
    %4807 = vmatpush1.bf16.xpose.msra.mxu0 0
    %4808 = vmatprep.subr.bf16.mxu0 0
    %4809 = vmatpush1.bf16.xpose.msra.mxu0 0
    %4810 = vmatprep.subr.bf16.mxu0 0
    %4811 = vmatpush1.bf16.xpose.msra.mxu0 0
    %4812 = vmatprep.subr.bf16.mxu0 0
    %4813 = vmatpush1.bf16.xpose.msra.mxu0 0
    %4814 = vmatprep.subr.bf16.mxu0 0
    %4815 = vmatpush1.bf16.xpose.msra.mxu0 0
    %4816 = vmatprep.subr.bf16.mxu0 0
    %4817 = vmatpush1.bf16.xpose.msra.mxu0 0
    %4818 = vmatprep.subr.bf16.mxu0 0
    %4819 = vmatpush1.bf16.xpose.msra.mxu0 0
    %4820 = vmatprep.mubr.bf16.mxu0 0
    %4821 = vmatmul.mubr.bf16.gmra.mrb[0].mxu0 %v4783
    %v4822 = vpop.f32.mrb[0].mxu0
    %v4823 = vadd.f32 0.0, %v4822
    %v4824 = vpop.f32.mrb[0].mxu0
    %v4825 = vpop.f32.mrb[0].mxu0
    %v4826 = vpop.f32.mrb[0].mxu0
    %4827 = vdwg.mxu0
    %v4828 = vsel %vm446, %v4773, -inf
    %4829 = vmax.xlane.f32.xlu0 %v4828
    %v4830 = vpop.xlane.xlu0 %4829
    %v4831 = vsel %vm446, %v4823, -inf
    %4832 = vmax.xlane.f32.xlu0 %v4831
    %v4833 = vpop.xlane.xlu0 %4832
    %v4834 = vsub.f32 %v4773, %v4830
    %v4835 = vsub.f32 %v4823, %v4833
    %v4836 = vmul.f32 %v4834, 1.442695
    %v4837 = vpow.pop %v4836
    %v4838 = vmul.f32 %v4835, 1.442695
    %v4839 = vpow.pop %v4838
    %v4840 = vsel %vm446, %v4837, 0.0
    %4841 = vadd.xlane.f32.xlu0 %v4840
    %v4842 = vpop.xlane.xlu0 %4841
    %v4843 = vsel %vm446, %v4839, 0.0
    %4844 = vadd.xlane.f32.xlu0 %v4843
    %v4845 = vpop.xlane.xlu0 %4844
    %v4846 = vrcp.pop %v4842
    %v4847 = vrcp.pop %v4845
    %v4848 = vmul.f32 %v4837, %v4846
    %v4849 = vmul.f32 %v4839, %v4847
    %v4850 = vpack.c.bf16 %v4848, %v4848
    %v4851 = vpack.c.bf16 %v4849, %v4849
    %4852 = vrot.lane.b32.xlu0 %v4290, 32
    %v4853 = vpop.permute.xlu0 %4852
    %v4855 = vsel %vm446, %v4850, 0
    %v4858 = vsel %vm474, %v4853, 0
    %4860 = vmatprep.subr.bf16.mxu0 0
    %4861 = vmatpush1.bf16.msra.mxu0 %v4858
    %4862 = vmatprep.subr.bf16.mxu0 0
    %4863 = vmatpush1.bf16.msra.mxu0 0
    %4864 = vmatprep.subr.bf16.mxu0 0
    %4865 = vmatpush1.bf16.msra.mxu0 0
    %4866 = vmatprep.subr.bf16.mxu0 0
    %4867 = vmatpush1.bf16.msra.mxu0 0
    %4868 = vmatprep.subr.bf16.mxu0 0
    %4869 = vmatpush1.bf16.msra.mxu0 0
    %4870 = vmatprep.subr.bf16.mxu0 0
    %4871 = vmatpush1.bf16.msra.mxu0 0
    %4872 = vmatprep.subr.bf16.mxu0 0
    %4873 = vmatpush1.bf16.msra.mxu0 0
    %4874 = vmatprep.subr.bf16.mxu0 0
    %4875 = vmatpush1.bf16.msra.mxu0 0
    %4876 = vmatprep.subr.bf16.mxu0 0
    %4877 = vmatpush1.bf16.msra.mxu0 0
    %4878 = vmatprep.subr.bf16.mxu0 0
    %4879 = vmatpush1.bf16.msra.mxu0 0
    %4880 = vmatprep.subr.bf16.mxu0 0
    %4881 = vmatpush1.bf16.msra.mxu0 0
    %4882 = vmatprep.subr.bf16.mxu0 0
    %4883 = vmatpush1.bf16.msra.mxu0 0
    %4884 = vmatprep.subr.bf16.mxu0 0
    %4885 = vmatpush1.bf16.msra.mxu0 0
    %4886 = vmatprep.subr.bf16.mxu0 0
    %4887 = vmatpush1.bf16.msra.mxu0 0
    %4888 = vmatprep.subr.bf16.mxu0 0
    %4889 = vmatpush1.bf16.msra.mxu0 0
    %4890 = vmatprep.subr.bf16.mxu0 0
    %4891 = vmatpush1.bf16.msra.mxu0 0
    %4892 = vmatprep.mubr.bf16.mxu0 0
    %4893 = vmatmul.mubr.bf16.gmra.mrb[0].mxu0 %v4855
    %v4894 = vpop.f32.mrb[0].mxu0
    %v4895 = vadd.f32 0.0, %v4894
    %v4896 = vpop.f32.mrb[0].mxu0
    %v4897 = vpop.f32.mrb[0].mxu0
    %v4898 = vpop.f32.mrb[0].mxu0
    %4899 = vdwg.mxu0
    %4900 = vrot.lane.b32.xlu0 %v4291, 32
    %v4901 = vpop.permute.xlu0 %4900
    %v4903 = vsel %vm446, %v4851, 0
    %v4906 = vsel %vm474, %v4901, 0
    %4908 = vmatprep.subr.bf16.mxu0 0
    %4909 = vmatpush1.bf16.msra.mxu0 %v4906
    %4910 = vmatprep.subr.bf16.mxu0 0
    %4911 = vmatpush1.bf16.msra.mxu0 0
    %4912 = vmatprep.subr.bf16.mxu0 0
    %4913 = vmatpush1.bf16.msra.mxu0 0
    %4914 = vmatprep.subr.bf16.mxu0 0
    %4915 = vmatpush1.bf16.msra.mxu0 0
    %4916 = vmatprep.subr.bf16.mxu0 0
    %4917 = vmatpush1.bf16.msra.mxu0 0
    %4918 = vmatprep.subr.bf16.mxu0 0
    %4919 = vmatpush1.bf16.msra.mxu0 0
    %4920 = vmatprep.subr.bf16.mxu0 0
    %4921 = vmatpush1.bf16.msra.mxu0 0
    %4922 = vmatprep.subr.bf16.mxu0 0
    %4923 = vmatpush1.bf16.msra.mxu0 0
    %4924 = vmatprep.subr.bf16.mxu0 0
    %4925 = vmatpush1.bf16.msra.mxu0 0
    %4926 = vmatprep.subr.bf16.mxu0 0
    %4927 = vmatpush1.bf16.msra.mxu0 0
    %4928 = vmatprep.subr.bf16.mxu0 0
    %4929 = vmatpush1.bf16.msra.mxu0 0
    %4930 = vmatprep.subr.bf16.mxu0 0
    %4931 = vmatpush1.bf16.msra.mxu0 0
    %4932 = vmatprep.subr.bf16.mxu0 0
    %4933 = vmatpush1.bf16.msra.mxu0 0
    %4934 = vmatprep.subr.bf16.mxu0 0
    %4935 = vmatpush1.bf16.msra.mxu0 0
    %4936 = vmatprep.subr.bf16.mxu0 0
    %4937 = vmatpush1.bf16.msra.mxu0 0
    %4938 = vmatprep.subr.bf16.mxu0 0
    %4939 = vmatpush1.bf16.msra.mxu0 0
    %4940 = vmatprep.mubr.bf16.mxu0 0
    %4941 = vmatmul.mubr.bf16.gmra.mrb[0].mxu0 %v4903
    %v4942 = vpop.f32.mrb[0].mxu0
    %v4943 = vadd.f32 0.0, %v4942
    %v4944 = vpop.f32.mrb[0].mxu0
    %v4945 = vpop.f32.mrb[0].mxu0
    %v4946 = vpop.f32.mrb[0].mxu0
    %4947 = vdwg.mxu0
    %4948 = vrot.lane.b32.xlu0 %v4288, 80
    %v4949 = vpop.permute.xlu0 %4948
    %4950 = vrot.lane.b32.xlu0 %v4290, 80
    %v4951 = vpop.permute.xlu0 %4950
    %v4953 = vsel %vm350, %v4949, 0
    %v4956 = vsel %vm350, %v4951, 0
    %4958 = vmatprep.subr.bf16.mxu0 0
    %4959 = vmatpush1.bf16.xpose.msra.mxu0 %v4956
    %4960 = vmatprep.subr.bf16.mxu0 0
    %4961 = vmatpush1.bf16.xpose.msra.mxu0 0
    %4962 = vmatprep.subr.bf16.mxu0 0
    %4963 = vmatpush1.bf16.xpose.msra.mxu0 0
    %4964 = vmatprep.subr.bf16.mxu0 0
    %4965 = vmatpush1.bf16.xpose.msra.mxu0 0
    %4966 = vmatprep.subr.bf16.mxu0 0
    %4967 = vmatpush1.bf16.xpose.msra.mxu0 0
    %4968 = vmatprep.subr.bf16.mxu0 0
    %4969 = vmatpush1.bf16.xpose.msra.mxu0 0
    %4970 = vmatprep.subr.bf16.mxu0 0
    %4971 = vmatpush1.bf16.xpose.msra.mxu0 0
    %4972 = vmatprep.subr.bf16.mxu0 0
    %4973 = vmatpush1.bf16.xpose.msra.mxu0 0
    %4974 = vmatprep.subr.bf16.mxu0 0
    %4975 = vmatpush1.bf16.xpose.msra.mxu0 0
    %4976 = vmatprep.subr.bf16.mxu0 0
    %4977 = vmatpush1.bf16.xpose.msra.mxu0 0
    %4978 = vmatprep.subr.bf16.mxu0 0
    %4979 = vmatpush1.bf16.xpose.msra.mxu0 0
    %4980 = vmatprep.subr.bf16.mxu0 0
    %4981 = vmatpush1.bf16.xpose.msra.mxu0 0
    %4982 = vmatprep.subr.bf16.mxu0 0
    %4983 = vmatpush1.bf16.xpose.msra.mxu0 0
    %4984 = vmatprep.subr.bf16.mxu0 0
    %4985 = vmatpush1.bf16.xpose.msra.mxu0 0
    %4986 = vmatprep.subr.bf16.mxu0 0
    %4987 = vmatpush1.bf16.xpose.msra.mxu0 0
    %4988 = vmatprep.subr.bf16.mxu0 0
    %4989 = vmatpush1.bf16.xpose.msra.mxu0 0
    %4990 = vmatprep.mubr.bf16.mxu0 0
    %4991 = vmatmul.mubr.bf16.gmra.mrb[0].mxu0 %v4953
    %v4992 = vpop.f32.mrb[0].mxu0
    %v4993 = vadd.f32 0.0, %v4992
    %v4994 = vpop.f32.mrb[0].mxu0
    %v4995 = vpop.f32.mrb[0].mxu0
    %v4996 = vpop.f32.mrb[0].mxu0
    %4997 = vdwg.mxu0
    %4998 = vrot.lane.b32.xlu0 %v4289, 80
    %v4999 = vpop.permute.xlu0 %4998
    %5000 = vrot.lane.b32.xlu0 %v4291, 80
    %v5001 = vpop.permute.xlu0 %5000
    %v5003 = vsel %vm350, %v4999, 0
    %v5006 = vsel %vm350, %v5001, 0
    %5008 = vmatprep.subr.bf16.mxu0 0
    %5009 = vmatpush1.bf16.xpose.msra.mxu0 %v5006
    %5010 = vmatprep.subr.bf16.mxu0 0
    %5011 = vmatpush1.bf16.xpose.msra.mxu0 0
    %5012 = vmatprep.subr.bf16.mxu0 0
    %5013 = vmatpush1.bf16.xpose.msra.mxu0 0
    %5014 = vmatprep.subr.bf16.mxu0 0
    %5015 = vmatpush1.bf16.xpose.msra.mxu0 0
    %5016 = vmatprep.subr.bf16.mxu0 0
    %5017 = vmatpush1.bf16.xpose.msra.mxu0 0
    %5018 = vmatprep.subr.bf16.mxu0 0
    %5019 = vmatpush1.bf16.xpose.msra.mxu0 0
    %5020 = vmatprep.subr.bf16.mxu0 0
    %5021 = vmatpush1.bf16.xpose.msra.mxu0 0
    %5022 = vmatprep.subr.bf16.mxu0 0
    %5023 = vmatpush1.bf16.xpose.msra.mxu0 0
    %5024 = vmatprep.subr.bf16.mxu0 0
    %5025 = vmatpush1.bf16.xpose.msra.mxu0 0
    %5026 = vmatprep.subr.bf16.mxu0 0
    %5027 = vmatpush1.bf16.xpose.msra.mxu0 0
    %5028 = vmatprep.subr.bf16.mxu0 0
    %5029 = vmatpush1.bf16.xpose.msra.mxu0 0
    %5030 = vmatprep.subr.bf16.mxu0 0
    %5031 = vmatpush1.bf16.xpose.msra.mxu0 0
    %5032 = vmatprep.subr.bf16.mxu0 0
    %5033 = vmatpush1.bf16.xpose.msra.mxu0 0
    %5034 = vmatprep.subr.bf16.mxu0 0
    %5035 = vmatpush1.bf16.xpose.msra.mxu0 0
    %5036 = vmatprep.subr.bf16.mxu0 0
    %5037 = vmatpush1.bf16.xpose.msra.mxu0 0
    %5038 = vmatprep.subr.bf16.mxu0 0
    %5039 = vmatpush1.bf16.xpose.msra.mxu0 0
    %5040 = vmatprep.mubr.bf16.mxu0 0
    %5041 = vmatmul.mubr.bf16.gmra.mrb[0].mxu0 %v5003
    %v5042 = vpop.f32.mrb[0].mxu0
    %v5043 = vadd.f32 0.0, %v5042
    %v5044 = vpop.f32.mrb[0].mxu0
    %v5045 = vpop.f32.mrb[0].mxu0
    %v5046 = vpop.f32.mrb[0].mxu0
    %5047 = vdwg.mxu0
    %v5048 = vsel %vm446, %v4993, -inf
    %5049 = vmax.xlane.f32.xlu0 %v5048
    %v5050 = vpop.xlane.xlu0 %5049
    %v5051 = vsel %vm446, %v5043, -inf
    %5052 = vmax.xlane.f32.xlu0 %v5051
    %v5053 = vpop.xlane.xlu0 %5052
    %v5054 = vsub.f32 %v4993, %v5050
    %v5055 = vsub.f32 %v5043, %v5053
    %v5056 = vmul.f32 %v5054, 1.442695
    %v5057 = vpow.pop %v5056
    %v5058 = vmul.f32 %v5055, 1.442695
    %v5059 = vpow.pop %v5058
    %v5060 = vsel %vm446, %v5057, 0.0
    %5061 = vadd.xlane.f32.xlu0 %v5060
    %v5062 = vpop.xlane.xlu0 %5061
    %v5063 = vsel %vm446, %v5059, 0.0
    %5064 = vadd.xlane.f32.xlu0 %v5063
    %v5065 = vpop.xlane.xlu0 %5064
    %v5066 = vrcp.pop %v5062
    %v5067 = vrcp.pop %v5065
    %v5068 = vmul.f32 %v5057, %v5066
    %v5069 = vmul.f32 %v5059, %v5067
    %v5070 = vpack.c.bf16 %v5068, %v5068
    %v5071 = vpack.c.bf16 %v5069, %v5069
    %5072 = vrot.lane.b32.xlu0 %v4290, 16
    %v5073 = vpop.permute.xlu0 %5072
    %v5075 = vsel %vm446, %v5070, 0
    %v5078 = vsel %vm474, %v5073, 0
    %5080 = vmatprep.subr.bf16.mxu0 0
    %5081 = vmatpush1.bf16.msra.mxu0 %v5078
    %5082 = vmatprep.subr.bf16.mxu0 0
    %5083 = vmatpush1.bf16.msra.mxu0 0
    %5084 = vmatprep.subr.bf16.mxu0 0
    %5085 = vmatpush1.bf16.msra.mxu0 0
    %5086 = vmatprep.subr.bf16.mxu0 0
    %5087 = vmatpush1.bf16.msra.mxu0 0
    %5088 = vmatprep.subr.bf16.mxu0 0
    %5089 = vmatpush1.bf16.msra.mxu0 0
    %5090 = vmatprep.subr.bf16.mxu0 0
    %5091 = vmatpush1.bf16.msra.mxu0 0
    %5092 = vmatprep.subr.bf16.mxu0 0
    %5093 = vmatpush1.bf16.msra.mxu0 0
    %5094 = vmatprep.subr.bf16.mxu0 0
    %5095 = vmatpush1.bf16.msra.mxu0 0
    %5096 = vmatprep.subr.bf16.mxu0 0
    %5097 = vmatpush1.bf16.msra.mxu0 0
    %5098 = vmatprep.subr.bf16.mxu0 0
    %5099 = vmatpush1.bf16.msra.mxu0 0
    %5100 = vmatprep.subr.bf16.mxu0 0
    %5101 = vmatpush1.bf16.msra.mxu0 0
    %5102 = vmatprep.subr.bf16.mxu0 0
    %5103 = vmatpush1.bf16.msra.mxu0 0
    %5104 = vmatprep.subr.bf16.mxu0 0
    %5105 = vmatpush1.bf16.msra.mxu0 0
    %5106 = vmatprep.subr.bf16.mxu0 0
    %5107 = vmatpush1.bf16.msra.mxu0 0
    %5108 = vmatprep.subr.bf16.mxu0 0
    %5109 = vmatpush1.bf16.msra.mxu0 0
    %5110 = vmatprep.subr.bf16.mxu0 0
    %5111 = vmatpush1.bf16.msra.mxu0 0
    %5112 = vmatprep.mubr.bf16.mxu0 0
    %5113 = vmatmul.mubr.bf16.gmra.mrb[0].mxu0 %v5075
    %v5114 = vpop.f32.mrb[0].mxu0
    %v5115 = vadd.f32 0.0, %v5114
    %v5116 = vpop.f32.mrb[0].mxu0
    %v5117 = vpop.f32.mrb[0].mxu0
    %v5118 = vpop.f32.mrb[0].mxu0
    %5119 = vdwg.mxu0
    %5120 = vrot.lane.b32.xlu0 %v4291, 16
    %v5121 = vpop.permute.xlu0 %5120
    %v5123 = vsel %vm446, %v5071, 0
    %v5126 = vsel %vm474, %v5121, 0
    %5128 = vmatprep.subr.bf16.mxu0 0
    %5129 = vmatpush1.bf16.msra.mxu0 %v5126
    %5130 = vmatprep.subr.bf16.mxu0 0
    %5131 = vmatpush1.bf16.msra.mxu0 0
    %5132 = vmatprep.subr.bf16.mxu0 0
    %5133 = vmatpush1.bf16.msra.mxu0 0
    %5134 = vmatprep.subr.bf16.mxu0 0
    %5135 = vmatpush1.bf16.msra.mxu0 0
    %5136 = vmatprep.subr.bf16.mxu0 0
    %5137 = vmatpush1.bf16.msra.mxu0 0
    %5138 = vmatprep.subr.bf16.mxu0 0
    %5139 = vmatpush1.bf16.msra.mxu0 0
    %5140 = vmatprep.subr.bf16.mxu0 0
    %5141 = vmatpush1.bf16.msra.mxu0 0
    %5142 = vmatprep.subr.bf16.mxu0 0
    %5143 = vmatpush1.bf16.msra.mxu0 0
    %5144 = vmatprep.subr.bf16.mxu0 0
    %5145 = vmatpush1.bf16.msra.mxu0 0
    %5146 = vmatprep.subr.bf16.mxu0 0
    %5147 = vmatpush1.bf16.msra.mxu0 0
    %5148 = vmatprep.subr.bf16.mxu0 0
    %5149 = vmatpush1.bf16.msra.mxu0 0
    %5150 = vmatprep.subr.bf16.mxu0 0
    %5151 = vmatpush1.bf16.msra.mxu0 0
    %5152 = vmatprep.subr.bf16.mxu0 0
    %5153 = vmatpush1.bf16.msra.mxu0 0
    %5154 = vmatprep.subr.bf16.mxu0 0
    %5155 = vmatpush1.bf16.msra.mxu0 0
    %5156 = vmatprep.subr.bf16.mxu0 0
    %5157 = vmatpush1.bf16.msra.mxu0 0
    %5158 = vmatprep.subr.bf16.mxu0 0
    %5159 = vmatpush1.bf16.msra.mxu0 0
    %5160 = vmatprep.mubr.bf16.mxu0 0
    %5161 = vmatmul.mubr.bf16.gmra.mrb[0].mxu0 %v5123
    %v5162 = vpop.f32.mrb[0].mxu0
    %v5163 = vadd.f32 0.0, %v5162
    %v5164 = vpop.f32.mrb[0].mxu0
    %v5165 = vpop.f32.mrb[0].mxu0
    %v5166 = vpop.f32.mrb[0].mxu0
    %5167 = vdwg.mxu0
    %5170 = vrot.lane.b32.xlu0 %v4675, 16
    %v5171 = vpop.permute.xlu0 %5170
    %5172 = vrot.lane.b32.xlu0 %v4723, 16
    %v5173 = vpop.permute.xlu0 %5172
    %5178 = vrot.lane.b32.xlu0 %v4895, 32
    %v5179 = vpop.permute.xlu0 %5178
    %5180 = vrot.lane.b32.xlu0 %v4943, 32
    %v5181 = vpop.permute.xlu0 %5180
    %5186 = vrot.lane.b32.xlu0 %v5115, 48
    %v5187 = vpop.permute.xlu0 %5186
    %5188 = vrot.lane.b32.xlu0 %v5163, 48
    %v5189 = vpop.permute.xlu0 %5188
    %v5192 = vsel %vm350, %v4452, %v5171
    %v5193 = vsel %vm350, %v4501, %v5173
    %v5194 = vsel %vm1252, %v5192, %v5179
    %v5195 = vsel %vm1252, %v5193, %v5181
    %v5196 = vsel %vm1255, %v5194, %v5187
    %v5197 = vsel %vm1255, %v5195, %v5189
    %v5198 = vpack.c.bf16 %v5197, %v5196
    %v5207 = vunpack.c.l.b16 %v4119
    %v5208 = vunpack.c.l.b16 %v4120
    %v5209 = vunpack.c.l.b16 %v4121
    %v5210 = vunpack.c.l.b16 %v4122
    %v5211 = vunpack.c.l.b16 %v4123
    %v5212 = vunpack.c.l.b16 %v4124
    %v5213 = vunpack.c.l.b16 %v4125
    %v5214 = vunpack.c.l.b16 %v4126
    %v5215 = vpack.c.b16 %v5208, %v5207
    %v5216 = vpack.c.b16 %v5210, %v5209
    %v5217 = vpack.c.b16 %v5212, %v5211
    %v5218 = vpack.c.b16 %v5214, %v5213
    %v5224 = vsel %vm232, %v5198, 0
    %5226 = vmatprep.subr.bf16.mxu0 0
    %5227 = vmatpush1.bf16.msra.mxu0 %v5215
    %5228 = vmatprep.subr.bf16.mxu0 0
    %5229 = vmatpush1.bf16.msra.mxu0 %v5216
    %5230 = vmatprep.subr.bf16.mxu0 0
    %5231 = vmatpush1.bf16.msra.mxu0 %v5217
    %5232 = vmatprep.subr.bf16.mxu0 0
    %5233 = vmatpush1.bf16.msra.mxu0 %v5218
    %5234 = vmatprep.subr.bf16.mxu0 0
    %5235 = vmatpush1.bf16.msra.mxu0 0
    %5236 = vmatprep.subr.bf16.mxu0 0
    %5237 = vmatpush1.bf16.msra.mxu0 0
    %5238 = vmatprep.subr.bf16.mxu0 0
    %5239 = vmatpush1.bf16.msra.mxu0 0
    %5240 = vmatprep.subr.bf16.mxu0 0
    %5241 = vmatpush1.bf16.msra.mxu0 0
    %5242 = vmatprep.subr.bf16.mxu0 0
    %5243 = vmatpush1.bf16.msra.mxu0 0
    %5244 = vmatprep.subr.bf16.mxu0 0
    %5245 = vmatpush1.bf16.msra.mxu0 0
    %5246 = vmatprep.subr.bf16.mxu0 0
    %5247 = vmatpush1.bf16.msra.mxu0 0
    %5248 = vmatprep.subr.bf16.mxu0 0
    %5249 = vmatpush1.bf16.msra.mxu0 0
    %5250 = vmatprep.subr.bf16.mxu0 0
    %5251 = vmatpush1.bf16.msra.mxu0 0
    %5252 = vmatprep.subr.bf16.mxu0 0
    %5253 = vmatpush1.bf16.msra.mxu0 0
    %5254 = vmatprep.subr.bf16.mxu0 0
    %5255 = vmatpush1.bf16.msra.mxu0 0
    %5256 = vmatprep.subr.bf16.mxu0 0
    %5257 = vmatpush1.bf16.msra.mxu0 0
    %5258 = vmatprep.mubr.bf16.mxu0 0
    %5259 = vmatmul.mubr.bf16.gmra.mrb[0].mxu0 %v5224
    %v5260 = vpop.f32.mrb[0].mxu0
    %v5261 = vadd.f32 0.0, %v5260
    %v5262 = vpop.f32.mrb[0].mxu0
    %v5263 = vpop.f32.mrb[0].mxu0
    %v5264 = vadd.f32 0.0, %v5263
    %v5265 = vpop.f32.mrb[0].mxu0
    %5266 = vdwg.mxu0
    %v5267 = vadd.f32 %v4100, %v5261
    %v5268 = vadd.f32 %v4101, %v5264
    %v5269 = vld [vmem:[%s19] sm:$0x1]
    %v5270 = vld [vmem:[%s20] sm:$0xf]
    %v5271 = vld [vmem:[%s20 + $0x4] sm:$0xf]
    %v5272 = vld [vmem:[%s20 + $0x8] sm:$0xf]
    %v5273 = vld [vmem:[%s20 + $0xc] sm:$0xf]
    %v5274 = vld [vmem:[%s20 + $0x10] sm:$0xf]
    %v5275 = vld [vmem:[%s20 + $0x14] sm:$0xf]
    %v5276 = vld [vmem:[%s20 + $0x18] sm:$0xf]
    %v5277 = vld [vmem:[%s20 + $0x1c] sm:$0xf]
    %v5278 = vld [vmem:[%s21] sm:$0xf]
    %v5279 = vld [vmem:[%s21 + $0x4] sm:$0xf]
    %v5280 = vld [vmem:[%s21 + $0x8] sm:$0xf]
    %v5281 = vld [vmem:[%s21 + $0xc] sm:$0xf]
    %v5282 = vld [vmem:[%s21 + $0x10] sm:$0xf]
    %v5283 = vld [vmem:[%s21 + $0x14] sm:$0xf]
    %v5284 = vld [vmem:[%s21 + $0x18] sm:$0xf]
    %v5285 = vld [vmem:[%s21 + $0x1c] sm:$0xf]
    %v5286 = vld [vmem:[%s21 + $0x20] sm:$0xf]
    %v5287 = vld [vmem:[%s21 + $0x24] sm:$0xf]
    %v5288 = vld [vmem:[%s21 + $0x28] sm:$0xf]
    %v5289 = vld [vmem:[%s21 + $0x2c] sm:$0xf]
    %v5290 = vld [vmem:[%s21 + $0x30] sm:$0xf]
    %v5291 = vld [vmem:[%s21 + $0x34] sm:$0xf]
    %v5292 = vld [vmem:[%s21 + $0x38] sm:$0xf]
    %v5293 = vld [vmem:[%s21 + $0x3c] sm:$0xf]
    %v5294 = vmul.f32 %v5267, %v5267
    %v5295 = vmul.f32 %v5268, %v5268
    %v5296 = vsel %vm232, %v5294, 0.0
    %5297 = vadd.xlane.f32.xlu0 %v5296
    %v5298 = vpop.xlane.xlu0 %5297
    %v5299 = vsel %vm232, %v5295, 0.0
    %5300 = vadd.xlane.f32.xlu0 %v5299
    %v5301 = vpop.xlane.xlu0 %5300
    %v5302 = vmul.f32 %v5298, %v239
    %v5303 = vmul.f32 %v5301, %v239
    %v5304 = vadd.f32 %v5302, 1e-06
    %v5305 = vadd.f32 %v5303, 1e-06
    %v5306 = vrsqrt.pop %v5304
    %v5307 = vrsqrt.pop %v5305
    %v5308 = vmul.f32 %v5267, %v5306
    %v5309 = vmul.f32 %v5268, %v5307
    %v5311 = vlaneseq
    %v5312 = vshrl.u32 %v5311, 7
    %v5313 = vsub.s32 0, %v5312
    %v5314 = vrot.slane %v5269, %v5313
    %v5316 = vmul.f32 %v5308, %v5314
    %v5317 = vmul.f32 %v5309, %v5314
    %v5318 = vpack.c.bf16 %v5317, %v5316
    %v5327 = vunpack.c.l.b16 %v5270
    %v5328 = vunpack.c.l.b16 %v5271
    %v5329 = vunpack.c.l.b16 %v5272
    %v5330 = vunpack.c.l.b16 %v5273
    %v5331 = vunpack.c.l.b16 %v5274
    %v5332 = vunpack.c.l.b16 %v5275
    %v5333 = vunpack.c.l.b16 %v5276
    %v5334 = vunpack.c.l.b16 %v5277
    %v5335 = vpack.c.b16 %v5328, %v5327
    %v5336 = vpack.c.b16 %v5330, %v5329
    %v5337 = vpack.c.b16 %v5332, %v5331
    %v5338 = vpack.c.b16 %v5334, %v5333
    %v5344 = vsel %vm232, %v5318, 0
    %5346 = vmatprep.subr.bf16.mxu0 0
    %5347 = vmatpush1.bf16.msra.mxu0 %v5335
    %5348 = vmatprep.subr.bf16.mxu0 0
    %5349 = vmatpush1.bf16.msra.mxu0 %v5336
    %5350 = vmatprep.subr.bf16.mxu0 0
    %5351 = vmatpush1.bf16.msra.mxu0 %v5337
    %5352 = vmatprep.subr.bf16.mxu0 0
    %5353 = vmatpush1.bf16.msra.mxu0 %v5338
    %5354 = vmatprep.subr.bf16.mxu0 0
    %5355 = vmatpush1.bf16.msra.mxu0 0
    %5356 = vmatprep.subr.bf16.mxu0 0
    %5357 = vmatpush1.bf16.msra.mxu0 0
    %5358 = vmatprep.subr.bf16.mxu0 0
    %5359 = vmatpush1.bf16.msra.mxu0 0
    %5360 = vmatprep.subr.bf16.mxu0 0
    %5361 = vmatpush1.bf16.msra.mxu0 0
    %5362 = vmatprep.subr.bf16.mxu0 0
    %5363 = vmatpush1.bf16.msra.mxu0 0
    %5364 = vmatprep.subr.bf16.mxu0 0
    %5365 = vmatpush1.bf16.msra.mxu0 0
    %5366 = vmatprep.subr.bf16.mxu0 0
    %5367 = vmatpush1.bf16.msra.mxu0 0
    %5368 = vmatprep.subr.bf16.mxu0 0
    %5369 = vmatpush1.bf16.msra.mxu0 0
    %5370 = vmatprep.subr.bf16.mxu0 0
    %5371 = vmatpush1.bf16.msra.mxu0 0
    %5372 = vmatprep.subr.bf16.mxu0 0
    %5373 = vmatpush1.bf16.msra.mxu0 0
    %5374 = vmatprep.subr.bf16.mxu0 0
    %5375 = vmatpush1.bf16.msra.mxu0 0
    %5376 = vmatprep.subr.bf16.mxu0 0
    %5377 = vmatpush1.bf16.msra.mxu0 0
    %5378 = vmatprep.mubr.bf16.mxu0 0
    %5379 = vmatmul.mubr.bf16.gmra.mrb[0].mxu0 %v5344
    %v5380 = vpop.f32.mrb[0].mxu0
    %v5381 = vadd.f32 0.0, %v5380
    %v5382 = vpop.f32.mrb[0].mxu0
    %v5383 = vpop.f32.mrb[0].mxu0
    %v5384 = vadd.f32 0.0, %v5383
    %v5385 = vpop.f32.mrb[0].mxu0
    %5386 = vdwg.mxu0
    %v5387 = vmax.f32 %v5381, 0.0
    %v5388 = vmax.f32 %v5384, 0.0
    %v5389 = vpack.c.bf16 %v5388, %v5387
    %v5406 = vunpack.c.l.b16 %v5278
    %v5407 = vunpack.c.l.b16 %v5279
    %v5408 = vunpack.c.l.b16 %v5280
    %v5409 = vunpack.c.l.b16 %v5281
    %v5410 = vunpack.c.l.b16 %v5282
    %v5411 = vunpack.c.l.b16 %v5283
    %v5412 = vunpack.c.l.b16 %v5284
    %v5413 = vunpack.c.l.b16 %v5285
    %v5414 = vunpack.c.l.b16 %v5286
    %v5415 = vunpack.c.l.b16 %v5287
    %v5416 = vunpack.c.l.b16 %v5288
    %v5417 = vunpack.c.l.b16 %v5289
    %v5418 = vunpack.c.l.b16 %v5290
    %v5419 = vunpack.c.l.b16 %v5291
    %v5420 = vunpack.c.l.b16 %v5292
    %v5421 = vunpack.c.l.b16 %v5293
    %v5422 = vpack.c.b16 %v5407, %v5406
    %v5423 = vpack.c.b16 %v5409, %v5408
    %v5424 = vpack.c.b16 %v5411, %v5410
    %v5425 = vpack.c.b16 %v5413, %v5412
    %v5426 = vpack.c.b16 %v5415, %v5414
    %v5427 = vpack.c.b16 %v5417, %v5416
    %v5428 = vpack.c.b16 %v5419, %v5418
    %v5429 = vpack.c.b16 %v5421, %v5420
    %5438 = vmatprep.subr.bf16.mxu0 0
    %5439 = vmatpush1.bf16.msra.mxu0 %v5422
    %5440 = vmatprep.subr.bf16.mxu0 0
    %5441 = vmatpush1.bf16.msra.mxu0 %v5423
    %5442 = vmatprep.subr.bf16.mxu0 0
    %5443 = vmatpush1.bf16.msra.mxu0 %v5424
    %5444 = vmatprep.subr.bf16.mxu0 0
    %5445 = vmatpush1.bf16.msra.mxu0 %v5425
    %5446 = vmatprep.subr.bf16.mxu0 0
    %5447 = vmatpush1.bf16.msra.mxu0 %v5426
    %5448 = vmatprep.subr.bf16.mxu0 0
    %5449 = vmatpush1.bf16.msra.mxu0 %v5427
    %5450 = vmatprep.subr.bf16.mxu0 0
    %5451 = vmatpush1.bf16.msra.mxu0 %v5428
    %5452 = vmatprep.subr.bf16.mxu0 0
    %5453 = vmatpush1.bf16.msra.mxu0 %v5429
    %5454 = vmatprep.subr.bf16.mxu0 0
    %5455 = vmatpush1.bf16.msra.mxu0 0
    %5456 = vmatprep.subr.bf16.mxu0 0
    %5457 = vmatpush1.bf16.msra.mxu0 0
    %5458 = vmatprep.subr.bf16.mxu0 0
    %5459 = vmatpush1.bf16.msra.mxu0 0
    %5460 = vmatprep.subr.bf16.mxu0 0
    %5461 = vmatpush1.bf16.msra.mxu0 0
    %5462 = vmatprep.subr.bf16.mxu0 0
    %5463 = vmatpush1.bf16.msra.mxu0 0
    %5464 = vmatprep.subr.bf16.mxu0 0
    %5465 = vmatpush1.bf16.msra.mxu0 0
    %5466 = vmatprep.subr.bf16.mxu0 0
    %5467 = vmatpush1.bf16.msra.mxu0 0
    %5468 = vmatprep.subr.bf16.mxu0 0
    %5469 = vmatpush1.bf16.msra.mxu0 0
    %5470 = vmatprep.mubr.bf16.mxu0 0
    %5471 = vmatmul.mubr.bf16.gmra.mrb[0].mxu0 %v5389
    %v5472 = vpop.f32.mrb[0].mxu0
    %v5473 = vadd.f32 0.0, %v5472
    %v5474 = vpop.f32.mrb[0].mxu0
    %v5475 = vpop.f32.mrb[0].mxu0
    %v5476 = vadd.f32 0.0, %v5475
    %v5477 = vpop.f32.mrb[0].mxu0
    %5478 = vdwg.mxu0
    %v5479 = vadd.f32 %v5267, %v5473
    %v5480 = vadd.f32 %v5268, %v5476
    %s5481 = scalar_lea.vmem %s12, 1
    %v5482 = vld [vmem:[%s5481] sm:$0x1]
    %s5483 = scalar_lea.vmem %s13, 64
    %v5484 = vld [vmem:[%s5483] sm:$0xff]
    %v5485 = vld [vmem:[%s5483 + $0x8] sm:$0xff]
    %v5486 = vld [vmem:[%s5483 + $0x10] sm:$0xff]
    %v5487 = vld [vmem:[%s5483 + $0x18] sm:$0xff]
    %v5488 = vld [vmem:[%s5483 + $0x20] sm:$0xff]
    %v5489 = vld [vmem:[%s5483 + $0x28] sm:$0xff]
    %v5490 = vld [vmem:[%s5483 + $0x30] sm:$0xff]
    %v5491 = vld [vmem:[%s5483 + $0x38] sm:$0xff]
    %s5492 = scalar_lea.vmem %s14, 32
    %v5493 = vld [vmem:[%s5492] sm:$0xf]
    %v5494 = vld [vmem:[%s5492 + $0x4] sm:$0xf]
    %v5495 = vld [vmem:[%s5492 + $0x8] sm:$0xf]
    %v5496 = vld [vmem:[%s5492 + $0xc] sm:$0xf]
    %v5497 = vld [vmem:[%s5492 + $0x10] sm:$0xf]
    %v5498 = vld [vmem:[%s5492 + $0x14] sm:$0xf]
    %v5499 = vld [vmem:[%s5492 + $0x18] sm:$0xf]
    %v5500 = vld [vmem:[%s5492 + $0x1c] sm:$0xf]
    %v5501 = vmul.f32 %v5479, %v5479
    %v5502 = vmul.f32 %v5480, %v5480
    %v5503 = vsel %vm232, %v5501, 0.0
    %5504 = vadd.xlane.f32.xlu0 %v5503
    %v5505 = vpop.xlane.xlu0 %5504
    %v5506 = vsel %vm232, %v5502, 0.0
    %5507 = vadd.xlane.f32.xlu0 %v5506
    %v5508 = vpop.xlane.xlu0 %5507
    %v5509 = vmul.f32 %v5505, %v239
    %v5510 = vmul.f32 %v5508, %v239
    %v5511 = vadd.f32 %v5509, 1e-06
    %v5512 = vadd.f32 %v5510, 1e-06
    %v5513 = vrsqrt.pop %v5511
    %v5514 = vrsqrt.pop %v5512
    %v5515 = vmul.f32 %v5479, %v5513
    %v5516 = vmul.f32 %v5480, %v5514
    %v5518 = vlaneseq
    %v5519 = vshrl.u32 %v5518, 7
    %v5520 = vsub.s32 0, %v5519
    %v5521 = vrot.slane %v5482, %v5520
    %v5523 = vmul.f32 %v5515, %v5521
    %v5524 = vmul.f32 %v5516, %v5521
    %v5525 = vpack.c.bf16 %v5524, %v5523
    %v5534 = vunpack.c.l.b16 %v5484
    %v5535 = vunpack.c.h.b16 %v5484
    %v5536 = vunpack.c.l.b16 %v5485
    %v5537 = vunpack.c.h.b16 %v5485
    %v5538 = vunpack.c.l.b16 %v5486
    %v5539 = vunpack.c.h.b16 %v5486
    %v5540 = vunpack.c.l.b16 %v5487
    %v5541 = vunpack.c.h.b16 %v5487
    %v5542 = vunpack.c.l.b16 %v5488
    %v5543 = vunpack.c.h.b16 %v5488
    %v5544 = vunpack.c.l.b16 %v5489
    %v5545 = vunpack.c.h.b16 %v5489
    %v5546 = vunpack.c.l.b16 %v5490
    %v5547 = vunpack.c.h.b16 %v5490
    %v5548 = vunpack.c.l.b16 %v5491
    %v5549 = vunpack.c.h.b16 %v5491
    %v5550 = vpack.c.b16 %v5536, %v5534
    %v5551 = vpack.c.b16 %v5537, %v5535
    %v5552 = vpack.c.b16 %v5540, %v5538
    %v5553 = vpack.c.b16 %v5541, %v5539
    %v5554 = vpack.c.b16 %v5544, %v5542
    %v5555 = vpack.c.b16 %v5545, %v5543
    %v5556 = vpack.c.b16 %v5548, %v5546
    %v5557 = vpack.c.b16 %v5549, %v5547
    %v5567 = vsel %vm232, %v5525, 0
    %5569 = vmatprep.subr.bf16.mxu0 %v5551
    %5570 = vmatpush1.bf16.msra.mxu0 %v5550
    %5571 = vmatprep.subr.bf16.mxu0 %v5553
    %5572 = vmatpush1.bf16.msra.mxu0 %v5552
    %5573 = vmatprep.subr.bf16.mxu0 %v5555
    %5574 = vmatpush1.bf16.msra.mxu0 %v5554
    %5575 = vmatprep.subr.bf16.mxu0 %v5557
    %5576 = vmatpush1.bf16.msra.mxu0 %v5556
    %5577 = vmatprep.subr.bf16.mxu0 0
    %5578 = vmatpush1.bf16.msra.mxu0 0
    %5579 = vmatprep.subr.bf16.mxu0 0
    %5580 = vmatpush1.bf16.msra.mxu0 0
    %5581 = vmatprep.subr.bf16.mxu0 0
    %5582 = vmatpush1.bf16.msra.mxu0 0
    %5583 = vmatprep.subr.bf16.mxu0 0
    %5584 = vmatpush1.bf16.msra.mxu0 0
    %5585 = vmatprep.subr.bf16.mxu0 0
    %5586 = vmatpush1.bf16.msra.mxu0 0
    %5587 = vmatprep.subr.bf16.mxu0 0
    %5588 = vmatpush1.bf16.msra.mxu0 0
    %5589 = vmatprep.subr.bf16.mxu0 0
    %5590 = vmatpush1.bf16.msra.mxu0 0
    %5591 = vmatprep.subr.bf16.mxu0 0
    %5592 = vmatpush1.bf16.msra.mxu0 0
    %5593 = vmatprep.subr.bf16.mxu0 0
    %5594 = vmatpush1.bf16.msra.mxu0 0
    %5595 = vmatprep.subr.bf16.mxu0 0
    %5596 = vmatpush1.bf16.msra.mxu0 0
    %5597 = vmatprep.subr.bf16.mxu0 0
    %5598 = vmatpush1.bf16.msra.mxu0 0
    %5599 = vmatprep.subr.bf16.mxu0 0
    %5600 = vmatpush1.bf16.msra.mxu0 0
    %5601 = vmatprep.mubr.bf16.mxu0 0
    %5602 = vmatmul.mubr.bf16.gmra.mrb[0].mxu0 %v5567
    %v5603 = vpop.f32.mrb[0].mxu0
    %v5604 = vadd.f32 0.0, %v5603
    %v5605 = vpop.f32.mrb[0].mxu0
    %v5606 = vadd.f32 0.0, %v5605
    %v5607 = vpop.f32.mrb[0].mxu0
    %v5608 = vadd.f32 0.0, %v5607
    %v5609 = vpop.f32.mrb[0].mxu0
    %v5610 = vadd.f32 0.0, %v5609
    %5611 = vdwg.mxu0
    %v5612 = vpack.c.bf16 %v5604, %v5604
    %v5613 = vpack.c.bf16 %v5608, %v5608
    %v5614 = vpack.c.bf16 %v5606, %v5606
    %v5615 = vpack.c.bf16 %v5610, %v5610
    %5617 = vrot.lane.b32.xlu0 %v5612, 64
    %v5618 = vpop.permute.xlu0 %5617
    %v5620 = vsel %vm350, %v5612, 0
    %v5623 = vsel %vm350, %v5618, 0
    %5625 = vmatprep.subr.bf16.mxu0 0
    %5626 = vmatpush1.bf16.xpose.msra.mxu0 %v5623
    %5627 = vmatprep.subr.bf16.mxu0 0
    %5628 = vmatpush1.bf16.xpose.msra.mxu0 0
    %5629 = vmatprep.subr.bf16.mxu0 0
    %5630 = vmatpush1.bf16.xpose.msra.mxu0 0
    %5631 = vmatprep.subr.bf16.mxu0 0
    %5632 = vmatpush1.bf16.xpose.msra.mxu0 0
    %5633 = vmatprep.subr.bf16.mxu0 0
    %5634 = vmatpush1.bf16.xpose.msra.mxu0 0
    %5635 = vmatprep.subr.bf16.mxu0 0
    %5636 = vmatpush1.bf16.xpose.msra.mxu0 0
    %5637 = vmatprep.subr.bf16.mxu0 0
    %5638 = vmatpush1.bf16.xpose.msra.mxu0 0
    %5639 = vmatprep.subr.bf16.mxu0 0
    %5640 = vmatpush1.bf16.xpose.msra.mxu0 0
    %5641 = vmatprep.subr.bf16.mxu0 0
    %5642 = vmatpush1.bf16.xpose.msra.mxu0 0
    %5643 = vmatprep.subr.bf16.mxu0 0
    %5644 = vmatpush1.bf16.xpose.msra.mxu0 0
    %5645 = vmatprep.subr.bf16.mxu0 0
    %5646 = vmatpush1.bf16.xpose.msra.mxu0 0
    %5647 = vmatprep.subr.bf16.mxu0 0
    %5648 = vmatpush1.bf16.xpose.msra.mxu0 0
    %5649 = vmatprep.subr.bf16.mxu0 0
    %5650 = vmatpush1.bf16.xpose.msra.mxu0 0
    %5651 = vmatprep.subr.bf16.mxu0 0
    %5652 = vmatpush1.bf16.xpose.msra.mxu0 0
    %5653 = vmatprep.subr.bf16.mxu0 0
    %5654 = vmatpush1.bf16.xpose.msra.mxu0 0
    %5655 = vmatprep.subr.bf16.mxu0 0
    %5656 = vmatpush1.bf16.xpose.msra.mxu0 0
    %5657 = vmatprep.mubr.bf16.mxu0 0
    %5658 = vmatmul.mubr.bf16.gmra.mrb[0].mxu0 %v5620
    %v5659 = vpop.f32.mrb[0].mxu0
    %v5660 = vadd.f32 %v2989, %v5659
    %v5661 = vpop.f32.mrb[0].mxu0
    %v5662 = vpop.f32.mrb[0].mxu0
    %v5663 = vpop.f32.mrb[0].mxu0
    %5664 = vdwg.mxu0
    %5666 = vrot.lane.b32.xlu0 %v5613, 64
    %v5667 = vpop.permute.xlu0 %5666
    %v5669 = vsel %vm350, %v5613, 0
    %v5672 = vsel %vm350, %v5667, 0
    %5674 = vmatprep.subr.bf16.mxu0 0
    %5675 = vmatpush1.bf16.xpose.msra.mxu0 %v5672
    %5676 = vmatprep.subr.bf16.mxu0 0
    %5677 = vmatpush1.bf16.xpose.msra.mxu0 0
    %5678 = vmatprep.subr.bf16.mxu0 0
    %5679 = vmatpush1.bf16.xpose.msra.mxu0 0
    %5680 = vmatprep.subr.bf16.mxu0 0
    %5681 = vmatpush1.bf16.xpose.msra.mxu0 0
    %5682 = vmatprep.subr.bf16.mxu0 0
    %5683 = vmatpush1.bf16.xpose.msra.mxu0 0
    %5684 = vmatprep.subr.bf16.mxu0 0
    %5685 = vmatpush1.bf16.xpose.msra.mxu0 0
    %5686 = vmatprep.subr.bf16.mxu0 0
    %5687 = vmatpush1.bf16.xpose.msra.mxu0 0
    %5688 = vmatprep.subr.bf16.mxu0 0
    %5689 = vmatpush1.bf16.xpose.msra.mxu0 0
    %5690 = vmatprep.subr.bf16.mxu0 0
    %5691 = vmatpush1.bf16.xpose.msra.mxu0 0
    %5692 = vmatprep.subr.bf16.mxu0 0
    %5693 = vmatpush1.bf16.xpose.msra.mxu0 0
    %5694 = vmatprep.subr.bf16.mxu0 0
    %5695 = vmatpush1.bf16.xpose.msra.mxu0 0
    %5696 = vmatprep.subr.bf16.mxu0 0
    %5697 = vmatpush1.bf16.xpose.msra.mxu0 0
    %5698 = vmatprep.subr.bf16.mxu0 0
    %5699 = vmatpush1.bf16.xpose.msra.mxu0 0
    %5700 = vmatprep.subr.bf16.mxu0 0
    %5701 = vmatpush1.bf16.xpose.msra.mxu0 0
    %5702 = vmatprep.subr.bf16.mxu0 0
    %5703 = vmatpush1.bf16.xpose.msra.mxu0 0
    %5704 = vmatprep.subr.bf16.mxu0 0
    %5705 = vmatpush1.bf16.xpose.msra.mxu0 0
    %5706 = vmatprep.mubr.bf16.mxu0 0
    %5707 = vmatmul.mubr.bf16.gmra.mrb[0].mxu0 %v5669
    %v5708 = vpop.f32.mrb[0].mxu0
    %v5709 = vadd.f32 %v2989, %v5708
    %v5710 = vpop.f32.mrb[0].mxu0
    %v5711 = vpop.f32.mrb[0].mxu0
    %v5712 = vpop.f32.mrb[0].mxu0
    %5713 = vdwg.mxu0
    %v5714 = vsel %vm446, %v5660, -inf
    %5715 = vmax.xlane.f32.xlu0 %v5714
    %v5716 = vpop.xlane.xlu0 %5715
    %v5717 = vsel %vm446, %v5709, -inf
    %5718 = vmax.xlane.f32.xlu0 %v5717
    %v5719 = vpop.xlane.xlu0 %5718
    %v5720 = vsub.f32 %v5660, %v5716
    %v5721 = vsub.f32 %v5709, %v5719
    %v5722 = vmul.f32 %v5720, 1.442695
    %v5723 = vpow.pop %v5722
    %v5724 = vmul.f32 %v5721, 1.442695
    %v5725 = vpow.pop %v5724
    %v5726 = vsel %vm446, %v5723, 0.0
    %5727 = vadd.xlane.f32.xlu0 %v5726
    %v5728 = vpop.xlane.xlu0 %5727
    %v5729 = vsel %vm446, %v5725, 0.0
    %5730 = vadd.xlane.f32.xlu0 %v5729
    %v5731 = vpop.xlane.xlu0 %5730
    %v5732 = vrcp.pop %v5728
    %v5733 = vrcp.pop %v5731
    %v5734 = vmul.f32 %v5723, %v5732
    %v5735 = vmul.f32 %v5725, %v5733
    %v5736 = vpack.c.bf16 %v5734, %v5734
    %v5737 = vpack.c.bf16 %v5735, %v5735
    %v5739 = vsel %vm446, %v5736, 0
    %v5742 = vsel %vm474, %v5614, 0
    %5744 = vmatprep.subr.bf16.mxu0 0
    %5745 = vmatpush1.bf16.msra.mxu0 %v5742
    %5746 = vmatprep.subr.bf16.mxu0 0
    %5747 = vmatpush1.bf16.msra.mxu0 0
    %5748 = vmatprep.subr.bf16.mxu0 0
    %5749 = vmatpush1.bf16.msra.mxu0 0
    %5750 = vmatprep.subr.bf16.mxu0 0
    %5751 = vmatpush1.bf16.msra.mxu0 0
    %5752 = vmatprep.subr.bf16.mxu0 0
    %5753 = vmatpush1.bf16.msra.mxu0 0
    %5754 = vmatprep.subr.bf16.mxu0 0
    %5755 = vmatpush1.bf16.msra.mxu0 0
    %5756 = vmatprep.subr.bf16.mxu0 0
    %5757 = vmatpush1.bf16.msra.mxu0 0
    %5758 = vmatprep.subr.bf16.mxu0 0
    %5759 = vmatpush1.bf16.msra.mxu0 0
    %5760 = vmatprep.subr.bf16.mxu0 0
    %5761 = vmatpush1.bf16.msra.mxu0 0
    %5762 = vmatprep.subr.bf16.mxu0 0
    %5763 = vmatpush1.bf16.msra.mxu0 0
    %5764 = vmatprep.subr.bf16.mxu0 0
    %5765 = vmatpush1.bf16.msra.mxu0 0
    %5766 = vmatprep.subr.bf16.mxu0 0
    %5767 = vmatpush1.bf16.msra.mxu0 0
    %5768 = vmatprep.subr.bf16.mxu0 0
    %5769 = vmatpush1.bf16.msra.mxu0 0
    %5770 = vmatprep.subr.bf16.mxu0 0
    %5771 = vmatpush1.bf16.msra.mxu0 0
    %5772 = vmatprep.subr.bf16.mxu0 0
    %5773 = vmatpush1.bf16.msra.mxu0 0
    %5774 = vmatprep.subr.bf16.mxu0 0
    %5775 = vmatpush1.bf16.msra.mxu0 0
    %5776 = vmatprep.mubr.bf16.mxu0 0
    %5777 = vmatmul.mubr.bf16.gmra.mrb[0].mxu0 %v5739
    %v5778 = vpop.f32.mrb[0].mxu0
    %v5779 = vadd.f32 0.0, %v5778
    %v5780 = vpop.f32.mrb[0].mxu0
    %v5781 = vpop.f32.mrb[0].mxu0
    %v5782 = vpop.f32.mrb[0].mxu0
    %5783 = vdwg.mxu0
    %v5785 = vsel %vm446, %v5737, 0
    %v5788 = vsel %vm474, %v5615, 0
    %5790 = vmatprep.subr.bf16.mxu0 0
    %5791 = vmatpush1.bf16.msra.mxu0 %v5788
    %5792 = vmatprep.subr.bf16.mxu0 0
    %5793 = vmatpush1.bf16.msra.mxu0 0
    %5794 = vmatprep.subr.bf16.mxu0 0
    %5795 = vmatpush1.bf16.msra.mxu0 0
    %5796 = vmatprep.subr.bf16.mxu0 0
    %5797 = vmatpush1.bf16.msra.mxu0 0
    %5798 = vmatprep.subr.bf16.mxu0 0
    %5799 = vmatpush1.bf16.msra.mxu0 0
    %5800 = vmatprep.subr.bf16.mxu0 0
    %5801 = vmatpush1.bf16.msra.mxu0 0
    %5802 = vmatprep.subr.bf16.mxu0 0
    %5803 = vmatpush1.bf16.msra.mxu0 0
    %5804 = vmatprep.subr.bf16.mxu0 0
    %5805 = vmatpush1.bf16.msra.mxu0 0
    %5806 = vmatprep.subr.bf16.mxu0 0
    %5807 = vmatpush1.bf16.msra.mxu0 0
    %5808 = vmatprep.subr.bf16.mxu0 0
    %5809 = vmatpush1.bf16.msra.mxu0 0
    %5810 = vmatprep.subr.bf16.mxu0 0
    %5811 = vmatpush1.bf16.msra.mxu0 0
    %5812 = vmatprep.subr.bf16.mxu0 0
    %5813 = vmatpush1.bf16.msra.mxu0 0
    %5814 = vmatprep.subr.bf16.mxu0 0
    %5815 = vmatpush1.bf16.msra.mxu0 0
    %5816 = vmatprep.subr.bf16.mxu0 0
    %5817 = vmatpush1.bf16.msra.mxu0 0
    %5818 = vmatprep.subr.bf16.mxu0 0
    %5819 = vmatpush1.bf16.msra.mxu0 0
    %5820 = vmatprep.subr.bf16.mxu0 0
    %5821 = vmatpush1.bf16.msra.mxu0 0
    %5822 = vmatprep.mubr.bf16.mxu0 0
    %5823 = vmatmul.mubr.bf16.gmra.mrb[0].mxu0 %v5785
    %v5824 = vpop.f32.mrb[0].mxu0
    %v5825 = vadd.f32 0.0, %v5824
    %v5826 = vpop.f32.mrb[0].mxu0
    %v5827 = vpop.f32.mrb[0].mxu0
    %v5828 = vpop.f32.mrb[0].mxu0
    %5829 = vdwg.mxu0
    %5830 = vrot.lane.b32.xlu0 %v5612, 112
    %v5831 = vpop.permute.xlu0 %5830
    %5832 = vrot.lane.b32.xlu0 %v5612, 48
    %v5833 = vpop.permute.xlu0 %5832
    %v5835 = vsel %vm350, %v5831, 0
    %v5838 = vsel %vm350, %v5833, 0
    %5840 = vmatprep.subr.bf16.mxu0 0
    %5841 = vmatpush1.bf16.xpose.msra.mxu0 %v5838
    %5842 = vmatprep.subr.bf16.mxu0 0
    %5843 = vmatpush1.bf16.xpose.msra.mxu0 0
    %5844 = vmatprep.subr.bf16.mxu0 0
    %5845 = vmatpush1.bf16.xpose.msra.mxu0 0
    %5846 = vmatprep.subr.bf16.mxu0 0
    %5847 = vmatpush1.bf16.xpose.msra.mxu0 0
    %5848 = vmatprep.subr.bf16.mxu0 0
    %5849 = vmatpush1.bf16.xpose.msra.mxu0 0
    %5850 = vmatprep.subr.bf16.mxu0 0
    %5851 = vmatpush1.bf16.xpose.msra.mxu0 0
    %5852 = vmatprep.subr.bf16.mxu0 0
    %5853 = vmatpush1.bf16.xpose.msra.mxu0 0
    %5854 = vmatprep.subr.bf16.mxu0 0
    %5855 = vmatpush1.bf16.xpose.msra.mxu0 0
    %5856 = vmatprep.subr.bf16.mxu0 0
    %5857 = vmatpush1.bf16.xpose.msra.mxu0 0
    %5858 = vmatprep.subr.bf16.mxu0 0
    %5859 = vmatpush1.bf16.xpose.msra.mxu0 0
    %5860 = vmatprep.subr.bf16.mxu0 0
    %5861 = vmatpush1.bf16.xpose.msra.mxu0 0
    %5862 = vmatprep.subr.bf16.mxu0 0
    %5863 = vmatpush1.bf16.xpose.msra.mxu0 0
    %5864 = vmatprep.subr.bf16.mxu0 0
    %5865 = vmatpush1.bf16.xpose.msra.mxu0 0
    %5866 = vmatprep.subr.bf16.mxu0 0
    %5867 = vmatpush1.bf16.xpose.msra.mxu0 0
    %5868 = vmatprep.subr.bf16.mxu0 0
    %5869 = vmatpush1.bf16.xpose.msra.mxu0 0
    %5870 = vmatprep.subr.bf16.mxu0 0
    %5871 = vmatpush1.bf16.xpose.msra.mxu0 0
    %5872 = vmatprep.mubr.bf16.mxu0 0
    %5873 = vmatmul.mubr.bf16.gmra.mrb[0].mxu0 %v5835
    %v5874 = vpop.f32.mrb[0].mxu0
    %v5875 = vadd.f32 %v2990, %v5874
    %v5876 = vpop.f32.mrb[0].mxu0
    %v5877 = vpop.f32.mrb[0].mxu0
    %v5878 = vpop.f32.mrb[0].mxu0
    %5879 = vdwg.mxu0
    %5880 = vrot.lane.b32.xlu0 %v5613, 112
    %v5881 = vpop.permute.xlu0 %5880
    %5882 = vrot.lane.b32.xlu0 %v5613, 48
    %v5883 = vpop.permute.xlu0 %5882
    %v5885 = vsel %vm350, %v5881, 0
    %v5888 = vsel %vm350, %v5883, 0
    %5890 = vmatprep.subr.bf16.mxu0 0
    %5891 = vmatpush1.bf16.xpose.msra.mxu0 %v5888
    %5892 = vmatprep.subr.bf16.mxu0 0
    %5893 = vmatpush1.bf16.xpose.msra.mxu0 0
    %5894 = vmatprep.subr.bf16.mxu0 0
    %5895 = vmatpush1.bf16.xpose.msra.mxu0 0
    %5896 = vmatprep.subr.bf16.mxu0 0
    %5897 = vmatpush1.bf16.xpose.msra.mxu0 0
    %5898 = vmatprep.subr.bf16.mxu0 0
    %5899 = vmatpush1.bf16.xpose.msra.mxu0 0
    %5900 = vmatprep.subr.bf16.mxu0 0
    %5901 = vmatpush1.bf16.xpose.msra.mxu0 0
    %5902 = vmatprep.subr.bf16.mxu0 0
    %5903 = vmatpush1.bf16.xpose.msra.mxu0 0
    %5904 = vmatprep.subr.bf16.mxu0 0
    %5905 = vmatpush1.bf16.xpose.msra.mxu0 0
    %5906 = vmatprep.subr.bf16.mxu0 0
    %5907 = vmatpush1.bf16.xpose.msra.mxu0 0
    %5908 = vmatprep.subr.bf16.mxu0 0
    %5909 = vmatpush1.bf16.xpose.msra.mxu0 0
    %5910 = vmatprep.subr.bf16.mxu0 0
    %5911 = vmatpush1.bf16.xpose.msra.mxu0 0
    %5912 = vmatprep.subr.bf16.mxu0 0
    %5913 = vmatpush1.bf16.xpose.msra.mxu0 0
    %5914 = vmatprep.subr.bf16.mxu0 0
    %5915 = vmatpush1.bf16.xpose.msra.mxu0 0
    %5916 = vmatprep.subr.bf16.mxu0 0
    %5917 = vmatpush1.bf16.xpose.msra.mxu0 0
    %5918 = vmatprep.subr.bf16.mxu0 0
    %5919 = vmatpush1.bf16.xpose.msra.mxu0 0
    %5920 = vmatprep.subr.bf16.mxu0 0
    %5921 = vmatpush1.bf16.xpose.msra.mxu0 0
    %5922 = vmatprep.mubr.bf16.mxu0 0
    %5923 = vmatmul.mubr.bf16.gmra.mrb[0].mxu0 %v5885
    %v5924 = vpop.f32.mrb[0].mxu0
    %v5925 = vadd.f32 %v2990, %v5924
    %v5926 = vpop.f32.mrb[0].mxu0
    %v5927 = vpop.f32.mrb[0].mxu0
    %v5928 = vpop.f32.mrb[0].mxu0
    %5929 = vdwg.mxu0
    %v5930 = vsel %vm446, %v5875, -inf
    %5931 = vmax.xlane.f32.xlu0 %v5930
    %v5932 = vpop.xlane.xlu0 %5931
    %v5933 = vsel %vm446, %v5925, -inf
    %5934 = vmax.xlane.f32.xlu0 %v5933
    %v5935 = vpop.xlane.xlu0 %5934
    %v5936 = vsub.f32 %v5875, %v5932
    %v5937 = vsub.f32 %v5925, %v5935
    %v5938 = vmul.f32 %v5936, 1.442695
    %v5939 = vpow.pop %v5938
    %v5940 = vmul.f32 %v5937, 1.442695
    %v5941 = vpow.pop %v5940
    %v5942 = vsel %vm446, %v5939, 0.0
    %5943 = vadd.xlane.f32.xlu0 %v5942
    %v5944 = vpop.xlane.xlu0 %5943
    %v5945 = vsel %vm446, %v5941, 0.0
    %5946 = vadd.xlane.f32.xlu0 %v5945
    %v5947 = vpop.xlane.xlu0 %5946
    %v5948 = vrcp.pop %v5944
    %v5949 = vrcp.pop %v5947
    %v5950 = vmul.f32 %v5939, %v5948
    %v5951 = vmul.f32 %v5941, %v5949
    %v5952 = vpack.c.bf16 %v5950, %v5950
    %v5953 = vpack.c.bf16 %v5951, %v5951
    %5955 = vrot.lane.b32.xlu0 %v5614, 112
    %v5956 = vpop.permute.xlu0 %5955
    %v5958 = vsel %vm446, %v5952, 0
    %v5961 = vsel %vm474, %v5956, 0
    %5963 = vmatprep.subr.bf16.mxu0 0
    %5964 = vmatpush1.bf16.msra.mxu0 %v5961
    %5965 = vmatprep.subr.bf16.mxu0 0
    %5966 = vmatpush1.bf16.msra.mxu0 0
    %5967 = vmatprep.subr.bf16.mxu0 0
    %5968 = vmatpush1.bf16.msra.mxu0 0
    %5969 = vmatprep.subr.bf16.mxu0 0
    %5970 = vmatpush1.bf16.msra.mxu0 0
    %5971 = vmatprep.subr.bf16.mxu0 0
    %5972 = vmatpush1.bf16.msra.mxu0 0
    %5973 = vmatprep.subr.bf16.mxu0 0
    %5974 = vmatpush1.bf16.msra.mxu0 0
    %5975 = vmatprep.subr.bf16.mxu0 0
    %5976 = vmatpush1.bf16.msra.mxu0 0
    %5977 = vmatprep.subr.bf16.mxu0 0
    %5978 = vmatpush1.bf16.msra.mxu0 0
    %5979 = vmatprep.subr.bf16.mxu0 0
    %5980 = vmatpush1.bf16.msra.mxu0 0
    %5981 = vmatprep.subr.bf16.mxu0 0
    %5982 = vmatpush1.bf16.msra.mxu0 0
    %5983 = vmatprep.subr.bf16.mxu0 0
    %5984 = vmatpush1.bf16.msra.mxu0 0
    %5985 = vmatprep.subr.bf16.mxu0 0
    %5986 = vmatpush1.bf16.msra.mxu0 0
    %5987 = vmatprep.subr.bf16.mxu0 0
    %5988 = vmatpush1.bf16.msra.mxu0 0
    %5989 = vmatprep.subr.bf16.mxu0 0
    %5990 = vmatpush1.bf16.msra.mxu0 0
    %5991 = vmatprep.subr.bf16.mxu0 0
    %5992 = vmatpush1.bf16.msra.mxu0 0
    %5993 = vmatprep.subr.bf16.mxu0 0
    %5994 = vmatpush1.bf16.msra.mxu0 0
    %5995 = vmatprep.mubr.bf16.mxu0 0
    %5996 = vmatmul.mubr.bf16.gmra.mrb[0].mxu0 %v5958
    %v5997 = vpop.f32.mrb[0].mxu0
    %v5998 = vadd.f32 0.0, %v5997
    %v5999 = vpop.f32.mrb[0].mxu0
    %v6000 = vpop.f32.mrb[0].mxu0
    %v6001 = vpop.f32.mrb[0].mxu0
    %6002 = vdwg.mxu0
    %6004 = vrot.lane.b32.xlu0 %v5615, 112
    %v6005 = vpop.permute.xlu0 %6004
    %v6007 = vsel %vm446, %v5953, 0
    %v6010 = vsel %vm474, %v6005, 0
    %6012 = vmatprep.subr.bf16.mxu0 0
    %6013 = vmatpush1.bf16.msra.mxu0 %v6010
    %6014 = vmatprep.subr.bf16.mxu0 0
    %6015 = vmatpush1.bf16.msra.mxu0 0
    %6016 = vmatprep.subr.bf16.mxu0 0
    %6017 = vmatpush1.bf16.msra.mxu0 0
    %6018 = vmatprep.subr.bf16.mxu0 0
    %6019 = vmatpush1.bf16.msra.mxu0 0
    %6020 = vmatprep.subr.bf16.mxu0 0
    %6021 = vmatpush1.bf16.msra.mxu0 0
    %6022 = vmatprep.subr.bf16.mxu0 0
    %6023 = vmatpush1.bf16.msra.mxu0 0
    %6024 = vmatprep.subr.bf16.mxu0 0
    %6025 = vmatpush1.bf16.msra.mxu0 0
    %6026 = vmatprep.subr.bf16.mxu0 0
    %6027 = vmatpush1.bf16.msra.mxu0 0
    %6028 = vmatprep.subr.bf16.mxu0 0
    %6029 = vmatpush1.bf16.msra.mxu0 0
    %6030 = vmatprep.subr.bf16.mxu0 0
    %6031 = vmatpush1.bf16.msra.mxu0 0
    %6032 = vmatprep.subr.bf16.mxu0 0
    %6033 = vmatpush1.bf16.msra.mxu0 0
    %6034 = vmatprep.subr.bf16.mxu0 0
    %6035 = vmatpush1.bf16.msra.mxu0 0
    %6036 = vmatprep.subr.bf16.mxu0 0
    %6037 = vmatpush1.bf16.msra.mxu0 0
    %6038 = vmatprep.subr.bf16.mxu0 0
    %6039 = vmatpush1.bf16.msra.mxu0 0
    %6040 = vmatprep.subr.bf16.mxu0 0
    %6041 = vmatpush1.bf16.msra.mxu0 0
    %6042 = vmatprep.subr.bf16.mxu0 0
    %6043 = vmatpush1.bf16.msra.mxu0 0
    %6044 = vmatprep.mubr.bf16.mxu0 0
    %6045 = vmatmul.mubr.bf16.gmra.mrb[0].mxu0 %v6007
    %v6046 = vpop.f32.mrb[0].mxu0
    %v6047 = vadd.f32 0.0, %v6046
    %v6048 = vpop.f32.mrb[0].mxu0
    %v6049 = vpop.f32.mrb[0].mxu0
    %v6050 = vpop.f32.mrb[0].mxu0
    %6051 = vdwg.mxu0
    %6052 = vrot.lane.b32.xlu0 %v5612, 96
    %v6053 = vpop.permute.xlu0 %6052
    %6054 = vrot.lane.b32.xlu0 %v5612, 32
    %v6055 = vpop.permute.xlu0 %6054
    %v6057 = vsel %vm350, %v6053, 0
    %v6060 = vsel %vm350, %v6055, 0
    %6062 = vmatprep.subr.bf16.mxu0 0
    %6063 = vmatpush1.bf16.xpose.msra.mxu0 %v6060
    %6064 = vmatprep.subr.bf16.mxu0 0
    %6065 = vmatpush1.bf16.xpose.msra.mxu0 0
    %6066 = vmatprep.subr.bf16.mxu0 0
    %6067 = vmatpush1.bf16.xpose.msra.mxu0 0
    %6068 = vmatprep.subr.bf16.mxu0 0
    %6069 = vmatpush1.bf16.xpose.msra.mxu0 0
    %6070 = vmatprep.subr.bf16.mxu0 0
    %6071 = vmatpush1.bf16.xpose.msra.mxu0 0
    %6072 = vmatprep.subr.bf16.mxu0 0
    %6073 = vmatpush1.bf16.xpose.msra.mxu0 0
    %6074 = vmatprep.subr.bf16.mxu0 0
    %6075 = vmatpush1.bf16.xpose.msra.mxu0 0
    %6076 = vmatprep.subr.bf16.mxu0 0
    %6077 = vmatpush1.bf16.xpose.msra.mxu0 0
    %6078 = vmatprep.subr.bf16.mxu0 0
    %6079 = vmatpush1.bf16.xpose.msra.mxu0 0
    %6080 = vmatprep.subr.bf16.mxu0 0
    %6081 = vmatpush1.bf16.xpose.msra.mxu0 0
    %6082 = vmatprep.subr.bf16.mxu0 0
    %6083 = vmatpush1.bf16.xpose.msra.mxu0 0
    %6084 = vmatprep.subr.bf16.mxu0 0
    %6085 = vmatpush1.bf16.xpose.msra.mxu0 0
    %6086 = vmatprep.subr.bf16.mxu0 0
    %6087 = vmatpush1.bf16.xpose.msra.mxu0 0
    %6088 = vmatprep.subr.bf16.mxu0 0
    %6089 = vmatpush1.bf16.xpose.msra.mxu0 0
    %6090 = vmatprep.subr.bf16.mxu0 0
    %6091 = vmatpush1.bf16.xpose.msra.mxu0 0
    %6092 = vmatprep.subr.bf16.mxu0 0
    %6093 = vmatpush1.bf16.xpose.msra.mxu0 0
    %6094 = vmatprep.mubr.bf16.mxu0 0
    %6095 = vmatmul.mubr.bf16.gmra.mrb[0].mxu0 %v6057
    %v6096 = vpop.f32.mrb[0].mxu0
    %v6097 = vadd.f32 %v2991, %v6096
    %v6098 = vpop.f32.mrb[0].mxu0
    %v6099 = vpop.f32.mrb[0].mxu0
    %v6100 = vpop.f32.mrb[0].mxu0
    %6101 = vdwg.mxu0
    %6102 = vrot.lane.b32.xlu0 %v5613, 96
    %v6103 = vpop.permute.xlu0 %6102
    %6104 = vrot.lane.b32.xlu0 %v5613, 32
    %v6105 = vpop.permute.xlu0 %6104
    %v6107 = vsel %vm350, %v6103, 0
    %v6110 = vsel %vm350, %v6105, 0
    %6112 = vmatprep.subr.bf16.mxu0 0
    %6113 = vmatpush1.bf16.xpose.msra.mxu0 %v6110
    %6114 = vmatprep.subr.bf16.mxu0 0
    %6115 = vmatpush1.bf16.xpose.msra.mxu0 0
    %6116 = vmatprep.subr.bf16.mxu0 0
    %6117 = vmatpush1.bf16.xpose.msra.mxu0 0
    %6118 = vmatprep.subr.bf16.mxu0 0
    %6119 = vmatpush1.bf16.xpose.msra.mxu0 0
    %6120 = vmatprep.subr.bf16.mxu0 0
    %6121 = vmatpush1.bf16.xpose.msra.mxu0 0
    %6122 = vmatprep.subr.bf16.mxu0 0
    %6123 = vmatpush1.bf16.xpose.msra.mxu0 0
    %6124 = vmatprep.subr.bf16.mxu0 0
    %6125 = vmatpush1.bf16.xpose.msra.mxu0 0
    %6126 = vmatprep.subr.bf16.mxu0 0
    %6127 = vmatpush1.bf16.xpose.msra.mxu0 0
    %6128 = vmatprep.subr.bf16.mxu0 0
    %6129 = vmatpush1.bf16.xpose.msra.mxu0 0
    %6130 = vmatprep.subr.bf16.mxu0 0
    %6131 = vmatpush1.bf16.xpose.msra.mxu0 0
    %6132 = vmatprep.subr.bf16.mxu0 0
    %6133 = vmatpush1.bf16.xpose.msra.mxu0 0
    %6134 = vmatprep.subr.bf16.mxu0 0
    %6135 = vmatpush1.bf16.xpose.msra.mxu0 0
    %6136 = vmatprep.subr.bf16.mxu0 0
    %6137 = vmatpush1.bf16.xpose.msra.mxu0 0
    %6138 = vmatprep.subr.bf16.mxu0 0
    %6139 = vmatpush1.bf16.xpose.msra.mxu0 0
    %6140 = vmatprep.subr.bf16.mxu0 0
    %6141 = vmatpush1.bf16.xpose.msra.mxu0 0
    %6142 = vmatprep.subr.bf16.mxu0 0
    %6143 = vmatpush1.bf16.xpose.msra.mxu0 0
    %6144 = vmatprep.mubr.bf16.mxu0 0
    %6145 = vmatmul.mubr.bf16.gmra.mrb[0].mxu0 %v6107
    %v6146 = vpop.f32.mrb[0].mxu0
    %v6147 = vadd.f32 %v2991, %v6146
    %v6148 = vpop.f32.mrb[0].mxu0
    %v6149 = vpop.f32.mrb[0].mxu0
    %v6150 = vpop.f32.mrb[0].mxu0
    %6151 = vdwg.mxu0
    %v6152 = vsel %vm446, %v6097, -inf
    %6153 = vmax.xlane.f32.xlu0 %v6152
    %v6154 = vpop.xlane.xlu0 %6153
    %v6155 = vsel %vm446, %v6147, -inf
    %6156 = vmax.xlane.f32.xlu0 %v6155
    %v6157 = vpop.xlane.xlu0 %6156
    %v6158 = vsub.f32 %v6097, %v6154
    %v6159 = vsub.f32 %v6147, %v6157
    %v6160 = vmul.f32 %v6158, 1.442695
    %v6161 = vpow.pop %v6160
    %v6162 = vmul.f32 %v6159, 1.442695
    %v6163 = vpow.pop %v6162
    %v6164 = vsel %vm446, %v6161, 0.0
    %6165 = vadd.xlane.f32.xlu0 %v6164
    %v6166 = vpop.xlane.xlu0 %6165
    %v6167 = vsel %vm446, %v6163, 0.0
    %6168 = vadd.xlane.f32.xlu0 %v6167
    %v6169 = vpop.xlane.xlu0 %6168
    %v6170 = vrcp.pop %v6166
    %v6171 = vrcp.pop %v6169
    %v6172 = vmul.f32 %v6161, %v6170
    %v6173 = vmul.f32 %v6163, %v6171
    %v6174 = vpack.c.bf16 %v6172, %v6172
    %v6175 = vpack.c.bf16 %v6173, %v6173
    %6176 = vrot.lane.b32.xlu0 %v5614, 96
    %v6177 = vpop.permute.xlu0 %6176
    %v6179 = vsel %vm446, %v6174, 0
    %v6182 = vsel %vm474, %v6177, 0
    %6184 = vmatprep.subr.bf16.mxu0 0
    %6185 = vmatpush1.bf16.msra.mxu0 %v6182
    %6186 = vmatprep.subr.bf16.mxu0 0
    %6187 = vmatpush1.bf16.msra.mxu0 0
    %6188 = vmatprep.subr.bf16.mxu0 0
    %6189 = vmatpush1.bf16.msra.mxu0 0
    %6190 = vmatprep.subr.bf16.mxu0 0
    %6191 = vmatpush1.bf16.msra.mxu0 0
    %6192 = vmatprep.subr.bf16.mxu0 0
    %6193 = vmatpush1.bf16.msra.mxu0 0
    %6194 = vmatprep.subr.bf16.mxu0 0
    %6195 = vmatpush1.bf16.msra.mxu0 0
    %6196 = vmatprep.subr.bf16.mxu0 0
    %6197 = vmatpush1.bf16.msra.mxu0 0
    %6198 = vmatprep.subr.bf16.mxu0 0
    %6199 = vmatpush1.bf16.msra.mxu0 0
    %6200 = vmatprep.subr.bf16.mxu0 0
    %6201 = vmatpush1.bf16.msra.mxu0 0
    %6202 = vmatprep.subr.bf16.mxu0 0
    %6203 = vmatpush1.bf16.msra.mxu0 0
    %6204 = vmatprep.subr.bf16.mxu0 0
    %6205 = vmatpush1.bf16.msra.mxu0 0
    %6206 = vmatprep.subr.bf16.mxu0 0
    %6207 = vmatpush1.bf16.msra.mxu0 0
    %6208 = vmatprep.subr.bf16.mxu0 0
    %6209 = vmatpush1.bf16.msra.mxu0 0
    %6210 = vmatprep.subr.bf16.mxu0 0
    %6211 = vmatpush1.bf16.msra.mxu0 0
    %6212 = vmatprep.subr.bf16.mxu0 0
    %6213 = vmatpush1.bf16.msra.mxu0 0
    %6214 = vmatprep.subr.bf16.mxu0 0
    %6215 = vmatpush1.bf16.msra.mxu0 0
    %6216 = vmatprep.mubr.bf16.mxu0 0
    %6217 = vmatmul.mubr.bf16.gmra.mrb[0].mxu0 %v6179
    %v6218 = vpop.f32.mrb[0].mxu0
    %v6219 = vadd.f32 0.0, %v6218
    %v6220 = vpop.f32.mrb[0].mxu0
    %v6221 = vpop.f32.mrb[0].mxu0
    %v6222 = vpop.f32.mrb[0].mxu0
    %6223 = vdwg.mxu0
    %6224 = vrot.lane.b32.xlu0 %v5615, 96
    %v6225 = vpop.permute.xlu0 %6224
    %v6227 = vsel %vm446, %v6175, 0
    %v6230 = vsel %vm474, %v6225, 0
    %6232 = vmatprep.subr.bf16.mxu0 0
    %6233 = vmatpush1.bf16.msra.mxu0 %v6230
    %6234 = vmatprep.subr.bf16.mxu0 0
    %6235 = vmatpush1.bf16.msra.mxu0 0
    %6236 = vmatprep.subr.bf16.mxu0 0
    %6237 = vmatpush1.bf16.msra.mxu0 0
    %6238 = vmatprep.subr.bf16.mxu0 0
    %6239 = vmatpush1.bf16.msra.mxu0 0
    %6240 = vmatprep.subr.bf16.mxu0 0
    %6241 = vmatpush1.bf16.msra.mxu0 0
    %6242 = vmatprep.subr.bf16.mxu0 0
    %6243 = vmatpush1.bf16.msra.mxu0 0
    %6244 = vmatprep.subr.bf16.mxu0 0
    %6245 = vmatpush1.bf16.msra.mxu0 0
    %6246 = vmatprep.subr.bf16.mxu0 0
    %6247 = vmatpush1.bf16.msra.mxu0 0
    %6248 = vmatprep.subr.bf16.mxu0 0
    %6249 = vmatpush1.bf16.msra.mxu0 0
    %6250 = vmatprep.subr.bf16.mxu0 0
    %6251 = vmatpush1.bf16.msra.mxu0 0
    %6252 = vmatprep.subr.bf16.mxu0 0
    %6253 = vmatpush1.bf16.msra.mxu0 0
    %6254 = vmatprep.subr.bf16.mxu0 0
    %6255 = vmatpush1.bf16.msra.mxu0 0
    %6256 = vmatprep.subr.bf16.mxu0 0
    %6257 = vmatpush1.bf16.msra.mxu0 0
    %6258 = vmatprep.subr.bf16.mxu0 0
    %6259 = vmatpush1.bf16.msra.mxu0 0
    %6260 = vmatprep.subr.bf16.mxu0 0
    %6261 = vmatpush1.bf16.msra.mxu0 0
    %6262 = vmatprep.subr.bf16.mxu0 0
    %6263 = vmatpush1.bf16.msra.mxu0 0
    %6264 = vmatprep.mubr.bf16.mxu0 0
    %6265 = vmatmul.mubr.bf16.gmra.mrb[0].mxu0 %v6227
    %v6266 = vpop.f32.mrb[0].mxu0
    %v6267 = vadd.f32 0.0, %v6266
    %v6268 = vpop.f32.mrb[0].mxu0
    %v6269 = vpop.f32.mrb[0].mxu0
    %v6270 = vpop.f32.mrb[0].mxu0
    %6271 = vdwg.mxu0
    %6272 = vrot.lane.b32.xlu0 %v5612, 80
    %v6273 = vpop.permute.xlu0 %6272
    %6274 = vrot.lane.b32.xlu0 %v5612, 16
    %v6275 = vpop.permute.xlu0 %6274
    %v6277 = vsel %vm350, %v6273, 0
    %v6280 = vsel %vm350, %v6275, 0
    %6282 = vmatprep.subr.bf16.mxu0 0
    %6283 = vmatpush1.bf16.xpose.msra.mxu0 %v6280
    %6284 = vmatprep.subr.bf16.mxu0 0
    %6285 = vmatpush1.bf16.xpose.msra.mxu0 0
    %6286 = vmatprep.subr.bf16.mxu0 0
    %6287 = vmatpush1.bf16.xpose.msra.mxu0 0
    %6288 = vmatprep.subr.bf16.mxu0 0
    %6289 = vmatpush1.bf16.xpose.msra.mxu0 0
    %6290 = vmatprep.subr.bf16.mxu0 0
    %6291 = vmatpush1.bf16.xpose.msra.mxu0 0
    %6292 = vmatprep.subr.bf16.mxu0 0
    %6293 = vmatpush1.bf16.xpose.msra.mxu0 0
    %6294 = vmatprep.subr.bf16.mxu0 0
    %6295 = vmatpush1.bf16.xpose.msra.mxu0 0
    %6296 = vmatprep.subr.bf16.mxu0 0
    %6297 = vmatpush1.bf16.xpose.msra.mxu0 0
    %6298 = vmatprep.subr.bf16.mxu0 0
    %6299 = vmatpush1.bf16.xpose.msra.mxu0 0
    %6300 = vmatprep.subr.bf16.mxu0 0
    %6301 = vmatpush1.bf16.xpose.msra.mxu0 0
    %6302 = vmatprep.subr.bf16.mxu0 0
    %6303 = vmatpush1.bf16.xpose.msra.mxu0 0
    %6304 = vmatprep.subr.bf16.mxu0 0
    %6305 = vmatpush1.bf16.xpose.msra.mxu0 0
    %6306 = vmatprep.subr.bf16.mxu0 0
    %6307 = vmatpush1.bf16.xpose.msra.mxu0 0
    %6308 = vmatprep.subr.bf16.mxu0 0
    %6309 = vmatpush1.bf16.xpose.msra.mxu0 0
    %6310 = vmatprep.subr.bf16.mxu0 0
    %6311 = vmatpush1.bf16.xpose.msra.mxu0 0
    %6312 = vmatprep.subr.bf16.mxu0 0
    %6313 = vmatpush1.bf16.xpose.msra.mxu0 0
    %6314 = vmatprep.mubr.bf16.mxu0 0
    %6315 = vmatmul.mubr.bf16.gmra.mrb[0].mxu0 %v6277
    %v6316 = vpop.f32.mrb[0].mxu0
    %v6317 = vadd.f32 %v2992, %v6316
    %v6318 = vpop.f32.mrb[0].mxu0
    %v6319 = vpop.f32.mrb[0].mxu0
    %v6320 = vpop.f32.mrb[0].mxu0
    %6321 = vdwg.mxu0
    %6322 = vrot.lane.b32.xlu0 %v5613, 80
    %v6323 = vpop.permute.xlu0 %6322
    %6324 = vrot.lane.b32.xlu0 %v5613, 16
    %v6325 = vpop.permute.xlu0 %6324
    %v6327 = vsel %vm350, %v6323, 0
    %v6330 = vsel %vm350, %v6325, 0
    %6332 = vmatprep.subr.bf16.mxu0 0
    %6333 = vmatpush1.bf16.xpose.msra.mxu0 %v6330
    %6334 = vmatprep.subr.bf16.mxu0 0
    %6335 = vmatpush1.bf16.xpose.msra.mxu0 0
    %6336 = vmatprep.subr.bf16.mxu0 0
    %6337 = vmatpush1.bf16.xpose.msra.mxu0 0
    %6338 = vmatprep.subr.bf16.mxu0 0
    %6339 = vmatpush1.bf16.xpose.msra.mxu0 0
    %6340 = vmatprep.subr.bf16.mxu0 0
    %6341 = vmatpush1.bf16.xpose.msra.mxu0 0
    %6342 = vmatprep.subr.bf16.mxu0 0
    %6343 = vmatpush1.bf16.xpose.msra.mxu0 0
    %6344 = vmatprep.subr.bf16.mxu0 0
    %6345 = vmatpush1.bf16.xpose.msra.mxu0 0
    %6346 = vmatprep.subr.bf16.mxu0 0
    %6347 = vmatpush1.bf16.xpose.msra.mxu0 0
    %6348 = vmatprep.subr.bf16.mxu0 0
    %6349 = vmatpush1.bf16.xpose.msra.mxu0 0
    %6350 = vmatprep.subr.bf16.mxu0 0
    %6351 = vmatpush1.bf16.xpose.msra.mxu0 0
    %6352 = vmatprep.subr.bf16.mxu0 0
    %6353 = vmatpush1.bf16.xpose.msra.mxu0 0
    %6354 = vmatprep.subr.bf16.mxu0 0
    %6355 = vmatpush1.bf16.xpose.msra.mxu0 0
    %6356 = vmatprep.subr.bf16.mxu0 0
    %6357 = vmatpush1.bf16.xpose.msra.mxu0 0
    %6358 = vmatprep.subr.bf16.mxu0 0
    %6359 = vmatpush1.bf16.xpose.msra.mxu0 0
    %6360 = vmatprep.subr.bf16.mxu0 0
    %6361 = vmatpush1.bf16.xpose.msra.mxu0 0
    %6362 = vmatprep.subr.bf16.mxu0 0
    %6363 = vmatpush1.bf16.xpose.msra.mxu0 0
    %6364 = vmatprep.mubr.bf16.mxu0 0
    %6365 = vmatmul.mubr.bf16.gmra.mrb[0].mxu0 %v6327
    %v6366 = vpop.f32.mrb[0].mxu0
    %v6367 = vadd.f32 %v2992, %v6366
    %v6368 = vpop.f32.mrb[0].mxu0
    %v6369 = vpop.f32.mrb[0].mxu0
    %v6370 = vpop.f32.mrb[0].mxu0
    %6371 = vdwg.mxu0
    %v6372 = vsel %vm446, %v6317, -inf
    %6373 = vmax.xlane.f32.xlu0 %v6372
    %v6374 = vpop.xlane.xlu0 %6373
    %v6375 = vsel %vm446, %v6367, -inf
    %6376 = vmax.xlane.f32.xlu0 %v6375
    %v6377 = vpop.xlane.xlu0 %6376
    %v6378 = vsub.f32 %v6317, %v6374
    %v6379 = vsub.f32 %v6367, %v6377
    %v6380 = vmul.f32 %v6378, 1.442695
    %v6381 = vpow.pop %v6380
    %v6382 = vmul.f32 %v6379, 1.442695
    %v6383 = vpow.pop %v6382
    %v6384 = vsel %vm446, %v6381, 0.0
    %6385 = vadd.xlane.f32.xlu0 %v6384
    %v6386 = vpop.xlane.xlu0 %6385
    %v6387 = vsel %vm446, %v6383, 0.0
    %6388 = vadd.xlane.f32.xlu0 %v6387
    %v6389 = vpop.xlane.xlu0 %6388
    %v6390 = vrcp.pop %v6386
    %v6391 = vrcp.pop %v6389
    %v6392 = vmul.f32 %v6381, %v6390
    %v6393 = vmul.f32 %v6383, %v6391
    %v6394 = vpack.c.bf16 %v6392, %v6392
    %v6395 = vpack.c.bf16 %v6393, %v6393
    %6396 = vrot.lane.b32.xlu0 %v5614, 80
    %v6397 = vpop.permute.xlu0 %6396
    %v6399 = vsel %vm446, %v6394, 0
    %v6402 = vsel %vm474, %v6397, 0
    %6404 = vmatprep.subr.bf16.mxu0 0
    %6405 = vmatpush1.bf16.msra.mxu0 %v6402
    %6406 = vmatprep.subr.bf16.mxu0 0
    %6407 = vmatpush1.bf16.msra.mxu0 0
    %6408 = vmatprep.subr.bf16.mxu0 0
    %6409 = vmatpush1.bf16.msra.mxu0 0
    %6410 = vmatprep.subr.bf16.mxu0 0
    %6411 = vmatpush1.bf16.msra.mxu0 0
    %6412 = vmatprep.subr.bf16.mxu0 0
    %6413 = vmatpush1.bf16.msra.mxu0 0
    %6414 = vmatprep.subr.bf16.mxu0 0
    %6415 = vmatpush1.bf16.msra.mxu0 0
    %6416 = vmatprep.subr.bf16.mxu0 0
    %6417 = vmatpush1.bf16.msra.mxu0 0
    %6418 = vmatprep.subr.bf16.mxu0 0
    %6419 = vmatpush1.bf16.msra.mxu0 0
    %6420 = vmatprep.subr.bf16.mxu0 0
    %6421 = vmatpush1.bf16.msra.mxu0 0
    %6422 = vmatprep.subr.bf16.mxu0 0
    %6423 = vmatpush1.bf16.msra.mxu0 0
    %6424 = vmatprep.subr.bf16.mxu0 0
    %6425 = vmatpush1.bf16.msra.mxu0 0
    %6426 = vmatprep.subr.bf16.mxu0 0
    %6427 = vmatpush1.bf16.msra.mxu0 0
    %6428 = vmatprep.subr.bf16.mxu0 0
    %6429 = vmatpush1.bf16.msra.mxu0 0
    %6430 = vmatprep.subr.bf16.mxu0 0
    %6431 = vmatpush1.bf16.msra.mxu0 0
    %6432 = vmatprep.subr.bf16.mxu0 0
    %6433 = vmatpush1.bf16.msra.mxu0 0
    %6434 = vmatprep.subr.bf16.mxu0 0
    %6435 = vmatpush1.bf16.msra.mxu0 0
    %6436 = vmatprep.mubr.bf16.mxu0 0
    %6437 = vmatmul.mubr.bf16.gmra.mrb[0].mxu0 %v6399
    %v6438 = vpop.f32.mrb[0].mxu0
    %v6439 = vadd.f32 0.0, %v6438
    %v6440 = vpop.f32.mrb[0].mxu0
    %v6441 = vpop.f32.mrb[0].mxu0
    %v6442 = vpop.f32.mrb[0].mxu0
    %6443 = vdwg.mxu0
    %6444 = vrot.lane.b32.xlu0 %v5615, 80
    %v6445 = vpop.permute.xlu0 %6444
    %v6447 = vsel %vm446, %v6395, 0
    %v6450 = vsel %vm474, %v6445, 0
    %6452 = vmatprep.subr.bf16.mxu0 0
    %6453 = vmatpush1.bf16.msra.mxu0 %v6450
    %6454 = vmatprep.subr.bf16.mxu0 0
    %6455 = vmatpush1.bf16.msra.mxu0 0
    %6456 = vmatprep.subr.bf16.mxu0 0
    %6457 = vmatpush1.bf16.msra.mxu0 0
    %6458 = vmatprep.subr.bf16.mxu0 0
    %6459 = vmatpush1.bf16.msra.mxu0 0
    %6460 = vmatprep.subr.bf16.mxu0 0
    %6461 = vmatpush1.bf16.msra.mxu0 0
    %6462 = vmatprep.subr.bf16.mxu0 0
    %6463 = vmatpush1.bf16.msra.mxu0 0
    %6464 = vmatprep.subr.bf16.mxu0 0
    %6465 = vmatpush1.bf16.msra.mxu0 0
    %6466 = vmatprep.subr.bf16.mxu0 0
    %6467 = vmatpush1.bf16.msra.mxu0 0
    %6468 = vmatprep.subr.bf16.mxu0 0
    %6469 = vmatpush1.bf16.msra.mxu0 0
    %6470 = vmatprep.subr.bf16.mxu0 0
    %6471 = vmatpush1.bf16.msra.mxu0 0
    %6472 = vmatprep.subr.bf16.mxu0 0
    %6473 = vmatpush1.bf16.msra.mxu0 0
    %6474 = vmatprep.subr.bf16.mxu0 0
    %6475 = vmatpush1.bf16.msra.mxu0 0
    %6476 = vmatprep.subr.bf16.mxu0 0
    %6477 = vmatpush1.bf16.msra.mxu0 0
    %6478 = vmatprep.subr.bf16.mxu0 0
    %6479 = vmatpush1.bf16.msra.mxu0 0
    %6480 = vmatprep.subr.bf16.mxu0 0
    %6481 = vmatpush1.bf16.msra.mxu0 0
    %6482 = vmatprep.subr.bf16.mxu0 0
    %6483 = vmatpush1.bf16.msra.mxu0 0
    %6484 = vmatprep.mubr.bf16.mxu0 0
    %6485 = vmatmul.mubr.bf16.gmra.mrb[0].mxu0 %v6447
    %v6486 = vpop.f32.mrb[0].mxu0
    %v6487 = vadd.f32 0.0, %v6486
    %v6488 = vpop.f32.mrb[0].mxu0
    %v6489 = vpop.f32.mrb[0].mxu0
    %v6490 = vpop.f32.mrb[0].mxu0
    %6491 = vdwg.mxu0
    %6494 = vrot.lane.b32.xlu0 %v5998, 16
    %v6495 = vpop.permute.xlu0 %6494
    %6496 = vrot.lane.b32.xlu0 %v6047, 16
    %v6497 = vpop.permute.xlu0 %6496
    %6502 = vrot.lane.b32.xlu0 %v6219, 32
    %v6503 = vpop.permute.xlu0 %6502
    %6504 = vrot.lane.b32.xlu0 %v6267, 32
    %v6505 = vpop.permute.xlu0 %6504
    %6510 = vrot.lane.b32.xlu0 %v6439, 48
    %v6511 = vpop.permute.xlu0 %6510
    %6512 = vrot.lane.b32.xlu0 %v6487, 48
    %v6513 = vpop.permute.xlu0 %6512
    %v6516 = vsel %vm350, %v5779, %v6495
    %v6517 = vsel %vm350, %v5825, %v6497
    %v6518 = vsel %vm1252, %v6516, %v6503
    %v6519 = vsel %vm1252, %v6517, %v6505
    %v6520 = vsel %vm1255, %v6518, %v6511
    %v6521 = vsel %vm1255, %v6519, %v6513
    %v6522 = vpack.c.bf16 %v6521, %v6520
    %v6531 = vunpack.c.l.b16 %v5493
    %v6532 = vunpack.c.l.b16 %v5494
    %v6533 = vunpack.c.l.b16 %v5495
    %v6534 = vunpack.c.l.b16 %v5496
    %v6535 = vunpack.c.l.b16 %v5497
    %v6536 = vunpack.c.l.b16 %v5498
    %v6537 = vunpack.c.l.b16 %v5499
    %v6538 = vunpack.c.l.b16 %v5500
    %v6539 = vpack.c.b16 %v6532, %v6531
    %v6540 = vpack.c.b16 %v6534, %v6533
    %v6541 = vpack.c.b16 %v6536, %v6535
    %v6542 = vpack.c.b16 %v6538, %v6537
    %v6548 = vsel %vm232, %v6522, 0
    %6550 = vmatprep.subr.bf16.mxu0 0
    %6551 = vmatpush1.bf16.msra.mxu0 %v6539
    %6552 = vmatprep.subr.bf16.mxu0 0
    %6553 = vmatpush1.bf16.msra.mxu0 %v6540
    %6554 = vmatprep.subr.bf16.mxu0 0
    %6555 = vmatpush1.bf16.msra.mxu0 %v6541
    %6556 = vmatprep.subr.bf16.mxu0 0
    %6557 = vmatpush1.bf16.msra.mxu0 %v6542
    %6558 = vmatprep.subr.bf16.mxu0 0
    %6559 = vmatpush1.bf16.msra.mxu0 0
    %6560 = vmatprep.subr.bf16.mxu0 0
    %6561 = vmatpush1.bf16.msra.mxu0 0
    %6562 = vmatprep.subr.bf16.mxu0 0
    %6563 = vmatpush1.bf16.msra.mxu0 0
    %6564 = vmatprep.subr.bf16.mxu0 0
    %6565 = vmatpush1.bf16.msra.mxu0 0
    %6566 = vmatprep.subr.bf16.mxu0 0
    %6567 = vmatpush1.bf16.msra.mxu0 0
    %6568 = vmatprep.subr.bf16.mxu0 0
    %6569 = vmatpush1.bf16.msra.mxu0 0
    %6570 = vmatprep.subr.bf16.mxu0 0
    %6571 = vmatpush1.bf16.msra.mxu0 0
    %6572 = vmatprep.subr.bf16.mxu0 0
    %6573 = vmatpush1.bf16.msra.mxu0 0
    %6574 = vmatprep.subr.bf16.mxu0 0
    %6575 = vmatpush1.bf16.msra.mxu0 0
    %6576 = vmatprep.subr.bf16.mxu0 0
    %6577 = vmatpush1.bf16.msra.mxu0 0
    %6578 = vmatprep.subr.bf16.mxu0 0
    %6579 = vmatpush1.bf16.msra.mxu0 0
    %6580 = vmatprep.subr.bf16.mxu0 0
    %6581 = vmatpush1.bf16.msra.mxu0 0
    %6582 = vmatprep.mubr.bf16.mxu0 0
    %6583 = vmatmul.mubr.bf16.gmra.mrb[0].mxu0 %v6548
    %v6584 = vpop.f32.mrb[0].mxu0
    %v6585 = vadd.f32 0.0, %v6584
    %v6586 = vpop.f32.mrb[0].mxu0
    %v6587 = vpop.f32.mrb[0].mxu0
    %v6588 = vadd.f32 0.0, %v6587
    %v6589 = vpop.f32.mrb[0].mxu0
    %6590 = vdwg.mxu0
    %v6591 = vadd.f32 %v5479, %v6585
    %v6592 = vadd.f32 %v5480, %v6588
    %s6593 = scalar_lea.vmem %s15, 1
    %v6594 = vld [vmem:[%s6593] sm:$0x1]
    %s6595 = scalar_lea.vmem %s16, 32
    %v6596 = vld [vmem:[%s6595] sm:$0xf]
    %v6597 = vld [vmem:[%s6595 + $0x4] sm:$0xf]
    %v6598 = vld [vmem:[%s6595 + $0x8] sm:$0xf]
    %v6599 = vld [vmem:[%s6595 + $0xc] sm:$0xf]
    %v6600 = vld [vmem:[%s6595 + $0x10] sm:$0xf]
    %v6601 = vld [vmem:[%s6595 + $0x14] sm:$0xf]
    %v6602 = vld [vmem:[%s6595 + $0x18] sm:$0xf]
    %v6603 = vld [vmem:[%s6595 + $0x1c] sm:$0xf]
    %s6604 = scalar_lea.vmem %s17, 32
    %v6605 = vld [vmem:[%s6604] sm:$0xf]
    %v6606 = vld [vmem:[%s6604 + $0x4] sm:$0xf]
    %v6607 = vld [vmem:[%s6604 + $0x8] sm:$0xf]
    %v6608 = vld [vmem:[%s6604 + $0xc] sm:$0xf]
    %v6609 = vld [vmem:[%s6604 + $0x10] sm:$0xf]
    %v6610 = vld [vmem:[%s6604 + $0x14] sm:$0xf]
    %v6611 = vld [vmem:[%s6604 + $0x18] sm:$0xf]
    %v6612 = vld [vmem:[%s6604 + $0x1c] sm:$0xf]
    %s6613 = scalar_lea.vmem %s18, 32
    %v6614 = vld [vmem:[%s6613] sm:$0xf]
    %v6615 = vld [vmem:[%s6613 + $0x4] sm:$0xf]
    %v6616 = vld [vmem:[%s6613 + $0x8] sm:$0xf]
    %v6617 = vld [vmem:[%s6613 + $0xc] sm:$0xf]
    %v6618 = vld [vmem:[%s6613 + $0x10] sm:$0xf]
    %v6619 = vld [vmem:[%s6613 + $0x14] sm:$0xf]
    %v6620 = vld [vmem:[%s6613 + $0x18] sm:$0xf]
    %v6621 = vld [vmem:[%s6613 + $0x1c] sm:$0xf]
    %v6622 = vmul.f32 %v6591, %v6591
    %v6623 = vmul.f32 %v6592, %v6592
    %v6624 = vsel %vm232, %v6622, 0.0
    %6625 = vadd.xlane.f32.xlu0 %v6624
    %v6626 = vpop.xlane.xlu0 %6625
    %v6627 = vsel %vm232, %v6623, 0.0
    %6628 = vadd.xlane.f32.xlu0 %v6627
    %v6629 = vpop.xlane.xlu0 %6628
    %v6630 = vmul.f32 %v6626, %v239
    %v6631 = vmul.f32 %v6629, %v239
    %v6632 = vadd.f32 %v6630, 1e-06
    %v6633 = vadd.f32 %v6631, 1e-06
    %v6634 = vrsqrt.pop %v6632
    %v6635 = vrsqrt.pop %v6633
    %v6636 = vmul.f32 %v6591, %v6634
    %v6637 = vmul.f32 %v6592, %v6635
    %v6639 = vlaneseq
    %v6640 = vshrl.u32 %v6639, 7
    %v6641 = vsub.s32 0, %v6640
    %v6642 = vrot.slane %v6594, %v6641
    %v6644 = vmul.f32 %v6636, %v6642
    %v6645 = vmul.f32 %v6637, %v6642
    %v6646 = vpack.c.bf16 %v6645, %v6644
    %v6655 = vunpack.c.l.b16 %v6596
    %v6656 = vunpack.c.l.b16 %v6597
    %v6657 = vunpack.c.l.b16 %v6598
    %v6658 = vunpack.c.l.b16 %v6599
    %v6659 = vunpack.c.l.b16 %v6600
    %v6660 = vunpack.c.l.b16 %v6601
    %v6661 = vunpack.c.l.b16 %v6602
    %v6662 = vunpack.c.l.b16 %v6603
    %v6663 = vpack.c.b16 %v6656, %v6655
    %v6664 = vpack.c.b16 %v6658, %v6657
    %v6665 = vpack.c.b16 %v6660, %v6659
    %v6666 = vpack.c.b16 %v6662, %v6661
    %v6672 = vsel %vm232, %v6646, 0
    %6674 = vmatprep.subr.bf16.mxu0 0
    %6675 = vmatpush1.bf16.msra.mxu0 %v6663
    %6676 = vmatprep.subr.bf16.mxu0 0
    %6677 = vmatpush1.bf16.msra.mxu0 %v6664
    %6678 = vmatprep.subr.bf16.mxu0 0
    %6679 = vmatpush1.bf16.msra.mxu0 %v6665
    %6680 = vmatprep.subr.bf16.mxu0 0
    %6681 = vmatpush1.bf16.msra.mxu0 %v6666
    %6682 = vmatprep.subr.bf16.mxu0 0
    %6683 = vmatpush1.bf16.msra.mxu0 0
    %6684 = vmatprep.subr.bf16.mxu0 0
    %6685 = vmatpush1.bf16.msra.mxu0 0
    %6686 = vmatprep.subr.bf16.mxu0 0
    %6687 = vmatpush1.bf16.msra.mxu0 0
    %6688 = vmatprep.subr.bf16.mxu0 0
    %6689 = vmatpush1.bf16.msra.mxu0 0
    %6690 = vmatprep.subr.bf16.mxu0 0
    %6691 = vmatpush1.bf16.msra.mxu0 0
    %6692 = vmatprep.subr.bf16.mxu0 0
    %6693 = vmatpush1.bf16.msra.mxu0 0
    %6694 = vmatprep.subr.bf16.mxu0 0
    %6695 = vmatpush1.bf16.msra.mxu0 0
    %6696 = vmatprep.subr.bf16.mxu0 0
    %6697 = vmatpush1.bf16.msra.mxu0 0
    %6698 = vmatprep.subr.bf16.mxu0 0
    %6699 = vmatpush1.bf16.msra.mxu0 0
    %6700 = vmatprep.subr.bf16.mxu0 0
    %6701 = vmatpush1.bf16.msra.mxu0 0
    %6702 = vmatprep.subr.bf16.mxu0 0
    %6703 = vmatpush1.bf16.msra.mxu0 0
    %6704 = vmatprep.subr.bf16.mxu0 0
    %6705 = vmatpush1.bf16.msra.mxu0 0
    %6706 = vmatprep.mubr.bf16.mxu0 0
    %6707 = vmatmul.mubr.bf16.gmra.mrb[0].mxu0 %v6672
    %v6708 = vpop.f32.mrb[0].mxu0
    %v6709 = vadd.f32 0.0, %v6708
    %v6710 = vpop.f32.mrb[0].mxu0
    %v6711 = vpop.f32.mrb[0].mxu0
    %v6712 = vadd.f32 0.0, %v6711
    %v6713 = vpop.f32.mrb[0].mxu0
    %6714 = vdwg.mxu0
    %v6723 = vunpack.c.l.b16 %v6605
    %v6724 = vunpack.c.l.b16 %v6606
    %v6725 = vunpack.c.l.b16 %v6607
    %v6726 = vunpack.c.l.b16 %v6608
    %v6727 = vunpack.c.l.b16 %v6609
    %v6728 = vunpack.c.l.b16 %v6610
    %v6729 = vunpack.c.l.b16 %v6611
    %v6730 = vunpack.c.l.b16 %v6612
    %v6731 = vpack.c.b16 %v6724, %v6723
    %v6732 = vpack.c.b16 %v6726, %v6725
    %v6733 = vpack.c.b16 %v6728, %v6727
    %v6734 = vpack.c.b16 %v6730, %v6729
    %6739 = vmatprep.subr.bf16.mxu0 0
    %6740 = vmatpush1.bf16.msra.mxu0 %v6731
    %6741 = vmatprep.subr.bf16.mxu0 0
    %6742 = vmatpush1.bf16.msra.mxu0 %v6732
    %6743 = vmatprep.subr.bf16.mxu0 0
    %6744 = vmatpush1.bf16.msra.mxu0 %v6733
    %6745 = vmatprep.subr.bf16.mxu0 0
    %6746 = vmatpush1.bf16.msra.mxu0 %v6734
    %6747 = vmatprep.subr.bf16.mxu0 0
    %6748 = vmatpush1.bf16.msra.mxu0 0
    %6749 = vmatprep.subr.bf16.mxu0 0
    %6750 = vmatpush1.bf16.msra.mxu0 0
    %6751 = vmatprep.subr.bf16.mxu0 0
    %6752 = vmatpush1.bf16.msra.mxu0 0
    %6753 = vmatprep.subr.bf16.mxu0 0
    %6754 = vmatpush1.bf16.msra.mxu0 0
    %6755 = vmatprep.subr.bf16.mxu0 0
    %6756 = vmatpush1.bf16.msra.mxu0 0
    %6757 = vmatprep.subr.bf16.mxu0 0
    %6758 = vmatpush1.bf16.msra.mxu0 0
    %6759 = vmatprep.subr.bf16.mxu0 0
    %6760 = vmatpush1.bf16.msra.mxu0 0
    %6761 = vmatprep.subr.bf16.mxu0 0
    %6762 = vmatpush1.bf16.msra.mxu0 0
    %6763 = vmatprep.subr.bf16.mxu0 0
    %6764 = vmatpush1.bf16.msra.mxu0 0
    %6765 = vmatprep.subr.bf16.mxu0 0
    %6766 = vmatpush1.bf16.msra.mxu0 0
    %6767 = vmatprep.subr.bf16.mxu0 0
    %6768 = vmatpush1.bf16.msra.mxu0 0
    %6769 = vmatprep.subr.bf16.mxu0 0
    %6770 = vmatpush1.bf16.msra.mxu0 0
    %6771 = vmatprep.mubr.bf16.mxu0 0
    %6772 = vmatmul.mubr.bf16.gmra.mrb[0].mxu0 %v4245
    %v6773 = vpop.f32.mrb[0].mxu0
    %v6774 = vadd.f32 0.0, %v6773
    %v6775 = vpop.f32.mrb[0].mxu0
    %v6776 = vpop.f32.mrb[0].mxu0
    %v6777 = vadd.f32 0.0, %v6776
    %v6778 = vpop.f32.mrb[0].mxu0
    %6779 = vdwg.mxu0
    %v6780 = vpack.c.bf16 %v6709, %v6709
    %v6781 = vpack.c.bf16 %v6712, %v6712
    %v6782 = vpack.c.bf16 %v6774, %v6774
    %v6783 = vpack.c.bf16 %v6777, %v6777
    %v6785 = vsel %vm350, %v6780, 0
    %v6788 = vsel %vm350, %v6782, 0
    %6790 = vmatprep.subr.bf16.mxu0 0
    %6791 = vmatpush1.bf16.xpose.msra.mxu0 %v6788
    %6792 = vmatprep.subr.bf16.mxu0 0
    %6793 = vmatpush1.bf16.xpose.msra.mxu0 0
    %6794 = vmatprep.subr.bf16.mxu0 0
    %6795 = vmatpush1.bf16.xpose.msra.mxu0 0
    %6796 = vmatprep.subr.bf16.mxu0 0
    %6797 = vmatpush1.bf16.xpose.msra.mxu0 0
    %6798 = vmatprep.subr.bf16.mxu0 0
    %6799 = vmatpush1.bf16.xpose.msra.mxu0 0
    %6800 = vmatprep.subr.bf16.mxu0 0
    %6801 = vmatpush1.bf16.xpose.msra.mxu0 0
    %6802 = vmatprep.subr.bf16.mxu0 0
    %6803 = vmatpush1.bf16.xpose.msra.mxu0 0
    %6804 = vmatprep.subr.bf16.mxu0 0
    %6805 = vmatpush1.bf16.xpose.msra.mxu0 0
    %6806 = vmatprep.subr.bf16.mxu0 0
    %6807 = vmatpush1.bf16.xpose.msra.mxu0 0
    %6808 = vmatprep.subr.bf16.mxu0 0
    %6809 = vmatpush1.bf16.xpose.msra.mxu0 0
    %6810 = vmatprep.subr.bf16.mxu0 0
    %6811 = vmatpush1.bf16.xpose.msra.mxu0 0
    %6812 = vmatprep.subr.bf16.mxu0 0
    %6813 = vmatpush1.bf16.xpose.msra.mxu0 0
    %6814 = vmatprep.subr.bf16.mxu0 0
    %6815 = vmatpush1.bf16.xpose.msra.mxu0 0
    %6816 = vmatprep.subr.bf16.mxu0 0
    %6817 = vmatpush1.bf16.xpose.msra.mxu0 0
    %6818 = vmatprep.subr.bf16.mxu0 0
    %6819 = vmatpush1.bf16.xpose.msra.mxu0 0
    %6820 = vmatprep.subr.bf16.mxu0 0
    %6821 = vmatpush1.bf16.xpose.msra.mxu0 0
    %6822 = vmatprep.mubr.bf16.mxu0 0
    %6823 = vmatmul.mubr.bf16.gmra.mrb[0].mxu0 %v6785
    %v6824 = vpop.f32.mrb[0].mxu0
    %v6825 = vadd.f32 0.0, %v6824
    %v6826 = vpop.f32.mrb[0].mxu0
    %v6827 = vpop.f32.mrb[0].mxu0
    %v6828 = vpop.f32.mrb[0].mxu0
    %6829 = vdwg.mxu0
    %v6831 = vsel %vm350, %v6781, 0
    %v6834 = vsel %vm350, %v6783, 0
    %6836 = vmatprep.subr.bf16.mxu0 0
    %6837 = vmatpush1.bf16.xpose.msra.mxu0 %v6834
    %6838 = vmatprep.subr.bf16.mxu0 0
    %6839 = vmatpush1.bf16.xpose.msra.mxu0 0
    %6840 = vmatprep.subr.bf16.mxu0 0
    %6841 = vmatpush1.bf16.xpose.msra.mxu0 0
    %6842 = vmatprep.subr.bf16.mxu0 0
    %6843 = vmatpush1.bf16.xpose.msra.mxu0 0
    %6844 = vmatprep.subr.bf16.mxu0 0
    %6845 = vmatpush1.bf16.xpose.msra.mxu0 0
    %6846 = vmatprep.subr.bf16.mxu0 0
    %6847 = vmatpush1.bf16.xpose.msra.mxu0 0
    %6848 = vmatprep.subr.bf16.mxu0 0
    %6849 = vmatpush1.bf16.xpose.msra.mxu0 0
    %6850 = vmatprep.subr.bf16.mxu0 0
    %6851 = vmatpush1.bf16.xpose.msra.mxu0 0
    %6852 = vmatprep.subr.bf16.mxu0 0
    %6853 = vmatpush1.bf16.xpose.msra.mxu0 0
    %6854 = vmatprep.subr.bf16.mxu0 0
    %6855 = vmatpush1.bf16.xpose.msra.mxu0 0
    %6856 = vmatprep.subr.bf16.mxu0 0
    %6857 = vmatpush1.bf16.xpose.msra.mxu0 0
    %6858 = vmatprep.subr.bf16.mxu0 0
    %6859 = vmatpush1.bf16.xpose.msra.mxu0 0
    %6860 = vmatprep.subr.bf16.mxu0 0
    %6861 = vmatpush1.bf16.xpose.msra.mxu0 0
    %6862 = vmatprep.subr.bf16.mxu0 0
    %6863 = vmatpush1.bf16.xpose.msra.mxu0 0
    %6864 = vmatprep.subr.bf16.mxu0 0
    %6865 = vmatpush1.bf16.xpose.msra.mxu0 0
    %6866 = vmatprep.subr.bf16.mxu0 0
    %6867 = vmatpush1.bf16.xpose.msra.mxu0 0
    %6868 = vmatprep.mubr.bf16.mxu0 0
    %6869 = vmatmul.mubr.bf16.gmra.mrb[0].mxu0 %v6831
    %v6870 = vpop.f32.mrb[0].mxu0
    %v6871 = vadd.f32 0.0, %v6870
    %v6872 = vpop.f32.mrb[0].mxu0
    %v6873 = vpop.f32.mrb[0].mxu0
    %v6874 = vpop.f32.mrb[0].mxu0
    %6875 = vdwg.mxu0
    %v6876 = vsel %vm446, %v6825, -inf
    %6877 = vmax.xlane.f32.xlu0 %v6876
    %v6878 = vpop.xlane.xlu0 %6877
    %v6879 = vsel %vm446, %v6871, -inf
    %6880 = vmax.xlane.f32.xlu0 %v6879
    %v6881 = vpop.xlane.xlu0 %6880
    %v6882 = vsub.f32 %v6825, %v6878
    %v6883 = vsub.f32 %v6871, %v6881
    %v6884 = vmul.f32 %v6882, 1.442695
    %v6885 = vpow.pop %v6884
    %v6886 = vmul.f32 %v6883, 1.442695
    %v6887 = vpow.pop %v6886
    %v6888 = vsel %vm446, %v6885, 0.0
    %6889 = vadd.xlane.f32.xlu0 %v6888
    %v6890 = vpop.xlane.xlu0 %6889
    %v6891 = vsel %vm446, %v6887, 0.0
    %6892 = vadd.xlane.f32.xlu0 %v6891
    %v6893 = vpop.xlane.xlu0 %6892
    %v6894 = vrcp.pop %v6890
    %v6895 = vrcp.pop %v6893
    %v6896 = vmul.f32 %v6885, %v6894
    %v6897 = vmul.f32 %v6887, %v6895
    %v6898 = vpack.c.bf16 %v6896, %v6896
    %v6899 = vpack.c.bf16 %v6897, %v6897
    %6901 = vrot.lane.b32.xlu0 %v6782, 64
    %v6902 = vpop.permute.xlu0 %6901
    %v6904 = vsel %vm446, %v6898, 0
    %v6907 = vsel %vm474, %v6902, 0
    %6909 = vmatprep.subr.bf16.mxu0 0
    %6910 = vmatpush1.bf16.msra.mxu0 %v6907
    %6911 = vmatprep.subr.bf16.mxu0 0
    %6912 = vmatpush1.bf16.msra.mxu0 0
    %6913 = vmatprep.subr.bf16.mxu0 0
    %6914 = vmatpush1.bf16.msra.mxu0 0
    %6915 = vmatprep.subr.bf16.mxu0 0
    %6916 = vmatpush1.bf16.msra.mxu0 0
    %6917 = vmatprep.subr.bf16.mxu0 0
    %6918 = vmatpush1.bf16.msra.mxu0 0
    %6919 = vmatprep.subr.bf16.mxu0 0
    %6920 = vmatpush1.bf16.msra.mxu0 0
    %6921 = vmatprep.subr.bf16.mxu0 0
    %6922 = vmatpush1.bf16.msra.mxu0 0
    %6923 = vmatprep.subr.bf16.mxu0 0
    %6924 = vmatpush1.bf16.msra.mxu0 0
    %6925 = vmatprep.subr.bf16.mxu0 0
    %6926 = vmatpush1.bf16.msra.mxu0 0
    %6927 = vmatprep.subr.bf16.mxu0 0
    %6928 = vmatpush1.bf16.msra.mxu0 0
    %6929 = vmatprep.subr.bf16.mxu0 0
    %6930 = vmatpush1.bf16.msra.mxu0 0
    %6931 = vmatprep.subr.bf16.mxu0 0
    %6932 = vmatpush1.bf16.msra.mxu0 0
    %6933 = vmatprep.subr.bf16.mxu0 0
    %6934 = vmatpush1.bf16.msra.mxu0 0
    %6935 = vmatprep.subr.bf16.mxu0 0
    %6936 = vmatpush1.bf16.msra.mxu0 0
    %6937 = vmatprep.subr.bf16.mxu0 0
    %6938 = vmatpush1.bf16.msra.mxu0 0
    %6939 = vmatprep.subr.bf16.mxu0 0
    %6940 = vmatpush1.bf16.msra.mxu0 0
    %6941 = vmatprep.mubr.bf16.mxu0 0
    %6942 = vmatmul.mubr.bf16.gmra.mrb[0].mxu0 %v6904
    %v6943 = vpop.f32.mrb[0].mxu0
    %v6944 = vadd.f32 0.0, %v6943
    %v6945 = vpop.f32.mrb[0].mxu0
    %v6946 = vpop.f32.mrb[0].mxu0
    %v6947 = vpop.f32.mrb[0].mxu0
    %6948 = vdwg.mxu0
    %6950 = vrot.lane.b32.xlu0 %v6783, 64
    %v6951 = vpop.permute.xlu0 %6950
    %v6953 = vsel %vm446, %v6899, 0
    %v6956 = vsel %vm474, %v6951, 0
    %6958 = vmatprep.subr.bf16.mxu0 0
    %6959 = vmatpush1.bf16.msra.mxu0 %v6956
    %6960 = vmatprep.subr.bf16.mxu0 0
    %6961 = vmatpush1.bf16.msra.mxu0 0
    %6962 = vmatprep.subr.bf16.mxu0 0
    %6963 = vmatpush1.bf16.msra.mxu0 0
    %6964 = vmatprep.subr.bf16.mxu0 0
    %6965 = vmatpush1.bf16.msra.mxu0 0
    %6966 = vmatprep.subr.bf16.mxu0 0
    %6967 = vmatpush1.bf16.msra.mxu0 0
    %6968 = vmatprep.subr.bf16.mxu0 0
    %6969 = vmatpush1.bf16.msra.mxu0 0
    %6970 = vmatprep.subr.bf16.mxu0 0
    %6971 = vmatpush1.bf16.msra.mxu0 0
    %6972 = vmatprep.subr.bf16.mxu0 0
    %6973 = vmatpush1.bf16.msra.mxu0 0
    %6974 = vmatprep.subr.bf16.mxu0 0
    %6975 = vmatpush1.bf16.msra.mxu0 0
    %6976 = vmatprep.subr.bf16.mxu0 0
    %6977 = vmatpush1.bf16.msra.mxu0 0
    %6978 = vmatprep.subr.bf16.mxu0 0
    %6979 = vmatpush1.bf16.msra.mxu0 0
    %6980 = vmatprep.subr.bf16.mxu0 0
    %6981 = vmatpush1.bf16.msra.mxu0 0
    %6982 = vmatprep.subr.bf16.mxu0 0
    %6983 = vmatpush1.bf16.msra.mxu0 0
    %6984 = vmatprep.subr.bf16.mxu0 0
    %6985 = vmatpush1.bf16.msra.mxu0 0
    %6986 = vmatprep.subr.bf16.mxu0 0
    %6987 = vmatpush1.bf16.msra.mxu0 0
    %6988 = vmatprep.subr.bf16.mxu0 0
    %6989 = vmatpush1.bf16.msra.mxu0 0
    %6990 = vmatprep.mubr.bf16.mxu0 0
    %6991 = vmatmul.mubr.bf16.gmra.mrb[0].mxu0 %v6953
    %v6992 = vpop.f32.mrb[0].mxu0
    %v6993 = vadd.f32 0.0, %v6992
    %v6994 = vpop.f32.mrb[0].mxu0
    %v6995 = vpop.f32.mrb[0].mxu0
    %v6996 = vpop.f32.mrb[0].mxu0
    %6997 = vdwg.mxu0
    %6999 = vrot.lane.b32.xlu0 %v6780, 112
    %v7000 = vpop.permute.xlu0 %6999
    %7001 = vrot.lane.b32.xlu0 %v6782, 112
    %v7002 = vpop.permute.xlu0 %7001
    %v7004 = vsel %vm350, %v7000, 0
    %v7007 = vsel %vm350, %v7002, 0
    %7009 = vmatprep.subr.bf16.mxu0 0
    %7010 = vmatpush1.bf16.xpose.msra.mxu0 %v7007
    %7011 = vmatprep.subr.bf16.mxu0 0
    %7012 = vmatpush1.bf16.xpose.msra.mxu0 0
    %7013 = vmatprep.subr.bf16.mxu0 0
    %7014 = vmatpush1.bf16.xpose.msra.mxu0 0
    %7015 = vmatprep.subr.bf16.mxu0 0
    %7016 = vmatpush1.bf16.xpose.msra.mxu0 0
    %7017 = vmatprep.subr.bf16.mxu0 0
    %7018 = vmatpush1.bf16.xpose.msra.mxu0 0
    %7019 = vmatprep.subr.bf16.mxu0 0
    %7020 = vmatpush1.bf16.xpose.msra.mxu0 0
    %7021 = vmatprep.subr.bf16.mxu0 0
    %7022 = vmatpush1.bf16.xpose.msra.mxu0 0
    %7023 = vmatprep.subr.bf16.mxu0 0
    %7024 = vmatpush1.bf16.xpose.msra.mxu0 0
    %7025 = vmatprep.subr.bf16.mxu0 0
    %7026 = vmatpush1.bf16.xpose.msra.mxu0 0
    %7027 = vmatprep.subr.bf16.mxu0 0
    %7028 = vmatpush1.bf16.xpose.msra.mxu0 0
    %7029 = vmatprep.subr.bf16.mxu0 0
    %7030 = vmatpush1.bf16.xpose.msra.mxu0 0
    %7031 = vmatprep.subr.bf16.mxu0 0
    %7032 = vmatpush1.bf16.xpose.msra.mxu0 0
    %7033 = vmatprep.subr.bf16.mxu0 0
    %7034 = vmatpush1.bf16.xpose.msra.mxu0 0
    %7035 = vmatprep.subr.bf16.mxu0 0
    %7036 = vmatpush1.bf16.xpose.msra.mxu0 0
    %7037 = vmatprep.subr.bf16.mxu0 0
    %7038 = vmatpush1.bf16.xpose.msra.mxu0 0
    %7039 = vmatprep.subr.bf16.mxu0 0
    %7040 = vmatpush1.bf16.xpose.msra.mxu0 0
    %7041 = vmatprep.mubr.bf16.mxu0 0
    %7042 = vmatmul.mubr.bf16.gmra.mrb[0].mxu0 %v7004
    %v7043 = vpop.f32.mrb[0].mxu0
    %v7044 = vadd.f32 0.0, %v7043
    %v7045 = vpop.f32.mrb[0].mxu0
    %v7046 = vpop.f32.mrb[0].mxu0
    %v7047 = vpop.f32.mrb[0].mxu0
    %7048 = vdwg.mxu0
    %7050 = vrot.lane.b32.xlu0 %v6781, 112
    %v7051 = vpop.permute.xlu0 %7050
    %7052 = vrot.lane.b32.xlu0 %v6783, 112
    %v7053 = vpop.permute.xlu0 %7052
    %v7055 = vsel %vm350, %v7051, 0
    %v7058 = vsel %vm350, %v7053, 0
    %7060 = vmatprep.subr.bf16.mxu0 0
    %7061 = vmatpush1.bf16.xpose.msra.mxu0 %v7058
    %7062 = vmatprep.subr.bf16.mxu0 0
    %7063 = vmatpush1.bf16.xpose.msra.mxu0 0
    %7064 = vmatprep.subr.bf16.mxu0 0
    %7065 = vmatpush1.bf16.xpose.msra.mxu0 0
    %7066 = vmatprep.subr.bf16.mxu0 0
    %7067 = vmatpush1.bf16.xpose.msra.mxu0 0
    %7068 = vmatprep.subr.bf16.mxu0 0
    %7069 = vmatpush1.bf16.xpose.msra.mxu0 0
    %7070 = vmatprep.subr.bf16.mxu0 0
    %7071 = vmatpush1.bf16.xpose.msra.mxu0 0
    %7072 = vmatprep.subr.bf16.mxu0 0
    %7073 = vmatpush1.bf16.xpose.msra.mxu0 0
    %7074 = vmatprep.subr.bf16.mxu0 0
    %7075 = vmatpush1.bf16.xpose.msra.mxu0 0
    %7076 = vmatprep.subr.bf16.mxu0 0
    %7077 = vmatpush1.bf16.xpose.msra.mxu0 0
    %7078 = vmatprep.subr.bf16.mxu0 0
    %7079 = vmatpush1.bf16.xpose.msra.mxu0 0
    %7080 = vmatprep.subr.bf16.mxu0 0
    %7081 = vmatpush1.bf16.xpose.msra.mxu0 0
    %7082 = vmatprep.subr.bf16.mxu0 0
    %7083 = vmatpush1.bf16.xpose.msra.mxu0 0
    %7084 = vmatprep.subr.bf16.mxu0 0
    %7085 = vmatpush1.bf16.xpose.msra.mxu0 0
    %7086 = vmatprep.subr.bf16.mxu0 0
    %7087 = vmatpush1.bf16.xpose.msra.mxu0 0
    %7088 = vmatprep.subr.bf16.mxu0 0
    %7089 = vmatpush1.bf16.xpose.msra.mxu0 0
    %7090 = vmatprep.subr.bf16.mxu0 0
    %7091 = vmatpush1.bf16.xpose.msra.mxu0 0
    %7092 = vmatprep.mubr.bf16.mxu0 0
    %7093 = vmatmul.mubr.bf16.gmra.mrb[0].mxu0 %v7055
    %v7094 = vpop.f32.mrb[0].mxu0
    %v7095 = vadd.f32 0.0, %v7094
    %v7096 = vpop.f32.mrb[0].mxu0
    %v7097 = vpop.f32.mrb[0].mxu0
    %v7098 = vpop.f32.mrb[0].mxu0
    %7099 = vdwg.mxu0
    %v7100 = vsel %vm446, %v7044, -inf
    %7101 = vmax.xlane.f32.xlu0 %v7100
    %v7102 = vpop.xlane.xlu0 %7101
    %v7103 = vsel %vm446, %v7095, -inf
    %7104 = vmax.xlane.f32.xlu0 %v7103
    %v7105 = vpop.xlane.xlu0 %7104
    %v7106 = vsub.f32 %v7044, %v7102
    %v7107 = vsub.f32 %v7095, %v7105
    %v7108 = vmul.f32 %v7106, 1.442695
    %v7109 = vpow.pop %v7108
    %v7110 = vmul.f32 %v7107, 1.442695
    %v7111 = vpow.pop %v7110
    %v7112 = vsel %vm446, %v7109, 0.0
    %7113 = vadd.xlane.f32.xlu0 %v7112
    %v7114 = vpop.xlane.xlu0 %7113
    %v7115 = vsel %vm446, %v7111, 0.0
    %7116 = vadd.xlane.f32.xlu0 %v7115
    %v7117 = vpop.xlane.xlu0 %7116
    %v7118 = vrcp.pop %v7114
    %v7119 = vrcp.pop %v7117
    %v7120 = vmul.f32 %v7109, %v7118
    %v7121 = vmul.f32 %v7111, %v7119
    %v7122 = vpack.c.bf16 %v7120, %v7120
    %v7123 = vpack.c.bf16 %v7121, %v7121
    %7124 = vrot.lane.b32.xlu0 %v6782, 48
    %v7125 = vpop.permute.xlu0 %7124
    %v7127 = vsel %vm446, %v7122, 0
    %v7130 = vsel %vm474, %v7125, 0
    %7132 = vmatprep.subr.bf16.mxu0 0
    %7133 = vmatpush1.bf16.msra.mxu0 %v7130
    %7134 = vmatprep.subr.bf16.mxu0 0
    %7135 = vmatpush1.bf16.msra.mxu0 0
    %7136 = vmatprep.subr.bf16.mxu0 0
    %7137 = vmatpush1.bf16.msra.mxu0 0
    %7138 = vmatprep.subr.bf16.mxu0 0
    %7139 = vmatpush1.bf16.msra.mxu0 0
    %7140 = vmatprep.subr.bf16.mxu0 0
    %7141 = vmatpush1.bf16.msra.mxu0 0
    %7142 = vmatprep.subr.bf16.mxu0 0
    %7143 = vmatpush1.bf16.msra.mxu0 0
    %7144 = vmatprep.subr.bf16.mxu0 0
    %7145 = vmatpush1.bf16.msra.mxu0 0
    %7146 = vmatprep.subr.bf16.mxu0 0
    %7147 = vmatpush1.bf16.msra.mxu0 0
    %7148 = vmatprep.subr.bf16.mxu0 0
    %7149 = vmatpush1.bf16.msra.mxu0 0
    %7150 = vmatprep.subr.bf16.mxu0 0
    %7151 = vmatpush1.bf16.msra.mxu0 0
    %7152 = vmatprep.subr.bf16.mxu0 0
    %7153 = vmatpush1.bf16.msra.mxu0 0
    %7154 = vmatprep.subr.bf16.mxu0 0
    %7155 = vmatpush1.bf16.msra.mxu0 0
    %7156 = vmatprep.subr.bf16.mxu0 0
    %7157 = vmatpush1.bf16.msra.mxu0 0
    %7158 = vmatprep.subr.bf16.mxu0 0
    %7159 = vmatpush1.bf16.msra.mxu0 0
    %7160 = vmatprep.subr.bf16.mxu0 0
    %7161 = vmatpush1.bf16.msra.mxu0 0
    %7162 = vmatprep.subr.bf16.mxu0 0
    %7163 = vmatpush1.bf16.msra.mxu0 0
    %7164 = vmatprep.mubr.bf16.mxu0 0
    %7165 = vmatmul.mubr.bf16.gmra.mrb[0].mxu0 %v7127
    %v7166 = vpop.f32.mrb[0].mxu0
    %v7167 = vadd.f32 0.0, %v7166
    %v7168 = vpop.f32.mrb[0].mxu0
    %v7169 = vpop.f32.mrb[0].mxu0
    %v7170 = vpop.f32.mrb[0].mxu0
    %7171 = vdwg.mxu0
    %7172 = vrot.lane.b32.xlu0 %v6783, 48
    %v7173 = vpop.permute.xlu0 %7172
    %v7175 = vsel %vm446, %v7123, 0
    %v7178 = vsel %vm474, %v7173, 0
    %7180 = vmatprep.subr.bf16.mxu0 0
    %7181 = vmatpush1.bf16.msra.mxu0 %v7178
    %7182 = vmatprep.subr.bf16.mxu0 0
    %7183 = vmatpush1.bf16.msra.mxu0 0
    %7184 = vmatprep.subr.bf16.mxu0 0
    %7185 = vmatpush1.bf16.msra.mxu0 0
    %7186 = vmatprep.subr.bf16.mxu0 0
    %7187 = vmatpush1.bf16.msra.mxu0 0
    %7188 = vmatprep.subr.bf16.mxu0 0
    %7189 = vmatpush1.bf16.msra.mxu0 0
    %7190 = vmatprep.subr.bf16.mxu0 0
    %7191 = vmatpush1.bf16.msra.mxu0 0
    %7192 = vmatprep.subr.bf16.mxu0 0
    %7193 = vmatpush1.bf16.msra.mxu0 0
    %7194 = vmatprep.subr.bf16.mxu0 0
    %7195 = vmatpush1.bf16.msra.mxu0 0
    %7196 = vmatprep.subr.bf16.mxu0 0
    %7197 = vmatpush1.bf16.msra.mxu0 0
    %7198 = vmatprep.subr.bf16.mxu0 0
    %7199 = vmatpush1.bf16.msra.mxu0 0
    %7200 = vmatprep.subr.bf16.mxu0 0
    %7201 = vmatpush1.bf16.msra.mxu0 0
    %7202 = vmatprep.subr.bf16.mxu0 0
    %7203 = vmatpush1.bf16.msra.mxu0 0
    %7204 = vmatprep.subr.bf16.mxu0 0
    %7205 = vmatpush1.bf16.msra.mxu0 0
    %7206 = vmatprep.subr.bf16.mxu0 0
    %7207 = vmatpush1.bf16.msra.mxu0 0
    %7208 = vmatprep.subr.bf16.mxu0 0
    %7209 = vmatpush1.bf16.msra.mxu0 0
    %7210 = vmatprep.subr.bf16.mxu0 0
    %7211 = vmatpush1.bf16.msra.mxu0 0
    %7212 = vmatprep.mubr.bf16.mxu0 0
    %7213 = vmatmul.mubr.bf16.gmra.mrb[0].mxu0 %v7175
    %v7214 = vpop.f32.mrb[0].mxu0
    %v7215 = vadd.f32 0.0, %v7214
    %v7216 = vpop.f32.mrb[0].mxu0
    %v7217 = vpop.f32.mrb[0].mxu0
    %v7218 = vpop.f32.mrb[0].mxu0
    %7219 = vdwg.mxu0
    %7220 = vrot.lane.b32.xlu0 %v6780, 96
    %v7221 = vpop.permute.xlu0 %7220
    %7222 = vrot.lane.b32.xlu0 %v6782, 96
    %v7223 = vpop.permute.xlu0 %7222
    %v7225 = vsel %vm350, %v7221, 0
    %v7228 = vsel %vm350, %v7223, 0
    %7230 = vmatprep.subr.bf16.mxu0 0
    %7231 = vmatpush1.bf16.xpose.msra.mxu0 %v7228
    %7232 = vmatprep.subr.bf16.mxu0 0
    %7233 = vmatpush1.bf16.xpose.msra.mxu0 0
    %7234 = vmatprep.subr.bf16.mxu0 0
    %7235 = vmatpush1.bf16.xpose.msra.mxu0 0
    %7236 = vmatprep.subr.bf16.mxu0 0
    %7237 = vmatpush1.bf16.xpose.msra.mxu0 0
    %7238 = vmatprep.subr.bf16.mxu0 0
    %7239 = vmatpush1.bf16.xpose.msra.mxu0 0
    %7240 = vmatprep.subr.bf16.mxu0 0
    %7241 = vmatpush1.bf16.xpose.msra.mxu0 0
    %7242 = vmatprep.subr.bf16.mxu0 0
    %7243 = vmatpush1.bf16.xpose.msra.mxu0 0
    %7244 = vmatprep.subr.bf16.mxu0 0
    %7245 = vmatpush1.bf16.xpose.msra.mxu0 0
    %7246 = vmatprep.subr.bf16.mxu0 0
    %7247 = vmatpush1.bf16.xpose.msra.mxu0 0
    %7248 = vmatprep.subr.bf16.mxu0 0
    %7249 = vmatpush1.bf16.xpose.msra.mxu0 0
    %7250 = vmatprep.subr.bf16.mxu0 0
    %7251 = vmatpush1.bf16.xpose.msra.mxu0 0
    %7252 = vmatprep.subr.bf16.mxu0 0
    %7253 = vmatpush1.bf16.xpose.msra.mxu0 0
    %7254 = vmatprep.subr.bf16.mxu0 0
    %7255 = vmatpush1.bf16.xpose.msra.mxu0 0
    %7256 = vmatprep.subr.bf16.mxu0 0
    %7257 = vmatpush1.bf16.xpose.msra.mxu0 0
    %7258 = vmatprep.subr.bf16.mxu0 0
    %7259 = vmatpush1.bf16.xpose.msra.mxu0 0
    %7260 = vmatprep.subr.bf16.mxu0 0
    %7261 = vmatpush1.bf16.xpose.msra.mxu0 0
    %7262 = vmatprep.mubr.bf16.mxu0 0
    %7263 = vmatmul.mubr.bf16.gmra.mrb[0].mxu0 %v7225
    %v7264 = vpop.f32.mrb[0].mxu0
    %v7265 = vadd.f32 0.0, %v7264
    %v7266 = vpop.f32.mrb[0].mxu0
    %v7267 = vpop.f32.mrb[0].mxu0
    %v7268 = vpop.f32.mrb[0].mxu0
    %7269 = vdwg.mxu0
    %7270 = vrot.lane.b32.xlu0 %v6781, 96
    %v7271 = vpop.permute.xlu0 %7270
    %7272 = vrot.lane.b32.xlu0 %v6783, 96
    %v7273 = vpop.permute.xlu0 %7272
    %v7275 = vsel %vm350, %v7271, 0
    %v7278 = vsel %vm350, %v7273, 0
    %7280 = vmatprep.subr.bf16.mxu0 0
    %7281 = vmatpush1.bf16.xpose.msra.mxu0 %v7278
    %7282 = vmatprep.subr.bf16.mxu0 0
    %7283 = vmatpush1.bf16.xpose.msra.mxu0 0
    %7284 = vmatprep.subr.bf16.mxu0 0
    %7285 = vmatpush1.bf16.xpose.msra.mxu0 0
    %7286 = vmatprep.subr.bf16.mxu0 0
    %7287 = vmatpush1.bf16.xpose.msra.mxu0 0
    %7288 = vmatprep.subr.bf16.mxu0 0
    %7289 = vmatpush1.bf16.xpose.msra.mxu0 0
    %7290 = vmatprep.subr.bf16.mxu0 0
    %7291 = vmatpush1.bf16.xpose.msra.mxu0 0
    %7292 = vmatprep.subr.bf16.mxu0 0
    %7293 = vmatpush1.bf16.xpose.msra.mxu0 0
    %7294 = vmatprep.subr.bf16.mxu0 0
    %7295 = vmatpush1.bf16.xpose.msra.mxu0 0
    %7296 = vmatprep.subr.bf16.mxu0 0
    %7297 = vmatpush1.bf16.xpose.msra.mxu0 0
    %7298 = vmatprep.subr.bf16.mxu0 0
    %7299 = vmatpush1.bf16.xpose.msra.mxu0 0
    %7300 = vmatprep.subr.bf16.mxu0 0
    %7301 = vmatpush1.bf16.xpose.msra.mxu0 0
    %7302 = vmatprep.subr.bf16.mxu0 0
    %7303 = vmatpush1.bf16.xpose.msra.mxu0 0
    %7304 = vmatprep.subr.bf16.mxu0 0
    %7305 = vmatpush1.bf16.xpose.msra.mxu0 0
    %7306 = vmatprep.subr.bf16.mxu0 0
    %7307 = vmatpush1.bf16.xpose.msra.mxu0 0
    %7308 = vmatprep.subr.bf16.mxu0 0
    %7309 = vmatpush1.bf16.xpose.msra.mxu0 0
    %7310 = vmatprep.subr.bf16.mxu0 0
    %7311 = vmatpush1.bf16.xpose.msra.mxu0 0
    %7312 = vmatprep.mubr.bf16.mxu0 0
    %7313 = vmatmul.mubr.bf16.gmra.mrb[0].mxu0 %v7275
    %v7314 = vpop.f32.mrb[0].mxu0
    %v7315 = vadd.f32 0.0, %v7314
    %v7316 = vpop.f32.mrb[0].mxu0
    %v7317 = vpop.f32.mrb[0].mxu0
    %v7318 = vpop.f32.mrb[0].mxu0
    %7319 = vdwg.mxu0
    %v7320 = vsel %vm446, %v7265, -inf
    %7321 = vmax.xlane.f32.xlu0 %v7320
    %v7322 = vpop.xlane.xlu0 %7321
    %v7323 = vsel %vm446, %v7315, -inf
    %7324 = vmax.xlane.f32.xlu0 %v7323
    %v7325 = vpop.xlane.xlu0 %7324
    %v7326 = vsub.f32 %v7265, %v7322
    %v7327 = vsub.f32 %v7315, %v7325
    %v7328 = vmul.f32 %v7326, 1.442695
    %v7329 = vpow.pop %v7328
    %v7330 = vmul.f32 %v7327, 1.442695
    %v7331 = vpow.pop %v7330
    %v7332 = vsel %vm446, %v7329, 0.0
    %7333 = vadd.xlane.f32.xlu0 %v7332
    %v7334 = vpop.xlane.xlu0 %7333
    %v7335 = vsel %vm446, %v7331, 0.0
    %7336 = vadd.xlane.f32.xlu0 %v7335
    %v7337 = vpop.xlane.xlu0 %7336
    %v7338 = vrcp.pop %v7334
    %v7339 = vrcp.pop %v7337
    %v7340 = vmul.f32 %v7329, %v7338
    %v7341 = vmul.f32 %v7331, %v7339
    %v7342 = vpack.c.bf16 %v7340, %v7340
    %v7343 = vpack.c.bf16 %v7341, %v7341
    %7344 = vrot.lane.b32.xlu0 %v6782, 32
    %v7345 = vpop.permute.xlu0 %7344
    %v7347 = vsel %vm446, %v7342, 0
    %v7350 = vsel %vm474, %v7345, 0
    %7352 = vmatprep.subr.bf16.mxu0 0
    %7353 = vmatpush1.bf16.msra.mxu0 %v7350
    %7354 = vmatprep.subr.bf16.mxu0 0
    %7355 = vmatpush1.bf16.msra.mxu0 0
    %7356 = vmatprep.subr.bf16.mxu0 0
    %7357 = vmatpush1.bf16.msra.mxu0 0
    %7358 = vmatprep.subr.bf16.mxu0 0
    %7359 = vmatpush1.bf16.msra.mxu0 0
    %7360 = vmatprep.subr.bf16.mxu0 0
    %7361 = vmatpush1.bf16.msra.mxu0 0
    %7362 = vmatprep.subr.bf16.mxu0 0
    %7363 = vmatpush1.bf16.msra.mxu0 0
    %7364 = vmatprep.subr.bf16.mxu0 0
    %7365 = vmatpush1.bf16.msra.mxu0 0
    %7366 = vmatprep.subr.bf16.mxu0 0
    %7367 = vmatpush1.bf16.msra.mxu0 0
    %7368 = vmatprep.subr.bf16.mxu0 0
    %7369 = vmatpush1.bf16.msra.mxu0 0
    %7370 = vmatprep.subr.bf16.mxu0 0
    %7371 = vmatpush1.bf16.msra.mxu0 0
    %7372 = vmatprep.subr.bf16.mxu0 0
    %7373 = vmatpush1.bf16.msra.mxu0 0
    %7374 = vmatprep.subr.bf16.mxu0 0
    %7375 = vmatpush1.bf16.msra.mxu0 0
    %7376 = vmatprep.subr.bf16.mxu0 0
    %7377 = vmatpush1.bf16.msra.mxu0 0
    %7378 = vmatprep.subr.bf16.mxu0 0
    %7379 = vmatpush1.bf16.msra.mxu0 0
    %7380 = vmatprep.subr.bf16.mxu0 0
    %7381 = vmatpush1.bf16.msra.mxu0 0
    %7382 = vmatprep.subr.bf16.mxu0 0
    %7383 = vmatpush1.bf16.msra.mxu0 0
    %7384 = vmatprep.mubr.bf16.mxu0 0
    %7385 = vmatmul.mubr.bf16.gmra.mrb[0].mxu0 %v7347
    %v7386 = vpop.f32.mrb[0].mxu0
    %v7387 = vadd.f32 0.0, %v7386
    %v7388 = vpop.f32.mrb[0].mxu0
    %v7389 = vpop.f32.mrb[0].mxu0
    %v7390 = vpop.f32.mrb[0].mxu0
    %7391 = vdwg.mxu0
    %7392 = vrot.lane.b32.xlu0 %v6783, 32
    %v7393 = vpop.permute.xlu0 %7392
    %v7395 = vsel %vm446, %v7343, 0
    %v7398 = vsel %vm474, %v7393, 0
    %7400 = vmatprep.subr.bf16.mxu0 0
    %7401 = vmatpush1.bf16.msra.mxu0 %v7398
    %7402 = vmatprep.subr.bf16.mxu0 0
    %7403 = vmatpush1.bf16.msra.mxu0 0
    %7404 = vmatprep.subr.bf16.mxu0 0
    %7405 = vmatpush1.bf16.msra.mxu0 0
    %7406 = vmatprep.subr.bf16.mxu0 0
    %7407 = vmatpush1.bf16.msra.mxu0 0
    %7408 = vmatprep.subr.bf16.mxu0 0
    %7409 = vmatpush1.bf16.msra.mxu0 0
    %7410 = vmatprep.subr.bf16.mxu0 0
    %7411 = vmatpush1.bf16.msra.mxu0 0
    %7412 = vmatprep.subr.bf16.mxu0 0
    %7413 = vmatpush1.bf16.msra.mxu0 0
    %7414 = vmatprep.subr.bf16.mxu0 0
    %7415 = vmatpush1.bf16.msra.mxu0 0
    %7416 = vmatprep.subr.bf16.mxu0 0
    %7417 = vmatpush1.bf16.msra.mxu0 0
    %7418 = vmatprep.subr.bf16.mxu0 0
    %7419 = vmatpush1.bf16.msra.mxu0 0
    %7420 = vmatprep.subr.bf16.mxu0 0
    %7421 = vmatpush1.bf16.msra.mxu0 0
    %7422 = vmatprep.subr.bf16.mxu0 0
    %7423 = vmatpush1.bf16.msra.mxu0 0
    %7424 = vmatprep.subr.bf16.mxu0 0
    %7425 = vmatpush1.bf16.msra.mxu0 0
    %7426 = vmatprep.subr.bf16.mxu0 0
    %7427 = vmatpush1.bf16.msra.mxu0 0
    %7428 = vmatprep.subr.bf16.mxu0 0
    %7429 = vmatpush1.bf16.msra.mxu0 0
    %7430 = vmatprep.subr.bf16.mxu0 0
    %7431 = vmatpush1.bf16.msra.mxu0 0
    %7432 = vmatprep.mubr.bf16.mxu0 0
    %7433 = vmatmul.mubr.bf16.gmra.mrb[0].mxu0 %v7395
    %v7434 = vpop.f32.mrb[0].mxu0
    %v7435 = vadd.f32 0.0, %v7434
    %v7436 = vpop.f32.mrb[0].mxu0
    %v7437 = vpop.f32.mrb[0].mxu0
    %v7438 = vpop.f32.mrb[0].mxu0
    %7439 = vdwg.mxu0
    %7440 = vrot.lane.b32.xlu0 %v6780, 80
    %v7441 = vpop.permute.xlu0 %7440
    %7442 = vrot.lane.b32.xlu0 %v6782, 80
    %v7443 = vpop.permute.xlu0 %7442
    %v7445 = vsel %vm350, %v7441, 0
    %v7448 = vsel %vm350, %v7443, 0
    %7450 = vmatprep.subr.bf16.mxu0 0
    %7451 = vmatpush1.bf16.xpose.msra.mxu0 %v7448
    %7452 = vmatprep.subr.bf16.mxu0 0
    %7453 = vmatpush1.bf16.xpose.msra.mxu0 0
    %7454 = vmatprep.subr.bf16.mxu0 0
    %7455 = vmatpush1.bf16.xpose.msra.mxu0 0
    %7456 = vmatprep.subr.bf16.mxu0 0
    %7457 = vmatpush1.bf16.xpose.msra.mxu0 0
    %7458 = vmatprep.subr.bf16.mxu0 0
    %7459 = vmatpush1.bf16.xpose.msra.mxu0 0
    %7460 = vmatprep.subr.bf16.mxu0 0
    %7461 = vmatpush1.bf16.xpose.msra.mxu0 0
    %7462 = vmatprep.subr.bf16.mxu0 0
    %7463 = vmatpush1.bf16.xpose.msra.mxu0 0
    %7464 = vmatprep.subr.bf16.mxu0 0
    %7465 = vmatpush1.bf16.xpose.msra.mxu0 0
    %7466 = vmatprep.subr.bf16.mxu0 0
    %7467 = vmatpush1.bf16.xpose.msra.mxu0 0
    %7468 = vmatprep.subr.bf16.mxu0 0
    %7469 = vmatpush1.bf16.xpose.msra.mxu0 0
    %7470 = vmatprep.subr.bf16.mxu0 0
    %7471 = vmatpush1.bf16.xpose.msra.mxu0 0
    %7472 = vmatprep.subr.bf16.mxu0 0
    %7473 = vmatpush1.bf16.xpose.msra.mxu0 0
    %7474 = vmatprep.subr.bf16.mxu0 0
    %7475 = vmatpush1.bf16.xpose.msra.mxu0 0
    %7476 = vmatprep.subr.bf16.mxu0 0
    %7477 = vmatpush1.bf16.xpose.msra.mxu0 0
    %7478 = vmatprep.subr.bf16.mxu0 0
    %7479 = vmatpush1.bf16.xpose.msra.mxu0 0
    %7480 = vmatprep.subr.bf16.mxu0 0
    %7481 = vmatpush1.bf16.xpose.msra.mxu0 0
    %7482 = vmatprep.mubr.bf16.mxu0 0
    %7483 = vmatmul.mubr.bf16.gmra.mrb[0].mxu0 %v7445
    %v7484 = vpop.f32.mrb[0].mxu0
    %v7485 = vadd.f32 0.0, %v7484
    %v7486 = vpop.f32.mrb[0].mxu0
    %v7487 = vpop.f32.mrb[0].mxu0
    %v7488 = vpop.f32.mrb[0].mxu0
    %7489 = vdwg.mxu0
    %7490 = vrot.lane.b32.xlu0 %v6781, 80
    %v7491 = vpop.permute.xlu0 %7490
    %7492 = vrot.lane.b32.xlu0 %v6783, 80
    %v7493 = vpop.permute.xlu0 %7492
    %v7495 = vsel %vm350, %v7491, 0
    %v7498 = vsel %vm350, %v7493, 0
    %7500 = vmatprep.subr.bf16.mxu0 0
    %7501 = vmatpush1.bf16.xpose.msra.mxu0 %v7498
    %7502 = vmatprep.subr.bf16.mxu0 0
    %7503 = vmatpush1.bf16.xpose.msra.mxu0 0
    %7504 = vmatprep.subr.bf16.mxu0 0
    %7505 = vmatpush1.bf16.xpose.msra.mxu0 0
    %7506 = vmatprep.subr.bf16.mxu0 0
    %7507 = vmatpush1.bf16.xpose.msra.mxu0 0
    %7508 = vmatprep.subr.bf16.mxu0 0
    %7509 = vmatpush1.bf16.xpose.msra.mxu0 0
    %7510 = vmatprep.subr.bf16.mxu0 0
    %7511 = vmatpush1.bf16.xpose.msra.mxu0 0
    %7512 = vmatprep.subr.bf16.mxu0 0
    %7513 = vmatpush1.bf16.xpose.msra.mxu0 0
    %7514 = vmatprep.subr.bf16.mxu0 0
    %7515 = vmatpush1.bf16.xpose.msra.mxu0 0
    %7516 = vmatprep.subr.bf16.mxu0 0
    %7517 = vmatpush1.bf16.xpose.msra.mxu0 0
    %7518 = vmatprep.subr.bf16.mxu0 0
    %7519 = vmatpush1.bf16.xpose.msra.mxu0 0
    %7520 = vmatprep.subr.bf16.mxu0 0
    %7521 = vmatpush1.bf16.xpose.msra.mxu0 0
    %7522 = vmatprep.subr.bf16.mxu0 0
    %7523 = vmatpush1.bf16.xpose.msra.mxu0 0
    %7524 = vmatprep.subr.bf16.mxu0 0
    %7525 = vmatpush1.bf16.xpose.msra.mxu0 0
    %7526 = vmatprep.subr.bf16.mxu0 0
    %7527 = vmatpush1.bf16.xpose.msra.mxu0 0
    %7528 = vmatprep.subr.bf16.mxu0 0
    %7529 = vmatpush1.bf16.xpose.msra.mxu0 0
    %7530 = vmatprep.subr.bf16.mxu0 0
    %7531 = vmatpush1.bf16.xpose.msra.mxu0 0
    %7532 = vmatprep.mubr.bf16.mxu0 0
    %7533 = vmatmul.mubr.bf16.gmra.mrb[0].mxu0 %v7495
    %v7534 = vpop.f32.mrb[0].mxu0
    %v7535 = vadd.f32 0.0, %v7534
    %v7536 = vpop.f32.mrb[0].mxu0
    %v7537 = vpop.f32.mrb[0].mxu0
    %v7538 = vpop.f32.mrb[0].mxu0
    %7539 = vdwg.mxu0
    %v7540 = vsel %vm446, %v7485, -inf
    %7541 = vmax.xlane.f32.xlu0 %v7540
    %v7542 = vpop.xlane.xlu0 %7541
    %v7543 = vsel %vm446, %v7535, -inf
    %7544 = vmax.xlane.f32.xlu0 %v7543
    %v7545 = vpop.xlane.xlu0 %7544
    %v7546 = vsub.f32 %v7485, %v7542
    %v7547 = vsub.f32 %v7535, %v7545
    %v7548 = vmul.f32 %v7546, 1.442695
    %v7549 = vpow.pop %v7548
    %v7550 = vmul.f32 %v7547, 1.442695
    %v7551 = vpow.pop %v7550
    %v7552 = vsel %vm446, %v7549, 0.0
    %7553 = vadd.xlane.f32.xlu0 %v7552
    %v7554 = vpop.xlane.xlu0 %7553
    %v7555 = vsel %vm446, %v7551, 0.0
    %7556 = vadd.xlane.f32.xlu0 %v7555
    %v7557 = vpop.xlane.xlu0 %7556
    %v7558 = vrcp.pop %v7554
    %v7559 = vrcp.pop %v7557
    %v7560 = vmul.f32 %v7549, %v7558
    %v7561 = vmul.f32 %v7551, %v7559
    %v7562 = vpack.c.bf16 %v7560, %v7560
    %v7563 = vpack.c.bf16 %v7561, %v7561
    %7564 = vrot.lane.b32.xlu0 %v6782, 16
    %v7565 = vpop.permute.xlu0 %7564
    %v7567 = vsel %vm446, %v7562, 0
    %v7570 = vsel %vm474, %v7565, 0
    %7572 = vmatprep.subr.bf16.mxu0 0
    %7573 = vmatpush1.bf16.msra.mxu0 %v7570
    %7574 = vmatprep.subr.bf16.mxu0 0
    %7575 = vmatpush1.bf16.msra.mxu0 0
    %7576 = vmatprep.subr.bf16.mxu0 0
    %7577 = vmatpush1.bf16.msra.mxu0 0
    %7578 = vmatprep.subr.bf16.mxu0 0
    %7579 = vmatpush1.bf16.msra.mxu0 0
    %7580 = vmatprep.subr.bf16.mxu0 0
    %7581 = vmatpush1.bf16.msra.mxu0 0
    %7582 = vmatprep.subr.bf16.mxu0 0
    %7583 = vmatpush1.bf16.msra.mxu0 0
    %7584 = vmatprep.subr.bf16.mxu0 0
    %7585 = vmatpush1.bf16.msra.mxu0 0
    %7586 = vmatprep.subr.bf16.mxu0 0
    %7587 = vmatpush1.bf16.msra.mxu0 0
    %7588 = vmatprep.subr.bf16.mxu0 0
    %7589 = vmatpush1.bf16.msra.mxu0 0
    %7590 = vmatprep.subr.bf16.mxu0 0
    %7591 = vmatpush1.bf16.msra.mxu0 0
    %7592 = vmatprep.subr.bf16.mxu0 0
    %7593 = vmatpush1.bf16.msra.mxu0 0
    %7594 = vmatprep.subr.bf16.mxu0 0
    %7595 = vmatpush1.bf16.msra.mxu0 0
    %7596 = vmatprep.subr.bf16.mxu0 0
    %7597 = vmatpush1.bf16.msra.mxu0 0
    %7598 = vmatprep.subr.bf16.mxu0 0
    %7599 = vmatpush1.bf16.msra.mxu0 0
    %7600 = vmatprep.subr.bf16.mxu0 0
    %7601 = vmatpush1.bf16.msra.mxu0 0
    %7602 = vmatprep.subr.bf16.mxu0 0
    %7603 = vmatpush1.bf16.msra.mxu0 0
    %7604 = vmatprep.mubr.bf16.mxu0 0
    %7605 = vmatmul.mubr.bf16.gmra.mrb[0].mxu0 %v7567
    %v7606 = vpop.f32.mrb[0].mxu0
    %v7607 = vadd.f32 0.0, %v7606
    %v7608 = vpop.f32.mrb[0].mxu0
    %v7609 = vpop.f32.mrb[0].mxu0
    %v7610 = vpop.f32.mrb[0].mxu0
    %7611 = vdwg.mxu0
    %7612 = vrot.lane.b32.xlu0 %v6783, 16
    %v7613 = vpop.permute.xlu0 %7612
    %v7615 = vsel %vm446, %v7563, 0
    %v7618 = vsel %vm474, %v7613, 0
    %7620 = vmatprep.subr.bf16.mxu0 0
    %7621 = vmatpush1.bf16.msra.mxu0 %v7618
    %7622 = vmatprep.subr.bf16.mxu0 0
    %7623 = vmatpush1.bf16.msra.mxu0 0
    %7624 = vmatprep.subr.bf16.mxu0 0
    %7625 = vmatpush1.bf16.msra.mxu0 0
    %7626 = vmatprep.subr.bf16.mxu0 0
    %7627 = vmatpush1.bf16.msra.mxu0 0
    %7628 = vmatprep.subr.bf16.mxu0 0
    %7629 = vmatpush1.bf16.msra.mxu0 0
    %7630 = vmatprep.subr.bf16.mxu0 0
    %7631 = vmatpush1.bf16.msra.mxu0 0
    %7632 = vmatprep.subr.bf16.mxu0 0
    %7633 = vmatpush1.bf16.msra.mxu0 0
    %7634 = vmatprep.subr.bf16.mxu0 0
    %7635 = vmatpush1.bf16.msra.mxu0 0
    %7636 = vmatprep.subr.bf16.mxu0 0
    %7637 = vmatpush1.bf16.msra.mxu0 0
    %7638 = vmatprep.subr.bf16.mxu0 0
    %7639 = vmatpush1.bf16.msra.mxu0 0
    %7640 = vmatprep.subr.bf16.mxu0 0
    %7641 = vmatpush1.bf16.msra.mxu0 0
    %7642 = vmatprep.subr.bf16.mxu0 0
    %7643 = vmatpush1.bf16.msra.mxu0 0
    %7644 = vmatprep.subr.bf16.mxu0 0
    %7645 = vmatpush1.bf16.msra.mxu0 0
    %7646 = vmatprep.subr.bf16.mxu0 0
    %7647 = vmatpush1.bf16.msra.mxu0 0
    %7648 = vmatprep.subr.bf16.mxu0 0
    %7649 = vmatpush1.bf16.msra.mxu0 0
    %7650 = vmatprep.subr.bf16.mxu0 0
    %7651 = vmatpush1.bf16.msra.mxu0 0
    %7652 = vmatprep.mubr.bf16.mxu0 0
    %7653 = vmatmul.mubr.bf16.gmra.mrb[0].mxu0 %v7615
    %v7654 = vpop.f32.mrb[0].mxu0
    %v7655 = vadd.f32 0.0, %v7654
    %v7656 = vpop.f32.mrb[0].mxu0
    %v7657 = vpop.f32.mrb[0].mxu0
    %v7658 = vpop.f32.mrb[0].mxu0
    %7659 = vdwg.mxu0
    %7662 = vrot.lane.b32.xlu0 %v7167, 16
    %v7663 = vpop.permute.xlu0 %7662
    %7664 = vrot.lane.b32.xlu0 %v7215, 16
    %v7665 = vpop.permute.xlu0 %7664
    %7670 = vrot.lane.b32.xlu0 %v7387, 32
    %v7671 = vpop.permute.xlu0 %7670
    %7672 = vrot.lane.b32.xlu0 %v7435, 32
    %v7673 = vpop.permute.xlu0 %7672
    %7678 = vrot.lane.b32.xlu0 %v7607, 48
    %v7679 = vpop.permute.xlu0 %7678
    %7680 = vrot.lane.b32.xlu0 %v7655, 48
    %v7681 = vpop.permute.xlu0 %7680
    %v7684 = vsel %vm350, %v6944, %v7663
    %v7685 = vsel %vm350, %v6993, %v7665
    %v7686 = vsel %vm1252, %v7684, %v7671
    %v7687 = vsel %vm1252, %v7685, %v7673
    %v7688 = vsel %vm1255, %v7686, %v7679
    %v7689 = vsel %vm1255, %v7687, %v7681
    %v7690 = vpack.c.bf16 %v7689, %v7688
    %v7699 = vunpack.c.l.b16 %v6614
    %v7700 = vunpack.c.l.b16 %v6615
    %v7701 = vunpack.c.l.b16 %v6616
    %v7702 = vunpack.c.l.b16 %v6617
    %v7703 = vunpack.c.l.b16 %v6618
    %v7704 = vunpack.c.l.b16 %v6619
    %v7705 = vunpack.c.l.b16 %v6620
    %v7706 = vunpack.c.l.b16 %v6621
    %v7707 = vpack.c.b16 %v7700, %v7699
    %v7708 = vpack.c.b16 %v7702, %v7701
    %v7709 = vpack.c.b16 %v7704, %v7703
    %v7710 = vpack.c.b16 %v7706, %v7705
    %v7716 = vsel %vm232, %v7690, 0
    %7718 = vmatprep.subr.bf16.mxu0 0
    %7719 = vmatpush1.bf16.msra.mxu0 %v7707
    %7720 = vmatprep.subr.bf16.mxu0 0
    %7721 = vmatpush1.bf16.msra.mxu0 %v7708
    %7722 = vmatprep.subr.bf16.mxu0 0
    %7723 = vmatpush1.bf16.msra.mxu0 %v7709
    %7724 = vmatprep.subr.bf16.mxu0 0
    %7725 = vmatpush1.bf16.msra.mxu0 %v7710
    %7726 = vmatprep.subr.bf16.mxu0 0
    %7727 = vmatpush1.bf16.msra.mxu0 0
    %7728 = vmatprep.subr.bf16.mxu0 0
    %7729 = vmatpush1.bf16.msra.mxu0 0
    %7730 = vmatprep.subr.bf16.mxu0 0
    %7731 = vmatpush1.bf16.msra.mxu0 0
    %7732 = vmatprep.subr.bf16.mxu0 0
    %7733 = vmatpush1.bf16.msra.mxu0 0
    %7734 = vmatprep.subr.bf16.mxu0 0
    %7735 = vmatpush1.bf16.msra.mxu0 0
    %7736 = vmatprep.subr.bf16.mxu0 0
    %7737 = vmatpush1.bf16.msra.mxu0 0
    %7738 = vmatprep.subr.bf16.mxu0 0
    %7739 = vmatpush1.bf16.msra.mxu0 0
    %7740 = vmatprep.subr.bf16.mxu0 0
    %7741 = vmatpush1.bf16.msra.mxu0 0
    %7742 = vmatprep.subr.bf16.mxu0 0
    %7743 = vmatpush1.bf16.msra.mxu0 0
    %7744 = vmatprep.subr.bf16.mxu0 0
    %7745 = vmatpush1.bf16.msra.mxu0 0
    %7746 = vmatprep.subr.bf16.mxu0 0
    %7747 = vmatpush1.bf16.msra.mxu0 0
    %7748 = vmatprep.subr.bf16.mxu0 0
    %7749 = vmatpush1.bf16.msra.mxu0 0
    %7750 = vmatprep.mubr.bf16.mxu0 0
    %7751 = vmatmul.mubr.bf16.gmra.mrb[0].mxu0 %v7716
    %v7752 = vpop.f32.mrb[0].mxu0
    %v7753 = vadd.f32 0.0, %v7752
    %v7754 = vpop.f32.mrb[0].mxu0
    %v7755 = vpop.f32.mrb[0].mxu0
    %v7756 = vadd.f32 0.0, %v7755
    %v7757 = vpop.f32.mrb[0].mxu0
    %7758 = vdwg.mxu0
    %v7759 = vadd.f32 %v6591, %v7753
    %v7760 = vadd.f32 %v6592, %v7756
    %s7761 = scalar_lea.vmem %s19, 1
    %v7762 = vld [vmem:[%s7761] sm:$0x1]
    %s7763 = scalar_lea.vmem %s20, 32
    %v7764 = vld [vmem:[%s7763] sm:$0xf]
    %v7765 = vld [vmem:[%s7763 + $0x4] sm:$0xf]
    %v7766 = vld [vmem:[%s7763 + $0x8] sm:$0xf]
    %v7767 = vld [vmem:[%s7763 + $0xc] sm:$0xf]
    %v7768 = vld [vmem:[%s7763 + $0x10] sm:$0xf]
    %v7769 = vld [vmem:[%s7763 + $0x14] sm:$0xf]
    %v7770 = vld [vmem:[%s7763 + $0x18] sm:$0xf]
    %v7771 = vld [vmem:[%s7763 + $0x1c] sm:$0xf]
    %s7772 = scalar_lea.vmem %s21, 64
    %v7773 = vld [vmem:[%s7772] sm:$0xf]
    %v7774 = vld [vmem:[%s7772 + $0x4] sm:$0xf]
    %v7775 = vld [vmem:[%s7772 + $0x8] sm:$0xf]
    %v7776 = vld [vmem:[%s7772 + $0xc] sm:$0xf]
    %v7777 = vld [vmem:[%s7772 + $0x10] sm:$0xf]
    %v7778 = vld [vmem:[%s7772 + $0x14] sm:$0xf]
    %v7779 = vld [vmem:[%s7772 + $0x18] sm:$0xf]
    %v7780 = vld [vmem:[%s7772 + $0x1c] sm:$0xf]
    %v7781 = vld [vmem:[%s7772 + $0x20] sm:$0xf]
    %v7782 = vld [vmem:[%s7772 + $0x24] sm:$0xf]
    %v7783 = vld [vmem:[%s7772 + $0x28] sm:$0xf]
    %v7784 = vld [vmem:[%s7772 + $0x2c] sm:$0xf]
    %v7785 = vld [vmem:[%s7772 + $0x30] sm:$0xf]
    %v7786 = vld [vmem:[%s7772 + $0x34] sm:$0xf]
    %v7787 = vld [vmem:[%s7772 + $0x38] sm:$0xf]
    %v7788 = vld [vmem:[%s7772 + $0x3c] sm:$0xf]
    %v7789 = vmul.f32 %v7759, %v7759
    %v7790 = vmul.f32 %v7760, %v7760
    %v7791 = vsel %vm232, %v7789, 0.0
    %7792 = vadd.xlane.f32.xlu0 %v7791
    %v7793 = vpop.xlane.xlu0 %7792
    %v7794 = vsel %vm232, %v7790, 0.0
    %7795 = vadd.xlane.f32.xlu0 %v7794
    %v7796 = vpop.xlane.xlu0 %7795
    %v7797 = vmul.f32 %v7793, %v239
    %v7798 = vmul.f32 %v7796, %v239
    %v7799 = vadd.f32 %v7797, 1e-06
    %v7800 = vadd.f32 %v7798, 1e-06
    %v7801 = vrsqrt.pop %v7799
    %v7802 = vrsqrt.pop %v7800
    %v7803 = vmul.f32 %v7759, %v7801
    %v7804 = vmul.f32 %v7760, %v7802
    %v7806 = vlaneseq
    %v7807 = vshrl.u32 %v7806, 7
    %v7808 = vsub.s32 0, %v7807
    %v7809 = vrot.slane %v7762, %v7808
    %v7811 = vmul.f32 %v7803, %v7809
    %v7812 = vmul.f32 %v7804, %v7809
    %v7813 = vpack.c.bf16 %v7812, %v7811
    %v7822 = vunpack.c.l.b16 %v7764
    %v7823 = vunpack.c.l.b16 %v7765
    %v7824 = vunpack.c.l.b16 %v7766
    %v7825 = vunpack.c.l.b16 %v7767
    %v7826 = vunpack.c.l.b16 %v7768
    %v7827 = vunpack.c.l.b16 %v7769
    %v7828 = vunpack.c.l.b16 %v7770
    %v7829 = vunpack.c.l.b16 %v7771
    %v7830 = vpack.c.b16 %v7823, %v7822
    %v7831 = vpack.c.b16 %v7825, %v7824
    %v7832 = vpack.c.b16 %v7827, %v7826
    %v7833 = vpack.c.b16 %v7829, %v7828
    %v7839 = vsel %vm232, %v7813, 0
    %7841 = vmatprep.subr.bf16.mxu0 0
    %7842 = vmatpush1.bf16.msra.mxu0 %v7830
    %7843 = vmatprep.subr.bf16.mxu0 0
    %7844 = vmatpush1.bf16.msra.mxu0 %v7831
    %7845 = vmatprep.subr.bf16.mxu0 0
    %7846 = vmatpush1.bf16.msra.mxu0 %v7832
    %7847 = vmatprep.subr.bf16.mxu0 0
    %7848 = vmatpush1.bf16.msra.mxu0 %v7833
    %7849 = vmatprep.subr.bf16.mxu0 0
    %7850 = vmatpush1.bf16.msra.mxu0 0
    %7851 = vmatprep.subr.bf16.mxu0 0
    %7852 = vmatpush1.bf16.msra.mxu0 0
    %7853 = vmatprep.subr.bf16.mxu0 0
    %7854 = vmatpush1.bf16.msra.mxu0 0
    %7855 = vmatprep.subr.bf16.mxu0 0
    %7856 = vmatpush1.bf16.msra.mxu0 0
    %7857 = vmatprep.subr.bf16.mxu0 0
    %7858 = vmatpush1.bf16.msra.mxu0 0
    %7859 = vmatprep.subr.bf16.mxu0 0
    %7860 = vmatpush1.bf16.msra.mxu0 0
    %7861 = vmatprep.subr.bf16.mxu0 0
    %7862 = vmatpush1.bf16.msra.mxu0 0
    %7863 = vmatprep.subr.bf16.mxu0 0
    %7864 = vmatpush1.bf16.msra.mxu0 0
    %7865 = vmatprep.subr.bf16.mxu0 0
    %7866 = vmatpush1.bf16.msra.mxu0 0
    %7867 = vmatprep.subr.bf16.mxu0 0
    %7868 = vmatpush1.bf16.msra.mxu0 0
    %7869 = vmatprep.subr.bf16.mxu0 0
    %7870 = vmatpush1.bf16.msra.mxu0 0
    %7871 = vmatprep.subr.bf16.mxu0 0
    %7872 = vmatpush1.bf16.msra.mxu0 0
    %7873 = vmatprep.mubr.bf16.mxu0 0
    %7874 = vmatmul.mubr.bf16.gmra.mrb[0].mxu0 %v7839
    %v7875 = vpop.f32.mrb[0].mxu0
    %v7876 = vadd.f32 0.0, %v7875
    %v7877 = vpop.f32.mrb[0].mxu0
    %v7878 = vpop.f32.mrb[0].mxu0
    %v7879 = vadd.f32 0.0, %v7878
    %v7880 = vpop.f32.mrb[0].mxu0
    %7881 = vdwg.mxu0
    %v7882 = vmax.f32 %v7876, 0.0
    %v7883 = vmax.f32 %v7879, 0.0
    %v7884 = vpack.c.bf16 %v7883, %v7882
    %v7901 = vunpack.c.l.b16 %v7773
    %v7902 = vunpack.c.l.b16 %v7774
    %v7903 = vunpack.c.l.b16 %v7775
    %v7904 = vunpack.c.l.b16 %v7776
    %v7905 = vunpack.c.l.b16 %v7777
    %v7906 = vunpack.c.l.b16 %v7778
    %v7907 = vunpack.c.l.b16 %v7779
    %v7908 = vunpack.c.l.b16 %v7780
    %v7909 = vunpack.c.l.b16 %v7781
    %v7910 = vunpack.c.l.b16 %v7782
    %v7911 = vunpack.c.l.b16 %v7783
    %v7912 = vunpack.c.l.b16 %v7784
    %v7913 = vunpack.c.l.b16 %v7785
    %v7914 = vunpack.c.l.b16 %v7786
    %v7915 = vunpack.c.l.b16 %v7787
    %v7916 = vunpack.c.l.b16 %v7788
    %v7917 = vpack.c.b16 %v7902, %v7901
    %v7918 = vpack.c.b16 %v7904, %v7903
    %v7919 = vpack.c.b16 %v7906, %v7905
    %v7920 = vpack.c.b16 %v7908, %v7907
    %v7921 = vpack.c.b16 %v7910, %v7909
    %v7922 = vpack.c.b16 %v7912, %v7911
    %v7923 = vpack.c.b16 %v7914, %v7913
    %v7924 = vpack.c.b16 %v7916, %v7915
    %7933 = vmatprep.subr.bf16.mxu0 0
    %7934 = vmatpush1.bf16.msra.mxu0 %v7917
    %7935 = vmatprep.subr.bf16.mxu0 0
    %7936 = vmatpush1.bf16.msra.mxu0 %v7918
    %7937 = vmatprep.subr.bf16.mxu0 0
    %7938 = vmatpush1.bf16.msra.mxu0 %v7919
    %7939 = vmatprep.subr.bf16.mxu0 0
    %7940 = vmatpush1.bf16.msra.mxu0 %v7920
    %7941 = vmatprep.subr.bf16.mxu0 0
    %7942 = vmatpush1.bf16.msra.mxu0 %v7921
    %7943 = vmatprep.subr.bf16.mxu0 0
    %7944 = vmatpush1.bf16.msra.mxu0 %v7922
    %7945 = vmatprep.subr.bf16.mxu0 0
    %7946 = vmatpush1.bf16.msra.mxu0 %v7923
    %7947 = vmatprep.subr.bf16.mxu0 0
    %7948 = vmatpush1.bf16.msra.mxu0 %v7924
    %7949 = vmatprep.subr.bf16.mxu0 0
    %7950 = vmatpush1.bf16.msra.mxu0 0
    %7951 = vmatprep.subr.bf16.mxu0 0
    %7952 = vmatpush1.bf16.msra.mxu0 0
    %7953 = vmatprep.subr.bf16.mxu0 0
    %7954 = vmatpush1.bf16.msra.mxu0 0
    %7955 = vmatprep.subr.bf16.mxu0 0
    %7956 = vmatpush1.bf16.msra.mxu0 0
    %7957 = vmatprep.subr.bf16.mxu0 0
    %7958 = vmatpush1.bf16.msra.mxu0 0
    %7959 = vmatprep.subr.bf16.mxu0 0
    %7960 = vmatpush1.bf16.msra.mxu0 0
    %7961 = vmatprep.subr.bf16.mxu0 0
    %7962 = vmatpush1.bf16.msra.mxu0 0
    %7963 = vmatprep.subr.bf16.mxu0 0
    %7964 = vmatpush1.bf16.msra.mxu0 0
    %7965 = vmatprep.mubr.bf16.mxu0 0
    %7966 = vmatmul.mubr.bf16.gmra.mrb[0].mxu0 %v7884
    %v7967 = vpop.f32.mrb[0].mxu0
    %v7968 = vadd.f32 0.0, %v7967
    %v7969 = vpop.f32.mrb[0].mxu0
    %v7970 = vpop.f32.mrb[0].mxu0
    %v7971 = vadd.f32 0.0, %v7970
    %v7972 = vpop.f32.mrb[0].mxu0
    %7973 = vdwg.mxu0
    %v7974 = vadd.f32 %v7759, %v7968
    %v7975 = vadd.f32 %v7760, %v7971
    %v7976 = vld [vmem:[%s22] sm:$0x1]
    %v7977 = vmul.f32 %v7974, %v7974
    %v7978 = vmul.f32 %v7975, %v7975
    %v7979 = vsel %vm232, %v7977, 0.0
    %7980 = vadd.xlane.f32.xlu0 %v7979
    %v7981 = vpop.xlane.xlu0 %7980
    %v7982 = vsel %vm232, %v7978, 0.0
    %7983 = vadd.xlane.f32.xlu0 %v7982
    %v7984 = vpop.xlane.xlu0 %7983
    %v7985 = vmul.f32 %v7981, %v239
    %v7986 = vmul.f32 %v7984, %v239
    %v7987 = vadd.f32 %v7985, 1e-06
    %v7988 = vadd.f32 %v7986, 1e-06
    %v7989 = vrsqrt.pop %v7987
    %v7990 = vrsqrt.pop %v7988
    %v7991 = vmul.f32 %v7974, %v7989
    %v7992 = vmul.f32 %v7975, %v7990
    %v7994 = vlaneseq
    %v7995 = vshrl.u32 %v7994, 7
    %v7996 = vsub.s32 0, %v7995
    %v7997 = vrot.slane %v7976, %v7996
    %v7999 = vmul.f32 %v7991, %v7997
    %v8000 = vmul.f32 %v7992, %v7997
    %v8001 = vmul.f32 %v7999, 0.125
    %v8002 = vmul.f32 %v8000, 0.125
    %v8003 = vpack.c.bf16 %v8002, %v8001
    %v8004 = vld [vmem:[%s23] sm:$0xff]
    %v8005 = vld [vmem:[%s23 + $0x8] sm:$0xff]
    %v8006 = vld [vmem:[%s23 + $0x10] sm:$0xff]
    %v8007 = vld [vmem:[%s23 + $0x18] sm:$0xff]
    %v8008 = vld [vmem:[%s23 + $0x20] sm:$0xff]
    %v8009 = vld [vmem:[%s23 + $0x28] sm:$0xff]
    %v8010 = vld [vmem:[%s23 + $0x30] sm:$0xff]
    %v8011 = vld [vmem:[%s23 + $0x38] sm:$0xff]
    %v8020 = vunpack.c.l.b16 %v8004
    %v8021 = vunpack.c.h.b16 %v8004
    %v8022 = vunpack.c.l.b16 %v8005
    %v8023 = vunpack.c.h.b16 %v8005
    %v8024 = vunpack.c.l.b16 %v8006
    %v8025 = vunpack.c.h.b16 %v8006
    %v8026 = vunpack.c.l.b16 %v8007
    %v8027 = vunpack.c.h.b16 %v8007
    %v8028 = vunpack.c.l.b16 %v8008
    %v8029 = vunpack.c.h.b16 %v8008
    %v8030 = vunpack.c.l.b16 %v8009
    %v8031 = vunpack.c.h.b16 %v8009
    %v8032 = vunpack.c.l.b16 %v8010
    %v8033 = vunpack.c.h.b16 %v8010
    %v8034 = vunpack.c.l.b16 %v8011
    %v8035 = vunpack.c.h.b16 %v8011
    %v8036 = vpack.c.b16 %v8022, %v8020
    %v8037 = vpack.c.b16 %v8023, %v8021
    %v8038 = vpack.c.b16 %v8026, %v8024
    %v8039 = vpack.c.b16 %v8027, %v8025
    %v8040 = vpack.c.b16 %v8030, %v8028
    %v8041 = vpack.c.b16 %v8031, %v8029
    %v8042 = vpack.c.b16 %v8034, %v8032
    %v8043 = vpack.c.b16 %v8035, %v8033
    %v8053 = vsel %vm232, %v8003, 0
    %8055 = vmatprep.subr.bf16.mxu0 %v8037
    %8056 = vmatpush1.bf16.msra.mxu0 %v8036
    %8057 = vmatprep.subr.bf16.mxu0 %v8039
    %8058 = vmatpush1.bf16.msra.mxu0 %v8038
    %8059 = vmatprep.subr.bf16.mxu0 %v8041
    %8060 = vmatpush1.bf16.msra.mxu0 %v8040
    %8061 = vmatprep.subr.bf16.mxu0 %v8043
    %8062 = vmatpush1.bf16.msra.mxu0 %v8042
    %8063 = vmatprep.subr.bf16.mxu0 0
    %8064 = vmatpush1.bf16.msra.mxu0 0
    %8065 = vmatprep.subr.bf16.mxu0 0
    %8066 = vmatpush1.bf16.msra.mxu0 0
    %8067 = vmatprep.subr.bf16.mxu0 0
    %8068 = vmatpush1.bf16.msra.mxu0 0
    %8069 = vmatprep.subr.bf16.mxu0 0
    %8070 = vmatpush1.bf16.msra.mxu0 0
    %8071 = vmatprep.subr.bf16.mxu0 0
    %8072 = vmatpush1.bf16.msra.mxu0 0
    %8073 = vmatprep.subr.bf16.mxu0 0
    %8074 = vmatpush1.bf16.msra.mxu0 0
    %8075 = vmatprep.subr.bf16.mxu0 0
    %8076 = vmatpush1.bf16.msra.mxu0 0
    %8077 = vmatprep.subr.bf16.mxu0 0
    %8078 = vmatpush1.bf16.msra.mxu0 0
    %8079 = vmatprep.subr.bf16.mxu0 0
    %8080 = vmatpush1.bf16.msra.mxu0 0
    %8081 = vmatprep.subr.bf16.mxu0 0
    %8082 = vmatpush1.bf16.msra.mxu0 0
    %8083 = vmatprep.subr.bf16.mxu0 0
    %8084 = vmatpush1.bf16.msra.mxu0 0
    %8085 = vmatprep.subr.bf16.mxu0 0
    %8086 = vmatpush1.bf16.msra.mxu0 0
    %8087 = vmatprep.mubr.bf16.mxu0 0
    %8088 = vmatmul.mubr.bf16.gmra.mrb[0].mxu0 %v8053
    %v8089 = vpop.f32.mrb[0].mxu0
    %v8090 = vadd.f32 0.0, %v8089
    %v8091 = vpop.f32.mrb[0].mxu0
    %v8092 = vadd.f32 0.0, %v8091
    %v8093 = vpop.f32.mrb[0].mxu0
    %v8094 = vadd.f32 0.0, %v8093
    %v8095 = vpop.f32.mrb[0].mxu0
    %v8096 = vadd.f32 0.0, %v8095
    %8097 = vdwg.mxu0
    %8098 = vst [vmem:[#allocation2] sm:$0xff] %v8090
    %8099 = vst [vmem:[#allocation2 + $0x8] sm:$0xff] %v8092
    %8100 = vst [vmem:[#allocation2 + $0x10] sm:$0xff] %v8094
    %8101 = vst [vmem:[#allocation2 + $0x18] sm:$0xff] %v8096
    // Predicated region
    $region98: #{t5_forward.1} parent=1 // pred_check
      _
    $region99: #{t5_forward.1} parent=1 // pred_check_branch
      %8103 = sbr.rel (0) target = $region101
    $region100: #{t5_forward.1} parent=1 // pred_region
      %s8105 = ssub.s32 512, 512
      %8106 = vsyncadd [#allocation3], %s8105
      %s8107 = sshll.u32 [#allocation2], 4
      %s8108 = int_to_ptr.vmem [resolvable:$true] %s8107
      %8113 = dma.vmem_to_hbm [thread:$0]  %s8108, 512, %s24, [#allocation3], 256, 256, 16
    $region101: #{t5_forward.1} parent=1 // pred_fallthru
      _
    // Predicated region
    $region102: #{t5_forward.1} parent=1 // pred_check
      _
    $region103: #{t5_forward.1} parent=1 // pred_check_branch
      %8115 = sbr.rel (0) target = $region105
    $region104: #{t5_forward.1} parent=1 // pred_region
      %8116 = dma.done [#allocation3], 512
    $region105: #{t5_forward.1} parent=1 // pred_fallthru
      _
    %8117 = vsyncpa [#allocation3], 1

</llo_original>
